<compile_context>
chip_gen: v7x
topology: tpu7x:2x2x1
jax: 0.10.0
libtpu: 0.0.40
codegen_flags: <defaults>
</compile_context>

<pallas_src>
import functools
import math

import jax
import jax.numpy as jnp
from jax.experimental import pallas as pl
from jax.experimental.pallas import tpu as pltpu


# bf16 MXU operands give ~2x (v5e) to ~4x (v6e/v7x) matmul rate and halve the
# weight DMA / resident VMEM.  Set to jnp.float32 for bit-closer parity with
# the PyTorch reference.
MXU_DTYPE = jnp.bfloat16
_LN_EPS = 1e-5           # nn.LayerNorm default


def _mm(a, b):
    """2-D MXU matmul: low-precision operands, f32 accumulation."""
    return jnp.dot(a.astype(MXU_DTYPE), b.astype(MXU_DTYPE),
                   preferred_element_type=jnp.float32)


def _layer_norm(x, gamma, beta):
    mu = jnp.mean(x, axis=-1, keepdims=True)
    var = jnp.mean((x - mu) ** 2, axis=-1, keepdims=True)
    return (x - mu) * jax.lax.rsqrt(var + _LN_EPS) * gamma + beta


def _mha(q, k, v, bias, n_heads, inv_scale):
    """All heads of one batch element in a single batched einsum pair.

    q: (Sq, E) f32, k/v: (Sk, E) f32, bias broadcastable to (H, Sq, Sk).
    Returns context (Sq, E) f32 and exact softmax probs (H, Sq, Sk) f32.
    """
    sq, e = q.shape
    sk = k.shape[0]
    dh = e // n_heads
    qh = q.reshape(sq, n_heads, dh).transpose(1, 0, 2)   # (H, Sq, Dh)
    kh = k.reshape(sk, n_heads, dh).transpose(1, 0, 2)   # (H, Sk, Dh)
    vh = v.reshape(sk, n_heads, dh).transpose(1, 0, 2)   # (H, Sk, Dh)

    s = jnp.einsum('hqd,hkd->hqk', qh.astype(MXU_DTYPE), kh.astype(MXU_DTYPE),
                   preferred_element_type=jnp.float32)
    s = s * inv_scale + bias                 # additive 0 / -1e10 bias, f32
    s = s - jnp.max(s, axis=-1, keepdims=True)
    p = jnp.exp(s)
    # Exact softmax (this tensor is also returned as `attention`); switch to
    # pl.reciprocal(..., approx=True) if parity of the probs is not required.
    p = p / jnp.sum(p, axis=-1, keepdims=True)

    ctx = jnp.einsum('hqk,hkd->hqd', p.astype(MXU_DTYPE), vh.astype(MXU_DTYPE),
                     preferred_element_type=jnp.float32)
    ctx = ctx.transpose(1, 0, 2).reshape(sq, e)
    return ctx, p


def decoder_layer_kernel(n_heads, inv_scale, bt, shared_trg_mask,
                         trg_ref, mem_ref, tbias_ref, sbias_ref,
                         wqkv_ref, bqkv_ref, wo1_ref, bo1_ref,
                         ln1_g_ref, ln1_b_ref,
                         wq2_ref, bq2_ref, wkv2_ref, bkv2_ref,
                         wo2_ref, bo2_ref, ln2_g_ref, ln2_b_ref,
                         wf1_ref, bf1_ref, wf2_ref, bf2_ref,
                         ln3_g_ref, ln3_b_ref,
                         out_ref, attn_ref):
    st = out_ref.shape[1]
    e = out_ref.shape[2]

    # Batch-fused rows: all projections / FFN run on a (bt*St, E) slab so the
    # MXU sees wide matmuls; attention is per batch element below.
    x = trg_ref[...].reshape(bt * st, e)                    # (R, E) f32

    # ---- masked self-attention: fused QKV projection, heads batched ----
    qkv = _mm(x, wqkv_ref[...]) + bqkv_ref[...]             # (R, 3E) f32
    sa_parts = []
    for i in range(bt):
        rows = slice(i * st, (i + 1) * st)
        q = qkv[rows, 0:e]
        k = qkv[rows, e:2 * e]
        v = qkv[rows, 2 * e:3 * e]
        tb = tbias_ref[...] if shared_trg_mask else tbias_ref[i]   # (St, St)
        ctx, _ = _mha(q, k, v, tb[None, :, :], n_heads, inv_scale)
        sa_parts.append(ctx)
    sa_ctx = sa_parts[0] if bt == 1 else jnp.concatenate(sa_parts, axis=0)
    sa_out = _mm(sa_ctx, wo1_ref[...]) + bo1_ref[...]
    x1 = _layer_norm(x + sa_out, ln1_g_ref[...], ln1_b_ref[...])

    # ---- encoder (cross) attention: fused Q over all rows, K|V per element
    #      (memory length need not be sublane aligned, so no mem flatten) ----
    q2 = _mm(x1, wq2_ref[...]) + bq2_ref[...]               # (R, E)
    ca_parts = []
    for i in range(bt):
        qi = q2[i * st:(i + 1) * st, :]
        kv_i = _mm(mem_ref[i], wkv2_ref[...]) + bkv2_ref[...]    # (Ss, 2E)
        ki = kv_i[:, 0:e]
        vi = kv_i[:, e:2 * e]
        sb = sbias_ref[i]                                        # (1, Ss)
        ctx, attn = _mha(qi, ki, vi, sb[None, :, :], n_heads, inv_scale)
        attn_ref[i] = attn                                       # (H, St, Ss)
        ca_parts.append(ctx)
    ca_ctx = ca_parts[0] if bt == 1 else jnp.concatenate(ca_parts, axis=0)
    ca_out = _mm(ca_ctx, wo2_ref[...]) + bo2_ref[...]
    x2 = _layer_norm(x1 + ca_out, ln2_g_ref[...], ln2_b_ref[...])

    # ---- feed-forward (relu), residual + LayerNorm ----
    h = jnp.maximum(_mm(x2, wf1_ref[...]) + bf1_ref[...], 0.0)
    ffn = _mm(h, wf2_ref[...]) + bf2_ref[...]
    y = _layer_norm(x2 + ffn, ln3_g_ref[...], ln3_b_ref[...])
    out_ref[...] = y.reshape(bt, st, e)


def _pick_block_b(batch, seq_q):
    """Fuse batch elements so each grid step feeds the MXU ~>=256 rows while
    keeping >= 2 grid steps (v7x megacore) and exact divisibility."""
    if seq_q % 8 != 0:                  # need sublane-aligned row merge
        return 1
    bt = max(1, min(batch, -(-256 // max(seq_q, 1))))
    while bt > 1 and (batch % bt != 0 or -(-batch // bt) < 2):
        bt -= 1
    return bt


def _vmem_limit_bytes():
    try:
        kind = jax.devices()[0].device_kind.lower()
    except Exception:
        kind = ""
    if "v6" in kind:
        return 96 * 1024 * 1024      # v6e: 128 MiB physical VMEM -> big blocks
    if "v5" in kind:
        return 32 * 1024 * 1024      # v5e: modest raise over 16 MiB default
    if "v7" in kind or "7x" in kind:
        return 48 * 1024 * 1024      # v7x: 64 MiB physical, leave headroom
    return None                      # unknown: keep compiler default


def decoder_layer(trg, memory, trg_mask, src_mask, lp, n_heads, block_b=None):
    """Forward pass of the PyTorch DecoderLayer (inference; dropout = identity).

    trg: (B, St, E) f32, memory: (B, Ss, E) f32.
    trg_mask: (St, St) (shared, e.g. causal), (B, St, St) or (B, 1, St, St).
    src_mask: (B, Ss) or (B, 1, 1, Ss).   1 = attend, 0 = masked.
    Returns (trg_out (B, St, E), attention (B, H, St, Ss)).
    """
    B, St, E = trg.shape
    Ss = memory.shape[1]
    inv_scale = 1.0 / math.sqrt(float(E // n_heads))

    if block_b is None:
        bt = _pick_block_b(B, St)
    else:
        bt = int(block_b)
        if bt < 1 or B % bt != 0:
            raise ValueError(f"block_b={bt} must divide batch={B}")
        if bt > 1 and St % 8 != 0:
            raise ValueError("block_b > 1 requires St to be a multiple of 8")

    # ---- masks -> additive f32 biases once, outside the kernel ----
    if trg_mask.ndim == 4:                       # (B, 1, St, St) -> (B, St, St)
        trg_mask = trg_mask.reshape(trg_mask.shape[0], St, St)
    shared_trg_mask = (trg_mask.ndim == 2)
    trg_bias = (trg_mask.astype(jnp.float32) - 1.0) * 1e10     # 0 / -1e10
    if src_mask.ndim == 4:                       # (B, 1, 1, Ss) -> (B, Ss)
        src_mask = src_mask.reshape(src_mask.shape[0], Ss)
    src_bias = ((src_mask.astype(jnp.float32) - 1.0) * 1e10).reshape(B, 1, Ss)

    # ---- matmul weights cast once to the MXU operand dtype (halves DMA) ----
    wqkv1 = lp['wqkv1'].astype(MXU_DTYPE)
    wo1 = lp['wo1'].astype(MXU_DTYPE)
    wq2 = lp['wq2'].astype(MXU_DTYPE)
    wkv2 = lp['wkv2'].astype(MXU_DTYPE)
    wo2 = lp['wo2'].astype(MXU_DTYPE)
    wf1 = lp['wf1'].astype(MXU_DTYPE)
    wf2 = lp['wf2'].astype(MXU_DTYPE)

    args = (trg, memory, trg_bias, src_bias,
            wqkv1, lp['bqkv1'], wo1, lp['bo1'], lp['ln1_g'], lp['ln1_b'],
            wq2, lp['bq2'], wkv2, lp['bkv2'], wo2, lp['bo2'],
            lp['ln2_g'], lp['ln2_b'],
            wf1, lp['bf1'], wf2, lp['bf2'], lp['ln3_g'], lp['ln3_b'])

    kernel = functools.partial(decoder_layer_kernel, n_heads, inv_scale, bt,
                               shared_trg_mask)

    out_shape = (jax.ShapeDtypeStruct((B, St, E), jnp.float32),
                 jax.ShapeDtypeStruct((B, n_heads, St, Ss), jnp.float32))
    out_specs = (pl.BlockSpec((bt, St, E), lambda b: (b, 0, 0)),
                 pl.BlockSpec((bt, n_heads, St, Ss), lambda b: (b, 0, 0, 0)))

    if shared_trg_mask:
        tbias_shape = (St, St)
        tbias_index = lambda b: (0, 0)            # one shared block, DMA'd once
    else:
        tbias_shape = (bt, St, St)
        tbias_index = lambda b: (b, 0, 0)

    def build_in_specs(single_buffer_weights):
        def wspec(arr):
            nd = arr.ndim
            index = lambda b, _nd=nd: (0,) * _nd
            if single_buffer_weights:
                # Constant index_map: the second pipeline buffer is pure VMEM
                # waste, so keep resident weights single-buffered.
                return pl.BlockSpec(arr.shape, index,
                                    pipeline_mode=pl.Buffered(1))
            return pl.BlockSpec(arr.shape, index)

        return ([pl.BlockSpec((bt, St, E), lambda b: (b, 0, 0)),
                 pl.BlockSpec((bt, Ss, E), lambda b: (b, 0, 0)),
                 pl.BlockSpec(tbias_shape, tbias_index),
                 pl.BlockSpec((bt, 1, Ss), lambda b: (b, 0, 0))]
                + [wspec(a) for a in args[4:]])

    compiler_params = pltpu.CompilerParams(
        dimension_semantics=("parallel",),        # megacore split on v7x
        vmem_limit_bytes=_vmem_limit_bytes())

    def run(single_buffer_weights):
        return pl.pallas_call(
            kernel,
            grid=(B // bt,),
            in_specs=build_in_specs(single_buffer_weights),
            out_specs=out_specs,
            out_shape=out_shape,
            compiler_params=compiler_params,
        )(*args)

    try:
        return run(True)
    except Exception:
        # pl.Buffered(1) (single-buffered resident weights) unsupported on this
        # JAX/Mosaic version -> fall back to default double buffering.
        return run(False)


def decoder_layer_reference(trg, memory, trg_mask, src_mask, lp, n_heads):
    """Pure-JAX f32 reference mirroring the PyTorch module (dropout=identity)."""
    B, St, E = trg.shape
    Ss = memory.shape[1]
    H = n_heads
    Dh = E // H
    scale = math.sqrt(float(Dh))

    def ln(x, g, b):
        mu = jnp.mean(x, axis=-1, keepdims=True)
        var = jnp.mean((x - mu) ** 2, axis=-1, keepdims=True)
        return (x - mu) / jnp.sqrt(var + _LN_EPS) * g + b

    def heads(x):
        b, s, _ = x.shape
        return x.reshape(b, s, H, Dh).transpose(0, 2, 1, 3)

    def mha(q_in, kv_in, wq, bq, wk, bk, wv, bv, wo, bo, mask):
        Q = heads(q_in @ wq + bq)
        K = heads(kv_in @ wk + bk)
        V = heads(kv_in @ wv + bv)
        s = jnp.einsum('bhqd,bhkd->bhqk', Q, K) / scale
        s = jnp.where(mask == 0, -1.0e10, s)
        a = jax.nn.softmax(s, axis=-1)
        ctx = jnp.einsum('bhqk,bhkd->bhqd', a, V)
        ctx = ctx.transpose(0, 2, 1, 3).reshape(q_in.shape[0], -1, E)
        return ctx @ wo + bo, a

    wq1, wk1, wv1 = (lp['wqkv1'][:, :E], lp['wqkv1'][:, E:2 * E],
                     lp['wqkv1'][:, 2 * E:])
    bq1, bk1, bv1 = (lp['bqkv1'][:, :E], lp['bqkv1'][:, E:2 * E],
                     lp['bqkv1'][:, 2 * E:])
    wk2, wv2 = lp['wkv2'][:, :E], lp['wkv2'][:, E:]
    bk2, bv2 = lp['bkv2'][:, :E], lp['bkv2'][:, E:]

    if trg_mask.ndim == 2:
        tmask = trg_mask[None, None]
    elif trg_mask.ndim == 3:
        tmask = trg_mask[:, None]
    else:
        tmask = trg_mask
    smask = src_mask.reshape(B, 1, 1, Ss)

    sa, _ = mha(trg, trg, wq1, bq1, wk1, bk1, wv1, bv1,
                lp['wo1'], lp['bo1'], tmask)
    x1 = ln(trg + sa, lp['ln1_g'], lp['ln1_b'])
    ca, attn = mha(x1, memory, lp['wq2'], lp['bq2'], wk2, bk2, wv2, bv2,
                   lp['wo2'], lp['bo2'], smask)
    x2 = ln(x1 + ca, lp['ln2_g'], lp['ln2_b'])
    h = jax.nn.relu(x2 @ lp['wf1'] + lp['bf1'])
    ff = h @ lp['wf2'] + lp['bf2']
    y = ln(x2 + ff, lp['ln3_g'], lp['ln3_b'])
    return y, attn


def init_params(key, embed_dim, hidden_dim):
    ks = jax.random.split(key, 20)
    e, h = embed_dim, hidden_dim

    def lin(k, din, dout):
        return jax.random.normal(k, (din, dout), jnp.float32) / math.sqrt(float(din))

    def bias(k, dout):
        return 0.01 * jax.random.normal(k, (1, dout), jnp.float32)

    return {
        # self-attention: fused q|k|v packed on the output axis (E, 3E)
        'wqkv1': jnp.concatenate([lin(ks[0], e, e), lin(ks[1], e, e),
                                  lin(ks[2], e, e)], axis=1),
        'bqkv1': jnp.concatenate([bias(ks[3], e), bias(ks[4], e),
                                  bias(ks[5], e)], axis=1),
        'wo1': lin(ks[6], e, e), 'bo1': bias(ks[7], e),
        'ln1_g': jnp.ones((1, e), jnp.float32), 'ln1_b': jnp.zeros((1, e), jnp.float32),
        # cross attention: separate Q proj, fused k|v proj (E, 2E)
        'wq2': lin(ks[8], e, e), 'bq2': bias(ks[9], e),
        'wkv2': jnp.concatenate([lin(ks[10], e, e), lin(ks[11], e, e)], axis=1),
        'bkv2': jnp.concatenate([bias(ks[12], e), bias(ks[13], e)], axis=1),
        'wo2': lin(ks[14], e, e), 'bo2': bias(ks[15], e),
        'ln2_g': jnp.ones((1, e), jnp.float32), 'ln2_b': jnp.zeros((1, e), jnp.float32),
        # feed-forward
        'wf1': lin(ks[16], e, h), 'bf1': bias(ks[17], h),
        'wf2': lin(ks[18], h, e), 'bf2': bias(ks[19], e),
        'ln3_g': jnp.ones((1, e), jnp.float32), 'ln3_b': jnp.zeros((1, e), jnp.float32),
    }


if __name__ == "__main__":
    B, ST, SS = 2, 8, 10                 # batch, target seq, source seq
    EMBED, N_HEADS, HIDDEN = 32, 4, 64

    key = jax.random.PRNGKey(0)
    kp, kt, km = jax.random.split(key, 3)
    params = init_params(kp, EMBED, HIDDEN)

    trg = jax.random.normal(kt, (B, ST, EMBED), jnp.float32)
    memory = jax.random.normal(km, (B, SS, EMBED), jnp.float32)

    # causal target mask (1 = attend, 0 = masked); batch-invariant -> shared block
    trg_mask = jnp.tril(jnp.ones((ST, ST), jnp.float32))
    # source key-padding mask: last two source positions of element 1 padded
    src_mask = jnp.ones((B, SS), jnp.float32).at[1, 8:].set(0.0)

    # one batch element per grid step (2 grid steps -> both v7x TCs busy)
    out, attn = decoder_layer(trg, memory, trg_mask, src_mask, params, N_HEADS)
    out = jax.block_until_ready(out)
    attn = jax.block_until_ready(attn)

    # batch-fused variant (2 elements per grid step) must agree exactly
    out2, attn2 = decoder_layer(trg, memory, trg_mask, src_mask, params,
                                N_HEADS, block_b=2)
    out2 = jax.block_until_ready(out2)

    ref_out, ref_attn = decoder_layer_reference(trg, memory, trg_mask, src_mask,
                                                params, N_HEADS)

    assert out.shape == (B, ST, EMBED) and out.dtype == jnp.float32
    assert attn.shape == (B, N_HEADS, ST, SS)
    assert bool(jnp.all(jnp.isfinite(out))) and bool(jnp.all(jnp.isfinite(attn)))
    assert bool(jnp.allclose(out, out2, atol=1e-3))
    assert bool(jnp.allclose(attn, attn2, atol=1e-3))

    # bf16 MXU operands vs. exact-f32 reference: RMS-level structural check
    def _rms(a, b):
        return float(jnp.sqrt(jnp.mean((a - b) ** 2)))

    assert _rms(attn, ref_attn) < 0.05
    assert _rms(out, ref_out) < 0.10

    print("KERNEL_OK")
</pallas_src>

<mosaic_0001>
module attributes {stable_mosaic.version = 11 : i64} {
  func.func @decoder_layer_kernel(%arg0: i32, %arg1: memref<1x8x32xf32, #tpu.memory_space<vmem>>, %arg2: memref<1x10x32xf32, #tpu.memory_space<vmem>>, %arg3: memref<8x8xf32, #tpu.memory_space<vmem>>, %arg4: memref<1x1x10xf32, #tpu.memory_space<vmem>>, %arg5: memref<32x96xbf16, #tpu.memory_space<vmem>>, %arg6: memref<1x96xf32, #tpu.memory_space<vmem>>, %arg7: memref<32x32xbf16, #tpu.memory_space<vmem>>, %arg8: memref<1x32xf32, #tpu.memory_space<vmem>>, %arg9: memref<1x32xf32, #tpu.memory_space<vmem>>, %arg10: memref<1x32xf32, #tpu.memory_space<vmem>>, %arg11: memref<32x32xbf16, #tpu.memory_space<vmem>>, %arg12: memref<1x32xf32, #tpu.memory_space<vmem>>, %arg13: memref<32x64xbf16, #tpu.memory_space<vmem>>, %arg14: memref<1x64xf32, #tpu.memory_space<vmem>>, %arg15: memref<32x32xbf16, #tpu.memory_space<vmem>>, %arg16: memref<1x32xf32, #tpu.memory_space<vmem>>, %arg17: memref<1x32xf32, #tpu.memory_space<vmem>>, %arg18: memref<1x32xf32, #tpu.memory_space<vmem>>, %arg19: memref<32x64xbf16, #tpu.memory_space<vmem>>, %arg20: memref<1x64xf32, #tpu.memory_space<vmem>>, %arg21: memref<64x32xbf16, #tpu.memory_space<vmem>>, %arg22: memref<1x32xf32, #tpu.memory_space<vmem>>, %arg23: memref<1x32xf32, #tpu.memory_space<vmem>>, %arg24: memref<1x32xf32, #tpu.memory_space<vmem>>, %arg25: memref<1x8x32xf32, #tpu.memory_space<vmem>>, %arg26: memref<1x4x8x10xf32, #tpu.memory_space<vmem>>) attributes {dimension_semantics = [#tpu.dimension_semantics<parallel>], iteration_bounds = array<i64: 2>, scalar_prefetch = 0 : i64, scratch_operands = 0 : i64, tpu.core_type = #tpu.core_type<tc>, window_params = [{transform_indices = @transform_0, window_bounds = array<i64: 1, 8, 32>}, {transform_indices = @transform_1, window_bounds = array<i64: 1, 10, 32>}, {pipeline_mode = #tpu.pipeline_mode<synchronous>, transform_indices = @transform_2, window_bounds = array<i64: 8, 8>}, {transform_indices = @transform_3, window_bounds = array<i64: 1, 1, 10>}, {pipeline_mode = #tpu.pipeline_mode<synchronous>, transform_indices = @transform_4, window_bounds = array<i64: 32, 96>}, {pipeline_mode = #tpu.pipeline_mode<synchronous>, transform_indices = @transform_5, window_bounds = array<i64: 1, 96>}, {pipeline_mode = #tpu.pipeline_mode<synchronous>, transform_indices = @transform_6, window_bounds = array<i64: 32, 32>}, {pipeline_mode = #tpu.pipeline_mode<synchronous>, transform_indices = @transform_7, window_bounds = array<i64: 1, 32>}, {pipeline_mode = #tpu.pipeline_mode<synchronous>, transform_indices = @transform_8, window_bounds = array<i64: 1, 32>}, {pipeline_mode = #tpu.pipeline_mode<synchronous>, transform_indices = @transform_9, window_bounds = array<i64: 1, 32>}, {pipeline_mode = #tpu.pipeline_mode<synchronous>, transform_indices = @transform_10, window_bounds = array<i64: 32, 32>}, {pipeline_mode = #tpu.pipeline_mode<synchronous>, transform_indices = @transform_11, window_bounds = array<i64: 1, 32>}, {pipeline_mode = #tpu.pipeline_mode<synchronous>, transform_indices = @transform_12, window_bounds = array<i64: 32, 64>}, {pipeline_mode = #tpu.pipeline_mode<synchronous>, transform_indices = @transform_13, window_bounds = array<i64: 1, 64>}, {pipeline_mode = #tpu.pipeline_mode<synchronous>, transform_indices = @transform_14, window_bounds = array<i64: 32, 32>}, {pipeline_mode = #tpu.pipeline_mode<synchronous>, transform_indices = @transform_15, window_bounds = array<i64: 1, 32>}, {pipeline_mode = #tpu.pipeline_mode<synchronous>, transform_indices = @transform_16, window_bounds = array<i64: 1, 32>}, {pipeline_mode = #tpu.pipeline_mode<synchronous>, transform_indices = @transform_17, window_bounds = array<i64: 1, 32>}, {pipeline_mode = #tpu.pipeline_mode<synchronous>, transform_indices = @transform_18, window_bounds = array<i64: 32, 64>}, {pipeline_mode = #tpu.pipeline_mode<synchronous>, transform_indices = @transform_19, window_bounds = array<i64: 1, 64>}, {pipeline_mode = #tpu.pipeline_mode<synchronous>, transform_indices = @transform_20, window_bounds = array<i64: 64, 32>}, {pipeline_mode = #tpu.pipeline_mode<synchronous>, transform_indices = @transform_21, window_bounds = array<i64: 1, 32>}, {pipeline_mode = #tpu.pipeline_mode<synchronous>, transform_indices = @transform_22, window_bounds = array<i64: 1, 32>}, {pipeline_mode = #tpu.pipeline_mode<synchronous>, transform_indices = @transform_23, window_bounds = array<i64: 1, 32>}, {transform_indices = @transform_24, window_bounds = array<i64: 1, 8, 32>}, {transform_indices = @transform_25, window_bounds = array<i64: 1, 4, 8, 10>}]} {
    %c0 = arith.constant 0 : index
    %c0_0 = arith.constant 0 : index
    %c0_1 = arith.constant 0 : index
    %0 = vector.load %arg1[%c0, %c0_0, %c0_1] : memref<1x8x32xf32, #tpu.memory_space<vmem>>, vector<1x8x32xf32>
    %1 = vector.shape_cast %0 : vector<1x8x32xf32> to vector<8x32xf32>
    %c0_2 = arith.constant 0 : index
    %c0_3 = arith.constant 0 : index
    %2 = vector.load %arg5[%c0_2, %c0_3] : memref<32x96xbf16, #tpu.memory_space<vmem>>, vector<32x96xbf16>
    %3 = arith.truncf %1 : vector<8x32xf32> to vector<8x32xbf16>
    %cst = arith.constant dense<0.000000e+00> : vector<8x96xf32>
    %4 = tpu.matmul %3, %2, %cst {dimension_numbers = #tpu.dot_dimension_numbers<[1], [0], [0], [1], [0, 0, 1, 1], [], []>} : vector<8x32xbf16>, vector<32x96xbf16>, vector<8x96xf32> -> vector<8x96xf32>
    %c0_4 = arith.constant 0 : index
    %c0_5 = arith.constant 0 : index
    %5 = vector.load %arg6[%c0_4, %c0_5] : memref<1x96xf32, #tpu.memory_space<vmem>>, vector<1x96xf32>
    %6 = vector.broadcast %5 : vector<1x96xf32> to vector<8x96xf32>
    %7 = arith.addf %4, %6 : vector<8x96xf32>
    %8 = vector.extract_strided_slice %7 {offsets = [0, 0], sizes = [8, 32], strides = [1, 1]} : vector<8x96xf32> to vector<8x32xf32>
    %9 = vector.extract_strided_slice %7 {offsets = [0, 32], sizes = [8, 32], strides = [1, 1]} : vector<8x96xf32> to vector<8x32xf32>
    %10 = vector.extract_strided_slice %7 {offsets = [0, 64], sizes = [8, 32], strides = [1, 1]} : vector<8x96xf32> to vector<8x32xf32>
    %c0_6 = arith.constant 0 : index
    %c0_7 = arith.constant 0 : index
    %11 = vector.load %arg3[%c0_6, %c0_7] : memref<8x8xf32, #tpu.memory_space<vmem>>, vector<8x8xf32>
    %12 = vector.shape_cast %11 : vector<8x8xf32> to vector<1x8x8xf32>
    %13 = vector.shape_cast %8 : vector<8x32xf32> to vector<8x4x8xf32>
    %14 = tpu.transpose %13, [1, 0, 2] : vector<8x4x8xf32> -> vector<4x8x8xf32>
    %15 = vector.shape_cast %9 : vector<8x32xf32> to vector<8x4x8xf32>
    %16 = tpu.transpose %15, [1, 0, 2] : vector<8x4x8xf32> -> vector<4x8x8xf32>
    %17 = vector.shape_cast %10 : vector<8x32xf32> to vector<8x4x8xf32>
    %18 = tpu.transpose %17, [1, 0, 2] : vector<8x4x8xf32> -> vector<4x8x8xf32>
    %19 = arith.truncf %14 : vector<4x8x8xf32> to vector<4x8x8xbf16>
    %20 = arith.truncf %16 : vector<4x8x8xf32> to vector<4x8x8xbf16>
    "tpu.trace_start"() <{level = 10 : i32, message = "hqd,hkd->hqk"}> : () -> ()
    %cst_8 = arith.constant dense<0.000000e+00> : vector<4x8x8xf32>
    %21 = tpu.matmul %19, %20, %cst_8 {dimension_numbers = #tpu.dot_dimension_numbers<[2], [2], [1], [1], [0, 0, 0, 1, 1, 1], [0], [0]>} : vector<4x8x8xbf16>, vector<4x8x8xbf16>, vector<4x8x8xf32> -> vector<4x8x8xf32>
    "tpu.trace_stop"() : () -> ()
    %cst_9 = arith.constant 0.353553385 : f32
    %22 = vector.broadcast %cst_9 : f32 to vector<4x8x8xf32>
    %23 = arith.mulf %21, %22 : vector<4x8x8xf32>
    %24 = vector.broadcast %12 : vector<1x8x8xf32> to vector<4x8x8xf32>
    %25 = arith.addf %23, %24 : vector<4x8x8xf32>
    %cst_10 = arith.constant dense<0xFF800000> : vector<4x8xf32>
    %26 = vector.multi_reduction <maximumf>, %25, %cst_10 [2] : vector<4x8x8xf32> to vector<4x8xf32>
    %27 = vector.shape_cast %26 : vector<4x8xf32> to vector<4x8x1xf32>
    %28 = vector.broadcast %27 : vector<4x8x1xf32> to vector<4x8x8xf32>
    %29 = arith.subf %25, %28 : vector<4x8x8xf32>
    %30 = math.exp %29 : vector<4x8x8xf32>
    %cst_11 = arith.constant dense<0.000000e+00> : vector<4x8xf32>
    %31 = vector.multi_reduction <add>, %30, %cst_11 [2] : vector<4x8x8xf32> to vector<4x8xf32>
    %32 = vector.shape_cast %31 : vector<4x8xf32> to vector<4x8x1xf32>
    %33 = vector.broadcast %32 : vector<4x8x1xf32> to vector<4x8x8xf32>
    %34 = arith.divf %30, %33 : vector<4x8x8xf32>
    %35 = arith.truncf %34 : vector<4x8x8xf32> to vector<4x8x8xbf16>
    %36 = arith.truncf %18 : vector<4x8x8xf32> to vector<4x8x8xbf16>
    "tpu.trace_start"() <{level = 10 : i32, message = "hqk,hkd->hqd"}> : () -> ()
    %cst_12 = arith.constant dense<0.000000e+00> : vector<4x8x8xf32>
    %37 = tpu.matmul %35, %36, %cst_12 {dimension_numbers = #tpu.dot_dimension_numbers<[2], [1], [1], [2], [0, 0, 0, 1, 1, 2], [0], [0]>} : vector<4x8x8xbf16>, vector<4x8x8xbf16>, vector<4x8x8xf32> -> vector<4x8x8xf32>
    "tpu.trace_stop"() : () -> ()
    %38 = tpu.transpose %37, [1, 0, 2] : vector<4x8x8xf32> -> vector<8x4x8xf32>
    %39 = vector.shape_cast %38 : vector<8x4x8xf32> to vector<8x32xf32>
    %c0_13 = arith.constant 0 : index
    %c0_14 = arith.constant 0 : index
    %40 = vector.load %arg7[%c0_13, %c0_14] : memref<32x32xbf16, #tpu.memory_space<vmem>>, vector<32x32xbf16>
    %41 = arith.truncf %39 : vector<8x32xf32> to vector<8x32xbf16>
    %cst_15 = arith.constant dense<0.000000e+00> : vector<8x32xf32>
    %42 = tpu.matmul %41, %40, %cst_15 {dimension_numbers = #tpu.dot_dimension_numbers<[1], [0], [0], [1], [0, 0, 1, 1], [], []>} : vector<8x32xbf16>, vector<32x32xbf16>, vector<8x32xf32> -> vector<8x32xf32>
    %c0_16 = arith.constant 0 : index
    %c0_17 = arith.constant 0 : index
    %43 = vector.load %arg8[%c0_16, %c0_17] : memref<1x32xf32, #tpu.memory_space<vmem>>, vector<1x32xf32>
    %44 = vector.broadcast %43 : vector<1x32xf32> to vector<8x32xf32>
    %45 = arith.addf %42, %44 : vector<8x32xf32>
    %46 = arith.addf %1, %45 : vector<8x32xf32>
    %c0_18 = arith.constant 0 : index
    %c0_19 = arith.constant 0 : index
    %47 = vector.load %arg9[%c0_18, %c0_19] : memref<1x32xf32, #tpu.memory_space<vmem>>, vector<1x32xf32>
    %c0_20 = arith.constant 0 : index
    %c0_21 = arith.constant 0 : index
    %48 = vector.load %arg10[%c0_20, %c0_21] : memref<1x32xf32, #tpu.memory_space<vmem>>, vector<1x32xf32>
    %cst_22 = arith.constant dense<0.000000e+00> : vector<8xf32>
    %49 = vector.multi_reduction <add>, %46, %cst_22 [1] : vector<8x32xf32> to vector<8xf32>
    %50 = vector.shape_cast %49 : vector<8xf32> to vector<8x1xf32>
    %cst_23 = arith.constant 3.200000e+01 : f32
    %51 = vector.broadcast %cst_23 : f32 to vector<8x1xf32>
    %52 = arith.divf %50, %51 : vector<8x1xf32>
    %53 = vector.broadcast %52 : vector<8x1xf32> to vector<8x32xf32>
    %54 = arith.subf %46, %53 : vector<8x32xf32>
    %55 = arith.mulf %54, %54 : vector<8x32xf32>
    %cst_24 = arith.constant dense<0.000000e+00> : vector<8xf32>
    %56 = vector.multi_reduction <add>, %55, %cst_24 [1] : vector<8x32xf32> to vector<8xf32>
    %57 = vector.shape_cast %56 : vector<8xf32> to vector<8x1xf32>
    %cst_25 = arith.constant 3.200000e+01 : f32
    %58 = vector.broadcast %cst_25 : f32 to vector<8x1xf32>
    %59 = arith.divf %57, %58 : vector<8x1xf32>
    %60 = vector.broadcast %52 : vector<8x1xf32> to vector<8x32xf32>
    %61 = arith.subf %46, %60 : vector<8x32xf32>
    %cst_26 = arith.constant 9.99999974E-6 : f32
    %62 = vector.broadcast %cst_26 : f32 to vector<8x1xf32>
    %63 = arith.addf %59, %62 : vector<8x1xf32>
    %64 = math.rsqrt %63 : vector<8x1xf32>
    %65 = vector.broadcast %64 : vector<8x1xf32> to vector<8x32xf32>
    %66 = arith.mulf %61, %65 : vector<8x32xf32>
    %67 = vector.broadcast %47 : vector<1x32xf32> to vector<8x32xf32>
    %68 = arith.mulf %66, %67 : vector<8x32xf32>
    %69 = vector.broadcast %48 : vector<1x32xf32> to vector<8x32xf32>
    %70 = arith.addf %68, %69 : vector<8x32xf32>
    %c0_27 = arith.constant 0 : index
    %c0_28 = arith.constant 0 : index
    %71 = vector.load %arg11[%c0_27, %c0_28] : memref<32x32xbf16, #tpu.memory_space<vmem>>, vector<32x32xbf16>
    %72 = arith.truncf %70 : vector<8x32xf32> to vector<8x32xbf16>
    %cst_29 = arith.constant dense<0.000000e+00> : vector<8x32xf32>
    %73 = tpu.matmul %72, %71, %cst_29 {dimension_numbers = #tpu.dot_dimension_numbers<[1], [0], [0], [1], [0, 0, 1, 1], [], []>} : vector<8x32xbf16>, vector<32x32xbf16>, vector<8x32xf32> -> vector<8x32xf32>
    %c0_30 = arith.constant 0 : index
    %c0_31 = arith.constant 0 : index
    %74 = vector.load %arg12[%c0_30, %c0_31] : memref<1x32xf32, #tpu.memory_space<vmem>>, vector<1x32xf32>
    %75 = vector.broadcast %74 : vector<1x32xf32> to vector<8x32xf32>
    %76 = arith.addf %73, %75 : vector<8x32xf32>
    %c0_32 = arith.constant 0 : index
    %c0_33 = arith.constant 0 : index
    %c0_34 = arith.constant 0 : index
    %77 = vector.load %arg2[%c0_32, %c0_33, %c0_34] : memref<1x10x32xf32, #tpu.memory_space<vmem>>, vector<1x10x32xf32>
    %78 = vector.shape_cast %77 : vector<1x10x32xf32> to vector<10x32xf32>
    %c0_35 = arith.constant 0 : index
    %c0_36 = arith.constant 0 : index
    %79 = vector.load %arg13[%c0_35, %c0_36] : memref<32x64xbf16, #tpu.memory_space<vmem>>, vector<32x64xbf16>
    %80 = arith.truncf %78 : vector<10x32xf32> to vector<10x32xbf16>
    %cst_37 = arith.constant dense<0.000000e+00> : vector<10x64xf32>
    %81 = tpu.matmul %80, %79, %cst_37 {dimension_numbers = #tpu.dot_dimension_numbers<[1], [0], [0], [1], [0, 0, 1, 1], [], []>} : vector<10x32xbf16>, vector<32x64xbf16>, vector<10x64xf32> -> vector<10x64xf32>
    %c0_38 = arith.constant 0 : index
    %c0_39 = arith.constant 0 : index
    %82 = vector.load %arg14[%c0_38, %c0_39] : memref<1x64xf32, #tpu.memory_space<vmem>>, vector<1x64xf32>
    %83 = vector.broadcast %82 : vector<1x64xf32> to vector<10x64xf32>
    %84 = arith.addf %81, %83 : vector<10x64xf32>
    %85 = vector.extract_strided_slice %84 {offsets = [0, 0], sizes = [10, 32], strides = [1, 1]} : vector<10x64xf32> to vector<10x32xf32>
    %86 = vector.extract_strided_slice %84 {offsets = [0, 32], sizes = [10, 32], strides = [1, 1]} : vector<10x64xf32> to vector<10x32xf32>
    %c0_40 = arith.constant 0 : index
    %c0_41 = arith.constant 0 : index
    %c0_42 = arith.constant 0 : index
    %87 = vector.load %arg4[%c0_40, %c0_41, %c0_42] : memref<1x1x10xf32, #tpu.memory_space<vmem>>, vector<1x1x10xf32>
    %88 = vector.shape_cast %87 : vector<1x1x10xf32> to vector<1x10xf32>
    %89 = vector.shape_cast %88 : vector<1x10xf32> to vector<1x1x10xf32>
    %90 = vector.shape_cast %76 : vector<8x32xf32> to vector<8x4x8xf32>
    %91 = tpu.transpose %90, [1, 0, 2] : vector<8x4x8xf32> -> vector<4x8x8xf32>
    %92 = vector.shape_cast %85 : vector<10x32xf32> to vector<10x4x8xf32>
    %93 = tpu.transpose %92, [1, 0, 2] : vector<10x4x8xf32> -> vector<4x10x8xf32>
    %94 = vector.shape_cast %86 : vector<10x32xf32> to vector<10x4x8xf32>
    %95 = tpu.transpose %94, [1, 0, 2] : vector<10x4x8xf32> -> vector<4x10x8xf32>
    %96 = arith.truncf %91 : vector<4x8x8xf32> to vector<4x8x8xbf16>
    %97 = arith.truncf %93 : vector<4x10x8xf32> to vector<4x10x8xbf16>
    "tpu.trace_start"() <{level = 10 : i32, message = "hqd,hkd->hqk"}> : () -> ()
    %cst_43 = arith.constant dense<0.000000e+00> : vector<4x8x10xf32>
    %98 = tpu.matmul %96, %97, %cst_43 {dimension_numbers = #tpu.dot_dimension_numbers<[2], [2], [1], [1], [0, 0, 0, 1, 1, 1], [0], [0]>} : vector<4x8x8xbf16>, vector<4x10x8xbf16>, vector<4x8x10xf32> -> vector<4x8x10xf32>
    "tpu.trace_stop"() : () -> ()
    %cst_44 = arith.constant 0.353553385 : f32
    %99 = vector.broadcast %cst_44 : f32 to vector<4x8x10xf32>
    %100 = arith.mulf %98, %99 : vector<4x8x10xf32>
    %101 = vector.broadcast %89 : vector<1x1x10xf32> to vector<4x8x10xf32>
    %102 = arith.addf %100, %101 : vector<4x8x10xf32>
    %cst_45 = arith.constant dense<0xFF800000> : vector<4x8xf32>
    %103 = vector.multi_reduction <maximumf>, %102, %cst_45 [2] : vector<4x8x10xf32> to vector<4x8xf32>
    %104 = vector.shape_cast %103 : vector<4x8xf32> to vector<4x8x1xf32>
    %105 = vector.broadcast %104 : vector<4x8x1xf32> to vector<4x8x10xf32>
    %106 = arith.subf %102, %105 : vector<4x8x10xf32>
    %107 = math.exp %106 : vector<4x8x10xf32>
    %cst_46 = arith.constant dense<0.000000e+00> : vector<4x8xf32>
    %108 = vector.multi_reduction <add>, %107, %cst_46 [2] : vector<4x8x10xf32> to vector<4x8xf32>
    %109 = vector.shape_cast %108 : vector<4x8xf32> to vector<4x8x1xf32>
    %110 = vector.broadcast %109 : vector<4x8x1xf32> to vector<4x8x10xf32>
    %111 = arith.divf %107, %110 : vector<4x8x10xf32>
    %112 = arith.truncf %111 : vector<4x8x10xf32> to vector<4x8x10xbf16>
    %113 = arith.truncf %95 : vector<4x10x8xf32> to vector<4x10x8xbf16>
    "tpu.trace_start"() <{level = 10 : i32, message = "hqk,hkd->hqd"}> : () -> ()
    %cst_47 = arith.constant dense<0.000000e+00> : vector<4x8x8xf32>
    %114 = tpu.matmul %112, %113, %cst_47 {dimension_numbers = #tpu.dot_dimension_numbers<[2], [1], [1], [2], [0, 0, 0, 1, 1, 2], [0], [0]>} : vector<4x8x10xbf16>, vector<4x10x8xbf16>, vector<4x8x8xf32> -> vector<4x8x8xf32>
    "tpu.trace_stop"() : () -> ()
    %115 = tpu.transpose %114, [1, 0, 2] : vector<4x8x8xf32> -> vector<8x4x8xf32>
    %116 = vector.shape_cast %115 : vector<8x4x8xf32> to vector<8x32xf32>
    %c0_48 = arith.constant 0 : index
    %c0_49 = arith.constant 0 : index
    %c0_50 = arith.constant 0 : index
    %c0_51 = arith.constant 0 : index
    %117 = vector.load %arg26[%c0_48, %c0_49, %c0_50, %c0_51] : memref<1x4x8x10xf32, #tpu.memory_space<vmem>>, vector<1x4x8x10xf32>
    %118 = vector.shape_cast %117 : vector<1x4x8x10xf32> to vector<4x8x10xf32>
    %119 = vector.shape_cast %111 : vector<4x8x10xf32> to vector<1x4x8x10xf32>
    tpu.vector_store %arg26[%c0_48, %c0_49, %c0_50, %c0_51], %119 {strides = array<i32>} : memref<1x4x8x10xf32, #tpu.memory_space<vmem>>, vector<1x4x8x10xf32>,
    %c0_52 = arith.constant 0 : index
    %c0_53 = arith.constant 0 : index
    %120 = vector.load %arg15[%c0_52, %c0_53] : memref<32x32xbf16, #tpu.memory_space<vmem>>, vector<32x32xbf16>
    %121 = arith.truncf %116 : vector<8x32xf32> to vector<8x32xbf16>
    %cst_54 = arith.constant dense<0.000000e+00> : vector<8x32xf32>
    %122 = tpu.matmul %121, %120, %cst_54 {dimension_numbers = #tpu.dot_dimension_numbers<[1], [0], [0], [1], [0, 0, 1, 1], [], []>} : vector<8x32xbf16>, vector<32x32xbf16>, vector<8x32xf32> -> vector<8x32xf32>
    %c0_55 = arith.constant 0 : index
    %c0_56 = arith.constant 0 : index
    %123 = vector.load %arg16[%c0_55, %c0_56] : memref<1x32xf32, #tpu.memory_space<vmem>>, vector<1x32xf32>
    %124 = vector.broadcast %123 : vector<1x32xf32> to vector<8x32xf32>
    %125 = arith.addf %122, %124 : vector<8x32xf32>
    %126 = arith.addf %70, %125 : vector<8x32xf32>
    %c0_57 = arith.constant 0 : index
    %c0_58 = arith.constant 0 : index
    %127 = vector.load %arg17[%c0_57, %c0_58] : memref<1x32xf32, #tpu.memory_space<vmem>>, vector<1x32xf32>
    %c0_59 = arith.constant 0 : index
    %c0_60 = arith.constant 0 : index
    %128 = vector.load %arg18[%c0_59, %c0_60] : memref<1x32xf32, #tpu.memory_space<vmem>>, vector<1x32xf32>
    %cst_61 = arith.constant dense<0.000000e+00> : vector<8xf32>
    %129 = vector.multi_reduction <add>, %126, %cst_61 [1] : vector<8x32xf32> to vector<8xf32>
    %130 = vector.shape_cast %129 : vector<8xf32> to vector<8x1xf32>
    %cst_62 = arith.constant 3.200000e+01 : f32
    %131 = vector.broadcast %cst_62 : f32 to vector<8x1xf32>
    %132 = arith.divf %130, %131 : vector<8x1xf32>
    %133 = vector.broadcast %132 : vector<8x1xf32> to vector<8x32xf32>
    %134 = arith.subf %126, %133 : vector<8x32xf32>
    %135 = arith.mulf %134, %134 : vector<8x32xf32>
    %cst_63 = arith.constant dense<0.000000e+00> : vector<8xf32>
    %136 = vector.multi_reduction <add>, %135, %cst_63 [1] : vector<8x32xf32> to vector<8xf32>
    %137 = vector.shape_cast %136 : vector<8xf32> to vector<8x1xf32>
    %cst_64 = arith.constant 3.200000e+01 : f32
    %138 = vector.broadcast %cst_64 : f32 to vector<8x1xf32>
    %139 = arith.divf %137, %138 : vector<8x1xf32>
    %140 = vector.broadcast %132 : vector<8x1xf32> to vector<8x32xf32>
    %141 = arith.subf %126, %140 : vector<8x32xf32>
    %cst_65 = arith.constant 9.99999974E-6 : f32
    %142 = vector.broadcast %cst_65 : f32 to vector<8x1xf32>
    %143 = arith.addf %139, %142 : vector<8x1xf32>
    %144 = math.rsqrt %143 : vector<8x1xf32>
    %145 = vector.broadcast %144 : vector<8x1xf32> to vector<8x32xf32>
    %146 = arith.mulf %141, %145 : vector<8x32xf32>
    %147 = vector.broadcast %127 : vector<1x32xf32> to vector<8x32xf32>
    %148 = arith.mulf %146, %147 : vector<8x32xf32>
    %149 = vector.broadcast %128 : vector<1x32xf32> to vector<8x32xf32>
    %150 = arith.addf %148, %149 : vector<8x32xf32>
    %c0_66 = arith.constant 0 : index
    %c0_67 = arith.constant 0 : index
    %151 = vector.load %arg19[%c0_66, %c0_67] : memref<32x64xbf16, #tpu.memory_space<vmem>>, vector<32x64xbf16>
    %152 = arith.truncf %150 : vector<8x32xf32> to vector<8x32xbf16>
    %cst_68 = arith.constant dense<0.000000e+00> : vector<8x64xf32>
    %153 = tpu.matmul %152, %151, %cst_68 {dimension_numbers = #tpu.dot_dimension_numbers<[1], [0], [0], [1], [0, 0, 1, 1], [], []>} : vector<8x32xbf16>, vector<32x64xbf16>, vector<8x64xf32> -> vector<8x64xf32>
    %c0_69 = arith.constant 0 : index
    %c0_70 = arith.constant 0 : index
    %154 = vector.load %arg20[%c0_69, %c0_70] : memref<1x64xf32, #tpu.memory_space<vmem>>, vector<1x64xf32>
    %155 = vector.broadcast %154 : vector<1x64xf32> to vector<8x64xf32>
    %156 = arith.addf %153, %155 : vector<8x64xf32>
    %cst_71 = arith.constant 0.000000e+00 : f32
    %157 = vector.broadcast %cst_71 : f32 to vector<8x64xf32>
    %158 = arith.maximumf %156, %157 : vector<8x64xf32>
    %c0_72 = arith.constant 0 : index
    %c0_73 = arith.constant 0 : index
    %159 = vector.load %arg21[%c0_72, %c0_73] : memref<64x32xbf16, #tpu.memory_space<vmem>>, vector<64x32xbf16>
    %160 = arith.truncf %158 : vector<8x64xf32> to vector<8x64xbf16>
    %cst_74 = arith.constant dense<0.000000e+00> : vector<8x32xf32>
    %161 = tpu.matmul %160, %159, %cst_74 {dimension_numbers = #tpu.dot_dimension_numbers<[1], [0], [0], [1], [0, 0, 1, 1], [], []>} : vector<8x64xbf16>, vector<64x32xbf16>, vector<8x32xf32> -> vector<8x32xf32>
    %c0_75 = arith.constant 0 : index
    %c0_76 = arith.constant 0 : index
    %162 = vector.load %arg22[%c0_75, %c0_76] : memref<1x32xf32, #tpu.memory_space<vmem>>, vector<1x32xf32>
    %163 = vector.broadcast %162 : vector<1x32xf32> to vector<8x32xf32>
    %164 = arith.addf %161, %163 : vector<8x32xf32>
    %165 = arith.addf %150, %164 : vector<8x32xf32>
    %c0_77 = arith.constant 0 : index
    %c0_78 = arith.constant 0 : index
    %166 = vector.load %arg23[%c0_77, %c0_78] : memref<1x32xf32, #tpu.memory_space<vmem>>, vector<1x32xf32>
    %c0_79 = arith.constant 0 : index
    %c0_80 = arith.constant 0 : index
    %167 = vector.load %arg24[%c0_79, %c0_80] : memref<1x32xf32, #tpu.memory_space<vmem>>, vector<1x32xf32>
    %cst_81 = arith.constant dense<0.000000e+00> : vector<8xf32>
    %168 = vector.multi_reduction <add>, %165, %cst_81 [1] : vector<8x32xf32> to vector<8xf32>
    %169 = vector.shape_cast %168 : vector<8xf32> to vector<8x1xf32>
    %cst_82 = arith.constant 3.200000e+01 : f32
    %170 = vector.broadcast %cst_82 : f32 to vector<8x1xf32>
    %171 = arith.divf %169, %170 : vector<8x1xf32>
    %172 = vector.broadcast %171 : vector<8x1xf32> to vector<8x32xf32>
    %173 = arith.subf %165, %172 : vector<8x32xf32>
    %174 = arith.mulf %173, %173 : vector<8x32xf32>
    %cst_83 = arith.constant dense<0.000000e+00> : vector<8xf32>
    %175 = vector.multi_reduction <add>, %174, %cst_83 [1] : vector<8x32xf32> to vector<8xf32>
    %176 = vector.shape_cast %175 : vector<8xf32> to vector<8x1xf32>
    %cst_84 = arith.constant 3.200000e+01 : f32
    %177 = vector.broadcast %cst_84 : f32 to vector<8x1xf32>
    %178 = arith.divf %176, %177 : vector<8x1xf32>
    %179 = vector.broadcast %171 : vector<8x1xf32> to vector<8x32xf32>
    %180 = arith.subf %165, %179 : vector<8x32xf32>
    %cst_85 = arith.constant 9.99999974E-6 : f32
    %181 = vector.broadcast %cst_85 : f32 to vector<8x1xf32>
    %182 = arith.addf %178, %181 : vector<8x1xf32>
    %183 = math.rsqrt %182 : vector<8x1xf32>
    %184 = vector.broadcast %183 : vector<8x1xf32> to vector<8x32xf32>
    %185 = arith.mulf %180, %184 : vector<8x32xf32>
    %186 = vector.broadcast %166 : vector<1x32xf32> to vector<8x32xf32>
    %187 = arith.mulf %185, %186 : vector<8x32xf32>
    %188 = vector.broadcast %167 : vector<1x32xf32> to vector<8x32xf32>
    %189 = arith.addf %187, %188 : vector<8x32xf32>
    %190 = vector.shape_cast %189 : vector<8x32xf32> to vector<1x8x32xf32>
    %c0_86 = arith.constant 0 : index
    %c0_87 = arith.constant 0 : index
    %c0_88 = arith.constant 0 : index
    %191 = vector.load %arg25[%c0_86, %c0_87, %c0_88] : memref<1x8x32xf32, #tpu.memory_space<vmem>>, vector<1x8x32xf32>
    tpu.vector_store %arg25[%c0_86, %c0_87, %c0_88], %190 {strides = array<i32>} : memref<1x8x32xf32, #tpu.memory_space<vmem>>, vector<1x8x32xf32>,
    return
  }
  func.func @transform_0(%arg0: i32) -> (i32, i32, i32) {
    %c0_i32 = arith.constant 0 : i32
    %c0_i32_0 = arith.constant 0 : i32
    %c0_i32_1 = arith.constant 0 : i32
    return %arg0, %c0_i32, %c0_i32_0 : i32, i32, i32
  }
  func.func @transform_1(%arg0: i32) -> (i32, i32, i32) {
    %c0_i32 = arith.constant 0 : i32
    %c0_i32_0 = arith.constant 0 : i32
    %c0_i32_1 = arith.constant 0 : i32
    return %arg0, %c0_i32, %c0_i32_0 : i32, i32, i32
  }
  func.func @transform_2(%arg0: i32) -> (i32, i32) {
    %c0_i32 = arith.constant 0 : i32
    %c0_i32_0 = arith.constant 0 : i32
    %c0_i32_1 = arith.constant 0 : i32
    return %c0_i32, %c0_i32_0 : i32, i32
  }
  func.func @transform_3(%arg0: i32) -> (i32, i32, i32) {
    %c0_i32 = arith.constant 0 : i32
    %c0_i32_0 = arith.constant 0 : i32
    %c0_i32_1 = arith.constant 0 : i32
    return %arg0, %c0_i32, %c0_i32_0 : i32, i32, i32
  }
  func.func @transform_4(%arg0: i32) -> (i32, i32) {
    %c0_i32 = arith.constant 0 : i32
    %c0_i32_0 = arith.constant 0 : i32
    %c0_i32_1 = arith.constant 0 : i32
    return %c0_i32, %c0_i32_0 : i32, i32
  }
  func.func @transform_5(%arg0: i32) -> (i32, i32) {
    %c0_i32 = arith.constant 0 : i32
    %c0_i32_0 = arith.constant 0 : i32
    %c0_i32_1 = arith.constant 0 : i32
    return %c0_i32, %c0_i32_0 : i32, i32
  }
  func.func @transform_6(%arg0: i32) -> (i32, i32) {
    %c0_i32 = arith.constant 0 : i32
    %c0_i32_0 = arith.constant 0 : i32
    %c0_i32_1 = arith.constant 0 : i32
    return %c0_i32, %c0_i32_0 : i32, i32
  }
  func.func @transform_7(%arg0: i32) -> (i32, i32) {
    %c0_i32 = arith.constant 0 : i32
    %c0_i32_0 = arith.constant 0 : i32
    %c0_i32_1 = arith.constant 0 : i32
    return %c0_i32, %c0_i32_0 : i32, i32
  }
  func.func @transform_8(%arg0: i32) -> (i32, i32) {
    %c0_i32 = arith.constant 0 : i32
    %c0_i32_0 = arith.constant 0 : i32
    %c0_i32_1 = arith.constant 0 : i32
    return %c0_i32, %c0_i32_0 : i32, i32
  }
  func.func @transform_9(%arg0: i32) -> (i32, i32) {
    %c0_i32 = arith.constant 0 : i32
    %c0_i32_0 = arith.constant 0 : i32
    %c0_i32_1 = arith.constant 0 : i32
    return %c0_i32, %c0_i32_0 : i32, i32
  }
  func.func @transform_10(%arg0: i32) -> (i32, i32) {
    %c0_i32 = arith.constant 0 : i32
    %c0_i32_0 = arith.constant 0 : i32
    %c0_i32_1 = arith.constant 0 : i32
    return %c0_i32, %c0_i32_0 : i32, i32
  }
  func.func @transform_11(%arg0: i32) -> (i32, i32) {
    %c0_i32 = arith.constant 0 : i32
    %c0_i32_0 = arith.constant 0 : i32
    %c0_i32_1 = arith.constant 0 : i32
    return %c0_i32, %c0_i32_0 : i32, i32
  }
  func.func @transform_12(%arg0: i32) -> (i32, i32) {
    %c0_i32 = arith.constant 0 : i32
    %c0_i32_0 = arith.constant 0 : i32
    %c0_i32_1 = arith.constant 0 : i32
    return %c0_i32, %c0_i32_0 : i32, i32
  }
  func.func @transform_13(%arg0: i32) -> (i32, i32) {
    %c0_i32 = arith.constant 0 : i32
    %c0_i32_0 = arith.constant 0 : i32
    %c0_i32_1 = arith.constant 0 : i32
    return %c0_i32, %c0_i32_0 : i32, i32
  }
  func.func @transform_14(%arg0: i32) -> (i32, i32) {
    %c0_i32 = arith.constant 0 : i32
    %c0_i32_0 = arith.constant 0 : i32
    %c0_i32_1 = arith.constant 0 : i32
    return %c0_i32, %c0_i32_0 : i32, i32
  }
  func.func @transform_15(%arg0: i32) -> (i32, i32) {
    %c0_i32 = arith.constant 0 : i32
    %c0_i32_0 = arith.constant 0 : i32
    %c0_i32_1 = arith.constant 0 : i32
    return %c0_i32, %c0_i32_0 : i32, i32
  }
  func.func @transform_16(%arg0: i32) -> (i32, i32) {
    %c0_i32 = arith.constant 0 : i32
    %c0_i32_0 = arith.constant 0 : i32
    %c0_i32_1 = arith.constant 0 : i32
    return %c0_i32, %c0_i32_0 : i32, i32
  }
  func.func @transform_17(%arg0: i32) -> (i32, i32) {
    %c0_i32 = arith.constant 0 : i32
    %c0_i32_0 = arith.constant 0 : i32
    %c0_i32_1 = arith.constant 0 : i32
    return %c0_i32, %c0_i32_0 : i32, i32
  }
  func.func @transform_18(%arg0: i32) -> (i32, i32) {
    %c0_i32 = arith.constant 0 : i32
    %c0_i32_0 = arith.constant 0 : i32
    %c0_i32_1 = arith.constant 0 : i32
    return %c0_i32, %c0_i32_0 : i32, i32
  }
  func.func @transform_19(%arg0: i32) -> (i32, i32) {
    %c0_i32 = arith.constant 0 : i32
    %c0_i32_0 = arith.constant 0 : i32
    %c0_i32_1 = arith.constant 0 : i32
    return %c0_i32, %c0_i32_0 : i32, i32
  }
  func.func @transform_20(%arg0: i32) -> (i32, i32) {
    %c0_i32 = arith.constant 0 : i32
    %c0_i32_0 = arith.constant 0 : i32
    %c0_i32_1 = arith.constant 0 : i32
    return %c0_i32, %c0_i32_0 : i32, i32
  }
  func.func @transform_21(%arg0: i32) -> (i32, i32) {
    %c0_i32 = arith.constant 0 : i32
    %c0_i32_0 = arith.constant 0 : i32
    %c0_i32_1 = arith.constant 0 : i32
    return %c0_i32, %c0_i32_0 : i32, i32
  }
  func.func @transform_22(%arg0: i32) -> (i32, i32) {
    %c0_i32 = arith.constant 0 : i32
    %c0_i32_0 = arith.constant 0 : i32
    %c0_i32_1 = arith.constant 0 : i32
    return %c0_i32, %c0_i32_0 : i32, i32
  }
  func.func @transform_23(%arg0: i32) -> (i32, i32) {
    %c0_i32 = arith.constant 0 : i32
    %c0_i32_0 = arith.constant 0 : i32
    %c0_i32_1 = arith.constant 0 : i32
    return %c0_i32, %c0_i32_0 : i32, i32
  }
  func.func @transform_24(%arg0: i32) -> (i32, i32, i32) {
    %c0_i32 = arith.constant 0 : i32
    %c0_i32_0 = arith.constant 0 : i32
    %c0_i32_1 = arith.constant 0 : i32
    return %arg0, %c0_i32, %c0_i32_0 : i32, i32, i32
  }
  func.func @transform_25(%arg0: i32) -> (i32, i32, i32, i32) {
    %c0_i32 = arith.constant 0 : i32
    %c0_i32_0 = arith.constant 0 : i32
    %c0_i32_1 = arith.constant 0 : i32
    %c0_i32_2 = arith.constant 0 : i32
    return %arg0, %c0_i32, %c0_i32_0, %c0_i32_1 : i32, i32, i32, i32
  }
}

module attributes {stable_mosaic.version = 11 : i64} {
  func.func @decoder_layer_kernel(%arg0: i32, %arg1: memref<1x8x32xf32, #tpu.memory_space<vmem>>, %arg2: memref<1x10x32xf32, #tpu.memory_space<vmem>>, %arg3: memref<8x8xf32, #tpu.memory_space<vmem>>, %arg4: memref<1x1x10xf32, #tpu.memory_space<vmem>>, %arg5: memref<32x96xbf16, #tpu.memory_space<vmem>>, %arg6: memref<1x96xf32, #tpu.memory_space<vmem>>, %arg7: memref<32x32xbf16, #tpu.memory_space<vmem>>, %arg8: memref<1x32xf32, #tpu.memory_space<vmem>>, %arg9: memref<1x32xf32, #tpu.memory_space<vmem>>, %arg10: memref<1x32xf32, #tpu.memory_space<vmem>>, %arg11: memref<32x32xbf16, #tpu.memory_space<vmem>>, %arg12: memref<1x32xf32, #tpu.memory_space<vmem>>, %arg13: memref<32x64xbf16, #tpu.memory_space<vmem>>, %arg14: memref<1x64xf32, #tpu.memory_space<vmem>>, %arg15: memref<32x32xbf16, #tpu.memory_space<vmem>>, %arg16: memref<1x32xf32, #tpu.memory_space<vmem>>, %arg17: memref<1x32xf32, #tpu.memory_space<vmem>>, %arg18: memref<1x32xf32, #tpu.memory_space<vmem>>, %arg19: memref<32x64xbf16, #tpu.memory_space<vmem>>, %arg20: memref<1x64xf32, #tpu.memory_space<vmem>>, %arg21: memref<64x32xbf16, #tpu.memory_space<vmem>>, %arg22: memref<1x32xf32, #tpu.memory_space<vmem>>, %arg23: memref<1x32xf32, #tpu.memory_space<vmem>>, %arg24: memref<1x32xf32, #tpu.memory_space<vmem>>, %arg25: memref<1x8x32xf32, #tpu.memory_space<vmem>>, %arg26: memref<1x4x8x10xf32, #tpu.memory_space<vmem>>) attributes {dimension_semantics = [#tpu.dimension_semantics<parallel>], iteration_bounds = array<i64: 2>, scalar_prefetch = 0 : i64, scratch_operands = 0 : i64, tpu.core_type = #tpu.core_type<tc>, window_params = [{transform_indices = @transform_0, window_bounds = array<i64: 1, 8, 32>}, {transform_indices = @transform_1, window_bounds = array<i64: 1, 10, 32>}, {pipeline_mode = #tpu.pipeline_mode<synchronous>, transform_indices = @transform_2, window_bounds = array<i64: 8, 8>}, {transform_indices = @transform_3, window_bounds = array<i64: 1, 1, 10>}, {pipeline_mode = #tpu.pipeline_mode<synchronous>, transform_indices = @transform_4, window_bounds = array<i64: 32, 96>}, {pipeline_mode = #tpu.pipeline_mode<synchronous>, transform_indices = @transform_5, window_bounds = array<i64: 1, 96>}, {pipeline_mode = #tpu.pipeline_mode<synchronous>, transform_indices = @transform_6, window_bounds = array<i64: 32, 32>}, {pipeline_mode = #tpu.pipeline_mode<synchronous>, transform_indices = @transform_7, window_bounds = array<i64: 1, 32>}, {pipeline_mode = #tpu.pipeline_mode<synchronous>, transform_indices = @transform_8, window_bounds = array<i64: 1, 32>}, {pipeline_mode = #tpu.pipeline_mode<synchronous>, transform_indices = @transform_9, window_bounds = array<i64: 1, 32>}, {pipeline_mode = #tpu.pipeline_mode<synchronous>, transform_indices = @transform_10, window_bounds = array<i64: 32, 32>}, {pipeline_mode = #tpu.pipeline_mode<synchronous>, transform_indices = @transform_11, window_bounds = array<i64: 1, 32>}, {pipeline_mode = #tpu.pipeline_mode<synchronous>, transform_indices = @transform_12, window_bounds = array<i64: 32, 64>}, {pipeline_mode = #tpu.pipeline_mode<synchronous>, transform_indices = @transform_13, window_bounds = array<i64: 1, 64>}, {pipeline_mode = #tpu.pipeline_mode<synchronous>, transform_indices = @transform_14, window_bounds = array<i64: 32, 32>}, {pipeline_mode = #tpu.pipeline_mode<synchronous>, transform_indices = @transform_15, window_bounds = array<i64: 1, 32>}, {pipeline_mode = #tpu.pipeline_mode<synchronous>, transform_indices = @transform_16, window_bounds = array<i64: 1, 32>}, {pipeline_mode = #tpu.pipeline_mode<synchronous>, transform_indices = @transform_17, window_bounds = array<i64: 1, 32>}, {pipeline_mode = #tpu.pipeline_mode<synchronous>, transform_indices = @transform_18, window_bounds = array<i64: 32, 64>}, {pipeline_mode = #tpu.pipeline_mode<synchronous>, transform_indices = @transform_19, window_bounds = array<i64: 1, 64>}, {pipeline_mode = #tpu.pipeline_mode<synchronous>, transform_indices = @transform_20, window_bounds = array<i64: 64, 32>}, {pipeline_mode = #tpu.pipeline_mode<synchronous>, transform_indices = @transform_21, window_bounds = array<i64: 1, 32>}, {pipeline_mode = #tpu.pipeline_mode<synchronous>, transform_indices = @transform_22, window_bounds = array<i64: 1, 32>}, {pipeline_mode = #tpu.pipeline_mode<synchronous>, transform_indices = @transform_23, window_bounds = array<i64: 1, 32>}, {transform_indices = @transform_24, window_bounds = array<i64: 1, 8, 32>}, {transform_indices = @transform_25, window_bounds = array<i64: 1, 4, 8, 10>}]} {
    %c0 = arith.constant 0 : index
    %c0_0 = arith.constant 0 : index
    %c0_1 = arith.constant 0 : index
    %0 = vector.load %arg1[%c0, %c0_0, %c0_1] : memref<1x8x32xf32, #tpu.memory_space<vmem>>, vector<1x8x32xf32>
    %1 = vector.shape_cast %0 : vector<1x8x32xf32> to vector<8x32xf32>
    %c0_2 = arith.constant 0 : index
    %c0_3 = arith.constant 0 : index
    %2 = vector.load %arg5[%c0_2, %c0_3] : memref<32x96xbf16, #tpu.memory_space<vmem>>, vector<32x96xbf16>
    %3 = arith.truncf %1 : vector<8x32xf32> to vector<8x32xbf16>
    %cst = arith.constant dense<0.000000e+00> : vector<8x96xf32>
    %4 = tpu.matmul %3, %2, %cst {dimension_numbers = #tpu.dot_dimension_numbers<[1], [0], [0], [1], [0, 0, 1, 1], [], []>} : vector<8x32xbf16>, vector<32x96xbf16>, vector<8x96xf32> -> vector<8x96xf32>
    %c0_4 = arith.constant 0 : index
    %c0_5 = arith.constant 0 : index
    %5 = vector.load %arg6[%c0_4, %c0_5] : memref<1x96xf32, #tpu.memory_space<vmem>>, vector<1x96xf32>
    %6 = vector.broadcast %5 : vector<1x96xf32> to vector<8x96xf32>
    %7 = arith.addf %4, %6 : vector<8x96xf32>
    %8 = vector.extract_strided_slice %7 {offsets = [0, 0], sizes = [8, 32], strides = [1, 1]} : vector<8x96xf32> to vector<8x32xf32>
    %9 = vector.extract_strided_slice %7 {offsets = [0, 32], sizes = [8, 32], strides = [1, 1]} : vector<8x96xf32> to vector<8x32xf32>
    %10 = vector.extract_strided_slice %7 {offsets = [0, 64], sizes = [8, 32], strides = [1, 1]} : vector<8x96xf32> to vector<8x32xf32>
    %c0_6 = arith.constant 0 : index
    %c0_7 = arith.constant 0 : index
    %11 = vector.load %arg3[%c0_6, %c0_7] : memref<8x8xf32, #tpu.memory_space<vmem>>, vector<8x8xf32>
    %12 = vector.shape_cast %11 : vector<8x8xf32> to vector<1x8x8xf32>
    %13 = vector.shape_cast %8 : vector<8x32xf32> to vector<8x4x8xf32>
    %14 = tpu.transpose %13, [1, 0, 2] : vector<8x4x8xf32> -> vector<4x8x8xf32>
    %15 = vector.shape_cast %9 : vector<8x32xf32> to vector<8x4x8xf32>
    %16 = tpu.transpose %15, [1, 0, 2] : vector<8x4x8xf32> -> vector<4x8x8xf32>
    %17 = vector.shape_cast %10 : vector<8x32xf32> to vector<8x4x8xf32>
    %18 = tpu.transpose %17, [1, 0, 2] : vector<8x4x8xf32> -> vector<4x8x8xf32>
    %19 = arith.truncf %14 : vector<4x8x8xf32> to vector<4x8x8xbf16>
    %20 = arith.truncf %16 : vector<4x8x8xf32> to vector<4x8x8xbf16>
    "tpu.trace_start"() <{level = 10 : i32, message = "hqd,hkd->hqk"}> : () -> ()
    %cst_8 = arith.constant dense<0.000000e+00> : vector<4x8x8xf32>
    %21 = tpu.matmul %19, %20, %cst_8 {dimension_numbers = #tpu.dot_dimension_numbers<[2], [2], [1], [1], [0, 0, 0, 1, 1, 1], [0], [0]>} : vector<4x8x8xbf16>, vector<4x8x8xbf16>, vector<4x8x8xf32> -> vector<4x8x8xf32>
    "tpu.trace_stop"() : () -> ()
    %cst_9 = arith.constant 0.353553385 : f32
    %22 = vector.broadcast %cst_9 : f32 to vector<4x8x8xf32>
    %23 = arith.mulf %21, %22 : vector<4x8x8xf32>
    %24 = vector.broadcast %12 : vector<1x8x8xf32> to vector<4x8x8xf32>
    %25 = arith.addf %23, %24 : vector<4x8x8xf32>
    %cst_10 = arith.constant dense<0xFF800000> : vector<4x8xf32>
    %26 = vector.multi_reduction <maximumf>, %25, %cst_10 [2] : vector<4x8x8xf32> to vector<4x8xf32>
    %27 = vector.shape_cast %26 : vector<4x8xf32> to vector<4x8x1xf32>
    %28 = vector.broadcast %27 : vector<4x8x1xf32> to vector<4x8x8xf32>
    %29 = arith.subf %25, %28 : vector<4x8x8xf32>
    %30 = math.exp %29 : vector<4x8x8xf32>
    %cst_11 = arith.constant dense<0.000000e+00> : vector<4x8xf32>
    %31 = vector.multi_reduction <add>, %30, %cst_11 [2] : vector<4x8x8xf32> to vector<4x8xf32>
    %32 = vector.shape_cast %31 : vector<4x8xf32> to vector<4x8x1xf32>
    %33 = vector.broadcast %32 : vector<4x8x1xf32> to vector<4x8x8xf32>
    %34 = arith.divf %30, %33 : vector<4x8x8xf32>
    %35 = arith.truncf %34 : vector<4x8x8xf32> to vector<4x8x8xbf16>
    %36 = arith.truncf %18 : vector<4x8x8xf32> to vector<4x8x8xbf16>
    "tpu.trace_start"() <{level = 10 : i32, message = "hqk,hkd->hqd"}> : () -> ()
    %cst_12 = arith.constant dense<0.000000e+00> : vector<4x8x8xf32>
    %37 = tpu.matmul %35, %36, %cst_12 {dimension_numbers = #tpu.dot_dimension_numbers<[2], [1], [1], [2], [0, 0, 0, 1, 1, 2], [0], [0]>} : vector<4x8x8xbf16>, vector<4x8x8xbf16>, vector<4x8x8xf32> -> vector<4x8x8xf32>
    "tpu.trace_stop"() : () -> ()
    %38 = tpu.transpose %37, [1, 0, 2] : vector<4x8x8xf32> -> vector<8x4x8xf32>
    %39 = vector.shape_cast %38 : vector<8x4x8xf32> to vector<8x32xf32>
    %c0_13 = arith.constant 0 : index
    %c0_14 = arith.constant 0 : index
    %40 = vector.load %arg7[%c0_13, %c0_14] : memref<32x32xbf16, #tpu.memory_space<vmem>>, vector<32x32xbf16>
    %41 = arith.truncf %39 : vector<8x32xf32> to vector<8x32xbf16>
    %cst_15 = arith.constant dense<0.000000e+00> : vector<8x32xf32>
    %42 = tpu.matmul %41, %40, %cst_15 {dimension_numbers = #tpu.dot_dimension_numbers<[1], [0], [0], [1], [0, 0, 1, 1], [], []>} : vector<8x32xbf16>, vector<32x32xbf16>, vector<8x32xf32> -> vector<8x32xf32>
    %c0_16 = arith.constant 0 : index
    %c0_17 = arith.constant 0 : index
    %43 = vector.load %arg8[%c0_16, %c0_17] : memref<1x32xf32, #tpu.memory_space<vmem>>, vector<1x32xf32>
    %44 = vector.broadcast %43 : vector<1x32xf32> to vector<8x32xf32>
    %45 = arith.addf %42, %44 : vector<8x32xf32>
    %46 = arith.addf %1, %45 : vector<8x32xf32>
    %c0_18 = arith.constant 0 : index
    %c0_19 = arith.constant 0 : index
    %47 = vector.load %arg9[%c0_18, %c0_19] : memref<1x32xf32, #tpu.memory_space<vmem>>, vector<1x32xf32>
    %c0_20 = arith.constant 0 : index
    %c0_21 = arith.constant 0 : index
    %48 = vector.load %arg10[%c0_20, %c0_21] : memref<1x32xf32, #tpu.memory_space<vmem>>, vector<1x32xf32>
    %cst_22 = arith.constant dense<0.000000e+00> : vector<8xf32>
    %49 = vector.multi_reduction <add>, %46, %cst_22 [1] : vector<8x32xf32> to vector<8xf32>
    %50 = vector.shape_cast %49 : vector<8xf32> to vector<8x1xf32>
    %cst_23 = arith.constant 3.200000e+01 : f32
    %51 = vector.broadcast %cst_23 : f32 to vector<8x1xf32>
    %52 = arith.divf %50, %51 : vector<8x1xf32>
    %53 = vector.broadcast %52 : vector<8x1xf32> to vector<8x32xf32>
    %54 = arith.subf %46, %53 : vector<8x32xf32>
    %55 = arith.mulf %54, %54 : vector<8x32xf32>
    %cst_24 = arith.constant dense<0.000000e+00> : vector<8xf32>
    %56 = vector.multi_reduction <add>, %55, %cst_24 [1] : vector<8x32xf32> to vector<8xf32>
    %57 = vector.shape_cast %56 : vector<8xf32> to vector<8x1xf32>
    %cst_25 = arith.constant 3.200000e+01 : f32
    %58 = vector.broadcast %cst_25 : f32 to vector<8x1xf32>
    %59 = arith.divf %57, %58 : vector<8x1xf32>
    %60 = vector.broadcast %52 : vector<8x1xf32> to vector<8x32xf32>
    %61 = arith.subf %46, %60 : vector<8x32xf32>
    %cst_26 = arith.constant 9.99999974E-6 : f32
    %62 = vector.broadcast %cst_26 : f32 to vector<8x1xf32>
    %63 = arith.addf %59, %62 : vector<8x1xf32>
    %64 = math.rsqrt %63 : vector<8x1xf32>
    %65 = vector.broadcast %64 : vector<8x1xf32> to vector<8x32xf32>
    %66 = arith.mulf %61, %65 : vector<8x32xf32>
    %67 = vector.broadcast %47 : vector<1x32xf32> to vector<8x32xf32>
    %68 = arith.mulf %66, %67 : vector<8x32xf32>
    %69 = vector.broadcast %48 : vector<1x32xf32> to vector<8x32xf32>
    %70 = arith.addf %68, %69 : vector<8x32xf32>
    %c0_27 = arith.constant 0 : index
    %c0_28 = arith.constant 0 : index
    %71 = vector.load %arg11[%c0_27, %c0_28] : memref<32x32xbf16, #tpu.memory_space<vmem>>, vector<32x32xbf16>
    %72 = arith.truncf %70 : vector<8x32xf32> to vector<8x32xbf16>
    %cst_29 = arith.constant dense<0.000000e+00> : vector<8x32xf32>
    %73 = tpu.matmul %72, %71, %cst_29 {dimension_numbers = #tpu.dot_dimension_numbers<[1], [0], [0], [1], [0, 0, 1, 1], [], []>} : vector<8x32xbf16>, vector<32x32xbf16>, vector<8x32xf32> -> vector<8x32xf32>
    %c0_30 = arith.constant 0 : index
    %c0_31 = arith.constant 0 : index
    %74 = vector.load %arg12[%c0_30, %c0_31] : memref<1x32xf32, #tpu.memory_space<vmem>>, vector<1x32xf32>
    %75 = vector.broadcast %74 : vector<1x32xf32> to vector<8x32xf32>
    %76 = arith.addf %73, %75 : vector<8x32xf32>
    %c0_32 = arith.constant 0 : index
    %c0_33 = arith.constant 0 : index
    %c0_34 = arith.constant 0 : index
    %77 = vector.load %arg2[%c0_32, %c0_33, %c0_34] : memref<1x10x32xf32, #tpu.memory_space<vmem>>, vector<1x10x32xf32>
    %78 = vector.shape_cast %77 : vector<1x10x32xf32> to vector<10x32xf32>
    %c0_35 = arith.constant 0 : index
    %c0_36 = arith.constant 0 : index
    %79 = vector.load %arg13[%c0_35, %c0_36] : memref<32x64xbf16, #tpu.memory_space<vmem>>, vector<32x64xbf16>
    %80 = arith.truncf %78 : vector<10x32xf32> to vector<10x32xbf16>
    %cst_37 = arith.constant dense<0.000000e+00> : vector<10x64xf32>
    %81 = tpu.matmul %80, %79, %cst_37 {dimension_numbers = #tpu.dot_dimension_numbers<[1], [0], [0], [1], [0, 0, 1, 1], [], []>} : vector<10x32xbf16>, vector<32x64xbf16>, vector<10x64xf32> -> vector<10x64xf32>
    %c0_38 = arith.constant 0 : index
    %c0_39 = arith.constant 0 : index
    %82 = vector.load %arg14[%c0_38, %c0_39] : memref<1x64xf32, #tpu.memory_space<vmem>>, vector<1x64xf32>
    %83 = vector.broadcast %82 : vector<1x64xf32> to vector<10x64xf32>
    %84 = arith.addf %81, %83 : vector<10x64xf32>
    %85 = vector.extract_strided_slice %84 {offsets = [0, 0], sizes = [10, 32], strides = [1, 1]} : vector<10x64xf32> to vector<10x32xf32>
    %86 = vector.extract_strided_slice %84 {offsets = [0, 32], sizes = [10, 32], strides = [1, 1]} : vector<10x64xf32> to vector<10x32xf32>
    %c0_40 = arith.constant 0 : index
    %c0_41 = arith.constant 0 : index
    %c0_42 = arith.constant 0 : index
    %87 = vector.load %arg4[%c0_40, %c0_41, %c0_42] : memref<1x1x10xf32, #tpu.memory_space<vmem>>, vector<1x1x10xf32>
    %88 = vector.shape_cast %87 : vector<1x1x10xf32> to vector<1x10xf32>
    %89 = vector.shape_cast %88 : vector<1x10xf32> to vector<1x1x10xf32>
    %90 = vector.shape_cast %76 : vector<8x32xf32> to vector<8x4x8xf32>
    %91 = tpu.transpose %90, [1, 0, 2] : vector<8x4x8xf32> -> vector<4x8x8xf32>
    %92 = vector.shape_cast %85 : vector<10x32xf32> to vector<10x4x8xf32>
    %93 = tpu.transpose %92, [1, 0, 2] : vector<10x4x8xf32> -> vector<4x10x8xf32>
    %94 = vector.shape_cast %86 : vector<10x32xf32> to vector<10x4x8xf32>
    %95 = tpu.transpose %94, [1, 0, 2] : vector<10x4x8xf32> -> vector<4x10x8xf32>
    %96 = arith.truncf %91 : vector<4x8x8xf32> to vector<4x8x8xbf16>
    %97 = arith.truncf %93 : vector<4x10x8xf32> to vector<4x10x8xbf16>
    "tpu.trace_start"() <{level = 10 : i32, message = "hqd,hkd->hqk"}> : () -> ()
    %cst_43 = arith.constant dense<0.000000e+00> : vector<4x8x10xf32>
    %98 = tpu.matmul %96, %97, %cst_43 {dimension_numbers = #tpu.dot_dimension_numbers<[2], [2], [1], [1], [0, 0, 0, 1, 1, 1], [0], [0]>} : vector<4x8x8xbf16>, vector<4x10x8xbf16>, vector<4x8x10xf32> -> vector<4x8x10xf32>
    "tpu.trace_stop"() : () -> ()
    %cst_44 = arith.constant 0.353553385 : f32
    %99 = vector.broadcast %cst_44 : f32 to vector<4x8x10xf32>
    %100 = arith.mulf %98, %99 : vector<4x8x10xf32>
    %101 = vector.broadcast %89 : vector<1x1x10xf32> to vector<4x8x10xf32>
    %102 = arith.addf %100, %101 : vector<4x8x10xf32>
    %cst_45 = arith.constant dense<0xFF800000> : vector<4x8xf32>
    %103 = vector.multi_reduction <maximumf>, %102, %cst_45 [2] : vector<4x8x10xf32> to vector<4x8xf32>
    %104 = vector.shape_cast %103 : vector<4x8xf32> to vector<4x8x1xf32>
    %105 = vector.broadcast %104 : vector<4x8x1xf32> to vector<4x8x10xf32>
    %106 = arith.subf %102, %105 : vector<4x8x10xf32>
    %107 = math.exp %106 : vector<4x8x10xf32>
    %cst_46 = arith.constant dense<0.000000e+00> : vector<4x8xf32>
    %108 = vector.multi_reduction <add>, %107, %cst_46 [2] : vector<4x8x10xf32> to vector<4x8xf32>
    %109 = vector.shape_cast %108 : vector<4x8xf32> to vector<4x8x1xf32>
    %110 = vector.broadcast %109 : vector<4x8x1xf32> to vector<4x8x10xf32>
    %111 = arith.divf %107, %110 : vector<4x8x10xf32>
    %112 = arith.truncf %111 : vector<4x8x10xf32> to vector<4x8x10xbf16>
    %113 = arith.truncf %95 : vector<4x10x8xf32> to vector<4x10x8xbf16>
    "tpu.trace_start"() <{level = 10 : i32, message = "hqk,hkd->hqd"}> : () -> ()
    %cst_47 = arith.constant dense<0.000000e+00> : vector<4x8x8xf32>
    %114 = tpu.matmul %112, %113, %cst_47 {dimension_numbers = #tpu.dot_dimension_numbers<[2], [1], [1], [2], [0, 0, 0, 1, 1, 2], [0], [0]>} : vector<4x8x10xbf16>, vector<4x10x8xbf16>, vector<4x8x8xf32> -> vector<4x8x8xf32>
    "tpu.trace_stop"() : () -> ()
    %115 = tpu.transpose %114, [1, 0, 2] : vector<4x8x8xf32> -> vector<8x4x8xf32>
    %116 = vector.shape_cast %115 : vector<8x4x8xf32> to vector<8x32xf32>
    %c0_48 = arith.constant 0 : index
    %c0_49 = arith.constant 0 : index
    %c0_50 = arith.constant 0 : index
    %c0_51 = arith.constant 0 : index
    %117 = vector.load %arg26[%c0_48, %c0_49, %c0_50, %c0_51] : memref<1x4x8x10xf32, #tpu.memory_space<vmem>>, vector<1x4x8x10xf32>
    %118 = vector.shape_cast %117 : vector<1x4x8x10xf32> to vector<4x8x10xf32>
    %119 = vector.shape_cast %111 : vector<4x8x10xf32> to vector<1x4x8x10xf32>
    tpu.vector_store %arg26[%c0_48, %c0_49, %c0_50, %c0_51], %119 {strides = array<i32>} : memref<1x4x8x10xf32, #tpu.memory_space<vmem>>, vector<1x4x8x10xf32>,
    %c0_52 = arith.constant 0 : index
    %c0_53 = arith.constant 0 : index
    %120 = vector.load %arg15[%c0_52, %c0_53] : memref<32x32xbf16, #tpu.memory_space<vmem>>, vector<32x32xbf16>
    %121 = arith.truncf %116 : vector<8x32xf32> to vector<8x32xbf16>
    %cst_54 = arith.constant dense<0.000000e+00> : vector<8x32xf32>
    %122 = tpu.matmul %121, %120, %cst_54 {dimension_numbers = #tpu.dot_dimension_numbers<[1], [0], [0], [1], [0, 0, 1, 1], [], []>} : vector<8x32xbf16>, vector<32x32xbf16>, vector<8x32xf32> -> vector<8x32xf32>
    %c0_55 = arith.constant 0 : index
    %c0_56 = arith.constant 0 : index
    %123 = vector.load %arg16[%c0_55, %c0_56] : memref<1x32xf32, #tpu.memory_space<vmem>>, vector<1x32xf32>
    %124 = vector.broadcast %123 : vector<1x32xf32> to vector<8x32xf32>
    %125 = arith.addf %122, %124 : vector<8x32xf32>
    %126 = arith.addf %70, %125 : vector<8x32xf32>
    %c0_57 = arith.constant 0 : index
    %c0_58 = arith.constant 0 : index
    %127 = vector.load %arg17[%c0_57, %c0_58] : memref<1x32xf32, #tpu.memory_space<vmem>>, vector<1x32xf32>
    %c0_59 = arith.constant 0 : index
    %c0_60 = arith.constant 0 : index
    %128 = vector.load %arg18[%c0_59, %c0_60] : memref<1x32xf32, #tpu.memory_space<vmem>>, vector<1x32xf32>
    %cst_61 = arith.constant dense<0.000000e+00> : vector<8xf32>
    %129 = vector.multi_reduction <add>, %126, %cst_61 [1] : vector<8x32xf32> to vector<8xf32>
    %130 = vector.shape_cast %129 : vector<8xf32> to vector<8x1xf32>
    %cst_62 = arith.constant 3.200000e+01 : f32
    %131 = vector.broadcast %cst_62 : f32 to vector<8x1xf32>
    %132 = arith.divf %130, %131 : vector<8x1xf32>
    %133 = vector.broadcast %132 : vector<8x1xf32> to vector<8x32xf32>
    %134 = arith.subf %126, %133 : vector<8x32xf32>
    %135 = arith.mulf %134, %134 : vector<8x32xf32>
    %cst_63 = arith.constant dense<0.000000e+00> : vector<8xf32>
    %136 = vector.multi_reduction <add>, %135, %cst_63 [1] : vector<8x32xf32> to vector<8xf32>
    %137 = vector.shape_cast %136 : vector<8xf32> to vector<8x1xf32>
    %cst_64 = arith.constant 3.200000e+01 : f32
    %138 = vector.broadcast %cst_64 : f32 to vector<8x1xf32>
    %139 = arith.divf %137, %138 : vector<8x1xf32>
    %140 = vector.broadcast %132 : vector<8x1xf32> to vector<8x32xf32>
    %141 = arith.subf %126, %140 : vector<8x32xf32>
    %cst_65 = arith.constant 9.99999974E-6 : f32
    %142 = vector.broadcast %cst_65 : f32 to vector<8x1xf32>
    %143 = arith.addf %139, %142 : vector<8x1xf32>
    %144 = math.rsqrt %143 : vector<8x1xf32>
    %145 = vector.broadcast %144 : vector<8x1xf32> to vector<8x32xf32>
    %146 = arith.mulf %141, %145 : vector<8x32xf32>
    %147 = vector.broadcast %127 : vector<1x32xf32> to vector<8x32xf32>
    %148 = arith.mulf %146, %147 : vector<8x32xf32>
    %149 = vector.broadcast %128 : vector<1x32xf32> to vector<8x32xf32>
    %150 = arith.addf %148, %149 : vector<8x32xf32>
    %c0_66 = arith.constant 0 : index
    %c0_67 = arith.constant 0 : index
    %151 = vector.load %arg19[%c0_66, %c0_67] : memref<32x64xbf16, #tpu.memory_space<vmem>>, vector<32x64xbf16>
    %152 = arith.truncf %150 : vector<8x32xf32> to vector<8x32xbf16>
    %cst_68 = arith.constant dense<0.000000e+00> : vector<8x64xf32>
    %153 = tpu.matmul %152, %151, %cst_68 {dimension_numbers = #tpu.dot_dimension_numbers<[1], [0], [0], [1], [0, 0, 1, 1], [], []>} : vector<8x32xbf16>, vector<32x64xbf16>, vector<8x64xf32> -> vector<8x64xf32>
    %c0_69 = arith.constant 0 : index
    %c0_70 = arith.constant 0 : index
    %154 = vector.load %arg20[%c0_69, %c0_70] : memref<1x64xf32, #tpu.memory_space<vmem>>, vector<1x64xf32>
    %155 = vector.broadcast %154 : vector<1x64xf32> to vector<8x64xf32>
    %156 = arith.addf %153, %155 : vector<8x64xf32>
    %cst_71 = arith.constant 0.000000e+00 : f32
    %157 = vector.broadcast %cst_71 : f32 to vector<8x64xf32>
    %158 = arith.maximumf %156, %157 : vector<8x64xf32>
    %c0_72 = arith.constant 0 : index
    %c0_73 = arith.constant 0 : index
    %159 = vector.load %arg21[%c0_72, %c0_73] : memref<64x32xbf16, #tpu.memory_space<vmem>>, vector<64x32xbf16>
    %160 = arith.truncf %158 : vector<8x64xf32> to vector<8x64xbf16>
    %cst_74 = arith.constant dense<0.000000e+00> : vector<8x32xf32>
    %161 = tpu.matmul %160, %159, %cst_74 {dimension_numbers = #tpu.dot_dimension_numbers<[1], [0], [0], [1], [0, 0, 1, 1], [], []>} : vector<8x64xbf16>, vector<64x32xbf16>, vector<8x32xf32> -> vector<8x32xf32>
    %c0_75 = arith.constant 0 : index
    %c0_76 = arith.constant 0 : index
    %162 = vector.load %arg22[%c0_75, %c0_76] : memref<1x32xf32, #tpu.memory_space<vmem>>, vector<1x32xf32>
    %163 = vector.broadcast %162 : vector<1x32xf32> to vector<8x32xf32>
    %164 = arith.addf %161, %163 : vector<8x32xf32>
    %165 = arith.addf %150, %164 : vector<8x32xf32>
    %c0_77 = arith.constant 0 : index
    %c0_78 = arith.constant 0 : index
    %166 = vector.load %arg23[%c0_77, %c0_78] : memref<1x32xf32, #tpu.memory_space<vmem>>, vector<1x32xf32>
    %c0_79 = arith.constant 0 : index
    %c0_80 = arith.constant 0 : index
    %167 = vector.load %arg24[%c0_79, %c0_80] : memref<1x32xf32, #tpu.memory_space<vmem>>, vector<1x32xf32>
    %cst_81 = arith.constant dense<0.000000e+00> : vector<8xf32>
    %168 = vector.multi_reduction <add>, %165, %cst_81 [1] : vector<8x32xf32> to vector<8xf32>
    %169 = vector.shape_cast %168 : vector<8xf32> to vector<8x1xf32>
    %cst_82 = arith.constant 3.200000e+01 : f32
    %170 = vector.broadcast %cst_82 : f32 to vector<8x1xf32>
    %171 = arith.divf %169, %170 : vector<8x1xf32>
    %172 = vector.broadcast %171 : vector<8x1xf32> to vector<8x32xf32>
    %173 = arith.subf %165, %172 : vector<8x32xf32>
    %174 = arith.mulf %173, %173 : vector<8x32xf32>
    %cst_83 = arith.constant dense<0.000000e+00> : vector<8xf32>
    %175 = vector.multi_reduction <add>, %174, %cst_83 [1] : vector<8x32xf32> to vector<8xf32>
    %176 = vector.shape_cast %175 : vector<8xf32> to vector<8x1xf32>
    %cst_84 = arith.constant 3.200000e+01 : f32
    %177 = vector.broadcast %cst_84 : f32 to vector<8x1xf32>
    %178 = arith.divf %176, %177 : vector<8x1xf32>
    %179 = vector.broadcast %171 : vector<8x1xf32> to vector<8x32xf32>
    %180 = arith.subf %165, %179 : vector<8x32xf32>
    %cst_85 = arith.constant 9.99999974E-6 : f32
    %181 = vector.broadcast %cst_85 : f32 to vector<8x1xf32>
    %182 = arith.addf %178, %181 : vector<8x1xf32>
    %183 = math.rsqrt %182 : vector<8x1xf32>
    %184 = vector.broadcast %183 : vector<8x1xf32> to vector<8x32xf32>
    %185 = arith.mulf %180, %184 : vector<8x32xf32>
    %186 = vector.broadcast %166 : vector<1x32xf32> to vector<8x32xf32>
    %187 = arith.mulf %185, %186 : vector<8x32xf32>
    %188 = vector.broadcast %167 : vector<1x32xf32> to vector<8x32xf32>
    %189 = arith.addf %187, %188 : vector<8x32xf32>
    %190 = vector.shape_cast %189 : vector<8x32xf32> to vector<1x8x32xf32>
    %c0_86 = arith.constant 0 : index
    %c0_87 = arith.constant 0 : index
    %c0_88 = arith.constant 0 : index
    %191 = vector.load %arg25[%c0_86, %c0_87, %c0_88] : memref<1x8x32xf32, #tpu.memory_space<vmem>>, vector<1x8x32xf32>
    tpu.vector_store %arg25[%c0_86, %c0_87, %c0_88], %190 {strides = array<i32>} : memref<1x8x32xf32, #tpu.memory_space<vmem>>, vector<1x8x32xf32>,
    return
  }
  func.func @transform_0(%arg0: i32) -> (i32, i32, i32) {
    %c0_i32 = arith.constant 0 : i32
    %c0_i32_0 = arith.constant 0 : i32
    %c0_i32_1 = arith.constant 0 : i32
    return %arg0, %c0_i32, %c0_i32_0 : i32, i32, i32
  }
  func.func @transform_1(%arg0: i32) -> (i32, i32, i32) {
    %c0_i32 = arith.constant 0 : i32
    %c0_i32_0 = arith.constant 0 : i32
    %c0_i32_1 = arith.constant 0 : i32
    return %arg0, %c0_i32, %c0_i32_0 : i32, i32, i32
  }
  func.func @transform_2(%arg0: i32) -> (i32, i32) {
    %c0_i32 = arith.constant 0 : i32
    %c0_i32_0 = arith.constant 0 : i32
    %c0_i32_1 = arith.constant 0 : i32
    return %c0_i32, %c0_i32_0 : i32, i32
  }
  func.func @transform_3(%arg0: i32) -> (i32, i32, i32) {
    %c0_i32 = arith.constant 0 : i32
    %c0_i32_0 = arith.constant 0 : i32
    %c0_i32_1 = arith.constant 0 : i32
    return %arg0, %c0_i32, %c0_i32_0 : i32, i32, i32
  }
  func.func @transform_4(%arg0: i32) -> (i32, i32) {
    %c0_i32 = arith.constant 0 : i32
    %c0_i32_0 = arith.constant 0 : i32
    %c0_i32_1 = arith.constant 0 : i32
    return %c0_i32, %c0_i32_0 : i32, i32
  }
  func.func @transform_5(%arg0: i32) -> (i32, i32) {
    %c0_i32 = arith.constant 0 : i32
    %c0_i32_0 = arith.constant 0 : i32
    %c0_i32_1 = arith.constant 0 : i32
    return %c0_i32, %c0_i32_0 : i32, i32
  }
  func.func @transform_6(%arg0: i32) -> (i32, i32) {
    %c0_i32 = arith.constant 0 : i32
    %c0_i32_0 = arith.constant 0 : i32
    %c0_i32_1 = arith.constant 0 : i32
    return %c0_i32, %c0_i32_0 : i32, i32
  }
  func.func @transform_7(%arg0: i32) -> (i32, i32) {
    %c0_i32 = arith.constant 0 : i32
    %c0_i32_0 = arith.constant 0 : i32
    %c0_i32_1 = arith.constant 0 : i32
    return %c0_i32, %c0_i32_0 : i32, i32
  }
  func.func @transform_8(%arg0: i32) -> (i32, i32) {
    %c0_i32 = arith.constant 0 : i32
    %c0_i32_0 = arith.constant 0 : i32
    %c0_i32_1 = arith.constant 0 : i32
    return %c0_i32, %c0_i32_0 : i32, i32
  }
  func.func @transform_9(%arg0: i32) -> (i32, i32) {
    %c0_i32 = arith.constant 0 : i32
    %c0_i32_0 = arith.constant 0 : i32
    %c0_i32_1 = arith.constant 0 : i32
    return %c0_i32, %c0_i32_0 : i32, i32
  }
  func.func @transform_10(%arg0: i32) -> (i32, i32) {
    %c0_i32 = arith.constant 0 : i32
    %c0_i32_0 = arith.constant 0 : i32
    %c0_i32_1 = arith.constant 0 : i32
    return %c0_i32, %c0_i32_0 : i32, i32
  }
  func.func @transform_11(%arg0: i32) -> (i32, i32) {
    %c0_i32 = arith.constant 0 : i32
    %c0_i32_0 = arith.constant 0 : i32
    %c0_i32_1 = arith.constant 0 : i32
    return %c0_i32, %c0_i32_0 : i32, i32
  }
  func.func @transform_12(%arg0: i32) -> (i32, i32) {
    %c0_i32 = arith.constant 0 : i32
    %c0_i32_0 = arith.constant 0 : i32
    %c0_i32_1 = arith.constant 0 : i32
    return %c0_i32, %c0_i32_0 : i32, i32
  }
  func.func @transform_13(%arg0: i32) -> (i32, i32) {
    %c0_i32 = arith.constant 0 : i32
    %c0_i32_0 = arith.constant 0 : i32
    %c0_i32_1 = arith.constant 0 : i32
    return %c0_i32, %c0_i32_0 : i32, i32
  }
  func.func @transform_14(%arg0: i32) -> (i32, i32) {
    %c0_i32 = arith.constant 0 : i32
    %c0_i32_0 = arith.constant 0 : i32
    %c0_i32_1 = arith.constant 0 : i32
    return %c0_i32, %c0_i32_0 : i32, i32
  }
  func.func @transform_15(%arg0: i32) -> (i32, i32) {
    %c0_i32 = arith.constant 0 : i32
    %c0_i32_0 = arith.constant 0 : i32
    %c0_i32_1 = arith.constant 0 : i32
    return %c0_i32, %c0_i32_0 : i32, i32
  }
  func.func @transform_16(%arg0: i32) -> (i32, i32) {
    %c0_i32 = arith.constant 0 : i32
    %c0_i32_0 = arith.constant 0 : i32
    %c0_i32_1 = arith.constant 0 : i32
    return %c0_i32, %c0_i32_0 : i32, i32
  }
  func.func @transform_17(%arg0: i32) -> (i32, i32) {
    %c0_i32 = arith.constant 0 : i32
    %c0_i32_0 = arith.constant 0 : i32
    %c0_i32_1 = arith.constant 0 : i32
    return %c0_i32, %c0_i32_0 : i32, i32
  }
  func.func @transform_18(%arg0: i32) -> (i32, i32) {
    %c0_i32 = arith.constant 0 : i32
    %c0_i32_0 = arith.constant 0 : i32
    %c0_i32_1 = arith.constant 0 : i32
    return %c0_i32, %c0_i32_0 : i32, i32
  }
  func.func @transform_19(%arg0: i32) -> (i32, i32) {
    %c0_i32 = arith.constant 0 : i32
    %c0_i32_0 = arith.constant 0 : i32
    %c0_i32_1 = arith.constant 0 : i32
    return %c0_i32, %c0_i32_0 : i32, i32
  }
  func.func @transform_20(%arg0: i32) -> (i32, i32) {
    %c0_i32 = arith.constant 0 : i32
    %c0_i32_0 = arith.constant 0 : i32
    %c0_i32_1 = arith.constant 0 : i32
    return %c0_i32, %c0_i32_0 : i32, i32
  }
  func.func @transform_21(%arg0: i32) -> (i32, i32) {
    %c0_i32 = arith.constant 0 : i32
    %c0_i32_0 = arith.constant 0 : i32
    %c0_i32_1 = arith.constant 0 : i32
    return %c0_i32, %c0_i32_0 : i32, i32
  }
  func.func @transform_22(%arg0: i32) -> (i32, i32) {
    %c0_i32 = arith.constant 0 : i32
    %c0_i32_0 = arith.constant 0 : i32
    %c0_i32_1 = arith.constant 0 : i32
    return %c0_i32, %c0_i32_0 : i32, i32
  }
  func.func @transform_23(%arg0: i32) -> (i32, i32) {
    %c0_i32 = arith.constant 0 : i32
    %c0_i32_0 = arith.constant 0 : i32
    %c0_i32_1 = arith.constant 0 : i32
    return %c0_i32, %c0_i32_0 : i32, i32
  }
  func.func @transform_24(%arg0: i32) -> (i32, i32, i32) {
    %c0_i32 = arith.constant 0 : i32
    %c0_i32_0 = arith.constant 0 : i32
    %c0_i32_1 = arith.constant 0 : i32
    return %arg0, %c0_i32, %c0_i32_0 : i32, i32, i32
  }
  func.func @transform_25(%arg0: i32) -> (i32, i32, i32, i32) {
    %c0_i32 = arith.constant 0 : i32
    %c0_i32_0 = arith.constant 0 : i32
    %c0_i32_1 = arith.constant 0 : i32
    %c0_i32_2 = arith.constant 0 : i32
    return %arg0, %c0_i32, %c0_i32_0, %c0_i32_1 : i32, i32, i32, i32
  }
}

</mosaic_0001>

<llo_original>
// kernel: tpu_custom_call.1
$region0: #{tpu_custom_call.1}
  #allocation0 [shape = 'u32[]', space=smem, size = 0x4, offset = 0x4, fixed_abs, tag = 'smem constant byte address 0x4 - core index']
  #allocation1 [shape = 'u32[144,128]{1,0:T(1,128)}', space=vmem, size = 0x12000, scoped, tag = 'internal scratch']
  %s0 = inlined_call_operand.vmem [shape: f32[2,8,32], index: 0, kind: input, shape index: {}]
  %s1 = inlined_call_operand.vmem [shape: f32[2,10,32], index: 1, kind: input, shape index: {}]
  %s2 = inlined_call_operand.hbm [shape: f32[8,8], index: 2, kind: input, shape index: {}]
  %s3 = inlined_call_operand.vmem [shape: f32[2,1,10], index: 3, kind: input, shape index: {}]
  %s4 = inlined_call_operand.vmem [shape: bf16[32,96], index: 4, kind: input, shape index: {}]
  %s5 = inlined_call_operand.hbm [shape: f32[1,96], index: 5, kind: input, shape index: {}]
  %s6 = inlined_call_operand.vmem [shape: bf16[32,32], index: 6, kind: input, shape index: {}]
  %s7 = inlined_call_operand.hbm [shape: f32[1,32], index: 7, kind: input, shape index: {}]
  %s8 = inlined_call_operand.hbm [shape: f32[1,32], index: 8, kind: input, shape index: {}]
  %s9 = inlined_call_operand.vmem [shape: f32[1,32], index: 9, kind: input, shape index: {}]
  %s10 = inlined_call_operand.vmem [shape: bf16[32,32], index: 10, kind: input, shape index: {}]
  %s11 = inlined_call_operand.vmem [shape: f32[1,32], index: 11, kind: input, shape index: {}]
  %s12 = inlined_call_operand.vmem [shape: bf16[32,64], index: 12, kind: input, shape index: {}]
  %s13 = inlined_call_operand.vmem [shape: f32[1,64], index: 13, kind: input, shape index: {}]
  %s14 = inlined_call_operand.vmem [shape: bf16[32,32], index: 14, kind: input, shape index: {}]
  %s15 = inlined_call_operand.vmem [shape: f32[1,32], index: 15, kind: input, shape index: {}]
  %s16 = inlined_call_operand.vmem [shape: f32[1,32], index: 16, kind: input, shape index: {}]
  %s17 = inlined_call_operand.vmem [shape: f32[1,32], index: 17, kind: input, shape index: {}]
  %s18 = inlined_call_operand.vmem [shape: bf16[32,64], index: 18, kind: input, shape index: {}]
  %s19 = inlined_call_operand.vmem [shape: f32[1,64], index: 19, kind: input, shape index: {}]
  %s20 = inlined_call_operand.vmem [shape: bf16[64,32], index: 20, kind: input, shape index: {}]
  %s21 = inlined_call_operand.vmem [shape: f32[1,32], index: 21, kind: input, shape index: {}]
  %s22 = inlined_call_operand.vmem [shape: f32[1,32], index: 22, kind: input, shape index: {}]
  %s23 = inlined_call_operand.vmem [shape: f32[1,32], index: 23, kind: input, shape index: {}]
  %s24 = inlined_call_operand.hbm [shape: f32[2,8,32], index: 24, kind: output, shape index: {0}]
  %s25 = inlined_call_operand.hbm [shape: f32[2,4,8,10], index: 25, kind: output, shape index: {1}]
  %26 = xla_tuple %s24, %s25
  %s27 = sld [smem:[#allocation0]]
  $region153: #{tpu_custom_call.1} parent=0
    _
  %s29 = ssub.s32 1, %s27
  %s30 = scalar_select 0, %s29, %s27
  $region1: #{tpu_custom_call.1} parent=0
    #allocation2 [shape = 'u8[4096]{0}', space=vmem, size = 0x1000, scoped, tag = 'input window, operand 2, single buffered']
    #allocation3 [shape = 's32[2]{0}', space=sflag, size = 0x8, scoped, tag = 'scoped memory for tpu_custom_call.1']
    #allocation4 [shape = 's32[2]{0}', space=sflag, size = 0x8, scoped, tag = 'scoped memory for tpu_custom_call.1']
    #allocation5 [shape = 'u8[512]{0}', space=vmem, size = 0x400, scoped, tag = 'input window, operand 5, single buffered']
    #allocation6 [shape = 's32[1]{0}', space=sflag, size = 0x4, scoped, tag = 'scoped memory for tpu_custom_call.1']
    #allocation7 [shape = 'u8[512]{0}', space=vmem, size = 0x400, scoped, tag = 'input window, operand 7, single buffered']
    #allocation8 [shape = 'u8[512]{0}', space=vmem, size = 0x400, scoped, tag = 'input window, operand 8, single buffered']
    #allocation9 [shape = 's32[1]{0}', space=sflag, size = 0x4, scoped, tag = 'scoped memory for tpu_custom_call.1']
    #allocation10 [shape = 'u8[8192]{0}', space=vmem, size = 0x2000, scoped, tag = 'output window, operand 0']
    #allocation11 [shape = 'u8[32768]{0}', space=vmem, size = 0x8000, scoped, tag = 'output window, operand 1']
    #allocation12 [shape = 's32[2]{0}', space=sflag, size = 0x8, scoped, tag = 'scoped memory for tpu_custom_call.1']
    %31 = vsyncpa [#allocation3], 0
    %32 = vsyncpa [#allocation6], 0
    %33 = vsyncpa [#allocation9], 0
    %34 = vsyncpa [#allocation4], 0
    %s35 = scalar_lea.sflag [#allocation4], 1
    %36 = vsyncpa %s35, 0
    %37 = vsyncpa [#allocation12], 0
    %s38 = scalar_lea.sflag [#allocation12], 1
    %39 = vsyncpa %s38, 0
    loop: start=0, step=1, limit=4
    $region2: #{tpu_custom_call.1} parent=1 // loop_pre_header
      _
    $region3: #{tpu_custom_call.1} parent=1 // loop_header
      %s41 = sphi 0, %s45
      %p42 = scmp.ge.s32.totalorder %s41, 4
      %s51 = sphi 0, %s53
      %s54 = sphi 0, %s51
      %s55 = sphi 0, %s54
      %s71 = sphi 0, %s55
      %s77 = sphi 0, %s79
      %s80 = sphi 0, %s77
      %s81 = sphi 0, %s80
      %s97 = sphi 0, %s81
      %s101 = sphi 0, %s101
      %s103 = sphi 0, %s101
      %s104 = sphi 0, %s103
      %s118 = sphi 0, %s104
      %s124 = sphi 0, %s126
      %s127 = sphi 0, %s124
      %s128 = sphi 0, %s127
      %s144 = sphi 0, %s128
      %s148 = sphi 0, %s148
      %s150 = sphi 0, %s148
      %s151 = sphi 0, %s150
      %s165 = sphi 0, %s151
      %s169 = sphi 0, %s169
      %s171 = sphi 0, %s169
      %s172 = sphi 0, %s171
      %s186 = sphi 0, %s172
      %s190 = sphi 0, %s190
      %s192 = sphi 0, %s190
      %s193 = sphi 0, %s192
      %s207 = sphi 0, %s193
      %s211 = sphi 0, %s211
      %s213 = sphi 0, %s211
      %s214 = sphi 0, %s213
      %s228 = sphi 0, %s214
      %s232 = sphi 0, %s232
      %s234 = sphi 0, %s232
      %s235 = sphi 0, %s234
      %s249 = sphi 0, %s235
      %s253 = sphi 0, %s253
      %s255 = sphi 0, %s253
      %s256 = sphi 0, %s255
      %s270 = sphi 0, %s256
      %s274 = sphi 0, %s274
      %s276 = sphi 0, %s274
      %s277 = sphi 0, %s276
      %s291 = sphi 0, %s277
      %s295 = sphi 0, %s295
      %s297 = sphi 0, %s295
      %s298 = sphi 0, %s297
      %s312 = sphi 0, %s298
      %s316 = sphi 0, %s316
      %s318 = sphi 0, %s316
      %s319 = sphi 0, %s318
      %s333 = sphi 0, %s319
      %s337 = sphi 0, %s337
      %s339 = sphi 0, %s337
      %s340 = sphi 0, %s339
      %s354 = sphi 0, %s340
      %s358 = sphi 0, %s358
      %s360 = sphi 0, %s358
      %s361 = sphi 0, %s360
      %s375 = sphi 0, %s361
      %s379 = sphi 0, %s379
      %s381 = sphi 0, %s379
      %s382 = sphi 0, %s381
      %s396 = sphi 0, %s382
      %s400 = sphi 0, %s400
      %s402 = sphi 0, %s400
      %s403 = sphi 0, %s402
      %s417 = sphi 0, %s403
      %s421 = sphi 0, %s421
      %s423 = sphi 0, %s421
      %s424 = sphi 0, %s423
      %s438 = sphi 0, %s424
      %s442 = sphi 0, %s442
      %s444 = sphi 0, %s442
      %s445 = sphi 0, %s444
      %s459 = sphi 0, %s445
      %s463 = sphi 0, %s463
      %s465 = sphi 0, %s463
      %s466 = sphi 0, %s465
      %s480 = sphi 0, %s466
      %s484 = sphi 0, %s484
      %s486 = sphi 0, %s484
      %s487 = sphi 0, %s486
      %s501 = sphi 0, %s487
      %s505 = sphi 0, %s505
      %s507 = sphi 0, %s505
      %s508 = sphi 0, %s507
      %s522 = sphi 0, %s508
      %s526 = sphi 0, %s526
      %s528 = sphi 0, %s526
      %s529 = sphi 0, %s528
      %s543 = sphi 0, %s529
      %s547 = sphi 0, %s547
      %s549 = sphi 0, %s547
      %s550 = sphi 0, %s549
      %s564 = sphi 0, %s550
      %s570 = sphi 0, %s572
      %s573 = sphi 0, %s570
      %s574 = sphi 0, %s573
      %s590 = sphi 0, %s574
      %s596 = sphi 0, %s598
      %s599 = sphi 0, %s596
      %s600 = sphi 0, %s599
      %s616 = sphi 0, %s600
    $region4: #{tpu_custom_call.1} parent=1 // loop_header_branch
      %44 = sbr.rel (%p42) target = $region8
    $region5: #{tpu_custom_call.1} parent=1 // loop_body
      %s46 = ssub.s32 %s41, 1
      %s47 = ssub.s32 %s41, 2
      %s48 = sadd.s32 %s41, 1
      %s49 = ssub.s32 %s41, %s48
      %p50 = scmp.eq.s32.totalorder %s49, 0
      %s52 = sadd.s32 %s51, 1
      %s53 = scalar_select %p50, %s51, %s52
      %p56 = pneg %p50
      %p57 = scmp.eq.s32.totalorder %s41, 1
      %p58 = por %p56, %p57
      %p59 = scmp.ne.s32.totalorder %s51, %s54
      %p60 = scmp.eq.s32.totalorder %s41, 0
      %p61 = por %p59, %p60
      %p62 = scmp.ne.s32.totalorder %s51, %s54
      %p63 = scmp.eq.s32.totalorder %s46, 1
      %p64 = por %p62, %p63
      %p65 = scmp.ne.s32.totalorder %s54, %s55
      %p66 = scmp.eq.s32.totalorder %s46, 0
      %p67 = por %p65, %p66
      %p68 = scmp.ne.s32.totalorder %s54, %s55
      %p69 = scmp.eq.s32.totalorder %s47, 1
      %p70 = por %p68, %p69
      %p72 = scmp.ne.s32.totalorder %s55, %s71
      %p73 = scmp.eq.s32.totalorder %s47, 0
      %p74 = por %p72, %p73
      %s75 = ssub.s32 %s41, %s48
      %p76 = scmp.eq.s32.totalorder %s75, 0
      %s78 = sadd.s32 %s77, 1
      %s79 = scalar_select %p76, %s77, %s78
      %p82 = pneg %p76
      %p83 = scmp.eq.s32.totalorder %s41, 1
      %p84 = por %p82, %p83
      %p85 = scmp.ne.s32.totalorder %s77, %s80
      %p86 = scmp.eq.s32.totalorder %s41, 0
      %p87 = por %p85, %p86
      %p88 = scmp.ne.s32.totalorder %s77, %s80
      %p89 = scmp.eq.s32.totalorder %s46, 1
      %p90 = por %p88, %p89
      %p91 = scmp.ne.s32.totalorder %s80, %s81
      %p92 = scmp.eq.s32.totalorder %s46, 0
      %p93 = por %p91, %p92
      %p94 = scmp.ne.s32.totalorder %s80, %s81
      %p95 = scmp.eq.s32.totalorder %s47, 1
      %p96 = por %p94, %p95
      %p98 = scmp.ne.s32.totalorder %s81, %s97
      %p99 = scmp.eq.s32.totalorder %s47, 0
      %p100 = por %p98, %p99
      %s102 = sadd.s32 %s101, 1
      %p105 = scmp.eq.s32.totalorder %s41, 1
      %p106 = scmp.ne.s32.totalorder %s101, %s103
      %p107 = scmp.eq.s32.totalorder %s41, 0
      %p108 = por %p106, %p107
      %p109 = scmp.ne.s32.totalorder %s101, %s103
      %p110 = scmp.eq.s32.totalorder %s46, 1
      %p111 = por %p109, %p110
      %p112 = scmp.ne.s32.totalorder %s103, %s104
      %p113 = scmp.eq.s32.totalorder %s46, 0
      %p114 = por %p112, %p113
      %p115 = scmp.ne.s32.totalorder %s103, %s104
      %p116 = scmp.eq.s32.totalorder %s47, 1
      %p117 = por %p115, %p116
      %p119 = scmp.ne.s32.totalorder %s104, %s118
      %p120 = scmp.eq.s32.totalorder %s47, 0
      %p121 = por %p119, %p120
      %s122 = ssub.s32 %s41, %s48
      %p123 = scmp.eq.s32.totalorder %s122, 0
      %s125 = sadd.s32 %s124, 1
      %s126 = scalar_select %p123, %s124, %s125
      %p129 = pneg %p123
      %p130 = scmp.eq.s32.totalorder %s41, 1
      %p131 = por %p129, %p130
      %p132 = scmp.ne.s32.totalorder %s124, %s127
      %p133 = scmp.eq.s32.totalorder %s41, 0
      %p134 = por %p132, %p133
      %p135 = scmp.ne.s32.totalorder %s124, %s127
      %p136 = scmp.eq.s32.totalorder %s46, 1
      %p137 = por %p135, %p136
      %p138 = scmp.ne.s32.totalorder %s127, %s128
      %p139 = scmp.eq.s32.totalorder %s46, 0
      %p140 = por %p138, %p139
      %p141 = scmp.ne.s32.totalorder %s127, %s128
      %p142 = scmp.eq.s32.totalorder %s47, 1
      %p143 = por %p141, %p142
      %p145 = scmp.ne.s32.totalorder %s128, %s144
      %p146 = scmp.eq.s32.totalorder %s47, 0
      %p147 = por %p145, %p146
      %s149 = sadd.s32 %s148, 1
      %p152 = scmp.eq.s32.totalorder %s41, 1
      %p153 = scmp.ne.s32.totalorder %s148, %s150
      %p154 = scmp.eq.s32.totalorder %s41, 0
      %p155 = por %p153, %p154
      %p156 = scmp.ne.s32.totalorder %s148, %s150
      %p157 = scmp.eq.s32.totalorder %s46, 1
      %p158 = por %p156, %p157
      %p159 = scmp.ne.s32.totalorder %s150, %s151
      %p160 = scmp.eq.s32.totalorder %s46, 0
      %p161 = por %p159, %p160
      %p162 = scmp.ne.s32.totalorder %s150, %s151
      %p163 = scmp.eq.s32.totalorder %s47, 1
      %p164 = por %p162, %p163
      %p166 = scmp.ne.s32.totalorder %s151, %s165
      %p167 = scmp.eq.s32.totalorder %s47, 0
      %p168 = por %p166, %p167
      %s170 = sadd.s32 %s169, 1
      %p173 = scmp.eq.s32.totalorder %s41, 1
      %p174 = scmp.ne.s32.totalorder %s169, %s171
      %p175 = scmp.eq.s32.totalorder %s41, 0
      %p176 = por %p174, %p175
      %p177 = scmp.ne.s32.totalorder %s169, %s171
      %p178 = scmp.eq.s32.totalorder %s46, 1
      %p179 = por %p177, %p178
      %p180 = scmp.ne.s32.totalorder %s171, %s172
      %p181 = scmp.eq.s32.totalorder %s46, 0
      %p182 = por %p180, %p181
      %p183 = scmp.ne.s32.totalorder %s171, %s172
      %p184 = scmp.eq.s32.totalorder %s47, 1
      %p185 = por %p183, %p184
      %p187 = scmp.ne.s32.totalorder %s172, %s186
      %p188 = scmp.eq.s32.totalorder %s47, 0
      %p189 = por %p187, %p188
      %s191 = sadd.s32 %s190, 1
      %p194 = scmp.eq.s32.totalorder %s41, 1
      %p195 = scmp.ne.s32.totalorder %s190, %s192
      %p196 = scmp.eq.s32.totalorder %s41, 0
      %p197 = por %p195, %p196
      %p198 = scmp.ne.s32.totalorder %s190, %s192
      %p199 = scmp.eq.s32.totalorder %s46, 1
      %p200 = por %p198, %p199
      %p201 = scmp.ne.s32.totalorder %s192, %s193
      %p202 = scmp.eq.s32.totalorder %s46, 0
      %p203 = por %p201, %p202
      %p204 = scmp.ne.s32.totalorder %s192, %s193
      %p205 = scmp.eq.s32.totalorder %s47, 1
      %p206 = por %p204, %p205
      %p208 = scmp.ne.s32.totalorder %s193, %s207
      %p209 = scmp.eq.s32.totalorder %s47, 0
      %p210 = por %p208, %p209
      %s212 = sadd.s32 %s211, 1
      %p215 = scmp.eq.s32.totalorder %s41, 1
      %p216 = scmp.ne.s32.totalorder %s211, %s213
      %p217 = scmp.eq.s32.totalorder %s41, 0
      %p218 = por %p216, %p217
      %p219 = scmp.ne.s32.totalorder %s211, %s213
      %p220 = scmp.eq.s32.totalorder %s46, 1
      %p221 = por %p219, %p220
      %p222 = scmp.ne.s32.totalorder %s213, %s214
      %p223 = scmp.eq.s32.totalorder %s46, 0
      %p224 = por %p222, %p223
      %p225 = scmp.ne.s32.totalorder %s213, %s214
      %p226 = scmp.eq.s32.totalorder %s47, 1
      %p227 = por %p225, %p226
      %p229 = scmp.ne.s32.totalorder %s214, %s228
      %p230 = scmp.eq.s32.totalorder %s47, 0
      %p231 = por %p229, %p230
      %s233 = sadd.s32 %s232, 1
      %p236 = scmp.eq.s32.totalorder %s41, 1
      %p237 = scmp.ne.s32.totalorder %s232, %s234
      %p238 = scmp.eq.s32.totalorder %s41, 0
      %p239 = por %p237, %p238
      %p240 = scmp.ne.s32.totalorder %s232, %s234
      %p241 = scmp.eq.s32.totalorder %s46, 1
      %p242 = por %p240, %p241
      %p243 = scmp.ne.s32.totalorder %s234, %s235
      %p244 = scmp.eq.s32.totalorder %s46, 0
      %p245 = por %p243, %p244
      %p246 = scmp.ne.s32.totalorder %s234, %s235
      %p247 = scmp.eq.s32.totalorder %s47, 1
      %p248 = por %p246, %p247
      %p250 = scmp.ne.s32.totalorder %s235, %s249
      %p251 = scmp.eq.s32.totalorder %s47, 0
      %p252 = por %p250, %p251
      %s254 = sadd.s32 %s253, 1
      %p257 = scmp.eq.s32.totalorder %s41, 1
      %p258 = scmp.ne.s32.totalorder %s253, %s255
      %p259 = scmp.eq.s32.totalorder %s41, 0
      %p260 = por %p258, %p259
      %p261 = scmp.ne.s32.totalorder %s253, %s255
      %p262 = scmp.eq.s32.totalorder %s46, 1
      %p263 = por %p261, %p262
      %p264 = scmp.ne.s32.totalorder %s255, %s256
      %p265 = scmp.eq.s32.totalorder %s46, 0
      %p266 = por %p264, %p265
      %p267 = scmp.ne.s32.totalorder %s255, %s256
      %p268 = scmp.eq.s32.totalorder %s47, 1
      %p269 = por %p267, %p268
      %p271 = scmp.ne.s32.totalorder %s256, %s270
      %p272 = scmp.eq.s32.totalorder %s47, 0
      %p273 = por %p271, %p272
      %s275 = sadd.s32 %s274, 1
      %p278 = scmp.eq.s32.totalorder %s41, 1
      %p279 = scmp.ne.s32.totalorder %s274, %s276
      %p280 = scmp.eq.s32.totalorder %s41, 0
      %p281 = por %p279, %p280
      %p282 = scmp.ne.s32.totalorder %s274, %s276
      %p283 = scmp.eq.s32.totalorder %s46, 1
      %p284 = por %p282, %p283
      %p285 = scmp.ne.s32.totalorder %s276, %s277
      %p286 = scmp.eq.s32.totalorder %s46, 0
      %p287 = por %p285, %p286
      %p288 = scmp.ne.s32.totalorder %s276, %s277
      %p289 = scmp.eq.s32.totalorder %s47, 1
      %p290 = por %p288, %p289
      %p292 = scmp.ne.s32.totalorder %s277, %s291
      %p293 = scmp.eq.s32.totalorder %s47, 0
      %p294 = por %p292, %p293
      %s296 = sadd.s32 %s295, 1
      %p299 = scmp.eq.s32.totalorder %s41, 1
      %p300 = scmp.ne.s32.totalorder %s295, %s297
      %p301 = scmp.eq.s32.totalorder %s41, 0
      %p302 = por %p300, %p301
      %p303 = scmp.ne.s32.totalorder %s295, %s297
      %p304 = scmp.eq.s32.totalorder %s46, 1
      %p305 = por %p303, %p304
      %p306 = scmp.ne.s32.totalorder %s297, %s298
      %p307 = scmp.eq.s32.totalorder %s46, 0
      %p308 = por %p306, %p307
      %p309 = scmp.ne.s32.totalorder %s297, %s298
      %p310 = scmp.eq.s32.totalorder %s47, 1
      %p311 = por %p309, %p310
      %p313 = scmp.ne.s32.totalorder %s298, %s312
      %p314 = scmp.eq.s32.totalorder %s47, 0
      %p315 = por %p313, %p314
      %s317 = sadd.s32 %s316, 1
      %p320 = scmp.eq.s32.totalorder %s41, 1
      %p321 = scmp.ne.s32.totalorder %s316, %s318
      %p322 = scmp.eq.s32.totalorder %s41, 0
      %p323 = por %p321, %p322
      %p324 = scmp.ne.s32.totalorder %s316, %s318
      %p325 = scmp.eq.s32.totalorder %s46, 1
      %p326 = por %p324, %p325
      %p327 = scmp.ne.s32.totalorder %s318, %s319
      %p328 = scmp.eq.s32.totalorder %s46, 0
      %p329 = por %p327, %p328
      %p330 = scmp.ne.s32.totalorder %s318, %s319
      %p331 = scmp.eq.s32.totalorder %s47, 1
      %p332 = por %p330, %p331
      %p334 = scmp.ne.s32.totalorder %s319, %s333
      %p335 = scmp.eq.s32.totalorder %s47, 0
      %p336 = por %p334, %p335
      %s338 = sadd.s32 %s337, 1
      %p341 = scmp.eq.s32.totalorder %s41, 1
      %p342 = scmp.ne.s32.totalorder %s337, %s339
      %p343 = scmp.eq.s32.totalorder %s41, 0
      %p344 = por %p342, %p343
      %p345 = scmp.ne.s32.totalorder %s337, %s339
      %p346 = scmp.eq.s32.totalorder %s46, 1
      %p347 = por %p345, %p346
      %p348 = scmp.ne.s32.totalorder %s339, %s340
      %p349 = scmp.eq.s32.totalorder %s46, 0
      %p350 = por %p348, %p349
      %p351 = scmp.ne.s32.totalorder %s339, %s340
      %p352 = scmp.eq.s32.totalorder %s47, 1
      %p353 = por %p351, %p352
      %p355 = scmp.ne.s32.totalorder %s340, %s354
      %p356 = scmp.eq.s32.totalorder %s47, 0
      %p357 = por %p355, %p356
      %s359 = sadd.s32 %s358, 1
      %p362 = scmp.eq.s32.totalorder %s41, 1
      %p363 = scmp.ne.s32.totalorder %s358, %s360
      %p364 = scmp.eq.s32.totalorder %s41, 0
      %p365 = por %p363, %p364
      %p366 = scmp.ne.s32.totalorder %s358, %s360
      %p367 = scmp.eq.s32.totalorder %s46, 1
      %p368 = por %p366, %p367
      %p369 = scmp.ne.s32.totalorder %s360, %s361
      %p370 = scmp.eq.s32.totalorder %s46, 0
      %p371 = por %p369, %p370
      %p372 = scmp.ne.s32.totalorder %s360, %s361
      %p373 = scmp.eq.s32.totalorder %s47, 1
      %p374 = por %p372, %p373
      %p376 = scmp.ne.s32.totalorder %s361, %s375
      %p377 = scmp.eq.s32.totalorder %s47, 0
      %p378 = por %p376, %p377
      %s380 = sadd.s32 %s379, 1
      %p383 = scmp.eq.s32.totalorder %s41, 1
      %p384 = scmp.ne.s32.totalorder %s379, %s381
      %p385 = scmp.eq.s32.totalorder %s41, 0
      %p386 = por %p384, %p385
      %p387 = scmp.ne.s32.totalorder %s379, %s381
      %p388 = scmp.eq.s32.totalorder %s46, 1
      %p389 = por %p387, %p388
      %p390 = scmp.ne.s32.totalorder %s381, %s382
      %p391 = scmp.eq.s32.totalorder %s46, 0
      %p392 = por %p390, %p391
      %p393 = scmp.ne.s32.totalorder %s381, %s382
      %p394 = scmp.eq.s32.totalorder %s47, 1
      %p395 = por %p393, %p394
      %p397 = scmp.ne.s32.totalorder %s382, %s396
      %p398 = scmp.eq.s32.totalorder %s47, 0
      %p399 = por %p397, %p398
      %s401 = sadd.s32 %s400, 1
      %p404 = scmp.eq.s32.totalorder %s41, 1
      %p405 = scmp.ne.s32.totalorder %s400, %s402
      %p406 = scmp.eq.s32.totalorder %s41, 0
      %p407 = por %p405, %p406
      %p408 = scmp.ne.s32.totalorder %s400, %s402
      %p409 = scmp.eq.s32.totalorder %s46, 1
      %p410 = por %p408, %p409
      %p411 = scmp.ne.s32.totalorder %s402, %s403
      %p412 = scmp.eq.s32.totalorder %s46, 0
      %p413 = por %p411, %p412
      %p414 = scmp.ne.s32.totalorder %s402, %s403
      %p415 = scmp.eq.s32.totalorder %s47, 1
      %p416 = por %p414, %p415
      %p418 = scmp.ne.s32.totalorder %s403, %s417
      %p419 = scmp.eq.s32.totalorder %s47, 0
      %p420 = por %p418, %p419
      %s422 = sadd.s32 %s421, 1
      %p425 = scmp.eq.s32.totalorder %s41, 1
      %p426 = scmp.ne.s32.totalorder %s421, %s423
      %p427 = scmp.eq.s32.totalorder %s41, 0
      %p428 = por %p426, %p427
      %p429 = scmp.ne.s32.totalorder %s421, %s423
      %p430 = scmp.eq.s32.totalorder %s46, 1
      %p431 = por %p429, %p430
      %p432 = scmp.ne.s32.totalorder %s423, %s424
      %p433 = scmp.eq.s32.totalorder %s46, 0
      %p434 = por %p432, %p433
      %p435 = scmp.ne.s32.totalorder %s423, %s424
      %p436 = scmp.eq.s32.totalorder %s47, 1
      %p437 = por %p435, %p436
      %p439 = scmp.ne.s32.totalorder %s424, %s438
      %p440 = scmp.eq.s32.totalorder %s47, 0
      %p441 = por %p439, %p440
      %s443 = sadd.s32 %s442, 1
      %p446 = scmp.eq.s32.totalorder %s41, 1
      %p447 = scmp.ne.s32.totalorder %s442, %s444
      %p448 = scmp.eq.s32.totalorder %s41, 0
      %p449 = por %p447, %p448
      %p450 = scmp.ne.s32.totalorder %s442, %s444
      %p451 = scmp.eq.s32.totalorder %s46, 1
      %p452 = por %p450, %p451
      %p453 = scmp.ne.s32.totalorder %s444, %s445
      %p454 = scmp.eq.s32.totalorder %s46, 0
      %p455 = por %p453, %p454
      %p456 = scmp.ne.s32.totalorder %s444, %s445
      %p457 = scmp.eq.s32.totalorder %s47, 1
      %p458 = por %p456, %p457
      %p460 = scmp.ne.s32.totalorder %s445, %s459
      %p461 = scmp.eq.s32.totalorder %s47, 0
      %p462 = por %p460, %p461
      %s464 = sadd.s32 %s463, 1
      %p467 = scmp.eq.s32.totalorder %s41, 1
      %p468 = scmp.ne.s32.totalorder %s463, %s465
      %p469 = scmp.eq.s32.totalorder %s41, 0
      %p470 = por %p468, %p469
      %p471 = scmp.ne.s32.totalorder %s463, %s465
      %p472 = scmp.eq.s32.totalorder %s46, 1
      %p473 = por %p471, %p472
      %p474 = scmp.ne.s32.totalorder %s465, %s466
      %p475 = scmp.eq.s32.totalorder %s46, 0
      %p476 = por %p474, %p475
      %p477 = scmp.ne.s32.totalorder %s465, %s466
      %p478 = scmp.eq.s32.totalorder %s47, 1
      %p479 = por %p477, %p478
      %p481 = scmp.ne.s32.totalorder %s466, %s480
      %p482 = scmp.eq.s32.totalorder %s47, 0
      %p483 = por %p481, %p482
      %s485 = sadd.s32 %s484, 1
      %p488 = scmp.eq.s32.totalorder %s41, 1
      %p489 = scmp.ne.s32.totalorder %s484, %s486
      %p490 = scmp.eq.s32.totalorder %s41, 0
      %p491 = por %p489, %p490
      %p492 = scmp.ne.s32.totalorder %s484, %s486
      %p493 = scmp.eq.s32.totalorder %s46, 1
      %p494 = por %p492, %p493
      %p495 = scmp.ne.s32.totalorder %s486, %s487
      %p496 = scmp.eq.s32.totalorder %s46, 0
      %p497 = por %p495, %p496
      %p498 = scmp.ne.s32.totalorder %s486, %s487
      %p499 = scmp.eq.s32.totalorder %s47, 1
      %p500 = por %p498, %p499
      %p502 = scmp.ne.s32.totalorder %s487, %s501
      %p503 = scmp.eq.s32.totalorder %s47, 0
      %p504 = por %p502, %p503
      %s506 = sadd.s32 %s505, 1
      %p509 = scmp.eq.s32.totalorder %s41, 1
      %p510 = scmp.ne.s32.totalorder %s505, %s507
      %p511 = scmp.eq.s32.totalorder %s41, 0
      %p512 = por %p510, %p511
      %p513 = scmp.ne.s32.totalorder %s505, %s507
      %p514 = scmp.eq.s32.totalorder %s46, 1
      %p515 = por %p513, %p514
      %p516 = scmp.ne.s32.totalorder %s507, %s508
      %p517 = scmp.eq.s32.totalorder %s46, 0
      %p518 = por %p516, %p517
      %p519 = scmp.ne.s32.totalorder %s507, %s508
      %p520 = scmp.eq.s32.totalorder %s47, 1
      %p521 = por %p519, %p520
      %p523 = scmp.ne.s32.totalorder %s508, %s522
      %p524 = scmp.eq.s32.totalorder %s47, 0
      %p525 = por %p523, %p524
      %s527 = sadd.s32 %s526, 1
      %p530 = scmp.eq.s32.totalorder %s41, 1
      %p531 = scmp.ne.s32.totalorder %s526, %s528
      %p532 = scmp.eq.s32.totalorder %s41, 0
      %p533 = por %p531, %p532
      %p534 = scmp.ne.s32.totalorder %s526, %s528
      %p535 = scmp.eq.s32.totalorder %s46, 1
      %p536 = por %p534, %p535
      %p537 = scmp.ne.s32.totalorder %s528, %s529
      %p538 = scmp.eq.s32.totalorder %s46, 0
      %p539 = por %p537, %p538
      %p540 = scmp.ne.s32.totalorder %s528, %s529
      %p541 = scmp.eq.s32.totalorder %s47, 1
      %p542 = por %p540, %p541
      %p544 = scmp.ne.s32.totalorder %s529, %s543
      %p545 = scmp.eq.s32.totalorder %s47, 0
      %p546 = por %p544, %p545
      %s548 = sadd.s32 %s547, 1
      %p551 = scmp.eq.s32.totalorder %s41, 1
      %p552 = scmp.ne.s32.totalorder %s547, %s549
      %p553 = scmp.eq.s32.totalorder %s41, 0
      %p554 = por %p552, %p553
      %p555 = scmp.ne.s32.totalorder %s547, %s549
      %p556 = scmp.eq.s32.totalorder %s46, 1
      %p557 = por %p555, %p556
      %p558 = scmp.ne.s32.totalorder %s549, %s550
      %p559 = scmp.eq.s32.totalorder %s46, 0
      %p560 = por %p558, %p559
      %p561 = scmp.ne.s32.totalorder %s549, %s550
      %p562 = scmp.eq.s32.totalorder %s47, 1
      %p563 = por %p561, %p562
      %p565 = scmp.ne.s32.totalorder %s550, %s564
      %p566 = scmp.eq.s32.totalorder %s47, 0
      %p567 = por %p565, %p566
      %s568 = ssub.s32 %s41, %s48
      %p569 = scmp.eq.s32.totalorder %s568, 0
      %s571 = sadd.s32 %s570, 1
      %s572 = scalar_select %p569, %s570, %s571
      %p575 = pneg %p569
      %p576 = scmp.eq.s32.totalorder %s41, 1
      %p577 = por %p575, %p576
      %p578 = scmp.ne.s32.totalorder %s570, %s573
      %p579 = scmp.eq.s32.totalorder %s41, 0
      %p580 = por %p578, %p579
      %p581 = scmp.ne.s32.totalorder %s570, %s573
      %p582 = scmp.eq.s32.totalorder %s46, 1
      %p583 = por %p581, %p582
      %p584 = scmp.ne.s32.totalorder %s573, %s574
      %p585 = scmp.eq.s32.totalorder %s46, 0
      %p586 = por %p584, %p585
      %p587 = scmp.ne.s32.totalorder %s573, %s574
      %p588 = scmp.eq.s32.totalorder %s47, 1
      %p589 = por %p587, %p588
      %p591 = scmp.ne.s32.totalorder %s574, %s590
      %p592 = scmp.eq.s32.totalorder %s47, 0
      %p593 = por %p591, %p592
      %s594 = ssub.s32 %s41, %s48
      %p595 = scmp.eq.s32.totalorder %s594, 0
      %s597 = sadd.s32 %s596, 1
      %s598 = scalar_select %p595, %s596, %s597
      %p601 = pneg %p595
      %p602 = scmp.eq.s32.totalorder %s41, 1
      %p603 = por %p601, %p602
      %p604 = scmp.ne.s32.totalorder %s596, %s599
      %p605 = scmp.eq.s32.totalorder %s41, 0
      %p606 = por %p604, %p605
      %p607 = scmp.ne.s32.totalorder %s596, %s599
      %p608 = scmp.eq.s32.totalorder %s46, 1
      %p609 = por %p607, %p608
      %p610 = scmp.ne.s32.totalorder %s599, %s600
      %p611 = scmp.eq.s32.totalorder %s46, 0
      %p612 = por %p610, %p611
      %p613 = scmp.ne.s32.totalorder %s599, %s600
      %p614 = scmp.eq.s32.totalorder %s47, 1
      %p615 = por %p613, %p614
      %p617 = scmp.ne.s32.totalorder %s600, %s616
      %p618 = scmp.eq.s32.totalorder %s47, 0
      %p619 = por %p617, %p618
      %p620 = scmp.le.s32.totalorder 1, %s41
      %p621 = scmp.lt.s32.totalorder %s41, 3
      %p622 = pnand %p620, %p621
      %p623 = pneg %p622
      // Predicated region
      $region9: #{tpu_custom_call.1} parent=5 // pred_check
        _
      $region10: #{tpu_custom_call.1} parent=5 // pred_check_branch
        %625 = sbr.rel (%p622) target = $region12
      $region11: #{tpu_custom_call.1} parent=5 // pred_region
        %s626 = ssub.s32 %s41, 1
        // Predicated region
        $region13: #{tpu_custom_call.1} parent=11 // pred_check
          %p627 = pneg %p114
        $region14: #{tpu_custom_call.1} parent=11 // pred_check_branch
          %629 = sbr.rel (%p627) target = $region16
        $region15: #{tpu_custom_call.1} parent=11 // pred_region
          %s631 = ssub.s32 128, 128
          %632 = vsyncadd [#allocation3], %s631
          %s634 = sshll.u32 [#allocation2], 4
          %s635 = int_to_ptr.vmem [resolvable:$true] %s634
          %637 = dma.hbm_to_vmem [thread:$0]  %s2, 128, %s635, [#allocation3]
        $region16: #{tpu_custom_call.1} parent=11 // pred_fallthru
          _
        // Predicated region
        $region17: #{tpu_custom_call.1} parent=11 // pred_check
          %p638 = pneg %p161
        $region18: #{tpu_custom_call.1} parent=11 // pred_check_branch
          %640 = sbr.rel (%p638) target = $region20
        $region19: #{tpu_custom_call.1} parent=11 // pred_region
          _
        $region20: #{tpu_custom_call.1} parent=11 // pred_fallthru
          _
        // Predicated region
        $region21: #{tpu_custom_call.1} parent=11 // pred_check
          %p641 = pneg %p182
        $region22: #{tpu_custom_call.1} parent=11 // pred_check_branch
          %643 = sbr.rel (%p641) target = $region24
        $region23: #{tpu_custom_call.1} parent=11 // pred_region
          %s645 = ssub.s32 16, 16
          %646 = vsyncadd [#allocation6], %s645
          %s648 = sshll.u32 [#allocation5], 4
          %s649 = int_to_ptr.vmem [resolvable:$true] %s648
          %651 = dma.hbm_to_vmem [thread:$0]  %s5, 16, %s649, [#allocation6]
        $region24: #{tpu_custom_call.1} parent=11 // pred_fallthru
          _
        // Predicated region
        $region25: #{tpu_custom_call.1} parent=11 // pred_check
          %p652 = pneg %p203
        $region26: #{tpu_custom_call.1} parent=11 // pred_check_branch
          %654 = sbr.rel (%p652) target = $region28
        $region27: #{tpu_custom_call.1} parent=11 // pred_region
          _
        $region28: #{tpu_custom_call.1} parent=11 // pred_fallthru
          _
        // Predicated region
        $region29: #{tpu_custom_call.1} parent=11 // pred_check
          %p655 = pneg %p224
        $region30: #{tpu_custom_call.1} parent=11 // pred_check_branch
          %657 = sbr.rel (%p655) target = $region32
        $region31: #{tpu_custom_call.1} parent=11 // pred_region
          %s659 = ssub.s32 16, 16
          %660 = vsyncadd [#allocation6], %s659
          %s662 = sshll.u32 [#allocation7], 4
          %s663 = int_to_ptr.vmem [resolvable:$true] %s662
          %665 = dma.hbm_to_vmem [thread:$0]  %s7, 16, %s663, [#allocation6]
        $region32: #{tpu_custom_call.1} parent=11 // pred_fallthru
          _
        // Predicated region
        $region33: #{tpu_custom_call.1} parent=11 // pred_check
          %p666 = pneg %p245
        $region34: #{tpu_custom_call.1} parent=11 // pred_check_branch
          %668 = sbr.rel (%p666) target = $region36
        $region35: #{tpu_custom_call.1} parent=11 // pred_region
          %s670 = ssub.s32 16, 16
          %671 = vsyncadd [#allocation9], %s670
          %s673 = sshll.u32 [#allocation8], 4
          %s674 = int_to_ptr.vmem [resolvable:$true] %s673
          %676 = dma.hbm_to_vmem [thread:$0]  %s8, 16, %s674, [#allocation9]
        $region36: #{tpu_custom_call.1} parent=11 // pred_fallthru
          _
        // Predicated region
        $region37: #{tpu_custom_call.1} parent=11 // pred_check
          %p677 = pneg %p266
        $region38: #{tpu_custom_call.1} parent=11 // pred_check_branch
          %679 = sbr.rel (%p677) target = $region40
        $region39: #{tpu_custom_call.1} parent=11 // pred_region
          _
        $region40: #{tpu_custom_call.1} parent=11 // pred_fallthru
          _
        // Predicated region
        $region41: #{tpu_custom_call.1} parent=11 // pred_check
          %p680 = pneg %p287
        $region42: #{tpu_custom_call.1} parent=11 // pred_check_branch
          %682 = sbr.rel (%p680) target = $region44
        $region43: #{tpu_custom_call.1} parent=11 // pred_region
          _
        $region44: #{tpu_custom_call.1} parent=11 // pred_fallthru
          _
        // Predicated region
        $region45: #{tpu_custom_call.1} parent=11 // pred_check
          %p683 = pneg %p308
        $region46: #{tpu_custom_call.1} parent=11 // pred_check_branch
          %685 = sbr.rel (%p683) target = $region48
        $region47: #{tpu_custom_call.1} parent=11 // pred_region
          _
        $region48: #{tpu_custom_call.1} parent=11 // pred_fallthru
          _
        // Predicated region
        $region49: #{tpu_custom_call.1} parent=11 // pred_check
          %p686 = pneg %p329
        $region50: #{tpu_custom_call.1} parent=11 // pred_check_branch
          %688 = sbr.rel (%p686) target = $region52
        $region51: #{tpu_custom_call.1} parent=11 // pred_region
          _
        $region52: #{tpu_custom_call.1} parent=11 // pred_fallthru
          _
        // Predicated region
        $region53: #{tpu_custom_call.1} parent=11 // pred_check
          %p689 = pneg %p350
        $region54: #{tpu_custom_call.1} parent=11 // pred_check_branch
          %691 = sbr.rel (%p689) target = $region56
        $region55: #{tpu_custom_call.1} parent=11 // pred_region
          _
        $region56: #{tpu_custom_call.1} parent=11 // pred_fallthru
          _
        // Predicated region
        $region57: #{tpu_custom_call.1} parent=11 // pred_check
          %p692 = pneg %p371
        $region58: #{tpu_custom_call.1} parent=11 // pred_check_branch
          %694 = sbr.rel (%p692) target = $region60
        $region59: #{tpu_custom_call.1} parent=11 // pred_region
          _
        $region60: #{tpu_custom_call.1} parent=11 // pred_fallthru
          _
        // Predicated region
        $region61: #{tpu_custom_call.1} parent=11 // pred_check
          %p695 = pneg %p392
        $region62: #{tpu_custom_call.1} parent=11 // pred_check_branch
          %697 = sbr.rel (%p695) target = $region64
        $region63: #{tpu_custom_call.1} parent=11 // pred_region
          _
        $region64: #{tpu_custom_call.1} parent=11 // pred_fallthru
          _
        // Predicated region
        $region65: #{tpu_custom_call.1} parent=11 // pred_check
          %p698 = pneg %p413
        $region66: #{tpu_custom_call.1} parent=11 // pred_check_branch
          %700 = sbr.rel (%p698) target = $region68
        $region67: #{tpu_custom_call.1} parent=11 // pred_region
          _
        $region68: #{tpu_custom_call.1} parent=11 // pred_fallthru
          _
        // Predicated region
        $region69: #{tpu_custom_call.1} parent=11 // pred_check
          %p701 = pneg %p434
        $region70: #{tpu_custom_call.1} parent=11 // pred_check_branch
          %703 = sbr.rel (%p701) target = $region72
        $region71: #{tpu_custom_call.1} parent=11 // pred_region
          _
        $region72: #{tpu_custom_call.1} parent=11 // pred_fallthru
          _
        // Predicated region
        $region73: #{tpu_custom_call.1} parent=11 // pred_check
          %p704 = pneg %p455
        $region74: #{tpu_custom_call.1} parent=11 // pred_check_branch
          %706 = sbr.rel (%p704) target = $region76
        $region75: #{tpu_custom_call.1} parent=11 // pred_region
          _
        $region76: #{tpu_custom_call.1} parent=11 // pred_fallthru
          _
        // Predicated region
        $region77: #{tpu_custom_call.1} parent=11 // pred_check
          %p707 = pneg %p476
        $region78: #{tpu_custom_call.1} parent=11 // pred_check_branch
          %709 = sbr.rel (%p707) target = $region80
        $region79: #{tpu_custom_call.1} parent=11 // pred_region
          _
        $region80: #{tpu_custom_call.1} parent=11 // pred_fallthru
          _
        // Predicated region
        $region81: #{tpu_custom_call.1} parent=11 // pred_check
          %p710 = pneg %p497
        $region82: #{tpu_custom_call.1} parent=11 // pred_check_branch
          %712 = sbr.rel (%p710) target = $region84
        $region83: #{tpu_custom_call.1} parent=11 // pred_region
          _
        $region84: #{tpu_custom_call.1} parent=11 // pred_fallthru
          _
        // Predicated region
        $region85: #{tpu_custom_call.1} parent=11 // pred_check
          %p713 = pneg %p518
        $region86: #{tpu_custom_call.1} parent=11 // pred_check_branch
          %715 = sbr.rel (%p713) target = $region88
        $region87: #{tpu_custom_call.1} parent=11 // pred_region
          _
        $region88: #{tpu_custom_call.1} parent=11 // pred_fallthru
          _
        // Predicated region
        $region89: #{tpu_custom_call.1} parent=11 // pred_check
          %p716 = pneg %p539
        $region90: #{tpu_custom_call.1} parent=11 // pred_check_branch
          %718 = sbr.rel (%p716) target = $region92
        $region91: #{tpu_custom_call.1} parent=11 // pred_region
          _
        $region92: #{tpu_custom_call.1} parent=11 // pred_fallthru
          _
        // Predicated region
        $region93: #{tpu_custom_call.1} parent=11 // pred_check
          %p719 = pneg %p560
        $region94: #{tpu_custom_call.1} parent=11 // pred_check_branch
          %721 = sbr.rel (%p719) target = $region96
        $region95: #{tpu_custom_call.1} parent=11 // pred_region
          _
        $region96: #{tpu_custom_call.1} parent=11 // pred_fallthru
          _
      $region12: #{tpu_custom_call.1} parent=5 // pred_fallthru
        _
      %p722 = scmp.lt.s32.totalorder %s41, 2
      // Predicated region
      $region97: #{tpu_custom_call.1} parent=5 // pred_check
        %p723 = pneg %p722
      $region98: #{tpu_custom_call.1} parent=5 // pred_check_branch
        %725 = sbr.rel (%p723) target = $region100
      $region99: #{tpu_custom_call.1} parent=5 // pred_region
        // Predicated region
        $region101: #{tpu_custom_call.1} parent=99 // pred_check
          %p726 = pneg %p61
        $region102: #{tpu_custom_call.1} parent=99 // pred_check_branch
          %728 = sbr.rel (%p726) target = $region104
        $region103: #{tpu_custom_call.1} parent=99 // pred_region
          %p729 = scmp.lt.s32.totalorder %s41, 1
          %s730 = scalar_select %p729, %s41, 1
          %s731 = smul.addr %s730, 8
          %s732 = scalar_lea.vmem %s0, %s731
        $region104: #{tpu_custom_call.1} parent=99 // pred_fallthru
          _
        // Predicated region
        $region105: #{tpu_custom_call.1} parent=99 // pred_check
          %p733 = pneg %p87
        $region106: #{tpu_custom_call.1} parent=99 // pred_check_branch
          %735 = sbr.rel (%p733) target = $region108
        $region107: #{tpu_custom_call.1} parent=99 // pred_region
          %p736 = scmp.lt.s32.totalorder %s41, 1
          %s737 = scalar_select %p736, %s41, 1
          %s738 = smul.addr %s737, 2
          %s739 = smul.addr %s738, 8
          %s740 = scalar_lea.vmem %s1, %s739
        $region108: #{tpu_custom_call.1} parent=99 // pred_fallthru
          _
        // Predicated region
        $region109: #{tpu_custom_call.1} parent=99 // pred_check
          %p741 = pneg %p134
        $region110: #{tpu_custom_call.1} parent=99 // pred_check_branch
          %743 = sbr.rel (%p741) target = $region112
        $region111: #{tpu_custom_call.1} parent=99 // pred_region
          %p744 = scmp.lt.s32.totalorder %s41, 1
          %s745 = scalar_select %p744, %s41, 1
          %s746 = scalar_lea.vmem %s3, %s745
        $region112: #{tpu_custom_call.1} parent=99 // pred_fallthru
          _
      $region100: #{tpu_custom_call.1} parent=5 // pred_fallthru
        _
      %p747 = scmp.le.s32.totalorder 1, %s41
      %p748 = scmp.lt.s32.totalorder %s41, 3
      %p749 = pnand %p747, %p748
      %p750 = pneg %p749
      // Predicated region
      $region113: #{tpu_custom_call.1} parent=5 // pred_check
        _
      $region114: #{tpu_custom_call.1} parent=5 // pred_check_branch
        %752 = sbr.rel (%p749) target = $region116
      $region115: #{tpu_custom_call.1} parent=5 // pred_region
        %s753 = ssub.s32 %s41, 1
        // Predicated region
        $region117: #{tpu_custom_call.1} parent=115 // pred_check
          %p754 = pneg %p114
        $region118: #{tpu_custom_call.1} parent=115 // pred_check_branch
          %756 = sbr.rel (%p754) target = $region120
        $region119: #{tpu_custom_call.1} parent=115 // pred_region
          %757 = dma.done [#allocation3], 128
        $region120: #{tpu_custom_call.1} parent=115 // pred_fallthru
          _
        // Predicated region
        $region121: #{tpu_custom_call.1} parent=115 // pred_check
          %p758 = pneg %p182
        $region122: #{tpu_custom_call.1} parent=115 // pred_check_branch
          %760 = sbr.rel (%p758) target = $region124
        $region123: #{tpu_custom_call.1} parent=115 // pred_region
          %761 = dma.done [#allocation6], 16
        $region124: #{tpu_custom_call.1} parent=115 // pred_fallthru
          _
        // Predicated region
        $region125: #{tpu_custom_call.1} parent=115 // pred_check
          %p762 = pneg %p224
        $region126: #{tpu_custom_call.1} parent=115 // pred_check_branch
          %764 = sbr.rel (%p762) target = $region128
        $region127: #{tpu_custom_call.1} parent=115 // pred_region
          %765 = dma.done [#allocation6], 16
        $region128: #{tpu_custom_call.1} parent=115 // pred_fallthru
          _
        // Predicated region
        $region129: #{tpu_custom_call.1} parent=115 // pred_check
          %p766 = pneg %p245
        $region130: #{tpu_custom_call.1} parent=115 // pred_check_branch
          %768 = sbr.rel (%p766) target = $region132
        $region131: #{tpu_custom_call.1} parent=115 // pred_region
          %769 = dma.done [#allocation9], 16
        $region132: #{tpu_custom_call.1} parent=115 // pred_fallthru
          _
        %p770 = scmp.lt.s32.totalorder %s46, 1
        %s771 = scalar_select %p770, %s46, 1
        %s772 = smul.addr %s771, 8
        %s773 = scalar_lea.vmem %s0, %s772
        %p774 = pneg %p67
        %p775 = pneg %p64
        %p776 = scmp.lt.s32.totalorder %s46, 1
        %s777 = scalar_select %p776, %s46, 1
        %s778 = smul.addr %s777, 2
        %s779 = smul.addr %s778, 8
        %s780 = scalar_lea.vmem %s1, %s779
        %p781 = pneg %p93
        %p782 = pneg %p90
        %p783 = pneg %p114
        %p784 = pneg %p111
        %p785 = scmp.lt.s32.totalorder %s46, 1
        %s786 = scalar_select %p785, %s46, 1
        %s787 = scalar_lea.vmem %s3, %s786
        %p788 = pneg %p140
        %p789 = pneg %p137
        %p790 = pneg %p161
        %p791 = pneg %p158
        %p792 = pneg %p182
        %p793 = pneg %p179
        %p794 = pneg %p203
        %p795 = pneg %p200
        %p796 = pneg %p224
        %p797 = pneg %p221
        %p798 = pneg %p245
        %p799 = pneg %p242
        %p800 = pneg %p266
        %p801 = pneg %p263
        %p802 = pneg %p287
        %p803 = pneg %p284
        %p804 = pneg %p308
        %p805 = pneg %p305
        %p806 = pneg %p329
        %p807 = pneg %p326
        %p808 = pneg %p350
        %p809 = pneg %p347
        %p810 = pneg %p371
        %p811 = pneg %p368
        %p812 = pneg %p392
        %p813 = pneg %p389
        %p814 = pneg %p413
        %p815 = pneg %p410
        %p816 = pneg %p434
        %p817 = pneg %p431
        %p818 = pneg %p455
        %p819 = pneg %p452
        %p820 = pneg %p476
        %p821 = pneg %p473
        %p822 = pneg %p497
        %p823 = pneg %p494
        %p824 = pneg %p518
        %p825 = pneg %p515
        %p826 = pneg %p539
        %p827 = pneg %p536
        %p828 = pneg %p560
        %p829 = pneg %p557
        %p830 = pneg %p586
        %p831 = pneg %p583
        %s832 = sand.u32 %s573, 1
        %s833 = scalar_lea.sflag [#allocation4], %s832
        %s834 = sand.u32 %s573, 1
        %s835 = smul.addr %s834, 8
        %s836 = scalar_lea.vmem [#allocation10], %s835
        %p837 = pneg %p612
        %p838 = pneg %p609
        %s839 = sand.u32 %s599, 1
        %s840 = scalar_lea.sflag [#allocation12], %s839
        %s841 = sand.u32 %s599, 1
        %s842 = smul.addr %s841, 32
        %s843 = scalar_lea.vmem [#allocation11], %s842
        %p844 = scmp.lt.s32.totalorder %s46, 1
        %s845 = scalar_select %p844, %s46, 1
        %s846 = smul.addr %s845, 8
        %s847 = scalar_lea.vmem %s0, %s846
        %p848 = scmp.lt.s32.totalorder %s46, 1
        %s849 = scalar_select %p848, %s46, 1
        %s850 = smul.addr %s849, 2
        %s851 = smul.addr %s850, 8
        %s852 = scalar_lea.vmem %s1, %s851
        %p853 = scmp.lt.s32.totalorder %s46, 1
        %s854 = scalar_select %p853, %s46, 1
        %s855 = scalar_lea.vmem %s3, %s854
        %v857 = vld [vmem:[%s847] sm:$0xff]
        %v858 = vld [vmem:[%s4] sm:$0xf]
        %v859 = vld [vmem:[%s4 + $0x4] sm:$0xf]
        %v860 = vld [vmem:[%s4 + $0x8] sm:$0xf]
        %v861 = vld [vmem:[%s4 + $0xc] sm:$0xf]
        %v862 = vpack.c.bf16 %v857, %v857
        %v863 = vld [vmem:[#allocation5] sm:$0x1]
        %v865 = vlaneseq
        %v866 = vshrl.u32 %v865, 7
        %v867 = vsub.s32 0, %v866
        %v868 = vrot.slane %v863, %v867
        %v874 = vunpack.c.l.b16 %v858
        %v875 = vunpack.c.l.b16 %v859
        %v876 = vunpack.c.l.b16 %v860
        %v877 = vunpack.c.l.b16 %v861
        %v878 = vpack.c.b16 %v875, %v874
        %v879 = vpack.c.b16 %v877, %v876
        %vm882 = vcmask 261120
        %v884 = vsel %vm882, %v862, 0
        %886 = vmatprep.subr.bf16.mxu0 0
        %887 = vmatpush1.bf16.msra.mxu0 %v878
        %888 = vmatprep.subr.bf16.mxu0 0
        %889 = vmatpush1.bf16.msra.mxu0 %v879
        %890 = vmatprep.subr.bf16.mxu0 0
        %891 = vmatpush1.bf16.msra.mxu0 0
        %892 = vmatprep.subr.bf16.mxu0 0
        %893 = vmatpush1.bf16.msra.mxu0 0
        %894 = vmatprep.subr.bf16.mxu0 0
        %895 = vmatpush1.bf16.msra.mxu0 0
        %896 = vmatprep.subr.bf16.mxu0 0
        %897 = vmatpush1.bf16.msra.mxu0 0
        %898 = vmatprep.subr.bf16.mxu0 0
        %899 = vmatpush1.bf16.msra.mxu0 0
        %900 = vmatprep.subr.bf16.mxu0 0
        %901 = vmatpush1.bf16.msra.mxu0 0
        %902 = vmatprep.subr.bf16.mxu0 0
        %903 = vmatpush1.bf16.msra.mxu0 0
        %904 = vmatprep.subr.bf16.mxu0 0
        %905 = vmatpush1.bf16.msra.mxu0 0
        %906 = vmatprep.subr.bf16.mxu0 0
        %907 = vmatpush1.bf16.msra.mxu0 0
        %908 = vmatprep.subr.bf16.mxu0 0
        %909 = vmatpush1.bf16.msra.mxu0 0
        %910 = vmatprep.subr.bf16.mxu0 0
        %911 = vmatpush1.bf16.msra.mxu0 0
        %912 = vmatprep.subr.bf16.mxu0 0
        %913 = vmatpush1.bf16.msra.mxu0 0
        %914 = vmatprep.subr.bf16.mxu0 0
        %915 = vmatpush1.bf16.msra.mxu0 0
        %916 = vmatprep.subr.bf16.mxu0 0
        %917 = vmatpush1.bf16.msra.mxu0 0
        %918 = vmatprep.mubr.bf16.mxu0 0
        %919 = vmatmul.mubr.bf16.gmra.mrb[0].mxu0 %v884
        %v920 = vpop.f32.mrb[0].mxu0
        %v921 = vadd.f32 %v868, %v920
        %v922 = vpop.f32.mrb[0].mxu0
        %v923 = vpop.f32.mrb[0].mxu0
        %v924 = vpop.f32.mrb[0].mxu0
        %925 = vdwg.mxu0
        %v926 = vld [vmem:[#allocation2] sm:$0xff]
        %928 = vrot.lane.b32.xlu0 %v921, 120
        %v929 = vpop.permute.xlu0 %928
        %931 = vrot.lane.b32.xlu0 %v921, 112
        %v932 = vpop.permute.xlu0 %931
        %934 = vrot.lane.b32.xlu0 %v921, 104
        %v935 = vpop.permute.xlu0 %934
        %v937 = vcombine.low %v921, %v932
        %v938 = vcombine.high %v921, %v932
        %v940 = vunpack.c.l.s4 1983009808
        %v941 = vunpack.c.0.s8 %v940
        %v942 = vlaneseq
        %v943 = vshrl.u32 %v942, 7
        %v944 = vsub.s32 %v941, %v943
        %v945 = vrot.slane %v937, %v944
        %v947 = vunpack.c.l.s4 1983009808
        %v948 = vunpack.c.0.s8 %v947
        %v949 = vlaneseq
        %v950 = vshrl.u32 %v949, 7
        %v951 = vsub.s32 %v948, %v950
        %v952 = vrot.slane %v938, %v951
        %v953 = vcombine.low %v929, %v935
        %v954 = vcombine.high %v929, %v935
        %v956 = vunpack.c.l.s4 1983009808
        %v957 = vunpack.c.0.s8 %v956
        %v958 = vlaneseq
        %v959 = vshrl.u32 %v958, 7
        %v960 = vsub.s32 %v957, %v959
        %v961 = vrot.slane %v953, %v960
        %v963 = vunpack.c.l.s4 1983009808
        %v964 = vunpack.c.0.s8 %v963
        %v965 = vlaneseq
        %v966 = vshrl.u32 %v965, 7
        %v967 = vsub.s32 %v964, %v966
        %v968 = vrot.slane %v954, %v967
        %v969 = vcombine.low %v945, %v961
        %v970 = vcombine.high %v945, %v961
        %v972 = vunpack.c.l.s4 1934713408
        %v973 = vunpack.c.0.s8 %v972
        %v974 = vlaneseq
        %v975 = vshrl.u32 %v974, 7
        %v976 = vsub.s32 %v973, %v975
        %v977 = vrot.slane %v969, %v976
        %v979 = vunpack.c.l.s4 1934713408
        %v980 = vunpack.c.0.s8 %v979
        %v981 = vlaneseq
        %v982 = vshrl.u32 %v981, 7
        %v983 = vsub.s32 %v980, %v982
        %v984 = vrot.slane %v970, %v983
        %v985 = vcombine.low %v952, %v968
        %v986 = vcombine.high %v952, %v968
        %v988 = vunpack.c.l.s4 1934713408
        %v989 = vunpack.c.0.s8 %v988
        %v990 = vlaneseq
        %v991 = vshrl.u32 %v990, 7
        %v992 = vsub.s32 %v989, %v991
        %v993 = vrot.slane %v985, %v992
        %v995 = vunpack.c.l.s4 1934713408
        %v996 = vunpack.c.0.s8 %v995
        %v997 = vlaneseq
        %v998 = vshrl.u32 %v997, 7
        %v999 = vsub.s32 %v996, %v998
        %v1000 = vrot.slane %v986, %v999
        %v1001 = vcombine.high %v977, 0.0
        %v1002 = vcombine.high %v984, 0.0
        %v1003 = vcombine.high %v993, 0.0
        %v1004 = vcombine.high %v1000, 0.0
        %v1005 = vcombine.low %v977, %v984
        %v1007 = vunpack.c.l.s4 1983009808
        %v1008 = vunpack.c.0.s8 %v1007
        %v1009 = vlaneseq
        %v1010 = vshrl.u32 %v1009, 7
        %v1011 = vsub.s32 %v1008, %v1010
        %v1012 = vrot.slane %v1005, %v1011
        %v1013 = vcombine.low %v1001, %v1002
        %v1015 = vunpack.c.l.s4 1983009808
        %v1016 = vunpack.c.0.s8 %v1015
        %v1017 = vlaneseq
        %v1018 = vshrl.u32 %v1017, 7
        %v1019 = vsub.s32 %v1016, %v1018
        %v1020 = vrot.slane %v1013, %v1019
        %v1021 = vcombine.low %v993, %v1000
        %v1023 = vunpack.c.l.s4 1983009808
        %v1024 = vunpack.c.0.s8 %v1023
        %v1025 = vlaneseq
        %v1026 = vshrl.u32 %v1025, 7
        %v1027 = vsub.s32 %v1024, %v1026
        %v1028 = vrot.slane %v1021, %v1027
        %v1029 = vcombine.low %v1003, %v1004
        %v1031 = vunpack.c.l.s4 1983009808
        %v1032 = vunpack.c.0.s8 %v1031
        %v1033 = vlaneseq
        %v1034 = vshrl.u32 %v1033, 7
        %v1035 = vsub.s32 %v1032, %v1034
        %v1036 = vrot.slane %v1029, %v1035
        %v1037 = vcombine.low %v1012, %v1020
        %v1038 = vcombine.high %v1012, %v1020
        %v1040 = vunpack.c.l.s4 1934713408
        %v1041 = vunpack.c.0.s8 %v1040
        %v1042 = vlaneseq
        %v1043 = vshrl.u32 %v1042, 7
        %v1044 = vsub.s32 %v1041, %v1043
        %v1045 = vrot.slane %v1037, %v1044
        %v1047 = vunpack.c.l.s4 1934713408
        %v1048 = vunpack.c.0.s8 %v1047
        %v1049 = vlaneseq
        %v1050 = vshrl.u32 %v1049, 7
        %v1051 = vsub.s32 %v1048, %v1050
        %v1052 = vrot.slane %v1038, %v1051
        %v1053 = vcombine.low %v1028, %v1036
        %v1054 = vcombine.high %v1028, %v1036
        %v1056 = vunpack.c.l.s4 1934713408
        %v1057 = vunpack.c.0.s8 %v1056
        %v1058 = vlaneseq
        %v1059 = vshrl.u32 %v1058, 7
        %v1060 = vsub.s32 %v1057, %v1059
        %v1061 = vrot.slane %v1053, %v1060
        %v1063 = vunpack.c.l.s4 1934713408
        %v1064 = vunpack.c.0.s8 %v1063
        %v1065 = vlaneseq
        %v1066 = vshrl.u32 %v1065, 7
        %v1067 = vsub.s32 %v1064, %v1066
        %v1068 = vrot.slane %v1054, %v1067
        %v1069 = vcombine.low %v1045, %v1061
        %v1070 = vcombine.high %v1045, %v1061
        %v1071 = vcombine.low %v1052, %v1068
        %v1072 = vcombine.high %v1052, %v1068
        %1073 = vrot.lane.b32.xlu0 %v921, 96
        %v1074 = vpop.permute.xlu0 %1073
        %1075 = vrot.lane.b32.xlu0 %v929, 96
        %v1076 = vpop.permute.xlu0 %1075
        %1077 = vrot.lane.b32.xlu0 %v932, 96
        %v1078 = vpop.permute.xlu0 %1077
        %1079 = vrot.lane.b32.xlu0 %v935, 96
        %v1080 = vpop.permute.xlu0 %1079
        %v1085 = vcombine.low %v1074, %v1078
        %v1086 = vcombine.high %v1074, %v1078
        %v1088 = vunpack.c.l.s4 1983009808
        %v1089 = vunpack.c.0.s8 %v1088
        %v1090 = vlaneseq
        %v1091 = vshrl.u32 %v1090, 7
        %v1092 = vsub.s32 %v1089, %v1091
        %v1093 = vrot.slane %v1085, %v1092
        %v1095 = vunpack.c.l.s4 1983009808
        %v1096 = vunpack.c.0.s8 %v1095
        %v1097 = vlaneseq
        %v1098 = vshrl.u32 %v1097, 7
        %v1099 = vsub.s32 %v1096, %v1098
        %v1100 = vrot.slane %v1086, %v1099
        %v1101 = vcombine.low %v1076, %v1080
        %v1102 = vcombine.high %v1076, %v1080
        %v1104 = vunpack.c.l.s4 1983009808
        %v1105 = vunpack.c.0.s8 %v1104
        %v1106 = vlaneseq
        %v1107 = vshrl.u32 %v1106, 7
        %v1108 = vsub.s32 %v1105, %v1107
        %v1109 = vrot.slane %v1101, %v1108
        %v1111 = vunpack.c.l.s4 1983009808
        %v1112 = vunpack.c.0.s8 %v1111
        %v1113 = vlaneseq
        %v1114 = vshrl.u32 %v1113, 7
        %v1115 = vsub.s32 %v1112, %v1114
        %v1116 = vrot.slane %v1102, %v1115
        %v1117 = vcombine.low %v1093, %v1109
        %v1118 = vcombine.high %v1093, %v1109
        %v1120 = vunpack.c.l.s4 1934713408
        %v1121 = vunpack.c.0.s8 %v1120
        %v1122 = vlaneseq
        %v1123 = vshrl.u32 %v1122, 7
        %v1124 = vsub.s32 %v1121, %v1123
        %v1125 = vrot.slane %v1117, %v1124
        %v1127 = vunpack.c.l.s4 1934713408
        %v1128 = vunpack.c.0.s8 %v1127
        %v1129 = vlaneseq
        %v1130 = vshrl.u32 %v1129, 7
        %v1131 = vsub.s32 %v1128, %v1130
        %v1132 = vrot.slane %v1118, %v1131
        %v1133 = vcombine.low %v1100, %v1116
        %v1134 = vcombine.high %v1100, %v1116
        %v1136 = vunpack.c.l.s4 1934713408
        %v1137 = vunpack.c.0.s8 %v1136
        %v1138 = vlaneseq
        %v1139 = vshrl.u32 %v1138, 7
        %v1140 = vsub.s32 %v1137, %v1139
        %v1141 = vrot.slane %v1133, %v1140
        %v1143 = vunpack.c.l.s4 1934713408
        %v1144 = vunpack.c.0.s8 %v1143
        %v1145 = vlaneseq
        %v1146 = vshrl.u32 %v1145, 7
        %v1147 = vsub.s32 %v1144, %v1146
        %v1148 = vrot.slane %v1134, %v1147
        %v1149 = vcombine.high %v1125, 0.0
        %v1150 = vcombine.high %v1132, 0.0
        %v1151 = vcombine.high %v1141, 0.0
        %v1152 = vcombine.high %v1148, 0.0
        %v1153 = vcombine.low %v1125, %v1132
        %v1155 = vunpack.c.l.s4 1983009808
        %v1156 = vunpack.c.0.s8 %v1155
        %v1157 = vlaneseq
        %v1158 = vshrl.u32 %v1157, 7
        %v1159 = vsub.s32 %v1156, %v1158
        %v1160 = vrot.slane %v1153, %v1159
        %v1161 = vcombine.low %v1149, %v1150
        %v1163 = vunpack.c.l.s4 1983009808
        %v1164 = vunpack.c.0.s8 %v1163
        %v1165 = vlaneseq
        %v1166 = vshrl.u32 %v1165, 7
        %v1167 = vsub.s32 %v1164, %v1166
        %v1168 = vrot.slane %v1161, %v1167
        %v1169 = vcombine.low %v1141, %v1148
        %v1171 = vunpack.c.l.s4 1983009808
        %v1172 = vunpack.c.0.s8 %v1171
        %v1173 = vlaneseq
        %v1174 = vshrl.u32 %v1173, 7
        %v1175 = vsub.s32 %v1172, %v1174
        %v1176 = vrot.slane %v1169, %v1175
        %v1177 = vcombine.low %v1151, %v1152
        %v1179 = vunpack.c.l.s4 1983009808
        %v1180 = vunpack.c.0.s8 %v1179
        %v1181 = vlaneseq
        %v1182 = vshrl.u32 %v1181, 7
        %v1183 = vsub.s32 %v1180, %v1182
        %v1184 = vrot.slane %v1177, %v1183
        %v1185 = vcombine.low %v1160, %v1168
        %v1186 = vcombine.high %v1160, %v1168
        %v1188 = vunpack.c.l.s4 1934713408
        %v1189 = vunpack.c.0.s8 %v1188
        %v1190 = vlaneseq
        %v1191 = vshrl.u32 %v1190, 7
        %v1192 = vsub.s32 %v1189, %v1191
        %v1193 = vrot.slane %v1185, %v1192
        %v1195 = vunpack.c.l.s4 1934713408
        %v1196 = vunpack.c.0.s8 %v1195
        %v1197 = vlaneseq
        %v1198 = vshrl.u32 %v1197, 7
        %v1199 = vsub.s32 %v1196, %v1198
        %v1200 = vrot.slane %v1186, %v1199
        %v1201 = vcombine.low %v1176, %v1184
        %v1202 = vcombine.high %v1176, %v1184
        %v1204 = vunpack.c.l.s4 1934713408
        %v1205 = vunpack.c.0.s8 %v1204
        %v1206 = vlaneseq
        %v1207 = vshrl.u32 %v1206, 7
        %v1208 = vsub.s32 %v1205, %v1207
        %v1209 = vrot.slane %v1201, %v1208
        %v1211 = vunpack.c.l.s4 1934713408
        %v1212 = vunpack.c.0.s8 %v1211
        %v1213 = vlaneseq
        %v1214 = vshrl.u32 %v1213, 7
        %v1215 = vsub.s32 %v1212, %v1214
        %v1216 = vrot.slane %v1202, %v1215
        %v1217 = vcombine.low %v1193, %v1209
        %v1218 = vcombine.high %v1193, %v1209
        %v1219 = vcombine.low %v1200, %v1216
        %v1220 = vcombine.high %v1200, %v1216
        %1221 = vrot.lane.b32.xlu0 %v921, 64
        %v1222 = vpop.permute.xlu0 %1221
        %1223 = vrot.lane.b32.xlu0 %v929, 64
        %v1224 = vpop.permute.xlu0 %1223
        %1225 = vrot.lane.b32.xlu0 %v932, 64
        %v1226 = vpop.permute.xlu0 %1225
        %1227 = vrot.lane.b32.xlu0 %v935, 64
        %v1228 = vpop.permute.xlu0 %1227
        %v1233 = vcombine.low %v1222, %v1226
        %v1234 = vcombine.high %v1222, %v1226
        %v1236 = vunpack.c.l.s4 1983009808
        %v1237 = vunpack.c.0.s8 %v1236
        %v1238 = vlaneseq
        %v1239 = vshrl.u32 %v1238, 7
        %v1240 = vsub.s32 %v1237, %v1239
        %v1241 = vrot.slane %v1233, %v1240
        %v1243 = vunpack.c.l.s4 1983009808
        %v1244 = vunpack.c.0.s8 %v1243
        %v1245 = vlaneseq
        %v1246 = vshrl.u32 %v1245, 7
        %v1247 = vsub.s32 %v1244, %v1246
        %v1248 = vrot.slane %v1234, %v1247
        %v1249 = vcombine.low %v1224, %v1228
        %v1250 = vcombine.high %v1224, %v1228
        %v1252 = vunpack.c.l.s4 1983009808
        %v1253 = vunpack.c.0.s8 %v1252
        %v1254 = vlaneseq
        %v1255 = vshrl.u32 %v1254, 7
        %v1256 = vsub.s32 %v1253, %v1255
        %v1257 = vrot.slane %v1249, %v1256
        %v1259 = vunpack.c.l.s4 1983009808
        %v1260 = vunpack.c.0.s8 %v1259
        %v1261 = vlaneseq
        %v1262 = vshrl.u32 %v1261, 7
        %v1263 = vsub.s32 %v1260, %v1262
        %v1264 = vrot.slane %v1250, %v1263
        %v1265 = vcombine.low %v1241, %v1257
        %v1266 = vcombine.high %v1241, %v1257
        %v1268 = vunpack.c.l.s4 1934713408
        %v1269 = vunpack.c.0.s8 %v1268
        %v1270 = vlaneseq
        %v1271 = vshrl.u32 %v1270, 7
        %v1272 = vsub.s32 %v1269, %v1271
        %v1273 = vrot.slane %v1265, %v1272
        %v1275 = vunpack.c.l.s4 1934713408
        %v1276 = vunpack.c.0.s8 %v1275
        %v1277 = vlaneseq
        %v1278 = vshrl.u32 %v1277, 7
        %v1279 = vsub.s32 %v1276, %v1278
        %v1280 = vrot.slane %v1266, %v1279
        %v1281 = vcombine.low %v1248, %v1264
        %v1282 = vcombine.high %v1248, %v1264
        %v1284 = vunpack.c.l.s4 1934713408
        %v1285 = vunpack.c.0.s8 %v1284
        %v1286 = vlaneseq
        %v1287 = vshrl.u32 %v1286, 7
        %v1288 = vsub.s32 %v1285, %v1287
        %v1289 = vrot.slane %v1281, %v1288
        %v1291 = vunpack.c.l.s4 1934713408
        %v1292 = vunpack.c.0.s8 %v1291
        %v1293 = vlaneseq
        %v1294 = vshrl.u32 %v1293, 7
        %v1295 = vsub.s32 %v1292, %v1294
        %v1296 = vrot.slane %v1282, %v1295
        %v1297 = vcombine.high %v1273, 0.0
        %v1298 = vcombine.high %v1280, 0.0
        %v1299 = vcombine.high %v1289, 0.0
        %v1300 = vcombine.high %v1296, 0.0
        %v1301 = vcombine.low %v1273, %v1280
        %v1303 = vunpack.c.l.s4 1983009808
        %v1304 = vunpack.c.0.s8 %v1303
        %v1305 = vlaneseq
        %v1306 = vshrl.u32 %v1305, 7
        %v1307 = vsub.s32 %v1304, %v1306
        %v1308 = vrot.slane %v1301, %v1307
        %v1309 = vcombine.low %v1297, %v1298
        %v1311 = vunpack.c.l.s4 1983009808
        %v1312 = vunpack.c.0.s8 %v1311
        %v1313 = vlaneseq
        %v1314 = vshrl.u32 %v1313, 7
        %v1315 = vsub.s32 %v1312, %v1314
        %v1316 = vrot.slane %v1309, %v1315
        %v1317 = vcombine.low %v1289, %v1296
        %v1319 = vunpack.c.l.s4 1983009808
        %v1320 = vunpack.c.0.s8 %v1319
        %v1321 = vlaneseq
        %v1322 = vshrl.u32 %v1321, 7
        %v1323 = vsub.s32 %v1320, %v1322
        %v1324 = vrot.slane %v1317, %v1323
        %v1325 = vcombine.low %v1299, %v1300
        %v1327 = vunpack.c.l.s4 1983009808
        %v1328 = vunpack.c.0.s8 %v1327
        %v1329 = vlaneseq
        %v1330 = vshrl.u32 %v1329, 7
        %v1331 = vsub.s32 %v1328, %v1330
        %v1332 = vrot.slane %v1325, %v1331
        %v1333 = vcombine.low %v1308, %v1316
        %v1334 = vcombine.high %v1308, %v1316
        %v1336 = vunpack.c.l.s4 1934713408
        %v1337 = vunpack.c.0.s8 %v1336
        %v1338 = vlaneseq
        %v1339 = vshrl.u32 %v1338, 7
        %v1340 = vsub.s32 %v1337, %v1339
        %v1341 = vrot.slane %v1333, %v1340
        %v1343 = vunpack.c.l.s4 1934713408
        %v1344 = vunpack.c.0.s8 %v1343
        %v1345 = vlaneseq
        %v1346 = vshrl.u32 %v1345, 7
        %v1347 = vsub.s32 %v1344, %v1346
        %v1348 = vrot.slane %v1334, %v1347
        %v1349 = vcombine.low %v1324, %v1332
        %v1350 = vcombine.high %v1324, %v1332
        %v1352 = vunpack.c.l.s4 1934713408
        %v1353 = vunpack.c.0.s8 %v1352
        %v1354 = vlaneseq
        %v1355 = vshrl.u32 %v1354, 7
        %v1356 = vsub.s32 %v1353, %v1355
        %v1357 = vrot.slane %v1349, %v1356
        %v1359 = vunpack.c.l.s4 1934713408
        %v1360 = vunpack.c.0.s8 %v1359
        %v1361 = vlaneseq
        %v1362 = vshrl.u32 %v1361, 7
        %v1363 = vsub.s32 %v1360, %v1362
        %v1364 = vrot.slane %v1350, %v1363
        %v1365 = vcombine.low %v1341, %v1357
        %v1366 = vcombine.high %v1341, %v1357
        %v1367 = vcombine.low %v1348, %v1364
        %v1368 = vcombine.high %v1348, %v1364
        %v1369 = vpack.c.bf16 %v1069, %v1069
        %v1370 = vpack.c.bf16 %v1070, %v1070
        %v1371 = vpack.c.bf16 %v1071, %v1071
        %v1372 = vpack.c.bf16 %v1072, %v1072
        %v1373 = vpack.c.bf16 %v1217, %v1217
        %v1374 = vpack.c.bf16 %v1218, %v1218
        %v1375 = vpack.c.bf16 %v1219, %v1219
        %v1376 = vpack.c.bf16 %v1220, %v1220
        %vm1377 = vcmask 64512
        %v1379 = vsel %vm1377, %v1369, 0
        %v1382 = vsel %vm1377, %v1373, 0
        %1384 = vmatprep.subr.bf16.mxu0 0
        %1385 = vmatpush1.bf16.xpose.msra.mxu0 %v1382
        %1386 = vmatprep.subr.bf16.mxu0 0
        %1387 = vmatpush1.bf16.xpose.msra.mxu0 0
        %1388 = vmatprep.subr.bf16.mxu0 0
        %1389 = vmatpush1.bf16.xpose.msra.mxu0 0
        %1390 = vmatprep.subr.bf16.mxu0 0
        %1391 = vmatpush1.bf16.xpose.msra.mxu0 0
        %1392 = vmatprep.subr.bf16.mxu0 0
        %1393 = vmatpush1.bf16.xpose.msra.mxu0 0
        %1394 = vmatprep.subr.bf16.mxu0 0
        %1395 = vmatpush1.bf16.xpose.msra.mxu0 0
        %1396 = vmatprep.subr.bf16.mxu0 0
        %1397 = vmatpush1.bf16.xpose.msra.mxu0 0
        %1398 = vmatprep.subr.bf16.mxu0 0
        %1399 = vmatpush1.bf16.xpose.msra.mxu0 0
        %1400 = vmatprep.subr.bf16.mxu0 0
        %1401 = vmatpush1.bf16.xpose.msra.mxu0 0
        %1402 = vmatprep.subr.bf16.mxu0 0
        %1403 = vmatpush1.bf16.xpose.msra.mxu0 0
        %1404 = vmatprep.subr.bf16.mxu0 0
        %1405 = vmatpush1.bf16.xpose.msra.mxu0 0
        %1406 = vmatprep.subr.bf16.mxu0 0
        %1407 = vmatpush1.bf16.xpose.msra.mxu0 0
        %1408 = vmatprep.subr.bf16.mxu0 0
        %1409 = vmatpush1.bf16.xpose.msra.mxu0 0
        %1410 = vmatprep.subr.bf16.mxu0 0
        %1411 = vmatpush1.bf16.xpose.msra.mxu0 0
        %1412 = vmatprep.subr.bf16.mxu0 0
        %1413 = vmatpush1.bf16.xpose.msra.mxu0 0
        %1414 = vmatprep.subr.bf16.mxu0 0
        %1415 = vmatpush1.bf16.xpose.msra.mxu0 0
        %1416 = vmatprep.mubr.bf16.mxu0 0
        %1417 = vmatmul.mubr.bf16.gmra.mrb[0].mxu0 %v1379
        %v1418 = vpop.f32.mrb[0].mxu0
        %v1419 = vadd.f32 0.0, %v1418
        %v1420 = vpop.f32.mrb[0].mxu0
        %v1421 = vpop.f32.mrb[0].mxu0
        %v1422 = vpop.f32.mrb[0].mxu0
        %1423 = vdwg.mxu0
        %v1425 = vsel %vm1377, %v1370, 0
        %v1428 = vsel %vm1377, %v1374, 0
        %1430 = vmatprep.subr.bf16.mxu0 0
        %1431 = vmatpush1.bf16.xpose.msra.mxu0 %v1428
        %1432 = vmatprep.subr.bf16.mxu0 0
        %1433 = vmatpush1.bf16.xpose.msra.mxu0 0
        %1434 = vmatprep.subr.bf16.mxu0 0
        %1435 = vmatpush1.bf16.xpose.msra.mxu0 0
        %1436 = vmatprep.subr.bf16.mxu0 0
        %1437 = vmatpush1.bf16.xpose.msra.mxu0 0
        %1438 = vmatprep.subr.bf16.mxu0 0
        %1439 = vmatpush1.bf16.xpose.msra.mxu0 0
        %1440 = vmatprep.subr.bf16.mxu0 0
        %1441 = vmatpush1.bf16.xpose.msra.mxu0 0
        %1442 = vmatprep.subr.bf16.mxu0 0
        %1443 = vmatpush1.bf16.xpose.msra.mxu0 0
        %1444 = vmatprep.subr.bf16.mxu0 0
        %1445 = vmatpush1.bf16.xpose.msra.mxu0 0
        %1446 = vmatprep.subr.bf16.mxu0 0
        %1447 = vmatpush1.bf16.xpose.msra.mxu0 0
        %1448 = vmatprep.subr.bf16.mxu0 0
        %1449 = vmatpush1.bf16.xpose.msra.mxu0 0
        %1450 = vmatprep.subr.bf16.mxu0 0
        %1451 = vmatpush1.bf16.xpose.msra.mxu0 0
        %1452 = vmatprep.subr.bf16.mxu0 0
        %1453 = vmatpush1.bf16.xpose.msra.mxu0 0
        %1454 = vmatprep.subr.bf16.mxu0 0
        %1455 = vmatpush1.bf16.xpose.msra.mxu0 0
        %1456 = vmatprep.subr.bf16.mxu0 0
        %1457 = vmatpush1.bf16.xpose.msra.mxu0 0
        %1458 = vmatprep.subr.bf16.mxu0 0
        %1459 = vmatpush1.bf16.xpose.msra.mxu0 0
        %1460 = vmatprep.subr.bf16.mxu0 0
        %1461 = vmatpush1.bf16.xpose.msra.mxu0 0
        %1462 = vmatprep.mubr.bf16.mxu0 0
        %1463 = vmatmul.mubr.bf16.gmra.mrb[0].mxu0 %v1425
        %v1464 = vpop.f32.mrb[0].mxu0
        %v1465 = vadd.f32 0.0, %v1464
        %v1466 = vpop.f32.mrb[0].mxu0
        %v1467 = vpop.f32.mrb[0].mxu0
        %v1468 = vpop.f32.mrb[0].mxu0
        %1469 = vdwg.mxu0
        %v1471 = vsel %vm1377, %v1371, 0
        %v1474 = vsel %vm1377, %v1375, 0
        %1476 = vmatprep.subr.bf16.mxu0 0
        %1477 = vmatpush1.bf16.xpose.msra.mxu0 %v1474
        %1478 = vmatprep.subr.bf16.mxu0 0
        %1479 = vmatpush1.bf16.xpose.msra.mxu0 0
        %1480 = vmatprep.subr.bf16.mxu0 0
        %1481 = vmatpush1.bf16.xpose.msra.mxu0 0
        %1482 = vmatprep.subr.bf16.mxu0 0
        %1483 = vmatpush1.bf16.xpose.msra.mxu0 0
        %1484 = vmatprep.subr.bf16.mxu0 0
        %1485 = vmatpush1.bf16.xpose.msra.mxu0 0
        %1486 = vmatprep.subr.bf16.mxu0 0
        %1487 = vmatpush1.bf16.xpose.msra.mxu0 0
        %1488 = vmatprep.subr.bf16.mxu0 0
        %1489 = vmatpush1.bf16.xpose.msra.mxu0 0
        %1490 = vmatprep.subr.bf16.mxu0 0
        %1491 = vmatpush1.bf16.xpose.msra.mxu0 0
        %1492 = vmatprep.subr.bf16.mxu0 0
        %1493 = vmatpush1.bf16.xpose.msra.mxu0 0
        %1494 = vmatprep.subr.bf16.mxu0 0
        %1495 = vmatpush1.bf16.xpose.msra.mxu0 0
        %1496 = vmatprep.subr.bf16.mxu0 0
        %1497 = vmatpush1.bf16.xpose.msra.mxu0 0
        %1498 = vmatprep.subr.bf16.mxu0 0
        %1499 = vmatpush1.bf16.xpose.msra.mxu0 0
        %1500 = vmatprep.subr.bf16.mxu0 0
        %1501 = vmatpush1.bf16.xpose.msra.mxu0 0
        %1502 = vmatprep.subr.bf16.mxu0 0
        %1503 = vmatpush1.bf16.xpose.msra.mxu0 0
        %1504 = vmatprep.subr.bf16.mxu0 0
        %1505 = vmatpush1.bf16.xpose.msra.mxu0 0
        %1506 = vmatprep.subr.bf16.mxu0 0
        %1507 = vmatpush1.bf16.xpose.msra.mxu0 0
        %1508 = vmatprep.mubr.bf16.mxu0 0
        %1509 = vmatmul.mubr.bf16.gmra.mrb[0].mxu0 %v1471
        %v1510 = vpop.f32.mrb[0].mxu0
        %v1511 = vadd.f32 0.0, %v1510
        %v1512 = vpop.f32.mrb[0].mxu0
        %v1513 = vpop.f32.mrb[0].mxu0
        %v1514 = vpop.f32.mrb[0].mxu0
        %1515 = vdwg.mxu0
        %v1517 = vsel %vm1377, %v1372, 0
        %v1520 = vsel %vm1377, %v1376, 0
        %1522 = vmatprep.subr.bf16.mxu0 0
        %1523 = vmatpush1.bf16.xpose.msra.mxu0 %v1520
        %1524 = vmatprep.subr.bf16.mxu0 0
        %1525 = vmatpush1.bf16.xpose.msra.mxu0 0
        %1526 = vmatprep.subr.bf16.mxu0 0
        %1527 = vmatpush1.bf16.xpose.msra.mxu0 0
        %1528 = vmatprep.subr.bf16.mxu0 0
        %1529 = vmatpush1.bf16.xpose.msra.mxu0 0
        %1530 = vmatprep.subr.bf16.mxu0 0
        %1531 = vmatpush1.bf16.xpose.msra.mxu0 0
        %1532 = vmatprep.subr.bf16.mxu0 0
        %1533 = vmatpush1.bf16.xpose.msra.mxu0 0
        %1534 = vmatprep.subr.bf16.mxu0 0
        %1535 = vmatpush1.bf16.xpose.msra.mxu0 0
        %1536 = vmatprep.subr.bf16.mxu0 0
        %1537 = vmatpush1.bf16.xpose.msra.mxu0 0
        %1538 = vmatprep.subr.bf16.mxu0 0
        %1539 = vmatpush1.bf16.xpose.msra.mxu0 0
        %1540 = vmatprep.subr.bf16.mxu0 0
        %1541 = vmatpush1.bf16.xpose.msra.mxu0 0
        %1542 = vmatprep.subr.bf16.mxu0 0
        %1543 = vmatpush1.bf16.xpose.msra.mxu0 0
        %1544 = vmatprep.subr.bf16.mxu0 0
        %1545 = vmatpush1.bf16.xpose.msra.mxu0 0
        %1546 = vmatprep.subr.bf16.mxu0 0
        %1547 = vmatpush1.bf16.xpose.msra.mxu0 0
        %1548 = vmatprep.subr.bf16.mxu0 0
        %1549 = vmatpush1.bf16.xpose.msra.mxu0 0
        %1550 = vmatprep.subr.bf16.mxu0 0
        %1551 = vmatpush1.bf16.xpose.msra.mxu0 0
        %1552 = vmatprep.subr.bf16.mxu0 0
        %1553 = vmatpush1.bf16.xpose.msra.mxu0 0
        %1554 = vmatprep.mubr.bf16.mxu0 0
        %1555 = vmatmul.mubr.bf16.gmra.mrb[0].mxu0 %v1517
        %v1556 = vpop.f32.mrb[0].mxu0
        %v1557 = vadd.f32 0.0, %v1556
        %v1558 = vpop.f32.mrb[0].mxu0
        %v1559 = vpop.f32.mrb[0].mxu0
        %v1560 = vpop.f32.mrb[0].mxu0
        %1561 = vdwg.mxu0
        %v1562 = vmul.f32 %v1419, 0.35355338
        %v1563 = vmul.f32 %v1465, 0.35355338
        %v1564 = vmul.f32 %v1511, 0.35355338
        %v1565 = vmul.f32 %v1557, 0.35355338
        %v1566 = vadd.f32 %v1562, %v926
        %v1567 = vadd.f32 %v1563, %v926
        %v1568 = vadd.f32 %v1564, %v926
        %v1569 = vadd.f32 %v1565, %v926
        %v1570 = vsel %vm1377, %v1566, -inf
        %1571 = vmax.xlane.f32.xlu0 %v1570
        %v1572 = vpop.xlane.xlu0 %1571
        %v1573 = vsel %vm1377, %v1567, -inf
        %1574 = vmax.xlane.f32.xlu0 %v1573
        %v1575 = vpop.xlane.xlu0 %1574
        %v1576 = vsel %vm1377, %v1568, -inf
        %1577 = vmax.xlane.f32.xlu0 %v1576
        %v1578 = vpop.xlane.xlu0 %1577
        %v1579 = vsel %vm1377, %v1569, -inf
        %1580 = vmax.xlane.f32.xlu0 %v1579
        %v1581 = vpop.xlane.xlu0 %1580
        %v1582 = vsub.f32 %v1566, %v1572
        %v1583 = vsub.f32 %v1567, %v1575
        %v1584 = vsub.f32 %v1568, %v1578
        %v1585 = vsub.f32 %v1569, %v1581
        %v1586 = vmul.f32 %v1582, 1.442695
        %v1587 = vpow.pop %v1586
        %v1588 = vmul.f32 %v1583, 1.442695
        %v1589 = vpow.pop %v1588
        %v1590 = vmul.f32 %v1584, 1.442695
        %v1591 = vpow.pop %v1590
        %v1592 = vmul.f32 %v1585, 1.442695
        %v1593 = vpow.pop %v1592
        %v1594 = vsel %vm1377, %v1587, 0.0
        %1595 = vadd.xlane.f32.xlu0 %v1594
        %v1596 = vpop.xlane.xlu0 %1595
        %v1597 = vsel %vm1377, %v1589, 0.0
        %1598 = vadd.xlane.f32.xlu0 %v1597
        %v1599 = vpop.xlane.xlu0 %1598
        %v1600 = vsel %vm1377, %v1591, 0.0
        %1601 = vadd.xlane.f32.xlu0 %v1600
        %v1602 = vpop.xlane.xlu0 %1601
        %v1603 = vsel %vm1377, %v1593, 0.0
        %1604 = vadd.xlane.f32.xlu0 %v1603
        %v1605 = vpop.xlane.xlu0 %1604
        %v1606 = vrcp.pop %v1596
        %v1607 = vmul.f32 %v1587, %v1606
        %v1608 = vrcp.pop %v1599
        %v1609 = vmul.f32 %v1589, %v1608
        %v1610 = vrcp.pop %v1602
        %v1611 = vmul.f32 %v1591, %v1610
        %v1612 = vrcp.pop %v1605
        %v1613 = vmul.f32 %v1593, %v1612
        %v1614 = vpack.c.bf16 %v1607, %v1607
        %v1615 = vpack.c.bf16 %v1609, %v1609
        %v1616 = vpack.c.bf16 %v1611, %v1611
        %v1617 = vpack.c.bf16 %v1613, %v1613
        %v1618 = vpack.c.bf16 %v1365, %v1365
        %v1619 = vpack.c.bf16 %v1366, %v1366
        %v1620 = vpack.c.bf16 %v1367, %v1367
        %v1621 = vpack.c.bf16 %v1368, %v1368
        %v1623 = vsel %vm1377, %v1614, 0
        %vm1625 = vcmask 1043456
        %v1627 = vsel %vm1625, %v1618, 0
        %1629 = vmatprep.subr.bf16.mxu0 0
        %1630 = vmatpush1.bf16.msra.mxu0 %v1627
        %1631 = vmatprep.subr.bf16.mxu0 0
        %1632 = vmatpush1.bf16.msra.mxu0 0
        %1633 = vmatprep.subr.bf16.mxu0 0
        %1634 = vmatpush1.bf16.msra.mxu0 0
        %1635 = vmatprep.subr.bf16.mxu0 0
        %1636 = vmatpush1.bf16.msra.mxu0 0
        %1637 = vmatprep.subr.bf16.mxu0 0
        %1638 = vmatpush1.bf16.msra.mxu0 0
        %1639 = vmatprep.subr.bf16.mxu0 0
        %1640 = vmatpush1.bf16.msra.mxu0 0
        %1641 = vmatprep.subr.bf16.mxu0 0
        %1642 = vmatpush1.bf16.msra.mxu0 0
        %1643 = vmatprep.subr.bf16.mxu0 0
        %1644 = vmatpush1.bf16.msra.mxu0 0
        %1645 = vmatprep.subr.bf16.mxu0 0
        %1646 = vmatpush1.bf16.msra.mxu0 0
        %1647 = vmatprep.subr.bf16.mxu0 0
        %1648 = vmatpush1.bf16.msra.mxu0 0
        %1649 = vmatprep.subr.bf16.mxu0 0
        %1650 = vmatpush1.bf16.msra.mxu0 0
        %1651 = vmatprep.subr.bf16.mxu0 0
        %1652 = vmatpush1.bf16.msra.mxu0 0
        %1653 = vmatprep.subr.bf16.mxu0 0
        %1654 = vmatpush1.bf16.msra.mxu0 0
        %1655 = vmatprep.subr.bf16.mxu0 0
        %1656 = vmatpush1.bf16.msra.mxu0 0
        %1657 = vmatprep.subr.bf16.mxu0 0
        %1658 = vmatpush1.bf16.msra.mxu0 0
        %1659 = vmatprep.subr.bf16.mxu0 0
        %1660 = vmatpush1.bf16.msra.mxu0 0
        %1661 = vmatprep.mubr.bf16.mxu0 0
        %1662 = vmatmul.mubr.bf16.gmra.mrb[0].mxu0 %v1623
        %v1663 = vpop.f32.mrb[0].mxu0
        %v1664 = vadd.f32 0.0, %v1663
        %v1665 = vpop.f32.mrb[0].mxu0
        %v1666 = vpop.f32.mrb[0].mxu0
        %v1667 = vpop.f32.mrb[0].mxu0
        %1668 = vdwg.mxu0
        %v1670 = vsel %vm1377, %v1615, 0
        %v1673 = vsel %vm1625, %v1619, 0
        %1675 = vmatprep.subr.bf16.mxu0 0
        %1676 = vmatpush1.bf16.msra.mxu0 %v1673
        %1677 = vmatprep.subr.bf16.mxu0 0
        %1678 = vmatpush1.bf16.msra.mxu0 0
        %1679 = vmatprep.subr.bf16.mxu0 0
        %1680 = vmatpush1.bf16.msra.mxu0 0
        %1681 = vmatprep.subr.bf16.mxu0 0
        %1682 = vmatpush1.bf16.msra.mxu0 0
        %1683 = vmatprep.subr.bf16.mxu0 0
        %1684 = vmatpush1.bf16.msra.mxu0 0
        %1685 = vmatprep.subr.bf16.mxu0 0
        %1686 = vmatpush1.bf16.msra.mxu0 0
        %1687 = vmatprep.subr.bf16.mxu0 0
        %1688 = vmatpush1.bf16.msra.mxu0 0
        %1689 = vmatprep.subr.bf16.mxu0 0
        %1690 = vmatpush1.bf16.msra.mxu0 0
        %1691 = vmatprep.subr.bf16.mxu0 0
        %1692 = vmatpush1.bf16.msra.mxu0 0
        %1693 = vmatprep.subr.bf16.mxu0 0
        %1694 = vmatpush1.bf16.msra.mxu0 0
        %1695 = vmatprep.subr.bf16.mxu0 0
        %1696 = vmatpush1.bf16.msra.mxu0 0
        %1697 = vmatprep.subr.bf16.mxu0 0
        %1698 = vmatpush1.bf16.msra.mxu0 0
        %1699 = vmatprep.subr.bf16.mxu0 0
        %1700 = vmatpush1.bf16.msra.mxu0 0
        %1701 = vmatprep.subr.bf16.mxu0 0
        %1702 = vmatpush1.bf16.msra.mxu0 0
        %1703 = vmatprep.subr.bf16.mxu0 0
        %1704 = vmatpush1.bf16.msra.mxu0 0
        %1705 = vmatprep.subr.bf16.mxu0 0
        %1706 = vmatpush1.bf16.msra.mxu0 0
        %1707 = vmatprep.mubr.bf16.mxu0 0
        %1708 = vmatmul.mubr.bf16.gmra.mrb[0].mxu0 %v1670
        %v1709 = vpop.f32.mrb[0].mxu0
        %v1710 = vadd.f32 0.0, %v1709
        %v1711 = vpop.f32.mrb[0].mxu0
        %v1712 = vpop.f32.mrb[0].mxu0
        %v1713 = vpop.f32.mrb[0].mxu0
        %1714 = vdwg.mxu0
        %v1716 = vsel %vm1377, %v1616, 0
        %v1719 = vsel %vm1625, %v1620, 0
        %1721 = vmatprep.subr.bf16.mxu0 0
        %1722 = vmatpush1.bf16.msra.mxu0 %v1719
        %1723 = vmatprep.subr.bf16.mxu0 0
        %1724 = vmatpush1.bf16.msra.mxu0 0
        %1725 = vmatprep.subr.bf16.mxu0 0
        %1726 = vmatpush1.bf16.msra.mxu0 0
        %1727 = vmatprep.subr.bf16.mxu0 0
        %1728 = vmatpush1.bf16.msra.mxu0 0
        %1729 = vmatprep.subr.bf16.mxu0 0
        %1730 = vmatpush1.bf16.msra.mxu0 0
        %1731 = vmatprep.subr.bf16.mxu0 0
        %1732 = vmatpush1.bf16.msra.mxu0 0
        %1733 = vmatprep.subr.bf16.mxu0 0
        %1734 = vmatpush1.bf16.msra.mxu0 0
        %1735 = vmatprep.subr.bf16.mxu0 0
        %1736 = vmatpush1.bf16.msra.mxu0 0
        %1737 = vmatprep.subr.bf16.mxu0 0
        %1738 = vmatpush1.bf16.msra.mxu0 0
        %1739 = vmatprep.subr.bf16.mxu0 0
        %1740 = vmatpush1.bf16.msra.mxu0 0
        %1741 = vmatprep.subr.bf16.mxu0 0
        %1742 = vmatpush1.bf16.msra.mxu0 0
        %1743 = vmatprep.subr.bf16.mxu0 0
        %1744 = vmatpush1.bf16.msra.mxu0 0
        %1745 = vmatprep.subr.bf16.mxu0 0
        %1746 = vmatpush1.bf16.msra.mxu0 0
        %1747 = vmatprep.subr.bf16.mxu0 0
        %1748 = vmatpush1.bf16.msra.mxu0 0
        %1749 = vmatprep.subr.bf16.mxu0 0
        %1750 = vmatpush1.bf16.msra.mxu0 0
        %1751 = vmatprep.subr.bf16.mxu0 0
        %1752 = vmatpush1.bf16.msra.mxu0 0
        %1753 = vmatprep.mubr.bf16.mxu0 0
        %1754 = vmatmul.mubr.bf16.gmra.mrb[0].mxu0 %v1716
        %v1755 = vpop.f32.mrb[0].mxu0
        %v1756 = vadd.f32 0.0, %v1755
        %v1757 = vpop.f32.mrb[0].mxu0
        %v1758 = vpop.f32.mrb[0].mxu0
        %v1759 = vpop.f32.mrb[0].mxu0
        %1760 = vdwg.mxu0
        %v1762 = vsel %vm1377, %v1617, 0
        %v1765 = vsel %vm1625, %v1621, 0
        %1767 = vmatprep.subr.bf16.mxu0 0
        %1768 = vmatpush1.bf16.msra.mxu0 %v1765
        %1769 = vmatprep.subr.bf16.mxu0 0
        %1770 = vmatpush1.bf16.msra.mxu0 0
        %1771 = vmatprep.subr.bf16.mxu0 0
        %1772 = vmatpush1.bf16.msra.mxu0 0
        %1773 = vmatprep.subr.bf16.mxu0 0
        %1774 = vmatpush1.bf16.msra.mxu0 0
        %1775 = vmatprep.subr.bf16.mxu0 0
        %1776 = vmatpush1.bf16.msra.mxu0 0
        %1777 = vmatprep.subr.bf16.mxu0 0
        %1778 = vmatpush1.bf16.msra.mxu0 0
        %1779 = vmatprep.subr.bf16.mxu0 0
        %1780 = vmatpush1.bf16.msra.mxu0 0
        %1781 = vmatprep.subr.bf16.mxu0 0
        %1782 = vmatpush1.bf16.msra.mxu0 0
        %1783 = vmatprep.subr.bf16.mxu0 0
        %1784 = vmatpush1.bf16.msra.mxu0 0
        %1785 = vmatprep.subr.bf16.mxu0 0
        %1786 = vmatpush1.bf16.msra.mxu0 0
        %1787 = vmatprep.subr.bf16.mxu0 0
        %1788 = vmatpush1.bf16.msra.mxu0 0
        %1789 = vmatprep.subr.bf16.mxu0 0
        %1790 = vmatpush1.bf16.msra.mxu0 0
        %1791 = vmatprep.subr.bf16.mxu0 0
        %1792 = vmatpush1.bf16.msra.mxu0 0
        %1793 = vmatprep.subr.bf16.mxu0 0
        %1794 = vmatpush1.bf16.msra.mxu0 0
        %1795 = vmatprep.subr.bf16.mxu0 0
        %1796 = vmatpush1.bf16.msra.mxu0 0
        %1797 = vmatprep.subr.bf16.mxu0 0
        %1798 = vmatpush1.bf16.msra.mxu0 0
        %1799 = vmatprep.mubr.bf16.mxu0 0
        %1800 = vmatmul.mubr.bf16.gmra.mrb[0].mxu0 %v1762
        %v1801 = vpop.f32.mrb[0].mxu0
        %v1802 = vadd.f32 0.0, %v1801
        %v1803 = vpop.f32.mrb[0].mxu0
        %v1804 = vpop.f32.mrb[0].mxu0
        %v1805 = vpop.f32.mrb[0].mxu0
        %1806 = vdwg.mxu0
        %v1807 = vcombine.low %v1664, %v1756
        %v1808 = vcombine.high %v1664, %v1756
        %v1810 = vunpack.c.l.s4 1983009808
        %v1811 = vunpack.c.0.s8 %v1810
        %v1812 = vlaneseq
        %v1813 = vshrl.u32 %v1812, 7
        %v1814 = vsub.s32 %v1811, %v1813
        %v1815 = vrot.slane %v1807, %v1814
        %v1817 = vunpack.c.l.s4 1983009808
        %v1818 = vunpack.c.0.s8 %v1817
        %v1819 = vlaneseq
        %v1820 = vshrl.u32 %v1819, 7
        %v1821 = vsub.s32 %v1818, %v1820
        %v1822 = vrot.slane %v1808, %v1821
        %v1823 = vcombine.low %v1710, %v1802
        %v1824 = vcombine.high %v1710, %v1802
        %v1826 = vunpack.c.l.s4 1983009808
        %v1827 = vunpack.c.0.s8 %v1826
        %v1828 = vlaneseq
        %v1829 = vshrl.u32 %v1828, 7
        %v1830 = vsub.s32 %v1827, %v1829
        %v1831 = vrot.slane %v1823, %v1830
        %v1833 = vunpack.c.l.s4 1983009808
        %v1834 = vunpack.c.0.s8 %v1833
        %v1835 = vlaneseq
        %v1836 = vshrl.u32 %v1835, 7
        %v1837 = vsub.s32 %v1834, %v1836
        %v1838 = vrot.slane %v1824, %v1837
        %v1839 = vcombine.low %v1815, %v1831
        %v1840 = vcombine.high %v1815, %v1831
        %v1842 = vunpack.c.l.s4 1934713408
        %v1843 = vunpack.c.0.s8 %v1842
        %v1844 = vlaneseq
        %v1845 = vshrl.u32 %v1844, 7
        %v1846 = vsub.s32 %v1843, %v1845
        %v1847 = vrot.slane %v1839, %v1846
        %v1849 = vunpack.c.l.s4 1934713408
        %v1850 = vunpack.c.0.s8 %v1849
        %v1851 = vlaneseq
        %v1852 = vshrl.u32 %v1851, 7
        %v1853 = vsub.s32 %v1850, %v1852
        %v1854 = vrot.slane %v1840, %v1853
        %v1855 = vcombine.low %v1822, %v1838
        %v1856 = vcombine.high %v1822, %v1838
        %v1858 = vunpack.c.l.s4 1934713408
        %v1859 = vunpack.c.0.s8 %v1858
        %v1860 = vlaneseq
        %v1861 = vshrl.u32 %v1860, 7
        %v1862 = vsub.s32 %v1859, %v1861
        %v1863 = vrot.slane %v1855, %v1862
        %v1865 = vunpack.c.l.s4 1934713408
        %v1866 = vunpack.c.0.s8 %v1865
        %v1867 = vlaneseq
        %v1868 = vshrl.u32 %v1867, 7
        %v1869 = vsub.s32 %v1866, %v1868
        %v1870 = vrot.slane %v1856, %v1869
        %v1871 = vcombine.high %v1847, 0.0
        %v1872 = vcombine.high %v1854, 0.0
        %v1873 = vcombine.high %v1863, 0.0
        %v1874 = vcombine.high %v1870, 0.0
        %v1875 = vcombine.low %v1847, %v1854
        %v1877 = vunpack.c.l.s4 1983009808
        %v1878 = vunpack.c.0.s8 %v1877
        %v1879 = vlaneseq
        %v1880 = vshrl.u32 %v1879, 7
        %v1881 = vsub.s32 %v1878, %v1880
        %v1882 = vrot.slane %v1875, %v1881
        %v1883 = vcombine.low %v1871, %v1872
        %v1885 = vunpack.c.l.s4 1983009808
        %v1886 = vunpack.c.0.s8 %v1885
        %v1887 = vlaneseq
        %v1888 = vshrl.u32 %v1887, 7
        %v1889 = vsub.s32 %v1886, %v1888
        %v1890 = vrot.slane %v1883, %v1889
        %v1891 = vcombine.low %v1863, %v1870
        %v1893 = vunpack.c.l.s4 1983009808
        %v1894 = vunpack.c.0.s8 %v1893
        %v1895 = vlaneseq
        %v1896 = vshrl.u32 %v1895, 7
        %v1897 = vsub.s32 %v1894, %v1896
        %v1898 = vrot.slane %v1891, %v1897
        %v1899 = vcombine.low %v1873, %v1874
        %v1901 = vunpack.c.l.s4 1983009808
        %v1902 = vunpack.c.0.s8 %v1901
        %v1903 = vlaneseq
        %v1904 = vshrl.u32 %v1903, 7
        %v1905 = vsub.s32 %v1902, %v1904
        %v1906 = vrot.slane %v1899, %v1905
        %v1907 = vcombine.low %v1882, %v1890
        %v1908 = vcombine.high %v1882, %v1890
        %v1910 = vunpack.c.l.s4 1934713408
        %v1911 = vunpack.c.0.s8 %v1910
        %v1912 = vlaneseq
        %v1913 = vshrl.u32 %v1912, 7
        %v1914 = vsub.s32 %v1911, %v1913
        %v1915 = vrot.slane %v1907, %v1914
        %v1917 = vunpack.c.l.s4 1934713408
        %v1918 = vunpack.c.0.s8 %v1917
        %v1919 = vlaneseq
        %v1920 = vshrl.u32 %v1919, 7
        %v1921 = vsub.s32 %v1918, %v1920
        %v1922 = vrot.slane %v1908, %v1921
        %v1923 = vcombine.low %v1898, %v1906
        %v1924 = vcombine.high %v1898, %v1906
        %v1926 = vunpack.c.l.s4 1934713408
        %v1927 = vunpack.c.0.s8 %v1926
        %v1928 = vlaneseq
        %v1929 = vshrl.u32 %v1928, 7
        %v1930 = vsub.s32 %v1927, %v1929
        %v1931 = vrot.slane %v1923, %v1930
        %v1933 = vunpack.c.l.s4 1934713408
        %v1934 = vunpack.c.0.s8 %v1933
        %v1935 = vlaneseq
        %v1936 = vshrl.u32 %v1935, 7
        %v1937 = vsub.s32 %v1934, %v1936
        %v1938 = vrot.slane %v1924, %v1937
        %v1939 = vcombine.low %v1915, %v1931
        %v1940 = vcombine.high %v1915, %v1931
        %v1941 = vcombine.low %v1922, %v1938
        %v1942 = vcombine.high %v1922, %v1938
        %1944 = vrot.lane.b32.xlu0 %v1940, 8
        %v1945 = vpop.permute.xlu0 %1944
        %1948 = vrot.lane.b32.xlu0 %v1941, 16
        %v1949 = vpop.permute.xlu0 %1948
        %1952 = vrot.lane.b32.xlu0 %v1942, 24
        %v1953 = vpop.permute.xlu0 %1952
        %v1955 = vsel %vm1377, %v1939, %v1945
        %vm1956 = vcmask 130048
        %v1957 = vsel %vm1956, %v1955, %v1949
        %vm1958 = vcmask 195584
        %v1959 = vsel %vm1958, %v1957, %v1953
        %v1960 = vld [vmem:[%s6] sm:$0xf]
        %v1961 = vld [vmem:[%s6 + $0x4] sm:$0xf]
        %v1962 = vld [vmem:[%s6 + $0x8] sm:$0xf]
        %v1963 = vld [vmem:[%s6 + $0xc] sm:$0xf]
        %v1964 = vpack.c.bf16 %v1959, %v1959
        %v1965 = vld [vmem:[#allocation7] sm:$0x1]
        %v1967 = vlaneseq
        %v1968 = vshrl.u32 %v1967, 7
        %v1969 = vsub.s32 0, %v1968
        %v1970 = vrot.slane %v1965, %v1969
        %v1976 = vunpack.c.l.b16 %v1960
        %v1977 = vunpack.c.l.b16 %v1961
        %v1978 = vunpack.c.l.b16 %v1962
        %v1979 = vunpack.c.l.b16 %v1963
        %v1980 = vpack.c.b16 %v1977, %v1976
        %v1981 = vpack.c.b16 %v1979, %v1978
        %v1985 = vsel %vm882, %v1964, 0
        %1987 = vmatprep.subr.bf16.mxu0 0
        %1988 = vmatpush1.bf16.msra.mxu0 %v1980
        %1989 = vmatprep.subr.bf16.mxu0 0
        %1990 = vmatpush1.bf16.msra.mxu0 %v1981
        %1991 = vmatprep.subr.bf16.mxu0 0
        %1992 = vmatpush1.bf16.msra.mxu0 0
        %1993 = vmatprep.subr.bf16.mxu0 0
        %1994 = vmatpush1.bf16.msra.mxu0 0
        %1995 = vmatprep.subr.bf16.mxu0 0
        %1996 = vmatpush1.bf16.msra.mxu0 0
        %1997 = vmatprep.subr.bf16.mxu0 0
        %1998 = vmatpush1.bf16.msra.mxu0 0
        %1999 = vmatprep.subr.bf16.mxu0 0
        %2000 = vmatpush1.bf16.msra.mxu0 0
        %2001 = vmatprep.subr.bf16.mxu0 0
        %2002 = vmatpush1.bf16.msra.mxu0 0
        %2003 = vmatprep.subr.bf16.mxu0 0
        %2004 = vmatpush1.bf16.msra.mxu0 0
        %2005 = vmatprep.subr.bf16.mxu0 0
        %2006 = vmatpush1.bf16.msra.mxu0 0
        %2007 = vmatprep.subr.bf16.mxu0 0
        %2008 = vmatpush1.bf16.msra.mxu0 0
        %2009 = vmatprep.subr.bf16.mxu0 0
        %2010 = vmatpush1.bf16.msra.mxu0 0
        %2011 = vmatprep.subr.bf16.mxu0 0
        %2012 = vmatpush1.bf16.msra.mxu0 0
        %2013 = vmatprep.subr.bf16.mxu0 0
        %2014 = vmatpush1.bf16.msra.mxu0 0
        %2015 = vmatprep.subr.bf16.mxu0 0
        %2016 = vmatpush1.bf16.msra.mxu0 0
        %2017 = vmatprep.subr.bf16.mxu0 0
        %2018 = vmatpush1.bf16.msra.mxu0 0
        %2019 = vmatprep.mubr.bf16.mxu0 0
        %2020 = vmatmul.mubr.bf16.gmra.mrb[0].mxu0 %v1985
        %v2021 = vpop.f32.mrb[0].mxu0
        %v2022 = vadd.f32 %v1970, %v2021
        %v2023 = vpop.f32.mrb[0].mxu0
        %v2024 = vpop.f32.mrb[0].mxu0
        %v2025 = vpop.f32.mrb[0].mxu0
        %2026 = vdwg.mxu0
        %v2027 = vadd.f32 %v857, %v2022
        %v2028 = vld [vmem:[#allocation8] sm:$0x1]
        %v2029 = vld [vmem:[%s9] sm:$0x1]
        %v2030 = vsel %vm882, %v2027, 0.0
        %2031 = vadd.xlane.f32.xlu0 %v2030
        %v2032 = vpop.xlane.xlu0 %2031
        %v2033 = vrcp.pop 32.0
        %v2034 = vmul.f32 %v2032, %v2033
        %v2035 = vsub.f32 %v2027, %v2034
        %v2036 = vmul.f32 %v2035, %v2035
        %v2037 = vsel %vm882, %v2036, 0.0
        %2038 = vadd.xlane.f32.xlu0 %v2037
        %v2039 = vpop.xlane.xlu0 %2038
        %v2040 = vmul.f32 %v2039, %v2033
        %v2041 = vadd.f32 %v2040, 1e-05
        %v2042 = vrsqrt.pop %v2041
        %v2043 = vmul.f32 %v2035, %v2042
        %v2045 = vlaneseq
        %v2046 = vshrl.u32 %v2045, 7
        %v2047 = vsub.s32 0, %v2046
        %v2048 = vrot.slane %v2028, %v2047
        %v2050 = vmul.f32 %v2043, %v2048
        %v2052 = vlaneseq
        %v2053 = vshrl.u32 %v2052, 7
        %v2054 = vsub.s32 0, %v2053
        %v2055 = vrot.slane %v2029, %v2054
        %v2057 = vadd.f32 %v2050, %v2055
        %v2058 = vld [vmem:[%s10] sm:$0xf]
        %v2059 = vld [vmem:[%s10 + $0x4] sm:$0xf]
        %v2060 = vld [vmem:[%s10 + $0x8] sm:$0xf]
        %v2061 = vld [vmem:[%s10 + $0xc] sm:$0xf]
        %v2062 = vpack.c.bf16 %v2057, %v2057
        %v2063 = vld [vmem:[%s11] sm:$0x1]
        %v2065 = vlaneseq
        %v2066 = vshrl.u32 %v2065, 7
        %v2067 = vsub.s32 0, %v2066
        %v2068 = vrot.slane %v2063, %v2067
        %v2074 = vunpack.c.l.b16 %v2058
        %v2075 = vunpack.c.l.b16 %v2059
        %v2076 = vunpack.c.l.b16 %v2060
        %v2077 = vunpack.c.l.b16 %v2061
        %v2078 = vpack.c.b16 %v2075, %v2074
        %v2079 = vpack.c.b16 %v2077, %v2076
        %v2083 = vsel %vm882, %v2062, 0
        %2085 = vmatprep.subr.bf16.mxu0 0
        %2086 = vmatpush1.bf16.msra.mxu0 %v2078
        %2087 = vmatprep.subr.bf16.mxu0 0
        %2088 = vmatpush1.bf16.msra.mxu0 %v2079
        %2089 = vmatprep.subr.bf16.mxu0 0
        %2090 = vmatpush1.bf16.msra.mxu0 0
        %2091 = vmatprep.subr.bf16.mxu0 0
        %2092 = vmatpush1.bf16.msra.mxu0 0
        %2093 = vmatprep.subr.bf16.mxu0 0
        %2094 = vmatpush1.bf16.msra.mxu0 0
        %2095 = vmatprep.subr.bf16.mxu0 0
        %2096 = vmatpush1.bf16.msra.mxu0 0
        %2097 = vmatprep.subr.bf16.mxu0 0
        %2098 = vmatpush1.bf16.msra.mxu0 0
        %2099 = vmatprep.subr.bf16.mxu0 0
        %2100 = vmatpush1.bf16.msra.mxu0 0
        %2101 = vmatprep.subr.bf16.mxu0 0
        %2102 = vmatpush1.bf16.msra.mxu0 0
        %2103 = vmatprep.subr.bf16.mxu0 0
        %2104 = vmatpush1.bf16.msra.mxu0 0
        %2105 = vmatprep.subr.bf16.mxu0 0
        %2106 = vmatpush1.bf16.msra.mxu0 0
        %2107 = vmatprep.subr.bf16.mxu0 0
        %2108 = vmatpush1.bf16.msra.mxu0 0
        %2109 = vmatprep.subr.bf16.mxu0 0
        %2110 = vmatpush1.bf16.msra.mxu0 0
        %2111 = vmatprep.subr.bf16.mxu0 0
        %2112 = vmatpush1.bf16.msra.mxu0 0
        %2113 = vmatprep.subr.bf16.mxu0 0
        %2114 = vmatpush1.bf16.msra.mxu0 0
        %2115 = vmatprep.subr.bf16.mxu0 0
        %2116 = vmatpush1.bf16.msra.mxu0 0
        %2117 = vmatprep.mubr.bf16.mxu0 0
        %2118 = vmatmul.mubr.bf16.gmra.mrb[0].mxu0 %v2083
        %v2119 = vpop.f32.mrb[0].mxu0
        %v2120 = vadd.f32 %v2068, %v2119
        %v2121 = vpop.f32.mrb[0].mxu0
        %v2122 = vpop.f32.mrb[0].mxu0
        %v2123 = vpop.f32.mrb[0].mxu0
        %2124 = vdwg.mxu0
        %v2125 = vld [vmem:[%s852] sm:$0xff]
        %v2126 = vld [vmem:[%s852 + $0x8] sm:$0x3]
        %v2127 = vld [vmem:[%s12] sm:$0xf]
        %v2128 = vld [vmem:[%s12 + $0x4] sm:$0xf]
        %v2129 = vld [vmem:[%s12 + $0x8] sm:$0xf]
        %v2130 = vld [vmem:[%s12 + $0xc] sm:$0xf]
        %v2131 = vpack.c.bf16 %v2126, %v2125
        %v2132 = vld [vmem:[%s13] sm:$0x1]
        %v2134 = vlaneseq
        %v2135 = vshrl.u32 %v2134, 7
        %v2136 = vsub.s32 0, %v2135
        %v2137 = vrot.slane %v2132, %v2136
        %v2143 = vunpack.c.l.b16 %v2127
        %v2144 = vunpack.c.l.b16 %v2128
        %v2145 = vunpack.c.l.b16 %v2129
        %v2146 = vunpack.c.l.b16 %v2130
        %v2147 = vpack.c.b16 %v2144, %v2143
        %v2148 = vpack.c.b16 %v2146, %v2145
        %v2152 = vsel %vm882, %v2131, 0
        %2154 = vmatprep.subr.bf16.mxu0 0
        %2155 = vmatpush1.bf16.msra.mxu0 %v2147
        %2156 = vmatprep.subr.bf16.mxu0 0
        %2157 = vmatpush1.bf16.msra.mxu0 %v2148
        %2158 = vmatprep.subr.bf16.mxu0 0
        %2159 = vmatpush1.bf16.msra.mxu0 0
        %2160 = vmatprep.subr.bf16.mxu0 0
        %2161 = vmatpush1.bf16.msra.mxu0 0
        %2162 = vmatprep.subr.bf16.mxu0 0
        %2163 = vmatpush1.bf16.msra.mxu0 0
        %2164 = vmatprep.subr.bf16.mxu0 0
        %2165 = vmatpush1.bf16.msra.mxu0 0
        %2166 = vmatprep.subr.bf16.mxu0 0
        %2167 = vmatpush1.bf16.msra.mxu0 0
        %2168 = vmatprep.subr.bf16.mxu0 0
        %2169 = vmatpush1.bf16.msra.mxu0 0
        %2170 = vmatprep.subr.bf16.mxu0 0
        %2171 = vmatpush1.bf16.msra.mxu0 0
        %2172 = vmatprep.subr.bf16.mxu0 0
        %2173 = vmatpush1.bf16.msra.mxu0 0
        %2174 = vmatprep.subr.bf16.mxu0 0
        %2175 = vmatpush1.bf16.msra.mxu0 0
        %2176 = vmatprep.subr.bf16.mxu0 0
        %2177 = vmatpush1.bf16.msra.mxu0 0
        %2178 = vmatprep.subr.bf16.mxu0 0
        %2179 = vmatpush1.bf16.msra.mxu0 0
        %2180 = vmatprep.subr.bf16.mxu0 0
        %2181 = vmatpush1.bf16.msra.mxu0 0
        %2182 = vmatprep.subr.bf16.mxu0 0
        %2183 = vmatpush1.bf16.msra.mxu0 0
        %2184 = vmatprep.subr.bf16.mxu0 0
        %2185 = vmatpush1.bf16.msra.mxu0 0
        %2186 = vmatprep.mubr.bf16.mxu0 0
        %2187 = vmatmul.mubr.bf16.gmra.mrb[0].mxu0 %v2152
        %v2188 = vpop.f32.mrb[0].mxu0
        %v2189 = vadd.f32 %v2137, %v2188
        %v2190 = vpop.f32.mrb[0].mxu0
        %v2191 = vpop.f32.mrb[0].mxu0
        %v2192 = vadd.f32 %v2137, %v2191
        %v2193 = vpop.f32.mrb[0].mxu0
        %2194 = vdwg.mxu0
        %v2195 = vld [vmem:[%s855] sm:$0x1]
        %2197 = vrot.lane.b32.xlu0 %v2120, 120
        %v2198 = vpop.permute.xlu0 %2197
        %2200 = vrot.lane.b32.xlu0 %v2120, 112
        %v2201 = vpop.permute.xlu0 %2200
        %2203 = vrot.lane.b32.xlu0 %v2120, 104
        %v2204 = vpop.permute.xlu0 %2203
        %v2206 = vcombine.low %v2120, %v2201
        %v2207 = vcombine.high %v2120, %v2201
        %v2209 = vunpack.c.l.s4 1983009808
        %v2210 = vunpack.c.0.s8 %v2209
        %v2211 = vlaneseq
        %v2212 = vshrl.u32 %v2211, 7
        %v2213 = vsub.s32 %v2210, %v2212
        %v2214 = vrot.slane %v2206, %v2213
        %v2216 = vunpack.c.l.s4 1983009808
        %v2217 = vunpack.c.0.s8 %v2216
        %v2218 = vlaneseq
        %v2219 = vshrl.u32 %v2218, 7
        %v2220 = vsub.s32 %v2217, %v2219
        %v2221 = vrot.slane %v2207, %v2220
        %v2222 = vcombine.low %v2198, %v2204
        %v2223 = vcombine.high %v2198, %v2204
        %v2225 = vunpack.c.l.s4 1983009808
        %v2226 = vunpack.c.0.s8 %v2225
        %v2227 = vlaneseq
        %v2228 = vshrl.u32 %v2227, 7
        %v2229 = vsub.s32 %v2226, %v2228
        %v2230 = vrot.slane %v2222, %v2229
        %v2232 = vunpack.c.l.s4 1983009808
        %v2233 = vunpack.c.0.s8 %v2232
        %v2234 = vlaneseq
        %v2235 = vshrl.u32 %v2234, 7
        %v2236 = vsub.s32 %v2233, %v2235
        %v2237 = vrot.slane %v2223, %v2236
        %v2238 = vcombine.low %v2214, %v2230
        %v2239 = vcombine.high %v2214, %v2230
        %v2241 = vunpack.c.l.s4 1934713408
        %v2242 = vunpack.c.0.s8 %v2241
        %v2243 = vlaneseq
        %v2244 = vshrl.u32 %v2243, 7
        %v2245 = vsub.s32 %v2242, %v2244
        %v2246 = vrot.slane %v2238, %v2245
        %v2248 = vunpack.c.l.s4 1934713408
        %v2249 = vunpack.c.0.s8 %v2248
        %v2250 = vlaneseq
        %v2251 = vshrl.u32 %v2250, 7
        %v2252 = vsub.s32 %v2249, %v2251
        %v2253 = vrot.slane %v2239, %v2252
        %v2254 = vcombine.low %v2221, %v2237
        %v2255 = vcombine.high %v2221, %v2237
        %v2257 = vunpack.c.l.s4 1934713408
        %v2258 = vunpack.c.0.s8 %v2257
        %v2259 = vlaneseq
        %v2260 = vshrl.u32 %v2259, 7
        %v2261 = vsub.s32 %v2258, %v2260
        %v2262 = vrot.slane %v2254, %v2261
        %v2264 = vunpack.c.l.s4 1934713408
        %v2265 = vunpack.c.0.s8 %v2264
        %v2266 = vlaneseq
        %v2267 = vshrl.u32 %v2266, 7
        %v2268 = vsub.s32 %v2265, %v2267
        %v2269 = vrot.slane %v2255, %v2268
        %v2270 = vcombine.high %v2246, 0.0
        %v2271 = vcombine.high %v2253, 0.0
        %v2272 = vcombine.high %v2262, 0.0
        %v2273 = vcombine.high %v2269, 0.0
        %v2274 = vcombine.low %v2246, %v2253
        %v2276 = vunpack.c.l.s4 1983009808
        %v2277 = vunpack.c.0.s8 %v2276
        %v2278 = vlaneseq
        %v2279 = vshrl.u32 %v2278, 7
        %v2280 = vsub.s32 %v2277, %v2279
        %v2281 = vrot.slane %v2274, %v2280
        %v2282 = vcombine.low %v2270, %v2271
        %v2284 = vunpack.c.l.s4 1983009808
        %v2285 = vunpack.c.0.s8 %v2284
        %v2286 = vlaneseq
        %v2287 = vshrl.u32 %v2286, 7
        %v2288 = vsub.s32 %v2285, %v2287
        %v2289 = vrot.slane %v2282, %v2288
        %v2290 = vcombine.low %v2262, %v2269
        %v2292 = vunpack.c.l.s4 1983009808
        %v2293 = vunpack.c.0.s8 %v2292
        %v2294 = vlaneseq
        %v2295 = vshrl.u32 %v2294, 7
        %v2296 = vsub.s32 %v2293, %v2295
        %v2297 = vrot.slane %v2290, %v2296
        %v2298 = vcombine.low %v2272, %v2273
        %v2300 = vunpack.c.l.s4 1983009808
        %v2301 = vunpack.c.0.s8 %v2300
        %v2302 = vlaneseq
        %v2303 = vshrl.u32 %v2302, 7
        %v2304 = vsub.s32 %v2301, %v2303
        %v2305 = vrot.slane %v2298, %v2304
        %v2306 = vcombine.low %v2281, %v2289
        %v2307 = vcombine.high %v2281, %v2289
        %v2309 = vunpack.c.l.s4 1934713408
        %v2310 = vunpack.c.0.s8 %v2309
        %v2311 = vlaneseq
        %v2312 = vshrl.u32 %v2311, 7
        %v2313 = vsub.s32 %v2310, %v2312
        %v2314 = vrot.slane %v2306, %v2313
        %v2316 = vunpack.c.l.s4 1934713408
        %v2317 = vunpack.c.0.s8 %v2316
        %v2318 = vlaneseq
        %v2319 = vshrl.u32 %v2318, 7
        %v2320 = vsub.s32 %v2317, %v2319
        %v2321 = vrot.slane %v2307, %v2320
        %v2322 = vcombine.low %v2297, %v2305
        %v2323 = vcombine.high %v2297, %v2305
        %v2325 = vunpack.c.l.s4 1934713408
        %v2326 = vunpack.c.0.s8 %v2325
        %v2327 = vlaneseq
        %v2328 = vshrl.u32 %v2327, 7
        %v2329 = vsub.s32 %v2326, %v2328
        %v2330 = vrot.slane %v2322, %v2329
        %v2332 = vunpack.c.l.s4 1934713408
        %v2333 = vunpack.c.0.s8 %v2332
        %v2334 = vlaneseq
        %v2335 = vshrl.u32 %v2334, 7
        %v2336 = vsub.s32 %v2333, %v2335
        %v2337 = vrot.slane %v2323, %v2336
        %v2338 = vcombine.low %v2314, %v2330
        %v2339 = vcombine.high %v2314, %v2330
        %v2340 = vcombine.low %v2321, %v2337
        %v2341 = vcombine.high %v2321, %v2337
        %2344 = vrot.lane.b32.xlu0 %v2189, 120
        %v2345 = vpop.permute.xlu0 %2344
        %2346 = vrot.lane.b32.xlu0 %v2192, 120
        %v2347 = vpop.permute.xlu0 %2346
        %2350 = vrot.lane.b32.xlu0 %v2189, 112
        %v2351 = vpop.permute.xlu0 %2350
        %2352 = vrot.lane.b32.xlu0 %v2192, 112
        %v2353 = vpop.permute.xlu0 %2352
        %2356 = vrot.lane.b32.xlu0 %v2189, 104
        %v2357 = vpop.permute.xlu0 %2356
        %2358 = vrot.lane.b32.xlu0 %v2192, 104
        %v2359 = vpop.permute.xlu0 %2358
        %v2362 = vcombine.low %v2189, %v2351
        %v2363 = vcombine.high %v2189, %v2351
        %v2365 = vunpack.c.l.s4 1983009808
        %v2366 = vunpack.c.0.s8 %v2365
        %v2367 = vlaneseq
        %v2368 = vshrl.u32 %v2367, 7
        %v2369 = vsub.s32 %v2366, %v2368
        %v2370 = vrot.slane %v2362, %v2369
        %v2372 = vunpack.c.l.s4 1983009808
        %v2373 = vunpack.c.0.s8 %v2372
        %v2374 = vlaneseq
        %v2375 = vshrl.u32 %v2374, 7
        %v2376 = vsub.s32 %v2373, %v2375
        %v2377 = vrot.slane %v2363, %v2376
        %v2378 = vcombine.low %v2345, %v2357
        %v2379 = vcombine.high %v2345, %v2357
        %v2381 = vunpack.c.l.s4 1983009808
        %v2382 = vunpack.c.0.s8 %v2381
        %v2383 = vlaneseq
        %v2384 = vshrl.u32 %v2383, 7
        %v2385 = vsub.s32 %v2382, %v2384
        %v2386 = vrot.slane %v2378, %v2385
        %v2388 = vunpack.c.l.s4 1983009808
        %v2389 = vunpack.c.0.s8 %v2388
        %v2390 = vlaneseq
        %v2391 = vshrl.u32 %v2390, 7
        %v2392 = vsub.s32 %v2389, %v2391
        %v2393 = vrot.slane %v2379, %v2392
        %v2394 = vcombine.low %v2370, %v2386
        %v2395 = vcombine.high %v2370, %v2386
        %v2397 = vunpack.c.l.s4 1934713408
        %v2398 = vunpack.c.0.s8 %v2397
        %v2399 = vlaneseq
        %v2400 = vshrl.u32 %v2399, 7
        %v2401 = vsub.s32 %v2398, %v2400
        %v2402 = vrot.slane %v2394, %v2401
        %v2404 = vunpack.c.l.s4 1934713408
        %v2405 = vunpack.c.0.s8 %v2404
        %v2406 = vlaneseq
        %v2407 = vshrl.u32 %v2406, 7
        %v2408 = vsub.s32 %v2405, %v2407
        %v2409 = vrot.slane %v2395, %v2408
        %v2410 = vcombine.low %v2377, %v2393
        %v2411 = vcombine.high %v2377, %v2393
        %v2413 = vunpack.c.l.s4 1934713408
        %v2414 = vunpack.c.0.s8 %v2413
        %v2415 = vlaneseq
        %v2416 = vshrl.u32 %v2415, 7
        %v2417 = vsub.s32 %v2414, %v2416
        %v2418 = vrot.slane %v2410, %v2417
        %v2420 = vunpack.c.l.s4 1934713408
        %v2421 = vunpack.c.0.s8 %v2420
        %v2422 = vlaneseq
        %v2423 = vshrl.u32 %v2422, 7
        %v2424 = vsub.s32 %v2421, %v2423
        %v2425 = vrot.slane %v2411, %v2424
        %v2426 = vcombine.high %v2402, 0.0
        %v2427 = vcombine.high %v2409, 0.0
        %v2428 = vcombine.high %v2418, 0.0
        %v2429 = vcombine.high %v2425, 0.0
        %v2430 = vcombine.low %v2192, %v2353
        %v2432 = vunpack.c.l.s4 1983009808
        %v2433 = vunpack.c.0.s8 %v2432
        %v2434 = vlaneseq
        %v2435 = vshrl.u32 %v2434, 7
        %v2436 = vsub.s32 %v2433, %v2435
        %v2437 = vrot.slane %v2430, %v2436
        %v2438 = vcombine.low %v2347, %v2359
        %v2440 = vunpack.c.l.s4 1983009808
        %v2441 = vunpack.c.0.s8 %v2440
        %v2442 = vlaneseq
        %v2443 = vshrl.u32 %v2442, 7
        %v2444 = vsub.s32 %v2441, %v2443
        %v2445 = vrot.slane %v2438, %v2444
        %v2446 = vcombine.low %v2437, %v2445
        %v2448 = vunpack.c.l.s4 1934713408
        %v2449 = vunpack.c.0.s8 %v2448
        %v2450 = vlaneseq
        %v2451 = vshrl.u32 %v2450, 7
        %v2452 = vsub.s32 %v2449, %v2451
        %v2453 = vrot.slane %v2446, %v2452
        %v2454 = vcombine.low %v2402, %v2409
        %v2456 = vunpack.c.l.s4 1983009808
        %v2457 = vunpack.c.0.s8 %v2456
        %v2458 = vlaneseq
        %v2459 = vshrl.u32 %v2458, 7
        %v2460 = vsub.s32 %v2457, %v2459
        %v2461 = vrot.slane %v2454, %v2460
        %v2462 = vcombine.low %v2426, %v2427
        %v2464 = vunpack.c.l.s4 1983009808
        %v2465 = vunpack.c.0.s8 %v2464
        %v2466 = vlaneseq
        %v2467 = vshrl.u32 %v2466, 7
        %v2468 = vsub.s32 %v2465, %v2467
        %v2469 = vrot.slane %v2462, %v2468
        %v2470 = vcombine.low %v2418, %v2425
        %v2472 = vunpack.c.l.s4 1983009808
        %v2473 = vunpack.c.0.s8 %v2472
        %v2474 = vlaneseq
        %v2475 = vshrl.u32 %v2474, 7
        %v2476 = vsub.s32 %v2473, %v2475
        %v2477 = vrot.slane %v2470, %v2476
        %v2478 = vcombine.low %v2428, %v2429
        %v2480 = vunpack.c.l.s4 1983009808
        %v2481 = vunpack.c.0.s8 %v2480
        %v2482 = vlaneseq
        %v2483 = vshrl.u32 %v2482, 7
        %v2484 = vsub.s32 %v2481, %v2483
        %v2485 = vrot.slane %v2478, %v2484
        %v2486 = vcombine.low %v2461, %v2469
        %v2487 = vcombine.high %v2461, %v2469
        %v2489 = vunpack.c.l.s4 1934713408
        %v2490 = vunpack.c.0.s8 %v2489
        %v2491 = vlaneseq
        %v2492 = vshrl.u32 %v2491, 7
        %v2493 = vsub.s32 %v2490, %v2492
        %v2494 = vrot.slane %v2486, %v2493
        %v2496 = vunpack.c.l.s4 1934713408
        %v2497 = vunpack.c.0.s8 %v2496
        %v2498 = vlaneseq
        %v2499 = vshrl.u32 %v2498, 7
        %v2500 = vsub.s32 %v2497, %v2499
        %v2501 = vrot.slane %v2487, %v2500
        %v2502 = vcombine.low %v2477, %v2485
        %v2503 = vcombine.high %v2477, %v2485
        %v2505 = vunpack.c.l.s4 1934713408
        %v2506 = vunpack.c.0.s8 %v2505
        %v2507 = vlaneseq
        %v2508 = vshrl.u32 %v2507, 7
        %v2509 = vsub.s32 %v2506, %v2508
        %v2510 = vrot.slane %v2502, %v2509
        %v2512 = vunpack.c.l.s4 1934713408
        %v2513 = vunpack.c.0.s8 %v2512
        %v2514 = vlaneseq
        %v2515 = vshrl.u32 %v2514, 7
        %v2516 = vsub.s32 %v2513, %v2515
        %v2517 = vrot.slane %v2503, %v2516
        %v2518 = vcombine.low %v2494, %v2510
        %v2519 = vcombine.high %v2494, %v2510
        %v2520 = vcombine.low %v2501, %v2517
        %v2521 = vcombine.high %v2501, %v2517
        %v2523 = vunpack.c.l.s4 1983009808
        %v2524 = vunpack.c.0.s8 %v2523
        %v2525 = vlaneseq
        %v2526 = vshrl.u32 %v2525, 7
        %v2527 = vsub.s32 %v2524, %v2526
        %v2528 = vrot.slane %v2453, %v2527
        %v2529 = vcombine.high %v2453, 0.0
        %v2531 = vunpack.c.l.s4 1983009808
        %v2532 = vunpack.c.0.s8 %v2531
        %v2533 = vlaneseq
        %v2534 = vshrl.u32 %v2533, 7
        %v2535 = vsub.s32 %v2532, %v2534
        %v2536 = vrot.slane %v2529, %v2535
        %v2537 = vcombine.low %v2528, %v2536
        %v2538 = vcombine.high %v2528, %v2536
        %v2540 = vunpack.c.l.s4 1934713408
        %v2541 = vunpack.c.0.s8 %v2540
        %v2542 = vlaneseq
        %v2543 = vshrl.u32 %v2542, 7
        %v2544 = vsub.s32 %v2541, %v2543
        %v2545 = vrot.slane %v2537, %v2544
        %v2547 = vunpack.c.l.s4 1934713408
        %v2548 = vunpack.c.0.s8 %v2547
        %v2549 = vlaneseq
        %v2550 = vshrl.u32 %v2549, 7
        %v2551 = vsub.s32 %v2548, %v2550
        %v2552 = vrot.slane %v2538, %v2551
        %v2553 = vcombine.high %v2545, 0.0
        %v2554 = vcombine.high %v2552, 0.0
        %2555 = vrot.lane.b32.xlu0 %v2189, 96
        %v2556 = vpop.permute.xlu0 %2555
        %2557 = vrot.lane.b32.xlu0 %v2192, 96
        %v2558 = vpop.permute.xlu0 %2557
        %2559 = vrot.lane.b32.xlu0 %v2345, 96
        %v2560 = vpop.permute.xlu0 %2559
        %2561 = vrot.lane.b32.xlu0 %v2347, 96
        %v2562 = vpop.permute.xlu0 %2561
        %2563 = vrot.lane.b32.xlu0 %v2351, 96
        %v2564 = vpop.permute.xlu0 %2563
        %2565 = vrot.lane.b32.xlu0 %v2353, 96
        %v2566 = vpop.permute.xlu0 %2565
        %2567 = vrot.lane.b32.xlu0 %v2357, 96
        %v2568 = vpop.permute.xlu0 %2567
        %2569 = vrot.lane.b32.xlu0 %v2359, 96
        %v2570 = vpop.permute.xlu0 %2569
        %v2579 = vcombine.low %v2556, %v2564
        %v2580 = vcombine.high %v2556, %v2564
        %v2582 = vunpack.c.l.s4 1983009808
        %v2583 = vunpack.c.0.s8 %v2582
        %v2584 = vlaneseq
        %v2585 = vshrl.u32 %v2584, 7
        %v2586 = vsub.s32 %v2583, %v2585
        %v2587 = vrot.slane %v2579, %v2586
        %v2589 = vunpack.c.l.s4 1983009808
        %v2590 = vunpack.c.0.s8 %v2589
        %v2591 = vlaneseq
        %v2592 = vshrl.u32 %v2591, 7
        %v2593 = vsub.s32 %v2590, %v2592
        %v2594 = vrot.slane %v2580, %v2593
        %v2595 = vcombine.low %v2560, %v2568
        %v2596 = vcombine.high %v2560, %v2568
        %v2598 = vunpack.c.l.s4 1983009808
        %v2599 = vunpack.c.0.s8 %v2598
        %v2600 = vlaneseq
        %v2601 = vshrl.u32 %v2600, 7
        %v2602 = vsub.s32 %v2599, %v2601
        %v2603 = vrot.slane %v2595, %v2602
        %v2605 = vunpack.c.l.s4 1983009808
        %v2606 = vunpack.c.0.s8 %v2605
        %v2607 = vlaneseq
        %v2608 = vshrl.u32 %v2607, 7
        %v2609 = vsub.s32 %v2606, %v2608
        %v2610 = vrot.slane %v2596, %v2609
        %v2611 = vcombine.low %v2587, %v2603
        %v2612 = vcombine.high %v2587, %v2603
        %v2614 = vunpack.c.l.s4 1934713408
        %v2615 = vunpack.c.0.s8 %v2614
        %v2616 = vlaneseq
        %v2617 = vshrl.u32 %v2616, 7
        %v2618 = vsub.s32 %v2615, %v2617
        %v2619 = vrot.slane %v2611, %v2618
        %v2621 = vunpack.c.l.s4 1934713408
        %v2622 = vunpack.c.0.s8 %v2621
        %v2623 = vlaneseq
        %v2624 = vshrl.u32 %v2623, 7
        %v2625 = vsub.s32 %v2622, %v2624
        %v2626 = vrot.slane %v2612, %v2625
        %v2627 = vcombine.low %v2594, %v2610
        %v2628 = vcombine.high %v2594, %v2610
        %v2630 = vunpack.c.l.s4 1934713408
        %v2631 = vunpack.c.0.s8 %v2630
        %v2632 = vlaneseq
        %v2633 = vshrl.u32 %v2632, 7
        %v2634 = vsub.s32 %v2631, %v2633
        %v2635 = vrot.slane %v2627, %v2634
        %v2637 = vunpack.c.l.s4 1934713408
        %v2638 = vunpack.c.0.s8 %v2637
        %v2639 = vlaneseq
        %v2640 = vshrl.u32 %v2639, 7
        %v2641 = vsub.s32 %v2638, %v2640
        %v2642 = vrot.slane %v2628, %v2641
        %v2643 = vcombine.high %v2619, 0.0
        %v2644 = vcombine.high %v2626, 0.0
        %v2645 = vcombine.high %v2635, 0.0
        %v2646 = vcombine.high %v2642, 0.0
        %v2647 = vcombine.low %v2558, %v2566
        %v2649 = vunpack.c.l.s4 1983009808
        %v2650 = vunpack.c.0.s8 %v2649
        %v2651 = vlaneseq
        %v2652 = vshrl.u32 %v2651, 7
        %v2653 = vsub.s32 %v2650, %v2652
        %v2654 = vrot.slane %v2647, %v2653
        %v2655 = vcombine.low %v2562, %v2570
        %v2657 = vunpack.c.l.s4 1983009808
        %v2658 = vunpack.c.0.s8 %v2657
        %v2659 = vlaneseq
        %v2660 = vshrl.u32 %v2659, 7
        %v2661 = vsub.s32 %v2658, %v2660
        %v2662 = vrot.slane %v2655, %v2661
        %v2663 = vcombine.low %v2654, %v2662
        %v2665 = vunpack.c.l.s4 1934713408
        %v2666 = vunpack.c.0.s8 %v2665
        %v2667 = vlaneseq
        %v2668 = vshrl.u32 %v2667, 7
        %v2669 = vsub.s32 %v2666, %v2668
        %v2670 = vrot.slane %v2663, %v2669
        %v2671 = vcombine.low %v2619, %v2626
        %v2673 = vunpack.c.l.s4 1983009808
        %v2674 = vunpack.c.0.s8 %v2673
        %v2675 = vlaneseq
        %v2676 = vshrl.u32 %v2675, 7
        %v2677 = vsub.s32 %v2674, %v2676
        %v2678 = vrot.slane %v2671, %v2677
        %v2679 = vcombine.low %v2643, %v2644
        %v2681 = vunpack.c.l.s4 1983009808
        %v2682 = vunpack.c.0.s8 %v2681
        %v2683 = vlaneseq
        %v2684 = vshrl.u32 %v2683, 7
        %v2685 = vsub.s32 %v2682, %v2684
        %v2686 = vrot.slane %v2679, %v2685
        %v2687 = vcombine.low %v2635, %v2642
        %v2689 = vunpack.c.l.s4 1983009808
        %v2690 = vunpack.c.0.s8 %v2689
        %v2691 = vlaneseq
        %v2692 = vshrl.u32 %v2691, 7
        %v2693 = vsub.s32 %v2690, %v2692
        %v2694 = vrot.slane %v2687, %v2693
        %v2695 = vcombine.low %v2645, %v2646
        %v2697 = vunpack.c.l.s4 1983009808
        %v2698 = vunpack.c.0.s8 %v2697
        %v2699 = vlaneseq
        %v2700 = vshrl.u32 %v2699, 7
        %v2701 = vsub.s32 %v2698, %v2700
        %v2702 = vrot.slane %v2695, %v2701
        %v2703 = vcombine.low %v2678, %v2686
        %v2704 = vcombine.high %v2678, %v2686
        %v2706 = vunpack.c.l.s4 1934713408
        %v2707 = vunpack.c.0.s8 %v2706
        %v2708 = vlaneseq
        %v2709 = vshrl.u32 %v2708, 7
        %v2710 = vsub.s32 %v2707, %v2709
        %v2711 = vrot.slane %v2703, %v2710
        %v2713 = vunpack.c.l.s4 1934713408
        %v2714 = vunpack.c.0.s8 %v2713
        %v2715 = vlaneseq
        %v2716 = vshrl.u32 %v2715, 7
        %v2717 = vsub.s32 %v2714, %v2716
        %v2718 = vrot.slane %v2704, %v2717
        %v2719 = vcombine.low %v2694, %v2702
        %v2720 = vcombine.high %v2694, %v2702
        %v2722 = vunpack.c.l.s4 1934713408
        %v2723 = vunpack.c.0.s8 %v2722
        %v2724 = vlaneseq
        %v2725 = vshrl.u32 %v2724, 7
        %v2726 = vsub.s32 %v2723, %v2725
        %v2727 = vrot.slane %v2719, %v2726
        %v2729 = vunpack.c.l.s4 1934713408
        %v2730 = vunpack.c.0.s8 %v2729
        %v2731 = vlaneseq
        %v2732 = vshrl.u32 %v2731, 7
        %v2733 = vsub.s32 %v2730, %v2732
        %v2734 = vrot.slane %v2720, %v2733
        %v2735 = vcombine.low %v2711, %v2727
        %v2736 = vcombine.high %v2711, %v2727
        %v2737 = vcombine.low %v2718, %v2734
        %v2738 = vcombine.high %v2718, %v2734
        %v2740 = vunpack.c.l.s4 1983009808
        %v2741 = vunpack.c.0.s8 %v2740
        %v2742 = vlaneseq
        %v2743 = vshrl.u32 %v2742, 7
        %v2744 = vsub.s32 %v2741, %v2743
        %v2745 = vrot.slane %v2670, %v2744
        %v2746 = vcombine.high %v2670, 0.0
        %v2748 = vunpack.c.l.s4 1983009808
        %v2749 = vunpack.c.0.s8 %v2748
        %v2750 = vlaneseq
        %v2751 = vshrl.u32 %v2750, 7
        %v2752 = vsub.s32 %v2749, %v2751
        %v2753 = vrot.slane %v2746, %v2752
        %v2754 = vcombine.low %v2745, %v2753
        %v2755 = vcombine.high %v2745, %v2753
        %v2757 = vunpack.c.l.s4 1934713408
        %v2758 = vunpack.c.0.s8 %v2757
        %v2759 = vlaneseq
        %v2760 = vshrl.u32 %v2759, 7
        %v2761 = vsub.s32 %v2758, %v2760
        %v2762 = vrot.slane %v2754, %v2761
        %v2764 = vunpack.c.l.s4 1934713408
        %v2765 = vunpack.c.0.s8 %v2764
        %v2766 = vlaneseq
        %v2767 = vshrl.u32 %v2766, 7
        %v2768 = vsub.s32 %v2765, %v2767
        %v2769 = vrot.slane %v2755, %v2768
        %v2770 = vcombine.high %v2762, 0.0
        %v2771 = vcombine.high %v2769, 0.0
        %v2772 = vpack.c.bf16 %v2338, %v2338
        %v2773 = vpack.c.bf16 %v2339, %v2339
        %v2774 = vpack.c.bf16 %v2340, %v2340
        %v2775 = vpack.c.bf16 %v2341, %v2341
        %v2776 = vpack.c.bf16 %v2545, %v2518
        %v2777 = vpack.c.bf16 %v2553, %v2519
        %v2778 = vpack.c.bf16 %v2552, %v2520
        %v2779 = vpack.c.bf16 %v2554, %v2521
        %v2781 = vsel %vm1377, %v2772, 0
        %v2784 = vsel %vm1377, %v2776, 0
        %2786 = vmatprep.subr.bf16.mxu0 0
        %2787 = vmatpush1.bf16.xpose.msra.mxu0 %v2784
        %2788 = vmatprep.subr.bf16.mxu0 0
        %2789 = vmatpush1.bf16.xpose.msra.mxu0 0
        %2790 = vmatprep.subr.bf16.mxu0 0
        %2791 = vmatpush1.bf16.xpose.msra.mxu0 0
        %2792 = vmatprep.subr.bf16.mxu0 0
        %2793 = vmatpush1.bf16.xpose.msra.mxu0 0
        %2794 = vmatprep.subr.bf16.mxu0 0
        %2795 = vmatpush1.bf16.xpose.msra.mxu0 0
        %2796 = vmatprep.subr.bf16.mxu0 0
        %2797 = vmatpush1.bf16.xpose.msra.mxu0 0
        %2798 = vmatprep.subr.bf16.mxu0 0
        %2799 = vmatpush1.bf16.xpose.msra.mxu0 0
        %2800 = vmatprep.subr.bf16.mxu0 0
        %2801 = vmatpush1.bf16.xpose.msra.mxu0 0
        %2802 = vmatprep.subr.bf16.mxu0 0
        %2803 = vmatpush1.bf16.xpose.msra.mxu0 0
        %2804 = vmatprep.subr.bf16.mxu0 0
        %2805 = vmatpush1.bf16.xpose.msra.mxu0 0
        %2806 = vmatprep.subr.bf16.mxu0 0
        %2807 = vmatpush1.bf16.xpose.msra.mxu0 0
        %2808 = vmatprep.subr.bf16.mxu0 0
        %2809 = vmatpush1.bf16.xpose.msra.mxu0 0
        %2810 = vmatprep.subr.bf16.mxu0 0
        %2811 = vmatpush1.bf16.xpose.msra.mxu0 0
        %2812 = vmatprep.subr.bf16.mxu0 0
        %2813 = vmatpush1.bf16.xpose.msra.mxu0 0
        %2814 = vmatprep.subr.bf16.mxu0 0
        %2815 = vmatpush1.bf16.xpose.msra.mxu0 0
        %2816 = vmatprep.subr.bf16.mxu0 0
        %2817 = vmatpush1.bf16.xpose.msra.mxu0 0
        %2818 = vmatprep.mubr.bf16.mxu0 0
        %2819 = vmatmul.mubr.bf16.gmra.mrb[0].mxu0 %v2781
        %v2820 = vpop.f32.mrb[0].mxu0
        %v2821 = vadd.f32 0.0, %v2820
        %v2822 = vpop.f32.mrb[0].mxu0
        %v2823 = vpop.f32.mrb[0].mxu0
        %v2824 = vpop.f32.mrb[0].mxu0
        %2825 = vdwg.mxu0
        %v2827 = vsel %vm1377, %v2773, 0
        %v2830 = vsel %vm1377, %v2777, 0
        %2832 = vmatprep.subr.bf16.mxu0 0
        %2833 = vmatpush1.bf16.xpose.msra.mxu0 %v2830
        %2834 = vmatprep.subr.bf16.mxu0 0
        %2835 = vmatpush1.bf16.xpose.msra.mxu0 0
        %2836 = vmatprep.subr.bf16.mxu0 0
        %2837 = vmatpush1.bf16.xpose.msra.mxu0 0
        %2838 = vmatprep.subr.bf16.mxu0 0
        %2839 = vmatpush1.bf16.xpose.msra.mxu0 0
        %2840 = vmatprep.subr.bf16.mxu0 0
        %2841 = vmatpush1.bf16.xpose.msra.mxu0 0
        %2842 = vmatprep.subr.bf16.mxu0 0
        %2843 = vmatpush1.bf16.xpose.msra.mxu0 0
        %2844 = vmatprep.subr.bf16.mxu0 0
        %2845 = vmatpush1.bf16.xpose.msra.mxu0 0
        %2846 = vmatprep.subr.bf16.mxu0 0
        %2847 = vmatpush1.bf16.xpose.msra.mxu0 0
        %2848 = vmatprep.subr.bf16.mxu0 0
        %2849 = vmatpush1.bf16.xpose.msra.mxu0 0
        %2850 = vmatprep.subr.bf16.mxu0 0
        %2851 = vmatpush1.bf16.xpose.msra.mxu0 0
        %2852 = vmatprep.subr.bf16.mxu0 0
        %2853 = vmatpush1.bf16.xpose.msra.mxu0 0
        %2854 = vmatprep.subr.bf16.mxu0 0
        %2855 = vmatpush1.bf16.xpose.msra.mxu0 0
        %2856 = vmatprep.subr.bf16.mxu0 0
        %2857 = vmatpush1.bf16.xpose.msra.mxu0 0
        %2858 = vmatprep.subr.bf16.mxu0 0
        %2859 = vmatpush1.bf16.xpose.msra.mxu0 0
        %2860 = vmatprep.subr.bf16.mxu0 0
        %2861 = vmatpush1.bf16.xpose.msra.mxu0 0
        %2862 = vmatprep.subr.bf16.mxu0 0
        %2863 = vmatpush1.bf16.xpose.msra.mxu0 0
        %2864 = vmatprep.mubr.bf16.mxu0 0
        %2865 = vmatmul.mubr.bf16.gmra.mrb[0].mxu0 %v2827
        %v2866 = vpop.f32.mrb[0].mxu0
        %v2867 = vadd.f32 0.0, %v2866
        %v2868 = vpop.f32.mrb[0].mxu0
        %v2869 = vpop.f32.mrb[0].mxu0
        %v2870 = vpop.f32.mrb[0].mxu0
        %2871 = vdwg.mxu0
        %v2873 = vsel %vm1377, %v2774, 0
        %v2876 = vsel %vm1377, %v2778, 0
        %2878 = vmatprep.subr.bf16.mxu0 0
        %2879 = vmatpush1.bf16.xpose.msra.mxu0 %v2876
        %2880 = vmatprep.subr.bf16.mxu0 0
        %2881 = vmatpush1.bf16.xpose.msra.mxu0 0
        %2882 = vmatprep.subr.bf16.mxu0 0
        %2883 = vmatpush1.bf16.xpose.msra.mxu0 0
        %2884 = vmatprep.subr.bf16.mxu0 0
        %2885 = vmatpush1.bf16.xpose.msra.mxu0 0
        %2886 = vmatprep.subr.bf16.mxu0 0
        %2887 = vmatpush1.bf16.xpose.msra.mxu0 0
        %2888 = vmatprep.subr.bf16.mxu0 0
        %2889 = vmatpush1.bf16.xpose.msra.mxu0 0
        %2890 = vmatprep.subr.bf16.mxu0 0
        %2891 = vmatpush1.bf16.xpose.msra.mxu0 0
        %2892 = vmatprep.subr.bf16.mxu0 0
        %2893 = vmatpush1.bf16.xpose.msra.mxu0 0
        %2894 = vmatprep.subr.bf16.mxu0 0
        %2895 = vmatpush1.bf16.xpose.msra.mxu0 0
        %2896 = vmatprep.subr.bf16.mxu0 0
        %2897 = vmatpush1.bf16.xpose.msra.mxu0 0
        %2898 = vmatprep.subr.bf16.mxu0 0
        %2899 = vmatpush1.bf16.xpose.msra.mxu0 0
        %2900 = vmatprep.subr.bf16.mxu0 0
        %2901 = vmatpush1.bf16.xpose.msra.mxu0 0
        %2902 = vmatprep.subr.bf16.mxu0 0
        %2903 = vmatpush1.bf16.xpose.msra.mxu0 0
        %2904 = vmatprep.subr.bf16.mxu0 0
        %2905 = vmatpush1.bf16.xpose.msra.mxu0 0
        %2906 = vmatprep.subr.bf16.mxu0 0
        %2907 = vmatpush1.bf16.xpose.msra.mxu0 0
        %2908 = vmatprep.subr.bf16.mxu0 0
        %2909 = vmatpush1.bf16.xpose.msra.mxu0 0
        %2910 = vmatprep.mubr.bf16.mxu0 0
        %2911 = vmatmul.mubr.bf16.gmra.mrb[0].mxu0 %v2873
        %v2912 = vpop.f32.mrb[0].mxu0
        %v2913 = vadd.f32 0.0, %v2912
        %v2914 = vpop.f32.mrb[0].mxu0
        %v2915 = vpop.f32.mrb[0].mxu0
        %v2916 = vpop.f32.mrb[0].mxu0
        %2917 = vdwg.mxu0
        %v2919 = vsel %vm1377, %v2775, 0
        %v2922 = vsel %vm1377, %v2779, 0
        %2924 = vmatprep.subr.bf16.mxu0 0
        %2925 = vmatpush1.bf16.xpose.msra.mxu0 %v2922
        %2926 = vmatprep.subr.bf16.mxu0 0
        %2927 = vmatpush1.bf16.xpose.msra.mxu0 0
        %2928 = vmatprep.subr.bf16.mxu0 0
        %2929 = vmatpush1.bf16.xpose.msra.mxu0 0
        %2930 = vmatprep.subr.bf16.mxu0 0
        %2931 = vmatpush1.bf16.xpose.msra.mxu0 0
        %2932 = vmatprep.subr.bf16.mxu0 0
        %2933 = vmatpush1.bf16.xpose.msra.mxu0 0
        %2934 = vmatprep.subr.bf16.mxu0 0
        %2935 = vmatpush1.bf16.xpose.msra.mxu0 0
        %2936 = vmatprep.subr.bf16.mxu0 0
        %2937 = vmatpush1.bf16.xpose.msra.mxu0 0
        %2938 = vmatprep.subr.bf16.mxu0 0
        %2939 = vmatpush1.bf16.xpose.msra.mxu0 0
        %2940 = vmatprep.subr.bf16.mxu0 0
        %2941 = vmatpush1.bf16.xpose.msra.mxu0 0
        %2942 = vmatprep.subr.bf16.mxu0 0
        %2943 = vmatpush1.bf16.xpose.msra.mxu0 0
        %2944 = vmatprep.subr.bf16.mxu0 0
        %2945 = vmatpush1.bf16.xpose.msra.mxu0 0
        %2946 = vmatprep.subr.bf16.mxu0 0
        %2947 = vmatpush1.bf16.xpose.msra.mxu0 0
        %2948 = vmatprep.subr.bf16.mxu0 0
        %2949 = vmatpush1.bf16.xpose.msra.mxu0 0
        %2950 = vmatprep.subr.bf16.mxu0 0
        %2951 = vmatpush1.bf16.xpose.msra.mxu0 0
        %2952 = vmatprep.subr.bf16.mxu0 0
        %2953 = vmatpush1.bf16.xpose.msra.mxu0 0
        %2954 = vmatprep.subr.bf16.mxu0 0
        %2955 = vmatpush1.bf16.xpose.msra.mxu0 0
        %2956 = vmatprep.mubr.bf16.mxu0 0
        %2957 = vmatmul.mubr.bf16.gmra.mrb[0].mxu0 %v2919
        %v2958 = vpop.f32.mrb[0].mxu0
        %v2959 = vadd.f32 0.0, %v2958
        %v2960 = vpop.f32.mrb[0].mxu0
        %v2961 = vpop.f32.mrb[0].mxu0
        %v2962 = vpop.f32.mrb[0].mxu0
        %2963 = vdwg.mxu0
        %v2964 = vmul.f32 %v2821, 0.35355338
        %v2965 = vmul.f32 %v2867, 0.35355338
        %v2966 = vmul.f32 %v2913, 0.35355338
        %v2967 = vmul.f32 %v2959, 0.35355338
        %v2969 = vlaneseq
        %v2970 = vshrl.u32 %v2969, 7
        %v2971 = vsub.s32 0, %v2970
        %v2972 = vrot.slane %v2195, %v2971
        %v2974 = vadd.f32 %v2964, %v2972
        %v2975 = vadd.f32 %v2965, %v2972
        %v2976 = vadd.f32 %v2966, %v2972
        %v2977 = vadd.f32 %v2967, %v2972
        %vm2978 = vcmask 80896
        %v2979 = vsel %vm2978, %v2974, -inf
        %2980 = vmax.xlane.f32.xlu0 %v2979
        %v2981 = vpop.xlane.xlu0 %2980
        %v2982 = vsel %vm2978, %v2975, -inf
        %2983 = vmax.xlane.f32.xlu0 %v2982
        %v2984 = vpop.xlane.xlu0 %2983
        %v2985 = vsel %vm2978, %v2976, -inf
        %2986 = vmax.xlane.f32.xlu0 %v2985
        %v2987 = vpop.xlane.xlu0 %2986
        %v2988 = vsel %vm2978, %v2977, -inf
        %2989 = vmax.xlane.f32.xlu0 %v2988
        %v2990 = vpop.xlane.xlu0 %2989
        %v2991 = vsub.f32 %v2974, %v2981
        %v2992 = vsub.f32 %v2975, %v2984
        %v2993 = vsub.f32 %v2976, %v2987
        %v2994 = vsub.f32 %v2977, %v2990
        %v2995 = vmul.f32 %v2991, 1.442695
        %v2996 = vpow.pop %v2995
        %v2997 = vmul.f32 %v2992, 1.442695
        %v2998 = vpow.pop %v2997
        %v2999 = vmul.f32 %v2993, 1.442695
        %v3000 = vpow.pop %v2999
        %v3001 = vmul.f32 %v2994, 1.442695
        %v3002 = vpow.pop %v3001
        %v3003 = vsel %vm2978, %v2996, 0.0
        %3004 = vadd.xlane.f32.xlu0 %v3003
        %v3005 = vpop.xlane.xlu0 %3004
        %v3006 = vsel %vm2978, %v2998, 0.0
        %3007 = vadd.xlane.f32.xlu0 %v3006
        %v3008 = vpop.xlane.xlu0 %3007
        %v3009 = vsel %vm2978, %v3000, 0.0
        %3010 = vadd.xlane.f32.xlu0 %v3009
        %v3011 = vpop.xlane.xlu0 %3010
        %v3012 = vsel %vm2978, %v3002, 0.0
        %3013 = vadd.xlane.f32.xlu0 %v3012
        %v3014 = vpop.xlane.xlu0 %3013
        %v3015 = vrcp.pop %v3005
        %v3016 = vmul.f32 %v2996, %v3015
        %v3017 = vrcp.pop %v3008
        %v3018 = vmul.f32 %v2998, %v3017
        %v3019 = vrcp.pop %v3011
        %v3020 = vmul.f32 %v3000, %v3019
        %v3021 = vrcp.pop %v3014
        %v3022 = vmul.f32 %v3002, %v3021
        %v3023 = vpack.c.bf16 %v3016, %v3016
        %v3024 = vpack.c.bf16 %v3018, %v3018
        %v3025 = vpack.c.bf16 %v3020, %v3020
        %v3026 = vpack.c.bf16 %v3022, %v3022
        %v3027 = vpack.c.bf16 %v2762, %v2735
        %v3028 = vpack.c.bf16 %v2770, %v2736
        %v3029 = vpack.c.bf16 %v2769, %v2737
        %v3030 = vpack.c.bf16 %v2771, %v2738
        %v3032 = vsel %vm2978, %v3023, 0
        %vm3034 = vcmask 1044480
        %v3036 = vsel %vm3034, %v3027, 0
        %3038 = vmatprep.subr.bf16.mxu0 0
        %3039 = vmatpush1.bf16.msra.mxu0 %v3036
        %3040 = vmatprep.subr.bf16.mxu0 0
        %3041 = vmatpush1.bf16.msra.mxu0 0
        %3042 = vmatprep.subr.bf16.mxu0 0
        %3043 = vmatpush1.bf16.msra.mxu0 0
        %3044 = vmatprep.subr.bf16.mxu0 0
        %3045 = vmatpush1.bf16.msra.mxu0 0
        %3046 = vmatprep.subr.bf16.mxu0 0
        %3047 = vmatpush1.bf16.msra.mxu0 0
        %3048 = vmatprep.subr.bf16.mxu0 0
        %3049 = vmatpush1.bf16.msra.mxu0 0
        %3050 = vmatprep.subr.bf16.mxu0 0
        %3051 = vmatpush1.bf16.msra.mxu0 0
        %3052 = vmatprep.subr.bf16.mxu0 0
        %3053 = vmatpush1.bf16.msra.mxu0 0
        %3054 = vmatprep.subr.bf16.mxu0 0
        %3055 = vmatpush1.bf16.msra.mxu0 0
        %3056 = vmatprep.subr.bf16.mxu0 0
        %3057 = vmatpush1.bf16.msra.mxu0 0
        %3058 = vmatprep.subr.bf16.mxu0 0
        %3059 = vmatpush1.bf16.msra.mxu0 0
        %3060 = vmatprep.subr.bf16.mxu0 0
        %3061 = vmatpush1.bf16.msra.mxu0 0
        %3062 = vmatprep.subr.bf16.mxu0 0
        %3063 = vmatpush1.bf16.msra.mxu0 0
        %3064 = vmatprep.subr.bf16.mxu0 0
        %3065 = vmatpush1.bf16.msra.mxu0 0
        %3066 = vmatprep.subr.bf16.mxu0 0
        %3067 = vmatpush1.bf16.msra.mxu0 0
        %3068 = vmatprep.subr.bf16.mxu0 0
        %3069 = vmatpush1.bf16.msra.mxu0 0
        %3070 = vmatprep.mubr.bf16.mxu0 0
        %3071 = vmatmul.mubr.bf16.gmra.mrb[0].mxu0 %v3032
        %v3072 = vpop.f32.mrb[0].mxu0
        %v3073 = vadd.f32 0.0, %v3072
        %v3074 = vpop.f32.mrb[0].mxu0
        %v3075 = vpop.f32.mrb[0].mxu0
        %v3076 = vpop.f32.mrb[0].mxu0
        %3077 = vdwg.mxu0
        %v3079 = vsel %vm2978, %v3024, 0
        %v3082 = vsel %vm3034, %v3028, 0
        %3084 = vmatprep.subr.bf16.mxu0 0
        %3085 = vmatpush1.bf16.msra.mxu0 %v3082
        %3086 = vmatprep.subr.bf16.mxu0 0
        %3087 = vmatpush1.bf16.msra.mxu0 0
        %3088 = vmatprep.subr.bf16.mxu0 0
        %3089 = vmatpush1.bf16.msra.mxu0 0
        %3090 = vmatprep.subr.bf16.mxu0 0
        %3091 = vmatpush1.bf16.msra.mxu0 0
        %3092 = vmatprep.subr.bf16.mxu0 0
        %3093 = vmatpush1.bf16.msra.mxu0 0
        %3094 = vmatprep.subr.bf16.mxu0 0
        %3095 = vmatpush1.bf16.msra.mxu0 0
        %3096 = vmatprep.subr.bf16.mxu0 0
        %3097 = vmatpush1.bf16.msra.mxu0 0
        %3098 = vmatprep.subr.bf16.mxu0 0
        %3099 = vmatpush1.bf16.msra.mxu0 0
        %3100 = vmatprep.subr.bf16.mxu0 0
        %3101 = vmatpush1.bf16.msra.mxu0 0
        %3102 = vmatprep.subr.bf16.mxu0 0
        %3103 = vmatpush1.bf16.msra.mxu0 0
        %3104 = vmatprep.subr.bf16.mxu0 0
        %3105 = vmatpush1.bf16.msra.mxu0 0
        %3106 = vmatprep.subr.bf16.mxu0 0
        %3107 = vmatpush1.bf16.msra.mxu0 0
        %3108 = vmatprep.subr.bf16.mxu0 0
        %3109 = vmatpush1.bf16.msra.mxu0 0
        %3110 = vmatprep.subr.bf16.mxu0 0
        %3111 = vmatpush1.bf16.msra.mxu0 0
        %3112 = vmatprep.subr.bf16.mxu0 0
        %3113 = vmatpush1.bf16.msra.mxu0 0
        %3114 = vmatprep.subr.bf16.mxu0 0
        %3115 = vmatpush1.bf16.msra.mxu0 0
        %3116 = vmatprep.mubr.bf16.mxu0 0
        %3117 = vmatmul.mubr.bf16.gmra.mrb[0].mxu0 %v3079
        %v3118 = vpop.f32.mrb[0].mxu0
        %v3119 = vadd.f32 0.0, %v3118
        %v3120 = vpop.f32.mrb[0].mxu0
        %v3121 = vpop.f32.mrb[0].mxu0
        %v3122 = vpop.f32.mrb[0].mxu0
        %3123 = vdwg.mxu0
        %v3125 = vsel %vm2978, %v3025, 0
        %v3128 = vsel %vm3034, %v3029, 0
        %3130 = vmatprep.subr.bf16.mxu0 0
        %3131 = vmatpush1.bf16.msra.mxu0 %v3128
        %3132 = vmatprep.subr.bf16.mxu0 0
        %3133 = vmatpush1.bf16.msra.mxu0 0
        %3134 = vmatprep.subr.bf16.mxu0 0
        %3135 = vmatpush1.bf16.msra.mxu0 0
        %3136 = vmatprep.subr.bf16.mxu0 0
        %3137 = vmatpush1.bf16.msra.mxu0 0
        %3138 = vmatprep.subr.bf16.mxu0 0
        %3139 = vmatpush1.bf16.msra.mxu0 0
        %3140 = vmatprep.subr.bf16.mxu0 0
        %3141 = vmatpush1.bf16.msra.mxu0 0
        %3142 = vmatprep.subr.bf16.mxu0 0
        %3143 = vmatpush1.bf16.msra.mxu0 0
        %3144 = vmatprep.subr.bf16.mxu0 0
        %3145 = vmatpush1.bf16.msra.mxu0 0
        %3146 = vmatprep.subr.bf16.mxu0 0
        %3147 = vmatpush1.bf16.msra.mxu0 0
        %3148 = vmatprep.subr.bf16.mxu0 0
        %3149 = vmatpush1.bf16.msra.mxu0 0
        %3150 = vmatprep.subr.bf16.mxu0 0
        %3151 = vmatpush1.bf16.msra.mxu0 0
        %3152 = vmatprep.subr.bf16.mxu0 0
        %3153 = vmatpush1.bf16.msra.mxu0 0
        %3154 = vmatprep.subr.bf16.mxu0 0
        %3155 = vmatpush1.bf16.msra.mxu0 0
        %3156 = vmatprep.subr.bf16.mxu0 0
        %3157 = vmatpush1.bf16.msra.mxu0 0
        %3158 = vmatprep.subr.bf16.mxu0 0
        %3159 = vmatpush1.bf16.msra.mxu0 0
        %3160 = vmatprep.subr.bf16.mxu0 0
        %3161 = vmatpush1.bf16.msra.mxu0 0
        %3162 = vmatprep.mubr.bf16.mxu0 0
        %3163 = vmatmul.mubr.bf16.gmra.mrb[0].mxu0 %v3125
        %v3164 = vpop.f32.mrb[0].mxu0
        %v3165 = vadd.f32 0.0, %v3164
        %v3166 = vpop.f32.mrb[0].mxu0
        %v3167 = vpop.f32.mrb[0].mxu0
        %v3168 = vpop.f32.mrb[0].mxu0
        %3169 = vdwg.mxu0
        %v3171 = vsel %vm2978, %v3026, 0
        %v3174 = vsel %vm3034, %v3030, 0
        %3176 = vmatprep.subr.bf16.mxu0 0
        %3177 = vmatpush1.bf16.msra.mxu0 %v3174
        %3178 = vmatprep.subr.bf16.mxu0 0
        %3179 = vmatpush1.bf16.msra.mxu0 0
        %3180 = vmatprep.subr.bf16.mxu0 0
        %3181 = vmatpush1.bf16.msra.mxu0 0
        %3182 = vmatprep.subr.bf16.mxu0 0
        %3183 = vmatpush1.bf16.msra.mxu0 0
        %3184 = vmatprep.subr.bf16.mxu0 0
        %3185 = vmatpush1.bf16.msra.mxu0 0
        %3186 = vmatprep.subr.bf16.mxu0 0
        %3187 = vmatpush1.bf16.msra.mxu0 0
        %3188 = vmatprep.subr.bf16.mxu0 0
        %3189 = vmatpush1.bf16.msra.mxu0 0
        %3190 = vmatprep.subr.bf16.mxu0 0
        %3191 = vmatpush1.bf16.msra.mxu0 0
        %3192 = vmatprep.subr.bf16.mxu0 0
        %3193 = vmatpush1.bf16.msra.mxu0 0
        %3194 = vmatprep.subr.bf16.mxu0 0
        %3195 = vmatpush1.bf16.msra.mxu0 0
        %3196 = vmatprep.subr.bf16.mxu0 0
        %3197 = vmatpush1.bf16.msra.mxu0 0
        %3198 = vmatprep.subr.bf16.mxu0 0
        %3199 = vmatpush1.bf16.msra.mxu0 0
        %3200 = vmatprep.subr.bf16.mxu0 0
        %3201 = vmatpush1.bf16.msra.mxu0 0
        %3202 = vmatprep.subr.bf16.mxu0 0
        %3203 = vmatpush1.bf16.msra.mxu0 0
        %3204 = vmatprep.subr.bf16.mxu0 0
        %3205 = vmatpush1.bf16.msra.mxu0 0
        %3206 = vmatprep.subr.bf16.mxu0 0
        %3207 = vmatpush1.bf16.msra.mxu0 0
        %3208 = vmatprep.mubr.bf16.mxu0 0
        %3209 = vmatmul.mubr.bf16.gmra.mrb[0].mxu0 %v3171
        %v3210 = vpop.f32.mrb[0].mxu0
        %v3211 = vadd.f32 0.0, %v3210
        %v3212 = vpop.f32.mrb[0].mxu0
        %v3213 = vpop.f32.mrb[0].mxu0
        %v3214 = vpop.f32.mrb[0].mxu0
        %3215 = vdwg.mxu0
        %v3216 = vcombine.low %v3073, %v3165
        %v3217 = vcombine.high %v3073, %v3165
        %v3219 = vunpack.c.l.s4 1983009808
        %v3220 = vunpack.c.0.s8 %v3219
        %v3221 = vlaneseq
        %v3222 = vshrl.u32 %v3221, 7
        %v3223 = vsub.s32 %v3220, %v3222
        %v3224 = vrot.slane %v3216, %v3223
        %v3226 = vunpack.c.l.s4 1983009808
        %v3227 = vunpack.c.0.s8 %v3226
        %v3228 = vlaneseq
        %v3229 = vshrl.u32 %v3228, 7
        %v3230 = vsub.s32 %v3227, %v3229
        %v3231 = vrot.slane %v3217, %v3230
        %v3232 = vcombine.low %v3119, %v3211
        %v3233 = vcombine.high %v3119, %v3211
        %v3235 = vunpack.c.l.s4 1983009808
        %v3236 = vunpack.c.0.s8 %v3235
        %v3237 = vlaneseq
        %v3238 = vshrl.u32 %v3237, 7
        %v3239 = vsub.s32 %v3236, %v3238
        %v3240 = vrot.slane %v3232, %v3239
        %v3242 = vunpack.c.l.s4 1983009808
        %v3243 = vunpack.c.0.s8 %v3242
        %v3244 = vlaneseq
        %v3245 = vshrl.u32 %v3244, 7
        %v3246 = vsub.s32 %v3243, %v3245
        %v3247 = vrot.slane %v3233, %v3246
        %v3248 = vcombine.low %v3224, %v3240
        %v3249 = vcombine.high %v3224, %v3240
        %v3251 = vunpack.c.l.s4 1934713408
        %v3252 = vunpack.c.0.s8 %v3251
        %v3253 = vlaneseq
        %v3254 = vshrl.u32 %v3253, 7
        %v3255 = vsub.s32 %v3252, %v3254
        %v3256 = vrot.slane %v3248, %v3255
        %v3258 = vunpack.c.l.s4 1934713408
        %v3259 = vunpack.c.0.s8 %v3258
        %v3260 = vlaneseq
        %v3261 = vshrl.u32 %v3260, 7
        %v3262 = vsub.s32 %v3259, %v3261
        %v3263 = vrot.slane %v3249, %v3262
        %v3264 = vcombine.low %v3231, %v3247
        %v3265 = vcombine.high %v3231, %v3247
        %v3267 = vunpack.c.l.s4 1934713408
        %v3268 = vunpack.c.0.s8 %v3267
        %v3269 = vlaneseq
        %v3270 = vshrl.u32 %v3269, 7
        %v3271 = vsub.s32 %v3268, %v3270
        %v3272 = vrot.slane %v3264, %v3271
        %v3274 = vunpack.c.l.s4 1934713408
        %v3275 = vunpack.c.0.s8 %v3274
        %v3276 = vlaneseq
        %v3277 = vshrl.u32 %v3276, 7
        %v3278 = vsub.s32 %v3275, %v3277
        %v3279 = vrot.slane %v3265, %v3278
        %v3280 = vcombine.high %v3256, 0.0
        %v3281 = vcombine.high %v3263, 0.0
        %v3282 = vcombine.high %v3272, 0.0
        %v3283 = vcombine.high %v3279, 0.0
        %v3284 = vcombine.low %v3256, %v3263
        %v3286 = vunpack.c.l.s4 1983009808
        %v3287 = vunpack.c.0.s8 %v3286
        %v3288 = vlaneseq
        %v3289 = vshrl.u32 %v3288, 7
        %v3290 = vsub.s32 %v3287, %v3289
        %v3291 = vrot.slane %v3284, %v3290
        %v3292 = vcombine.low %v3280, %v3281
        %v3294 = vunpack.c.l.s4 1983009808
        %v3295 = vunpack.c.0.s8 %v3294
        %v3296 = vlaneseq
        %v3297 = vshrl.u32 %v3296, 7
        %v3298 = vsub.s32 %v3295, %v3297
        %v3299 = vrot.slane %v3292, %v3298
        %v3300 = vcombine.low %v3272, %v3279
        %v3302 = vunpack.c.l.s4 1983009808
        %v3303 = vunpack.c.0.s8 %v3302
        %v3304 = vlaneseq
        %v3305 = vshrl.u32 %v3304, 7
        %v3306 = vsub.s32 %v3303, %v3305
        %v3307 = vrot.slane %v3300, %v3306
        %v3308 = vcombine.low %v3282, %v3283
        %v3310 = vunpack.c.l.s4 1983009808
        %v3311 = vunpack.c.0.s8 %v3310
        %v3312 = vlaneseq
        %v3313 = vshrl.u32 %v3312, 7
        %v3314 = vsub.s32 %v3311, %v3313
        %v3315 = vrot.slane %v3308, %v3314
        %v3316 = vcombine.low %v3291, %v3299
        %v3317 = vcombine.high %v3291, %v3299
        %v3319 = vunpack.c.l.s4 1934713408
        %v3320 = vunpack.c.0.s8 %v3319
        %v3321 = vlaneseq
        %v3322 = vshrl.u32 %v3321, 7
        %v3323 = vsub.s32 %v3320, %v3322
        %v3324 = vrot.slane %v3316, %v3323
        %v3326 = vunpack.c.l.s4 1934713408
        %v3327 = vunpack.c.0.s8 %v3326
        %v3328 = vlaneseq
        %v3329 = vshrl.u32 %v3328, 7
        %v3330 = vsub.s32 %v3327, %v3329
        %v3331 = vrot.slane %v3317, %v3330
        %v3332 = vcombine.low %v3307, %v3315
        %v3333 = vcombine.high %v3307, %v3315
        %v3335 = vunpack.c.l.s4 1934713408
        %v3336 = vunpack.c.0.s8 %v3335
        %v3337 = vlaneseq
        %v3338 = vshrl.u32 %v3337, 7
        %v3339 = vsub.s32 %v3336, %v3338
        %v3340 = vrot.slane %v3332, %v3339
        %v3342 = vunpack.c.l.s4 1934713408
        %v3343 = vunpack.c.0.s8 %v3342
        %v3344 = vlaneseq
        %v3345 = vshrl.u32 %v3344, 7
        %v3346 = vsub.s32 %v3343, %v3345
        %v3347 = vrot.slane %v3333, %v3346
        %v3348 = vcombine.low %v3324, %v3340
        %v3349 = vcombine.high %v3324, %v3340
        %v3350 = vcombine.low %v3331, %v3347
        %v3351 = vcombine.high %v3331, %v3347
        %3353 = vrot.lane.b32.xlu0 %v3349, 8
        %v3354 = vpop.permute.xlu0 %3353
        %3357 = vrot.lane.b32.xlu0 %v3350, 16
        %v3358 = vpop.permute.xlu0 %3357
        %3361 = vrot.lane.b32.xlu0 %v3351, 24
        %v3362 = vpop.permute.xlu0 %3361
        %v3364 = vsel %vm1377, %v3348, %v3354
        %v3365 = vsel %vm1956, %v3364, %v3358
        %v3366 = vsel %vm1958, %v3365, %v3362
        %3367 = vst.msk [vmem:[%s843] sm:$0xff] %vm2978, %v3016
        %3368 = vst.msk [vmem:[%s843 + $0x8] sm:$0xff] %vm2978, %v3018
        %3369 = vst.msk [vmem:[%s843 + $0x10] sm:$0xff] %vm2978, %v3020
        %3370 = vst.msk [vmem:[%s843 + $0x18] sm:$0xff] %vm2978, %v3022
        %v3371 = vld [vmem:[%s14] sm:$0xf]
        %v3372 = vld [vmem:[%s14 + $0x4] sm:$0xf]
        %v3373 = vld [vmem:[%s14 + $0x8] sm:$0xf]
        %v3374 = vld [vmem:[%s14 + $0xc] sm:$0xf]
        %v3375 = vpack.c.bf16 %v3366, %v3366
        %v3376 = vld [vmem:[%s15] sm:$0x1]
        %v3378 = vlaneseq
        %v3379 = vshrl.u32 %v3378, 7
        %v3380 = vsub.s32 0, %v3379
        %v3381 = vrot.slane %v3376, %v3380
        %v3387 = vunpack.c.l.b16 %v3371
        %v3388 = vunpack.c.l.b16 %v3372
        %v3389 = vunpack.c.l.b16 %v3373
        %v3390 = vunpack.c.l.b16 %v3374
        %v3391 = vpack.c.b16 %v3388, %v3387
        %v3392 = vpack.c.b16 %v3390, %v3389
        %v3396 = vsel %vm882, %v3375, 0
        %3398 = vmatprep.subr.bf16.mxu0 0
        %3399 = vmatpush1.bf16.msra.mxu0 %v3391
        %3400 = vmatprep.subr.bf16.mxu0 0
        %3401 = vmatpush1.bf16.msra.mxu0 %v3392
        %3402 = vmatprep.subr.bf16.mxu0 0
        %3403 = vmatpush1.bf16.msra.mxu0 0
        %3404 = vmatprep.subr.bf16.mxu0 0
        %3405 = vmatpush1.bf16.msra.mxu0 0
        %3406 = vmatprep.subr.bf16.mxu0 0
        %3407 = vmatpush1.bf16.msra.mxu0 0
        %3408 = vmatprep.subr.bf16.mxu0 0
        %3409 = vmatpush1.bf16.msra.mxu0 0
        %3410 = vmatprep.subr.bf16.mxu0 0
        %3411 = vmatpush1.bf16.msra.mxu0 0
        %3412 = vmatprep.subr.bf16.mxu0 0
        %3413 = vmatpush1.bf16.msra.mxu0 0
        %3414 = vmatprep.subr.bf16.mxu0 0
        %3415 = vmatpush1.bf16.msra.mxu0 0
        %3416 = vmatprep.subr.bf16.mxu0 0
        %3417 = vmatpush1.bf16.msra.mxu0 0
        %3418 = vmatprep.subr.bf16.mxu0 0
        %3419 = vmatpush1.bf16.msra.mxu0 0
        %3420 = vmatprep.subr.bf16.mxu0 0
        %3421 = vmatpush1.bf16.msra.mxu0 0
        %3422 = vmatprep.subr.bf16.mxu0 0
        %3423 = vmatpush1.bf16.msra.mxu0 0
        %3424 = vmatprep.subr.bf16.mxu0 0
        %3425 = vmatpush1.bf16.msra.mxu0 0
        %3426 = vmatprep.subr.bf16.mxu0 0
        %3427 = vmatpush1.bf16.msra.mxu0 0
        %3428 = vmatprep.subr.bf16.mxu0 0
        %3429 = vmatpush1.bf16.msra.mxu0 0
        %3430 = vmatprep.mubr.bf16.mxu0 0
        %3431 = vmatmul.mubr.bf16.gmra.mrb[0].mxu0 %v3396
        %v3432 = vpop.f32.mrb[0].mxu0
        %v3433 = vadd.f32 %v3381, %v3432
        %v3434 = vpop.f32.mrb[0].mxu0
        %v3435 = vpop.f32.mrb[0].mxu0
        %v3436 = vpop.f32.mrb[0].mxu0
        %3437 = vdwg.mxu0
        %v3438 = vadd.f32 %v2057, %v3433
        %v3439 = vld [vmem:[%s16] sm:$0x1]
        %v3440 = vld [vmem:[%s17] sm:$0x1]
        %v3441 = vsel %vm882, %v3438, 0.0
        %3442 = vadd.xlane.f32.xlu0 %v3441
        %v3443 = vpop.xlane.xlu0 %3442
        %v3444 = vmul.f32 %v3443, %v2033
        %v3445 = vsub.f32 %v3438, %v3444
        %v3446 = vmul.f32 %v3445, %v3445
        %v3447 = vsel %vm882, %v3446, 0.0
        %3448 = vadd.xlane.f32.xlu0 %v3447
        %v3449 = vpop.xlane.xlu0 %3448
        %v3450 = vmul.f32 %v3449, %v2033
        %v3451 = vadd.f32 %v3450, 1e-05
        %v3452 = vrsqrt.pop %v3451
        %v3453 = vmul.f32 %v3445, %v3452
        %v3455 = vlaneseq
        %v3456 = vshrl.u32 %v3455, 7
        %v3457 = vsub.s32 0, %v3456
        %v3458 = vrot.slane %v3439, %v3457
        %v3460 = vmul.f32 %v3453, %v3458
        %v3462 = vlaneseq
        %v3463 = vshrl.u32 %v3462, 7
        %v3464 = vsub.s32 0, %v3463
        %v3465 = vrot.slane %v3440, %v3464
        %v3467 = vadd.f32 %v3460, %v3465
        %v3468 = vld [vmem:[%s18] sm:$0xf]
        %v3469 = vld [vmem:[%s18 + $0x4] sm:$0xf]
        %v3470 = vld [vmem:[%s18 + $0x8] sm:$0xf]
        %v3471 = vld [vmem:[%s18 + $0xc] sm:$0xf]
        %v3472 = vpack.c.bf16 %v3467, %v3467
        %v3473 = vld [vmem:[%s19] sm:$0x1]
        %v3475 = vlaneseq
        %v3476 = vshrl.u32 %v3475, 7
        %v3477 = vsub.s32 0, %v3476
        %v3478 = vrot.slane %v3473, %v3477
        %v3484 = vunpack.c.l.b16 %v3468
        %v3485 = vunpack.c.l.b16 %v3469
        %v3486 = vunpack.c.l.b16 %v3470
        %v3487 = vunpack.c.l.b16 %v3471
        %v3488 = vpack.c.b16 %v3485, %v3484
        %v3489 = vpack.c.b16 %v3487, %v3486
        %v3493 = vsel %vm882, %v3472, 0
        %3495 = vmatprep.subr.bf16.mxu0 0
        %3496 = vmatpush1.bf16.msra.mxu0 %v3488
        %3497 = vmatprep.subr.bf16.mxu0 0
        %3498 = vmatpush1.bf16.msra.mxu0 %v3489
        %3499 = vmatprep.subr.bf16.mxu0 0
        %3500 = vmatpush1.bf16.msra.mxu0 0
        %3501 = vmatprep.subr.bf16.mxu0 0
        %3502 = vmatpush1.bf16.msra.mxu0 0
        %3503 = vmatprep.subr.bf16.mxu0 0
        %3504 = vmatpush1.bf16.msra.mxu0 0
        %3505 = vmatprep.subr.bf16.mxu0 0
        %3506 = vmatpush1.bf16.msra.mxu0 0
        %3507 = vmatprep.subr.bf16.mxu0 0
        %3508 = vmatpush1.bf16.msra.mxu0 0
        %3509 = vmatprep.subr.bf16.mxu0 0
        %3510 = vmatpush1.bf16.msra.mxu0 0
        %3511 = vmatprep.subr.bf16.mxu0 0
        %3512 = vmatpush1.bf16.msra.mxu0 0
        %3513 = vmatprep.subr.bf16.mxu0 0
        %3514 = vmatpush1.bf16.msra.mxu0 0
        %3515 = vmatprep.subr.bf16.mxu0 0
        %3516 = vmatpush1.bf16.msra.mxu0 0
        %3517 = vmatprep.subr.bf16.mxu0 0
        %3518 = vmatpush1.bf16.msra.mxu0 0
        %3519 = vmatprep.subr.bf16.mxu0 0
        %3520 = vmatpush1.bf16.msra.mxu0 0
        %3521 = vmatprep.subr.bf16.mxu0 0
        %3522 = vmatpush1.bf16.msra.mxu0 0
        %3523 = vmatprep.subr.bf16.mxu0 0
        %3524 = vmatpush1.bf16.msra.mxu0 0
        %3525 = vmatprep.subr.bf16.mxu0 0
        %3526 = vmatpush1.bf16.msra.mxu0 0
        %3527 = vmatprep.mubr.bf16.mxu0 0
        %3528 = vmatmul.mubr.bf16.gmra.mrb[0].mxu0 %v3493
        %v3529 = vpop.f32.mrb[0].mxu0
        %v3530 = vadd.f32 %v3478, %v3529
        %v3531 = vpop.f32.mrb[0].mxu0
        %v3532 = vpop.f32.mrb[0].mxu0
        %v3533 = vpop.f32.mrb[0].mxu0
        %3534 = vdwg.mxu0
        %v3535 = vmax.f32 %v3530, 0.0
        %v3536 = vld [vmem:[%s20] sm:$0xf]
        %v3537 = vld [vmem:[%s20 + $0x4] sm:$0xf]
        %v3538 = vld [vmem:[%s20 + $0x8] sm:$0xf]
        %v3539 = vld [vmem:[%s20 + $0xc] sm:$0xf]
        %v3540 = vld [vmem:[%s20 + $0x10] sm:$0xf]
        %v3541 = vld [vmem:[%s20 + $0x14] sm:$0xf]
        %v3542 = vld [vmem:[%s20 + $0x18] sm:$0xf]
        %v3543 = vld [vmem:[%s20 + $0x1c] sm:$0xf]
        %v3544 = vpack.c.bf16 %v3535, %v3535
        %v3545 = vld [vmem:[%s21] sm:$0x1]
        %v3547 = vlaneseq
        %v3548 = vshrl.u32 %v3547, 7
        %v3549 = vsub.s32 0, %v3548
        %v3550 = vrot.slane %v3545, %v3549
        %v3560 = vunpack.c.l.b16 %v3536
        %v3561 = vunpack.c.l.b16 %v3537
        %v3562 = vunpack.c.l.b16 %v3538
        %v3563 = vunpack.c.l.b16 %v3539
        %v3564 = vunpack.c.l.b16 %v3540
        %v3565 = vunpack.c.l.b16 %v3541
        %v3566 = vunpack.c.l.b16 %v3542
        %v3567 = vunpack.c.l.b16 %v3543
        %v3568 = vpack.c.b16 %v3561, %v3560
        %v3569 = vpack.c.b16 %v3563, %v3562
        %v3570 = vpack.c.b16 %v3565, %v3564
        %v3571 = vpack.c.b16 %v3567, %v3566
        %vm3576 = vcmask 523264
        %v3578 = vsel %vm3576, %v3544, 0
        %3580 = vmatprep.subr.bf16.mxu0 0
        %3581 = vmatpush1.bf16.msra.mxu0 %v3568
        %3582 = vmatprep.subr.bf16.mxu0 0
        %3583 = vmatpush1.bf16.msra.mxu0 %v3569
        %3584 = vmatprep.subr.bf16.mxu0 0
        %3585 = vmatpush1.bf16.msra.mxu0 %v3570
        %3586 = vmatprep.subr.bf16.mxu0 0
        %3587 = vmatpush1.bf16.msra.mxu0 %v3571
        %3588 = vmatprep.subr.bf16.mxu0 0
        %3589 = vmatpush1.bf16.msra.mxu0 0
        %3590 = vmatprep.subr.bf16.mxu0 0
        %3591 = vmatpush1.bf16.msra.mxu0 0
        %3592 = vmatprep.subr.bf16.mxu0 0
        %3593 = vmatpush1.bf16.msra.mxu0 0
        %3594 = vmatprep.subr.bf16.mxu0 0
        %3595 = vmatpush1.bf16.msra.mxu0 0
        %3596 = vmatprep.subr.bf16.mxu0 0
        %3597 = vmatpush1.bf16.msra.mxu0 0
        %3598 = vmatprep.subr.bf16.mxu0 0
        %3599 = vmatpush1.bf16.msra.mxu0 0
        %3600 = vmatprep.subr.bf16.mxu0 0
        %3601 = vmatpush1.bf16.msra.mxu0 0
        %3602 = vmatprep.subr.bf16.mxu0 0
        %3603 = vmatpush1.bf16.msra.mxu0 0
        %3604 = vmatprep.subr.bf16.mxu0 0
        %3605 = vmatpush1.bf16.msra.mxu0 0
        %3606 = vmatprep.subr.bf16.mxu0 0
        %3607 = vmatpush1.bf16.msra.mxu0 0
        %3608 = vmatprep.subr.bf16.mxu0 0
        %3609 = vmatpush1.bf16.msra.mxu0 0
        %3610 = vmatprep.subr.bf16.mxu0 0
        %3611 = vmatpush1.bf16.msra.mxu0 0
        %3612 = vmatprep.mubr.bf16.mxu0 0
        %3613 = vmatmul.mubr.bf16.gmra.mrb[0].mxu0 %v3578
        %v3614 = vpop.f32.mrb[0].mxu0
        %v3615 = vadd.f32 %v3550, %v3614
        %v3616 = vpop.f32.mrb[0].mxu0
        %v3617 = vpop.f32.mrb[0].mxu0
        %v3618 = vpop.f32.mrb[0].mxu0
        %3619 = vdwg.mxu0
        %v3620 = vadd.f32 %v3467, %v3615
        %v3621 = vld [vmem:[%s22] sm:$0x1]
        %v3622 = vld [vmem:[%s23] sm:$0x1]
        %v3623 = vsel %vm882, %v3620, 0.0
        %3624 = vadd.xlane.f32.xlu0 %v3623
        %v3625 = vpop.xlane.xlu0 %3624
        %v3626 = vmul.f32 %v3625, %v2033
        %v3627 = vsub.f32 %v3620, %v3626
        %v3628 = vmul.f32 %v3627, %v3627
        %v3629 = vsel %vm882, %v3628, 0.0
        %3630 = vadd.xlane.f32.xlu0 %v3629
        %v3631 = vpop.xlane.xlu0 %3630
        %v3632 = vmul.f32 %v3631, %v2033
        %v3633 = vadd.f32 %v3632, 1e-05
        %v3634 = vrsqrt.pop %v3633
        %v3635 = vmul.f32 %v3627, %v3634
        %v3637 = vlaneseq
        %v3638 = vshrl.u32 %v3637, 7
        %v3639 = vsub.s32 0, %v3638
        %v3640 = vrot.slane %v3621, %v3639
        %v3642 = vmul.f32 %v3635, %v3640
        %v3644 = vlaneseq
        %v3645 = vshrl.u32 %v3644, 7
        %v3646 = vsub.s32 0, %v3645
        %v3647 = vrot.slane %v3622, %v3646
        %v3649 = vadd.f32 %v3642, %v3647
        %3650 = vst.msk [vmem:[%s836] sm:$0xff] %vm882, %v3649
        %s3651 = sand.u32 %s573, 1
        %s3652 = scalar_lea.sflag [#allocation4], %s3651
        %s3653 = sand.u32 %s573, 1
        %s3654 = smul.addr %s3653, 8
        %s3655 = scalar_lea.vmem [#allocation10], %s3654
        %s3656 = sand.u32 %s599, 1
        %s3657 = scalar_lea.sflag [#allocation12], %s3656
        %s3658 = sand.u32 %s599, 1
        %s3659 = smul.addr %s3658, 32
        %s3660 = scalar_lea.vmem [#allocation11], %s3659
        // Predicated region
        $region133: #{tpu_custom_call.1} parent=115 // pred_check
          %p3661 = pneg %p583
        $region134: #{tpu_custom_call.1} parent=115 // pred_check_branch
          %3663 = sbr.rel (%p3661) target = $region136
        $region135: #{tpu_custom_call.1} parent=115 // pred_region
          %s3665 = ssub.s32 128, 128
          %3666 = vsyncadd %s3652, %s3665
          %s3667 = smul.addr %s46, 128
          %s3668 = scalar_lea.hbm %s24, %s3667
          %s3670 = sshll.u32 %s3655, 4
          %s3671 = int_to_ptr.vmem [resolvable:$true] %s3670
          %3673 = dma.vmem_to_hbm [thread:$0]  %s3671, 128, %s3668, %s3652
        $region136: #{tpu_custom_call.1} parent=115 // pred_fallthru
          _
        // Predicated region
        $region137: #{tpu_custom_call.1} parent=115 // pred_check
          %p3674 = pneg %p609
        $region138: #{tpu_custom_call.1} parent=115 // pred_check_branch
          %3676 = sbr.rel (%p3674) target = $region140
        $region139: #{tpu_custom_call.1} parent=115 // pred_region
          %s3678 = ssub.s32 512, 512
          %3679 = vsyncadd %s3657, %s3678
          %s3680 = smul.addr %s46, 4
          %s3681 = smul.addr %s3680, 128
          %s3682 = scalar_lea.hbm %s25, %s3681
          %s3683 = sshll.u32 %s3660, 4
          %s3684 = int_to_ptr.vmem [resolvable:$true] %s3683
          %3689 = dma.vmem_to_hbm [thread:$0]  %s3684, 512, %s3682, %s3657, 128, 128, 8
        $region140: #{tpu_custom_call.1} parent=115 // pred_fallthru
          _
      $region116: #{tpu_custom_call.1} parent=5 // pred_fallthru
        _
      %p3690 = scmp.le.s32.totalorder 2, %s41
      // Predicated region
      $region141: #{tpu_custom_call.1} parent=5 // pred_check
        %p3691 = pneg %p3690
      $region142: #{tpu_custom_call.1} parent=5 // pred_check_branch
        %3693 = sbr.rel (%p3691) target = $region144
      $region143: #{tpu_custom_call.1} parent=5 // pred_region
        %s3694 = ssub.s32 %s41, 2
        // Predicated region
        $region145: #{tpu_custom_call.1} parent=143 // pred_check
          %p3695 = pneg %p589
        $region146: #{tpu_custom_call.1} parent=143 // pred_check_branch
          %3697 = sbr.rel (%p3695) target = $region148
        $region147: #{tpu_custom_call.1} parent=143 // pred_region
          %s3698 = sand.u32 %s574, 1
          %s3699 = scalar_lea.sflag [#allocation4], %s3698
          %s3700 = sand.u32 %s574, 1
          %s3701 = smul.addr %s3700, 8
          %s3702 = scalar_lea.vmem [#allocation10], %s3701
          %3703 = dma.done %s3699, 128
        $region148: #{tpu_custom_call.1} parent=143 // pred_fallthru
          _
        // Predicated region
        $region149: #{tpu_custom_call.1} parent=143 // pred_check
          %p3704 = pneg %p615
        $region150: #{tpu_custom_call.1} parent=143 // pred_check_branch
          %3706 = sbr.rel (%p3704) target = $region152
        $region151: #{tpu_custom_call.1} parent=143 // pred_region
          %s3707 = sand.u32 %s600, 1
          %s3708 = scalar_lea.sflag [#allocation12], %s3707
          %s3709 = sand.u32 %s600, 1
          %s3710 = smul.addr %s3709, 32
          %s3711 = scalar_lea.vmem [#allocation11], %s3710
          %3712 = dma.done %s3708, 512
        $region152: #{tpu_custom_call.1} parent=143 // pred_fallthru
          _
      $region144: #{tpu_custom_call.1} parent=5 // pred_fallthru
        _
    $region6: #{tpu_custom_call.1} parent=1 // loop_footer
      %s45 = sadd.s32 1, %s41
    $region7: #{tpu_custom_call.1} parent=1 // loop_footer_branch
      %40 = sbr.rel target = $region3
    $region8: #{tpu_custom_call.1} parent=1 // loop_exit
      _
    %3713 = vsyncpa [#allocation3], 1
    %s3714 = scalar_lea.sflag [#allocation3], 1
    %3715 = vsyncpa %s3714, 1
    %3716 = vsyncpa [#allocation6], 1
    %3717 = vsyncpa [#allocation9], 1
    %3718 = vsyncpa [#allocation4], 1
    %s3719 = scalar_lea.sflag [#allocation4], 1
    %3720 = vsyncpa %s3719, 1
    %3721 = vsyncpa [#allocation12], 1
    %s3722 = scalar_lea.sflag [#allocation12], 1
    %3723 = vsyncpa %s3722, 1

// kernel: tpu_custom_call.1
$region0: #{tpu_custom_call.1}
  #allocation0 [shape = 'u32[]', space=smem, size = 0x4, offset = 0x4, fixed_abs, tag = 'smem constant byte address 0x4 - core index']
  #allocation1 [shape = 'u32[144,128]{1,0:T(1,128)}', space=vmem, size = 0x12000, scoped, tag = 'internal scratch']
  %s0 = inlined_call_operand.vmem [shape: f32[2,8,32], index: 0, kind: input, shape index: {}]
  %s1 = inlined_call_operand.vmem [shape: f32[2,10,32], index: 1, kind: input, shape index: {}]
  %s2 = inlined_call_operand.hbm [shape: f32[8,8], index: 2, kind: input, shape index: {}]
  %s3 = inlined_call_operand.vmem [shape: f32[2,1,10], index: 3, kind: input, shape index: {}]
  %s4 = inlined_call_operand.vmem [shape: bf16[32,96], index: 4, kind: input, shape index: {}]
  %s5 = inlined_call_operand.hbm [shape: f32[1,96], index: 5, kind: input, shape index: {}]
  %s6 = inlined_call_operand.vmem [shape: bf16[32,32], index: 6, kind: input, shape index: {}]
  %s7 = inlined_call_operand.hbm [shape: f32[1,32], index: 7, kind: input, shape index: {}]
  %s8 = inlined_call_operand.hbm [shape: f32[1,32], index: 8, kind: input, shape index: {}]
  %s9 = inlined_call_operand.vmem [shape: f32[1,32], index: 9, kind: input, shape index: {}]
  %s10 = inlined_call_operand.vmem [shape: bf16[32,32], index: 10, kind: input, shape index: {}]
  %s11 = inlined_call_operand.vmem [shape: f32[1,32], index: 11, kind: input, shape index: {}]
  %s12 = inlined_call_operand.vmem [shape: bf16[32,64], index: 12, kind: input, shape index: {}]
  %s13 = inlined_call_operand.vmem [shape: f32[1,64], index: 13, kind: input, shape index: {}]
  %s14 = inlined_call_operand.vmem [shape: bf16[32,32], index: 14, kind: input, shape index: {}]
  %s15 = inlined_call_operand.vmem [shape: f32[1,32], index: 15, kind: input, shape index: {}]
  %s16 = inlined_call_operand.vmem [shape: f32[1,32], index: 16, kind: input, shape index: {}]
  %s17 = inlined_call_operand.vmem [shape: f32[1,32], index: 17, kind: input, shape index: {}]
  %s18 = inlined_call_operand.vmem [shape: bf16[32,64], index: 18, kind: input, shape index: {}]
  %s19 = inlined_call_operand.vmem [shape: f32[1,64], index: 19, kind: input, shape index: {}]
  %s20 = inlined_call_operand.vmem [shape: bf16[64,32], index: 20, kind: input, shape index: {}]
  %s21 = inlined_call_operand.vmem [shape: f32[1,32], index: 21, kind: input, shape index: {}]
  %s22 = inlined_call_operand.vmem [shape: f32[1,32], index: 22, kind: input, shape index: {}]
  %s23 = inlined_call_operand.vmem [shape: f32[1,32], index: 23, kind: input, shape index: {}]
  %s24 = inlined_call_operand.hbm [shape: f32[2,8,32], index: 24, kind: output, shape index: {0}]
  %s25 = inlined_call_operand.hbm [shape: f32[2,4,8,10], index: 25, kind: output, shape index: {1}]
  %26 = xla_tuple %s24, %s25
  %s27 = sld [smem:[#allocation0]]
  $region153: #{tpu_custom_call.1} parent=0
    _
  %s29 = ssub.s32 1, %s27
  %s30 = scalar_select 0, %s29, %s27
  $region1: #{tpu_custom_call.1} parent=0
    #allocation2 [shape = 'u8[4096]{0}', space=vmem, size = 0x1000, scoped, tag = 'input window, operand 2, single buffered']
    #allocation3 [shape = 's32[2]{0}', space=sflag, size = 0x8, scoped, tag = 'scoped memory for tpu_custom_call.1']
    #allocation4 [shape = 's32[2]{0}', space=sflag, size = 0x8, scoped, tag = 'scoped memory for tpu_custom_call.1']
    #allocation5 [shape = 'u8[512]{0}', space=vmem, size = 0x400, scoped, tag = 'input window, operand 5, single buffered']
    #allocation6 [shape = 's32[1]{0}', space=sflag, size = 0x4, scoped, tag = 'scoped memory for tpu_custom_call.1']
    #allocation7 [shape = 'u8[512]{0}', space=vmem, size = 0x400, scoped, tag = 'input window, operand 7, single buffered']
    #allocation8 [shape = 'u8[512]{0}', space=vmem, size = 0x400, scoped, tag = 'input window, operand 8, single buffered']
    #allocation9 [shape = 's32[1]{0}', space=sflag, size = 0x4, scoped, tag = 'scoped memory for tpu_custom_call.1']
    #allocation10 [shape = 'u8[8192]{0}', space=vmem, size = 0x2000, scoped, tag = 'output window, operand 0']
    #allocation11 [shape = 'u8[32768]{0}', space=vmem, size = 0x8000, scoped, tag = 'output window, operand 1']
    #allocation12 [shape = 's32[2]{0}', space=sflag, size = 0x8, scoped, tag = 'scoped memory for tpu_custom_call.1']
    %31 = vsyncpa [#allocation3], 0
    %32 = vsyncpa [#allocation6], 0
    %33 = vsyncpa [#allocation9], 0
    %34 = vsyncpa [#allocation4], 0
    %s35 = scalar_lea.sflag [#allocation4], 1
    %36 = vsyncpa %s35, 0
    %37 = vsyncpa [#allocation12], 0
    %s38 = scalar_lea.sflag [#allocation12], 1
    %39 = vsyncpa %s38, 0
    loop: start=0, step=1, limit=4
    $region2: #{tpu_custom_call.1} parent=1 // loop_pre_header
      _
    $region3: #{tpu_custom_call.1} parent=1 // loop_header
      %s41 = sphi 0, %s45
      %p42 = scmp.ge.s32.totalorder %s41, 4
      %s51 = sphi 0, %s53
      %s54 = sphi 0, %s51
      %s55 = sphi 0, %s54
      %s71 = sphi 0, %s55
      %s77 = sphi 0, %s79
      %s80 = sphi 0, %s77
      %s81 = sphi 0, %s80
      %s97 = sphi 0, %s81
      %s101 = sphi 0, %s101
      %s103 = sphi 0, %s101
      %s104 = sphi 0, %s103
      %s118 = sphi 0, %s104
      %s124 = sphi 0, %s126
      %s127 = sphi 0, %s124
      %s128 = sphi 0, %s127
      %s144 = sphi 0, %s128
      %s148 = sphi 0, %s148
      %s150 = sphi 0, %s148
      %s151 = sphi 0, %s150
      %s165 = sphi 0, %s151
      %s169 = sphi 0, %s169
      %s171 = sphi 0, %s169
      %s172 = sphi 0, %s171
      %s186 = sphi 0, %s172
      %s190 = sphi 0, %s190
      %s192 = sphi 0, %s190
      %s193 = sphi 0, %s192
      %s207 = sphi 0, %s193
      %s211 = sphi 0, %s211
      %s213 = sphi 0, %s211
      %s214 = sphi 0, %s213
      %s228 = sphi 0, %s214
      %s232 = sphi 0, %s232
      %s234 = sphi 0, %s232
      %s235 = sphi 0, %s234
      %s249 = sphi 0, %s235
      %s253 = sphi 0, %s253
      %s255 = sphi 0, %s253
      %s256 = sphi 0, %s255
      %s270 = sphi 0, %s256
      %s274 = sphi 0, %s274
      %s276 = sphi 0, %s274
      %s277 = sphi 0, %s276
      %s291 = sphi 0, %s277
      %s295 = sphi 0, %s295
      %s297 = sphi 0, %s295
      %s298 = sphi 0, %s297
      %s312 = sphi 0, %s298
      %s316 = sphi 0, %s316
      %s318 = sphi 0, %s316
      %s319 = sphi 0, %s318
      %s333 = sphi 0, %s319
      %s337 = sphi 0, %s337
      %s339 = sphi 0, %s337
      %s340 = sphi 0, %s339
      %s354 = sphi 0, %s340
      %s358 = sphi 0, %s358
      %s360 = sphi 0, %s358
      %s361 = sphi 0, %s360
      %s375 = sphi 0, %s361
      %s379 = sphi 0, %s379
      %s381 = sphi 0, %s379
      %s382 = sphi 0, %s381
      %s396 = sphi 0, %s382
      %s400 = sphi 0, %s400
      %s402 = sphi 0, %s400
      %s403 = sphi 0, %s402
      %s417 = sphi 0, %s403
      %s421 = sphi 0, %s421
      %s423 = sphi 0, %s421
      %s424 = sphi 0, %s423
      %s438 = sphi 0, %s424
      %s442 = sphi 0, %s442
      %s444 = sphi 0, %s442
      %s445 = sphi 0, %s444
      %s459 = sphi 0, %s445
      %s463 = sphi 0, %s463
      %s465 = sphi 0, %s463
      %s466 = sphi 0, %s465
      %s480 = sphi 0, %s466
      %s484 = sphi 0, %s484
      %s486 = sphi 0, %s484
      %s487 = sphi 0, %s486
      %s501 = sphi 0, %s487
      %s505 = sphi 0, %s505
      %s507 = sphi 0, %s505
      %s508 = sphi 0, %s507
      %s522 = sphi 0, %s508
      %s526 = sphi 0, %s526
      %s528 = sphi 0, %s526
      %s529 = sphi 0, %s528
      %s543 = sphi 0, %s529
      %s547 = sphi 0, %s547
      %s549 = sphi 0, %s547
      %s550 = sphi 0, %s549
      %s564 = sphi 0, %s550
      %s570 = sphi 0, %s572
      %s573 = sphi 0, %s570
      %s574 = sphi 0, %s573
      %s590 = sphi 0, %s574
      %s596 = sphi 0, %s598
      %s599 = sphi 0, %s596
      %s600 = sphi 0, %s599
      %s616 = sphi 0, %s600
    $region4: #{tpu_custom_call.1} parent=1 // loop_header_branch
      %44 = sbr.rel (%p42) target = $region8
    $region5: #{tpu_custom_call.1} parent=1 // loop_body
      %s46 = ssub.s32 %s41, 1
      %s47 = ssub.s32 %s41, 2
      %s48 = sadd.s32 %s41, 1
      %s49 = ssub.s32 %s41, %s48
      %p50 = scmp.eq.s32.totalorder %s49, 0
      %s52 = sadd.s32 %s51, 1
      %s53 = scalar_select %p50, %s51, %s52
      %p56 = pneg %p50
      %p57 = scmp.eq.s32.totalorder %s41, 1
      %p58 = por %p56, %p57
      %p59 = scmp.ne.s32.totalorder %s51, %s54
      %p60 = scmp.eq.s32.totalorder %s41, 0
      %p61 = por %p59, %p60
      %p62 = scmp.ne.s32.totalorder %s51, %s54
      %p63 = scmp.eq.s32.totalorder %s46, 1
      %p64 = por %p62, %p63
      %p65 = scmp.ne.s32.totalorder %s54, %s55
      %p66 = scmp.eq.s32.totalorder %s46, 0
      %p67 = por %p65, %p66
      %p68 = scmp.ne.s32.totalorder %s54, %s55
      %p69 = scmp.eq.s32.totalorder %s47, 1
      %p70 = por %p68, %p69
      %p72 = scmp.ne.s32.totalorder %s55, %s71
      %p73 = scmp.eq.s32.totalorder %s47, 0
      %p74 = por %p72, %p73
      %s75 = ssub.s32 %s41, %s48
      %p76 = scmp.eq.s32.totalorder %s75, 0
      %s78 = sadd.s32 %s77, 1
      %s79 = scalar_select %p76, %s77, %s78
      %p82 = pneg %p76
      %p83 = scmp.eq.s32.totalorder %s41, 1
      %p84 = por %p82, %p83
      %p85 = scmp.ne.s32.totalorder %s77, %s80
      %p86 = scmp.eq.s32.totalorder %s41, 0
      %p87 = por %p85, %p86
      %p88 = scmp.ne.s32.totalorder %s77, %s80
      %p89 = scmp.eq.s32.totalorder %s46, 1
      %p90 = por %p88, %p89
      %p91 = scmp.ne.s32.totalorder %s80, %s81
      %p92 = scmp.eq.s32.totalorder %s46, 0
      %p93 = por %p91, %p92
      %p94 = scmp.ne.s32.totalorder %s80, %s81
      %p95 = scmp.eq.s32.totalorder %s47, 1
      %p96 = por %p94, %p95
      %p98 = scmp.ne.s32.totalorder %s81, %s97
      %p99 = scmp.eq.s32.totalorder %s47, 0
      %p100 = por %p98, %p99
      %s102 = sadd.s32 %s101, 1
      %p105 = scmp.eq.s32.totalorder %s41, 1
      %p106 = scmp.ne.s32.totalorder %s101, %s103
      %p107 = scmp.eq.s32.totalorder %s41, 0
      %p108 = por %p106, %p107
      %p109 = scmp.ne.s32.totalorder %s101, %s103
      %p110 = scmp.eq.s32.totalorder %s46, 1
      %p111 = por %p109, %p110
      %p112 = scmp.ne.s32.totalorder %s103, %s104
      %p113 = scmp.eq.s32.totalorder %s46, 0
      %p114 = por %p112, %p113
      %p115 = scmp.ne.s32.totalorder %s103, %s104
      %p116 = scmp.eq.s32.totalorder %s47, 1
      %p117 = por %p115, %p116
      %p119 = scmp.ne.s32.totalorder %s104, %s118
      %p120 = scmp.eq.s32.totalorder %s47, 0
      %p121 = por %p119, %p120
      %s122 = ssub.s32 %s41, %s48
      %p123 = scmp.eq.s32.totalorder %s122, 0
      %s125 = sadd.s32 %s124, 1
      %s126 = scalar_select %p123, %s124, %s125
      %p129 = pneg %p123
      %p130 = scmp.eq.s32.totalorder %s41, 1
      %p131 = por %p129, %p130
      %p132 = scmp.ne.s32.totalorder %s124, %s127
      %p133 = scmp.eq.s32.totalorder %s41, 0
      %p134 = por %p132, %p133
      %p135 = scmp.ne.s32.totalorder %s124, %s127
      %p136 = scmp.eq.s32.totalorder %s46, 1
      %p137 = por %p135, %p136
      %p138 = scmp.ne.s32.totalorder %s127, %s128
      %p139 = scmp.eq.s32.totalorder %s46, 0
      %p140 = por %p138, %p139
      %p141 = scmp.ne.s32.totalorder %s127, %s128
      %p142 = scmp.eq.s32.totalorder %s47, 1
      %p143 = por %p141, %p142
      %p145 = scmp.ne.s32.totalorder %s128, %s144
      %p146 = scmp.eq.s32.totalorder %s47, 0
      %p147 = por %p145, %p146
      %s149 = sadd.s32 %s148, 1
      %p152 = scmp.eq.s32.totalorder %s41, 1
      %p153 = scmp.ne.s32.totalorder %s148, %s150
      %p154 = scmp.eq.s32.totalorder %s41, 0
      %p155 = por %p153, %p154
      %p156 = scmp.ne.s32.totalorder %s148, %s150
      %p157 = scmp.eq.s32.totalorder %s46, 1
      %p158 = por %p156, %p157
      %p159 = scmp.ne.s32.totalorder %s150, %s151
      %p160 = scmp.eq.s32.totalorder %s46, 0
      %p161 = por %p159, %p160
      %p162 = scmp.ne.s32.totalorder %s150, %s151
      %p163 = scmp.eq.s32.totalorder %s47, 1
      %p164 = por %p162, %p163
      %p166 = scmp.ne.s32.totalorder %s151, %s165
      %p167 = scmp.eq.s32.totalorder %s47, 0
      %p168 = por %p166, %p167
      %s170 = sadd.s32 %s169, 1
      %p173 = scmp.eq.s32.totalorder %s41, 1
      %p174 = scmp.ne.s32.totalorder %s169, %s171
      %p175 = scmp.eq.s32.totalorder %s41, 0
      %p176 = por %p174, %p175
      %p177 = scmp.ne.s32.totalorder %s169, %s171
      %p178 = scmp.eq.s32.totalorder %s46, 1
      %p179 = por %p177, %p178
      %p180 = scmp.ne.s32.totalorder %s171, %s172
      %p181 = scmp.eq.s32.totalorder %s46, 0
      %p182 = por %p180, %p181
      %p183 = scmp.ne.s32.totalorder %s171, %s172
      %p184 = scmp.eq.s32.totalorder %s47, 1
      %p185 = por %p183, %p184
      %p187 = scmp.ne.s32.totalorder %s172, %s186
      %p188 = scmp.eq.s32.totalorder %s47, 0
      %p189 = por %p187, %p188
      %s191 = sadd.s32 %s190, 1
      %p194 = scmp.eq.s32.totalorder %s41, 1
      %p195 = scmp.ne.s32.totalorder %s190, %s192
      %p196 = scmp.eq.s32.totalorder %s41, 0
      %p197 = por %p195, %p196
      %p198 = scmp.ne.s32.totalorder %s190, %s192
      %p199 = scmp.eq.s32.totalorder %s46, 1
      %p200 = por %p198, %p199
      %p201 = scmp.ne.s32.totalorder %s192, %s193
      %p202 = scmp.eq.s32.totalorder %s46, 0
      %p203 = por %p201, %p202
      %p204 = scmp.ne.s32.totalorder %s192, %s193
      %p205 = scmp.eq.s32.totalorder %s47, 1
      %p206 = por %p204, %p205
      %p208 = scmp.ne.s32.totalorder %s193, %s207
      %p209 = scmp.eq.s32.totalorder %s47, 0
      %p210 = por %p208, %p209
      %s212 = sadd.s32 %s211, 1
      %p215 = scmp.eq.s32.totalorder %s41, 1
      %p216 = scmp.ne.s32.totalorder %s211, %s213
      %p217 = scmp.eq.s32.totalorder %s41, 0
      %p218 = por %p216, %p217
      %p219 = scmp.ne.s32.totalorder %s211, %s213
      %p220 = scmp.eq.s32.totalorder %s46, 1
      %p221 = por %p219, %p220
      %p222 = scmp.ne.s32.totalorder %s213, %s214
      %p223 = scmp.eq.s32.totalorder %s46, 0
      %p224 = por %p222, %p223
      %p225 = scmp.ne.s32.totalorder %s213, %s214
      %p226 = scmp.eq.s32.totalorder %s47, 1
      %p227 = por %p225, %p226
      %p229 = scmp.ne.s32.totalorder %s214, %s228
      %p230 = scmp.eq.s32.totalorder %s47, 0
      %p231 = por %p229, %p230
      %s233 = sadd.s32 %s232, 1
      %p236 = scmp.eq.s32.totalorder %s41, 1
      %p237 = scmp.ne.s32.totalorder %s232, %s234
      %p238 = scmp.eq.s32.totalorder %s41, 0
      %p239 = por %p237, %p238
      %p240 = scmp.ne.s32.totalorder %s232, %s234
      %p241 = scmp.eq.s32.totalorder %s46, 1
      %p242 = por %p240, %p241
      %p243 = scmp.ne.s32.totalorder %s234, %s235
      %p244 = scmp.eq.s32.totalorder %s46, 0
      %p245 = por %p243, %p244
      %p246 = scmp.ne.s32.totalorder %s234, %s235
      %p247 = scmp.eq.s32.totalorder %s47, 1
      %p248 = por %p246, %p247
      %p250 = scmp.ne.s32.totalorder %s235, %s249
      %p251 = scmp.eq.s32.totalorder %s47, 0
      %p252 = por %p250, %p251
      %s254 = sadd.s32 %s253, 1
      %p257 = scmp.eq.s32.totalorder %s41, 1
      %p258 = scmp.ne.s32.totalorder %s253, %s255
      %p259 = scmp.eq.s32.totalorder %s41, 0
      %p260 = por %p258, %p259
      %p261 = scmp.ne.s32.totalorder %s253, %s255
      %p262 = scmp.eq.s32.totalorder %s46, 1
      %p263 = por %p261, %p262
      %p264 = scmp.ne.s32.totalorder %s255, %s256
      %p265 = scmp.eq.s32.totalorder %s46, 0
      %p266 = por %p264, %p265
      %p267 = scmp.ne.s32.totalorder %s255, %s256
      %p268 = scmp.eq.s32.totalorder %s47, 1
      %p269 = por %p267, %p268
      %p271 = scmp.ne.s32.totalorder %s256, %s270
      %p272 = scmp.eq.s32.totalorder %s47, 0
      %p273 = por %p271, %p272
      %s275 = sadd.s32 %s274, 1
      %p278 = scmp.eq.s32.totalorder %s41, 1
      %p279 = scmp.ne.s32.totalorder %s274, %s276
      %p280 = scmp.eq.s32.totalorder %s41, 0
      %p281 = por %p279, %p280
      %p282 = scmp.ne.s32.totalorder %s274, %s276
      %p283 = scmp.eq.s32.totalorder %s46, 1
      %p284 = por %p282, %p283
      %p285 = scmp.ne.s32.totalorder %s276, %s277
      %p286 = scmp.eq.s32.totalorder %s46, 0
      %p287 = por %p285, %p286
      %p288 = scmp.ne.s32.totalorder %s276, %s277
      %p289 = scmp.eq.s32.totalorder %s47, 1
      %p290 = por %p288, %p289
      %p292 = scmp.ne.s32.totalorder %s277, %s291
      %p293 = scmp.eq.s32.totalorder %s47, 0
      %p294 = por %p292, %p293
      %s296 = sadd.s32 %s295, 1
      %p299 = scmp.eq.s32.totalorder %s41, 1
      %p300 = scmp.ne.s32.totalorder %s295, %s297
      %p301 = scmp.eq.s32.totalorder %s41, 0
      %p302 = por %p300, %p301
      %p303 = scmp.ne.s32.totalorder %s295, %s297
      %p304 = scmp.eq.s32.totalorder %s46, 1
      %p305 = por %p303, %p304
      %p306 = scmp.ne.s32.totalorder %s297, %s298
      %p307 = scmp.eq.s32.totalorder %s46, 0
      %p308 = por %p306, %p307
      %p309 = scmp.ne.s32.totalorder %s297, %s298
      %p310 = scmp.eq.s32.totalorder %s47, 1
      %p311 = por %p309, %p310
      %p313 = scmp.ne.s32.totalorder %s298, %s312
      %p314 = scmp.eq.s32.totalorder %s47, 0
      %p315 = por %p313, %p314
      %s317 = sadd.s32 %s316, 1
      %p320 = scmp.eq.s32.totalorder %s41, 1
      %p321 = scmp.ne.s32.totalorder %s316, %s318
      %p322 = scmp.eq.s32.totalorder %s41, 0
      %p323 = por %p321, %p322
      %p324 = scmp.ne.s32.totalorder %s316, %s318
      %p325 = scmp.eq.s32.totalorder %s46, 1
      %p326 = por %p324, %p325
      %p327 = scmp.ne.s32.totalorder %s318, %s319
      %p328 = scmp.eq.s32.totalorder %s46, 0
      %p329 = por %p327, %p328
      %p330 = scmp.ne.s32.totalorder %s318, %s319
      %p331 = scmp.eq.s32.totalorder %s47, 1
      %p332 = por %p330, %p331
      %p334 = scmp.ne.s32.totalorder %s319, %s333
      %p335 = scmp.eq.s32.totalorder %s47, 0
      %p336 = por %p334, %p335
      %s338 = sadd.s32 %s337, 1
      %p341 = scmp.eq.s32.totalorder %s41, 1
      %p342 = scmp.ne.s32.totalorder %s337, %s339
      %p343 = scmp.eq.s32.totalorder %s41, 0
      %p344 = por %p342, %p343
      %p345 = scmp.ne.s32.totalorder %s337, %s339
      %p346 = scmp.eq.s32.totalorder %s46, 1
      %p347 = por %p345, %p346
      %p348 = scmp.ne.s32.totalorder %s339, %s340
      %p349 = scmp.eq.s32.totalorder %s46, 0
      %p350 = por %p348, %p349
      %p351 = scmp.ne.s32.totalorder %s339, %s340
      %p352 = scmp.eq.s32.totalorder %s47, 1
      %p353 = por %p351, %p352
      %p355 = scmp.ne.s32.totalorder %s340, %s354
      %p356 = scmp.eq.s32.totalorder %s47, 0
      %p357 = por %p355, %p356
      %s359 = sadd.s32 %s358, 1
      %p362 = scmp.eq.s32.totalorder %s41, 1
      %p363 = scmp.ne.s32.totalorder %s358, %s360
      %p364 = scmp.eq.s32.totalorder %s41, 0
      %p365 = por %p363, %p364
      %p366 = scmp.ne.s32.totalorder %s358, %s360
      %p367 = scmp.eq.s32.totalorder %s46, 1
      %p368 = por %p366, %p367
      %p369 = scmp.ne.s32.totalorder %s360, %s361
      %p370 = scmp.eq.s32.totalorder %s46, 0
      %p371 = por %p369, %p370
      %p372 = scmp.ne.s32.totalorder %s360, %s361
      %p373 = scmp.eq.s32.totalorder %s47, 1
      %p374 = por %p372, %p373
      %p376 = scmp.ne.s32.totalorder %s361, %s375
      %p377 = scmp.eq.s32.totalorder %s47, 0
      %p378 = por %p376, %p377
      %s380 = sadd.s32 %s379, 1
      %p383 = scmp.eq.s32.totalorder %s41, 1
      %p384 = scmp.ne.s32.totalorder %s379, %s381
      %p385 = scmp.eq.s32.totalorder %s41, 0
      %p386 = por %p384, %p385
      %p387 = scmp.ne.s32.totalorder %s379, %s381
      %p388 = scmp.eq.s32.totalorder %s46, 1
      %p389 = por %p387, %p388
      %p390 = scmp.ne.s32.totalorder %s381, %s382
      %p391 = scmp.eq.s32.totalorder %s46, 0
      %p392 = por %p390, %p391
      %p393 = scmp.ne.s32.totalorder %s381, %s382
      %p394 = scmp.eq.s32.totalorder %s47, 1
      %p395 = por %p393, %p394
      %p397 = scmp.ne.s32.totalorder %s382, %s396
      %p398 = scmp.eq.s32.totalorder %s47, 0
      %p399 = por %p397, %p398
      %s401 = sadd.s32 %s400, 1
      %p404 = scmp.eq.s32.totalorder %s41, 1
      %p405 = scmp.ne.s32.totalorder %s400, %s402
      %p406 = scmp.eq.s32.totalorder %s41, 0
      %p407 = por %p405, %p406
      %p408 = scmp.ne.s32.totalorder %s400, %s402
      %p409 = scmp.eq.s32.totalorder %s46, 1
      %p410 = por %p408, %p409
      %p411 = scmp.ne.s32.totalorder %s402, %s403
      %p412 = scmp.eq.s32.totalorder %s46, 0
      %p413 = por %p411, %p412
      %p414 = scmp.ne.s32.totalorder %s402, %s403
      %p415 = scmp.eq.s32.totalorder %s47, 1
      %p416 = por %p414, %p415
      %p418 = scmp.ne.s32.totalorder %s403, %s417
      %p419 = scmp.eq.s32.totalorder %s47, 0
      %p420 = por %p418, %p419
      %s422 = sadd.s32 %s421, 1
      %p425 = scmp.eq.s32.totalorder %s41, 1
      %p426 = scmp.ne.s32.totalorder %s421, %s423
      %p427 = scmp.eq.s32.totalorder %s41, 0
      %p428 = por %p426, %p427
      %p429 = scmp.ne.s32.totalorder %s421, %s423
      %p430 = scmp.eq.s32.totalorder %s46, 1
      %p431 = por %p429, %p430
      %p432 = scmp.ne.s32.totalorder %s423, %s424
      %p433 = scmp.eq.s32.totalorder %s46, 0
      %p434 = por %p432, %p433
      %p435 = scmp.ne.s32.totalorder %s423, %s424
      %p436 = scmp.eq.s32.totalorder %s47, 1
      %p437 = por %p435, %p436
      %p439 = scmp.ne.s32.totalorder %s424, %s438
      %p440 = scmp.eq.s32.totalorder %s47, 0
      %p441 = por %p439, %p440
      %s443 = sadd.s32 %s442, 1
      %p446 = scmp.eq.s32.totalorder %s41, 1
      %p447 = scmp.ne.s32.totalorder %s442, %s444
      %p448 = scmp.eq.s32.totalorder %s41, 0
      %p449 = por %p447, %p448
      %p450 = scmp.ne.s32.totalorder %s442, %s444
      %p451 = scmp.eq.s32.totalorder %s46, 1
      %p452 = por %p450, %p451
      %p453 = scmp.ne.s32.totalorder %s444, %s445
      %p454 = scmp.eq.s32.totalorder %s46, 0
      %p455 = por %p453, %p454
      %p456 = scmp.ne.s32.totalorder %s444, %s445
      %p457 = scmp.eq.s32.totalorder %s47, 1
      %p458 = por %p456, %p457
      %p460 = scmp.ne.s32.totalorder %s445, %s459
      %p461 = scmp.eq.s32.totalorder %s47, 0
      %p462 = por %p460, %p461
      %s464 = sadd.s32 %s463, 1
      %p467 = scmp.eq.s32.totalorder %s41, 1
      %p468 = scmp.ne.s32.totalorder %s463, %s465
      %p469 = scmp.eq.s32.totalorder %s41, 0
      %p470 = por %p468, %p469
      %p471 = scmp.ne.s32.totalorder %s463, %s465
      %p472 = scmp.eq.s32.totalorder %s46, 1
      %p473 = por %p471, %p472
      %p474 = scmp.ne.s32.totalorder %s465, %s466
      %p475 = scmp.eq.s32.totalorder %s46, 0
      %p476 = por %p474, %p475
      %p477 = scmp.ne.s32.totalorder %s465, %s466
      %p478 = scmp.eq.s32.totalorder %s47, 1
      %p479 = por %p477, %p478
      %p481 = scmp.ne.s32.totalorder %s466, %s480
      %p482 = scmp.eq.s32.totalorder %s47, 0
      %p483 = por %p481, %p482
      %s485 = sadd.s32 %s484, 1
      %p488 = scmp.eq.s32.totalorder %s41, 1
      %p489 = scmp.ne.s32.totalorder %s484, %s486
      %p490 = scmp.eq.s32.totalorder %s41, 0
      %p491 = por %p489, %p490
      %p492 = scmp.ne.s32.totalorder %s484, %s486
      %p493 = scmp.eq.s32.totalorder %s46, 1
      %p494 = por %p492, %p493
      %p495 = scmp.ne.s32.totalorder %s486, %s487
      %p496 = scmp.eq.s32.totalorder %s46, 0
      %p497 = por %p495, %p496
      %p498 = scmp.ne.s32.totalorder %s486, %s487
      %p499 = scmp.eq.s32.totalorder %s47, 1
      %p500 = por %p498, %p499
      %p502 = scmp.ne.s32.totalorder %s487, %s501
      %p503 = scmp.eq.s32.totalorder %s47, 0
      %p504 = por %p502, %p503
      %s506 = sadd.s32 %s505, 1
      %p509 = scmp.eq.s32.totalorder %s41, 1
      %p510 = scmp.ne.s32.totalorder %s505, %s507
      %p511 = scmp.eq.s32.totalorder %s41, 0
      %p512 = por %p510, %p511
      %p513 = scmp.ne.s32.totalorder %s505, %s507
      %p514 = scmp.eq.s32.totalorder %s46, 1
      %p515 = por %p513, %p514
      %p516 = scmp.ne.s32.totalorder %s507, %s508
      %p517 = scmp.eq.s32.totalorder %s46, 0
      %p518 = por %p516, %p517
      %p519 = scmp.ne.s32.totalorder %s507, %s508
      %p520 = scmp.eq.s32.totalorder %s47, 1
      %p521 = por %p519, %p520
      %p523 = scmp.ne.s32.totalorder %s508, %s522
      %p524 = scmp.eq.s32.totalorder %s47, 0
      %p525 = por %p523, %p524
      %s527 = sadd.s32 %s526, 1
      %p530 = scmp.eq.s32.totalorder %s41, 1
      %p531 = scmp.ne.s32.totalorder %s526, %s528
      %p532 = scmp.eq.s32.totalorder %s41, 0
      %p533 = por %p531, %p532
      %p534 = scmp.ne.s32.totalorder %s526, %s528
      %p535 = scmp.eq.s32.totalorder %s46, 1
      %p536 = por %p534, %p535
      %p537 = scmp.ne.s32.totalorder %s528, %s529
      %p538 = scmp.eq.s32.totalorder %s46, 0
      %p539 = por %p537, %p538
      %p540 = scmp.ne.s32.totalorder %s528, %s529
      %p541 = scmp.eq.s32.totalorder %s47, 1
      %p542 = por %p540, %p541
      %p544 = scmp.ne.s32.totalorder %s529, %s543
      %p545 = scmp.eq.s32.totalorder %s47, 0
      %p546 = por %p544, %p545
      %s548 = sadd.s32 %s547, 1
      %p551 = scmp.eq.s32.totalorder %s41, 1
      %p552 = scmp.ne.s32.totalorder %s547, %s549
      %p553 = scmp.eq.s32.totalorder %s41, 0
      %p554 = por %p552, %p553
      %p555 = scmp.ne.s32.totalorder %s547, %s549
      %p556 = scmp.eq.s32.totalorder %s46, 1
      %p557 = por %p555, %p556
      %p558 = scmp.ne.s32.totalorder %s549, %s550
      %p559 = scmp.eq.s32.totalorder %s46, 0
      %p560 = por %p558, %p559
      %p561 = scmp.ne.s32.totalorder %s549, %s550
      %p562 = scmp.eq.s32.totalorder %s47, 1
      %p563 = por %p561, %p562
      %p565 = scmp.ne.s32.totalorder %s550, %s564
      %p566 = scmp.eq.s32.totalorder %s47, 0
      %p567 = por %p565, %p566
      %s568 = ssub.s32 %s41, %s48
      %p569 = scmp.eq.s32.totalorder %s568, 0
      %s571 = sadd.s32 %s570, 1
      %s572 = scalar_select %p569, %s570, %s571
      %p575 = pneg %p569
      %p576 = scmp.eq.s32.totalorder %s41, 1
      %p577 = por %p575, %p576
      %p578 = scmp.ne.s32.totalorder %s570, %s573
      %p579 = scmp.eq.s32.totalorder %s41, 0
      %p580 = por %p578, %p579
      %p581 = scmp.ne.s32.totalorder %s570, %s573
      %p582 = scmp.eq.s32.totalorder %s46, 1
      %p583 = por %p581, %p582
      %p584 = scmp.ne.s32.totalorder %s573, %s574
      %p585 = scmp.eq.s32.totalorder %s46, 0
      %p586 = por %p584, %p585
      %p587 = scmp.ne.s32.totalorder %s573, %s574
      %p588 = scmp.eq.s32.totalorder %s47, 1
      %p589 = por %p587, %p588
      %p591 = scmp.ne.s32.totalorder %s574, %s590
      %p592 = scmp.eq.s32.totalorder %s47, 0
      %p593 = por %p591, %p592
      %s594 = ssub.s32 %s41, %s48
      %p595 = scmp.eq.s32.totalorder %s594, 0
      %s597 = sadd.s32 %s596, 1
      %s598 = scalar_select %p595, %s596, %s597
      %p601 = pneg %p595
      %p602 = scmp.eq.s32.totalorder %s41, 1
      %p603 = por %p601, %p602
      %p604 = scmp.ne.s32.totalorder %s596, %s599
      %p605 = scmp.eq.s32.totalorder %s41, 0
      %p606 = por %p604, %p605
      %p607 = scmp.ne.s32.totalorder %s596, %s599
      %p608 = scmp.eq.s32.totalorder %s46, 1
      %p609 = por %p607, %p608
      %p610 = scmp.ne.s32.totalorder %s599, %s600
      %p611 = scmp.eq.s32.totalorder %s46, 0
      %p612 = por %p610, %p611
      %p613 = scmp.ne.s32.totalorder %s599, %s600
      %p614 = scmp.eq.s32.totalorder %s47, 1
      %p615 = por %p613, %p614
      %p617 = scmp.ne.s32.totalorder %s600, %s616
      %p618 = scmp.eq.s32.totalorder %s47, 0
      %p619 = por %p617, %p618
      %p620 = scmp.le.s32.totalorder 1, %s41
      %p621 = scmp.lt.s32.totalorder %s41, 3
      %p622 = pnand %p620, %p621
      %p623 = pneg %p622
      // Predicated region
      $region9: #{tpu_custom_call.1} parent=5 // pred_check
        _
      $region10: #{tpu_custom_call.1} parent=5 // pred_check_branch
        %625 = sbr.rel (%p622) target = $region12
      $region11: #{tpu_custom_call.1} parent=5 // pred_region
        %s626 = ssub.s32 %s41, 1
        // Predicated region
        $region13: #{tpu_custom_call.1} parent=11 // pred_check
          %p627 = pneg %p114
        $region14: #{tpu_custom_call.1} parent=11 // pred_check_branch
          %629 = sbr.rel (%p627) target = $region16
        $region15: #{tpu_custom_call.1} parent=11 // pred_region
          %s631 = ssub.s32 128, 128
          %632 = vsyncadd [#allocation3], %s631
          %s634 = sshll.u32 [#allocation2], 4
          %s635 = int_to_ptr.vmem [resolvable:$true] %s634
          %637 = dma.hbm_to_vmem [thread:$0]  %s2, 128, %s635, [#allocation3]
        $region16: #{tpu_custom_call.1} parent=11 // pred_fallthru
          _
        // Predicated region
        $region17: #{tpu_custom_call.1} parent=11 // pred_check
          %p638 = pneg %p161
        $region18: #{tpu_custom_call.1} parent=11 // pred_check_branch
          %640 = sbr.rel (%p638) target = $region20
        $region19: #{tpu_custom_call.1} parent=11 // pred_region
          _
        $region20: #{tpu_custom_call.1} parent=11 // pred_fallthru
          _
        // Predicated region
        $region21: #{tpu_custom_call.1} parent=11 // pred_check
          %p641 = pneg %p182
        $region22: #{tpu_custom_call.1} parent=11 // pred_check_branch
          %643 = sbr.rel (%p641) target = $region24
        $region23: #{tpu_custom_call.1} parent=11 // pred_region
          %s645 = ssub.s32 16, 16
          %646 = vsyncadd [#allocation6], %s645
          %s648 = sshll.u32 [#allocation5], 4
          %s649 = int_to_ptr.vmem [resolvable:$true] %s648
          %651 = dma.hbm_to_vmem [thread:$0]  %s5, 16, %s649, [#allocation6]
        $region24: #{tpu_custom_call.1} parent=11 // pred_fallthru
          _
        // Predicated region
        $region25: #{tpu_custom_call.1} parent=11 // pred_check
          %p652 = pneg %p203
        $region26: #{tpu_custom_call.1} parent=11 // pred_check_branch
          %654 = sbr.rel (%p652) target = $region28
        $region27: #{tpu_custom_call.1} parent=11 // pred_region
          _
        $region28: #{tpu_custom_call.1} parent=11 // pred_fallthru
          _
        // Predicated region
        $region29: #{tpu_custom_call.1} parent=11 // pred_check
          %p655 = pneg %p224
        $region30: #{tpu_custom_call.1} parent=11 // pred_check_branch
          %657 = sbr.rel (%p655) target = $region32
        $region31: #{tpu_custom_call.1} parent=11 // pred_region
          %s659 = ssub.s32 16, 16
          %660 = vsyncadd [#allocation6], %s659
          %s662 = sshll.u32 [#allocation7], 4
          %s663 = int_to_ptr.vmem [resolvable:$true] %s662
          %665 = dma.hbm_to_vmem [thread:$0]  %s7, 16, %s663, [#allocation6]
        $region32: #{tpu_custom_call.1} parent=11 // pred_fallthru
          _
        // Predicated region
        $region33: #{tpu_custom_call.1} parent=11 // pred_check
          %p666 = pneg %p245
        $region34: #{tpu_custom_call.1} parent=11 // pred_check_branch
          %668 = sbr.rel (%p666) target = $region36
        $region35: #{tpu_custom_call.1} parent=11 // pred_region
          %s670 = ssub.s32 16, 16
          %671 = vsyncadd [#allocation9], %s670
          %s673 = sshll.u32 [#allocation8], 4
          %s674 = int_to_ptr.vmem [resolvable:$true] %s673
          %676 = dma.hbm_to_vmem [thread:$0]  %s8, 16, %s674, [#allocation9]
        $region36: #{tpu_custom_call.1} parent=11 // pred_fallthru
          _
        // Predicated region
        $region37: #{tpu_custom_call.1} parent=11 // pred_check
          %p677 = pneg %p266
        $region38: #{tpu_custom_call.1} parent=11 // pred_check_branch
          %679 = sbr.rel (%p677) target = $region40
        $region39: #{tpu_custom_call.1} parent=11 // pred_region
          _
        $region40: #{tpu_custom_call.1} parent=11 // pred_fallthru
          _
        // Predicated region
        $region41: #{tpu_custom_call.1} parent=11 // pred_check
          %p680 = pneg %p287
        $region42: #{tpu_custom_call.1} parent=11 // pred_check_branch
          %682 = sbr.rel (%p680) target = $region44
        $region43: #{tpu_custom_call.1} parent=11 // pred_region
          _
        $region44: #{tpu_custom_call.1} parent=11 // pred_fallthru
          _
        // Predicated region
        $region45: #{tpu_custom_call.1} parent=11 // pred_check
          %p683 = pneg %p308
        $region46: #{tpu_custom_call.1} parent=11 // pred_check_branch
          %685 = sbr.rel (%p683) target = $region48
        $region47: #{tpu_custom_call.1} parent=11 // pred_region
          _
        $region48: #{tpu_custom_call.1} parent=11 // pred_fallthru
          _
        // Predicated region
        $region49: #{tpu_custom_call.1} parent=11 // pred_check
          %p686 = pneg %p329
        $region50: #{tpu_custom_call.1} parent=11 // pred_check_branch
          %688 = sbr.rel (%p686) target = $region52
        $region51: #{tpu_custom_call.1} parent=11 // pred_region
          _
        $region52: #{tpu_custom_call.1} parent=11 // pred_fallthru
          _
        // Predicated region
        $region53: #{tpu_custom_call.1} parent=11 // pred_check
          %p689 = pneg %p350
        $region54: #{tpu_custom_call.1} parent=11 // pred_check_branch
          %691 = sbr.rel (%p689) target = $region56
        $region55: #{tpu_custom_call.1} parent=11 // pred_region
          _
        $region56: #{tpu_custom_call.1} parent=11 // pred_fallthru
          _
        // Predicated region
        $region57: #{tpu_custom_call.1} parent=11 // pred_check
          %p692 = pneg %p371
        $region58: #{tpu_custom_call.1} parent=11 // pred_check_branch
          %694 = sbr.rel (%p692) target = $region60
        $region59: #{tpu_custom_call.1} parent=11 // pred_region
          _
        $region60: #{tpu_custom_call.1} parent=11 // pred_fallthru
          _
        // Predicated region
        $region61: #{tpu_custom_call.1} parent=11 // pred_check
          %p695 = pneg %p392
        $region62: #{tpu_custom_call.1} parent=11 // pred_check_branch
          %697 = sbr.rel (%p695) target = $region64
        $region63: #{tpu_custom_call.1} parent=11 // pred_region
          _
        $region64: #{tpu_custom_call.1} parent=11 // pred_fallthru
          _
        // Predicated region
        $region65: #{tpu_custom_call.1} parent=11 // pred_check
          %p698 = pneg %p413
        $region66: #{tpu_custom_call.1} parent=11 // pred_check_branch
          %700 = sbr.rel (%p698) target = $region68
        $region67: #{tpu_custom_call.1} parent=11 // pred_region
          _
        $region68: #{tpu_custom_call.1} parent=11 // pred_fallthru
          _
        // Predicated region
        $region69: #{tpu_custom_call.1} parent=11 // pred_check
          %p701 = pneg %p434
        $region70: #{tpu_custom_call.1} parent=11 // pred_check_branch
          %703 = sbr.rel (%p701) target = $region72
        $region71: #{tpu_custom_call.1} parent=11 // pred_region
          _
        $region72: #{tpu_custom_call.1} parent=11 // pred_fallthru
          _
        // Predicated region
        $region73: #{tpu_custom_call.1} parent=11 // pred_check
          %p704 = pneg %p455
        $region74: #{tpu_custom_call.1} parent=11 // pred_check_branch
          %706 = sbr.rel (%p704) target = $region76
        $region75: #{tpu_custom_call.1} parent=11 // pred_region
          _
        $region76: #{tpu_custom_call.1} parent=11 // pred_fallthru
          _
        // Predicated region
        $region77: #{tpu_custom_call.1} parent=11 // pred_check
          %p707 = pneg %p476
        $region78: #{tpu_custom_call.1} parent=11 // pred_check_branch
          %709 = sbr.rel (%p707) target = $region80
        $region79: #{tpu_custom_call.1} parent=11 // pred_region
          _
        $region80: #{tpu_custom_call.1} parent=11 // pred_fallthru
          _
        // Predicated region
        $region81: #{tpu_custom_call.1} parent=11 // pred_check
          %p710 = pneg %p497
        $region82: #{tpu_custom_call.1} parent=11 // pred_check_branch
          %712 = sbr.rel (%p710) target = $region84
        $region83: #{tpu_custom_call.1} parent=11 // pred_region
          _
        $region84: #{tpu_custom_call.1} parent=11 // pred_fallthru
          _
        // Predicated region
        $region85: #{tpu_custom_call.1} parent=11 // pred_check
          %p713 = pneg %p518
        $region86: #{tpu_custom_call.1} parent=11 // pred_check_branch
          %715 = sbr.rel (%p713) target = $region88
        $region87: #{tpu_custom_call.1} parent=11 // pred_region
          _
        $region88: #{tpu_custom_call.1} parent=11 // pred_fallthru
          _
        // Predicated region
        $region89: #{tpu_custom_call.1} parent=11 // pred_check
          %p716 = pneg %p539
        $region90: #{tpu_custom_call.1} parent=11 // pred_check_branch
          %718 = sbr.rel (%p716) target = $region92
        $region91: #{tpu_custom_call.1} parent=11 // pred_region
          _
        $region92: #{tpu_custom_call.1} parent=11 // pred_fallthru
          _
        // Predicated region
        $region93: #{tpu_custom_call.1} parent=11 // pred_check
          %p719 = pneg %p560
        $region94: #{tpu_custom_call.1} parent=11 // pred_check_branch
          %721 = sbr.rel (%p719) target = $region96
        $region95: #{tpu_custom_call.1} parent=11 // pred_region
          _
        $region96: #{tpu_custom_call.1} parent=11 // pred_fallthru
          _
      $region12: #{tpu_custom_call.1} parent=5 // pred_fallthru
        _
      %p722 = scmp.lt.s32.totalorder %s41, 2
      // Predicated region
      $region97: #{tpu_custom_call.1} parent=5 // pred_check
        %p723 = pneg %p722
      $region98: #{tpu_custom_call.1} parent=5 // pred_check_branch
        %725 = sbr.rel (%p723) target = $region100
      $region99: #{tpu_custom_call.1} parent=5 // pred_region
        // Predicated region
        $region101: #{tpu_custom_call.1} parent=99 // pred_check
          %p726 = pneg %p61
        $region102: #{tpu_custom_call.1} parent=99 // pred_check_branch
          %728 = sbr.rel (%p726) target = $region104
        $region103: #{tpu_custom_call.1} parent=99 // pred_region
          %p729 = scmp.lt.s32.totalorder %s41, 1
          %s730 = scalar_select %p729, %s41, 1
          %s731 = smul.addr %s730, 8
          %s732 = scalar_lea.vmem %s0, %s731
        $region104: #{tpu_custom_call.1} parent=99 // pred_fallthru
          _
        // Predicated region
        $region105: #{tpu_custom_call.1} parent=99 // pred_check
          %p733 = pneg %p87
        $region106: #{tpu_custom_call.1} parent=99 // pred_check_branch
          %735 = sbr.rel (%p733) target = $region108
        $region107: #{tpu_custom_call.1} parent=99 // pred_region
          %p736 = scmp.lt.s32.totalorder %s41, 1
          %s737 = scalar_select %p736, %s41, 1
          %s738 = smul.addr %s737, 2
          %s739 = smul.addr %s738, 8
          %s740 = scalar_lea.vmem %s1, %s739
        $region108: #{tpu_custom_call.1} parent=99 // pred_fallthru
          _
        // Predicated region
        $region109: #{tpu_custom_call.1} parent=99 // pred_check
          %p741 = pneg %p134
        $region110: #{tpu_custom_call.1} parent=99 // pred_check_branch
          %743 = sbr.rel (%p741) target = $region112
        $region111: #{tpu_custom_call.1} parent=99 // pred_region
          %p744 = scmp.lt.s32.totalorder %s41, 1
          %s745 = scalar_select %p744, %s41, 1
          %s746 = scalar_lea.vmem %s3, %s745
        $region112: #{tpu_custom_call.1} parent=99 // pred_fallthru
          _
      $region100: #{tpu_custom_call.1} parent=5 // pred_fallthru
        _
      %p747 = scmp.le.s32.totalorder 1, %s41
      %p748 = scmp.lt.s32.totalorder %s41, 3
      %p749 = pnand %p747, %p748
      %p750 = pneg %p749
      // Predicated region
      $region113: #{tpu_custom_call.1} parent=5 // pred_check
        _
      $region114: #{tpu_custom_call.1} parent=5 // pred_check_branch
        %752 = sbr.rel (%p749) target = $region116
      $region115: #{tpu_custom_call.1} parent=5 // pred_region
        %s753 = ssub.s32 %s41, 1
        // Predicated region
        $region117: #{tpu_custom_call.1} parent=115 // pred_check
          %p754 = pneg %p114
        $region118: #{tpu_custom_call.1} parent=115 // pred_check_branch
          %756 = sbr.rel (%p754) target = $region120
        $region119: #{tpu_custom_call.1} parent=115 // pred_region
          %757 = dma.done [#allocation3], 128
        $region120: #{tpu_custom_call.1} parent=115 // pred_fallthru
          _
        // Predicated region
        $region121: #{tpu_custom_call.1} parent=115 // pred_check
          %p758 = pneg %p182
        $region122: #{tpu_custom_call.1} parent=115 // pred_check_branch
          %760 = sbr.rel (%p758) target = $region124
        $region123: #{tpu_custom_call.1} parent=115 // pred_region
          %761 = dma.done [#allocation6], 16
        $region124: #{tpu_custom_call.1} parent=115 // pred_fallthru
          _
        // Predicated region
        $region125: #{tpu_custom_call.1} parent=115 // pred_check
          %p762 = pneg %p224
        $region126: #{tpu_custom_call.1} parent=115 // pred_check_branch
          %764 = sbr.rel (%p762) target = $region128
        $region127: #{tpu_custom_call.1} parent=115 // pred_region
          %765 = dma.done [#allocation6], 16
        $region128: #{tpu_custom_call.1} parent=115 // pred_fallthru
          _
        // Predicated region
        $region129: #{tpu_custom_call.1} parent=115 // pred_check
          %p766 = pneg %p245
        $region130: #{tpu_custom_call.1} parent=115 // pred_check_branch
          %768 = sbr.rel (%p766) target = $region132
        $region131: #{tpu_custom_call.1} parent=115 // pred_region
          %769 = dma.done [#allocation9], 16
        $region132: #{tpu_custom_call.1} parent=115 // pred_fallthru
          _
        %p770 = scmp.lt.s32.totalorder %s46, 1
        %s771 = scalar_select %p770, %s46, 1
        %s772 = smul.addr %s771, 8
        %s773 = scalar_lea.vmem %s0, %s772
        %p774 = pneg %p67
        %p775 = pneg %p64
        %p776 = scmp.lt.s32.totalorder %s46, 1
        %s777 = scalar_select %p776, %s46, 1
        %s778 = smul.addr %s777, 2
        %s779 = smul.addr %s778, 8
        %s780 = scalar_lea.vmem %s1, %s779
        %p781 = pneg %p93
        %p782 = pneg %p90
        %p783 = pneg %p114
        %p784 = pneg %p111
        %p785 = scmp.lt.s32.totalorder %s46, 1
        %s786 = scalar_select %p785, %s46, 1
        %s787 = scalar_lea.vmem %s3, %s786
        %p788 = pneg %p140
        %p789 = pneg %p137
        %p790 = pneg %p161
        %p791 = pneg %p158
        %p792 = pneg %p182
        %p793 = pneg %p179
        %p794 = pneg %p203
        %p795 = pneg %p200
        %p796 = pneg %p224
        %p797 = pneg %p221
        %p798 = pneg %p245
        %p799 = pneg %p242
        %p800 = pneg %p266
        %p801 = pneg %p263
        %p802 = pneg %p287
        %p803 = pneg %p284
        %p804 = pneg %p308
        %p805 = pneg %p305
        %p806 = pneg %p329
        %p807 = pneg %p326
        %p808 = pneg %p350
        %p809 = pneg %p347
        %p810 = pneg %p371
        %p811 = pneg %p368
        %p812 = pneg %p392
        %p813 = pneg %p389
        %p814 = pneg %p413
        %p815 = pneg %p410
        %p816 = pneg %p434
        %p817 = pneg %p431
        %p818 = pneg %p455
        %p819 = pneg %p452
        %p820 = pneg %p476
        %p821 = pneg %p473
        %p822 = pneg %p497
        %p823 = pneg %p494
        %p824 = pneg %p518
        %p825 = pneg %p515
        %p826 = pneg %p539
        %p827 = pneg %p536
        %p828 = pneg %p560
        %p829 = pneg %p557
        %p830 = pneg %p586
        %p831 = pneg %p583
        %s832 = sand.u32 %s573, 1
        %s833 = scalar_lea.sflag [#allocation4], %s832
        %s834 = sand.u32 %s573, 1
        %s835 = smul.addr %s834, 8
        %s836 = scalar_lea.vmem [#allocation10], %s835
        %p837 = pneg %p612
        %p838 = pneg %p609
        %s839 = sand.u32 %s599, 1
        %s840 = scalar_lea.sflag [#allocation12], %s839
        %s841 = sand.u32 %s599, 1
        %s842 = smul.addr %s841, 32
        %s843 = scalar_lea.vmem [#allocation11], %s842
        %p844 = scmp.lt.s32.totalorder %s46, 1
        %s845 = scalar_select %p844, %s46, 1
        %s846 = smul.addr %s845, 8
        %s847 = scalar_lea.vmem %s0, %s846
        %p848 = scmp.lt.s32.totalorder %s46, 1
        %s849 = scalar_select %p848, %s46, 1
        %s850 = smul.addr %s849, 2
        %s851 = smul.addr %s850, 8
        %s852 = scalar_lea.vmem %s1, %s851
        %p853 = scmp.lt.s32.totalorder %s46, 1
        %s854 = scalar_select %p853, %s46, 1
        %s855 = scalar_lea.vmem %s3, %s854
        %v857 = vld [vmem:[%s847] sm:$0xff]
        %v858 = vld [vmem:[%s4] sm:$0xf]
        %v859 = vld [vmem:[%s4 + $0x4] sm:$0xf]
        %v860 = vld [vmem:[%s4 + $0x8] sm:$0xf]
        %v861 = vld [vmem:[%s4 + $0xc] sm:$0xf]
        %v862 = vpack.c.bf16 %v857, %v857
        %v863 = vld [vmem:[#allocation5] sm:$0x1]
        %v865 = vlaneseq
        %v866 = vshrl.u32 %v865, 7
        %v867 = vsub.s32 0, %v866
        %v868 = vrot.slane %v863, %v867
        %v874 = vunpack.c.l.b16 %v858
        %v875 = vunpack.c.l.b16 %v859
        %v876 = vunpack.c.l.b16 %v860
        %v877 = vunpack.c.l.b16 %v861
        %v878 = vpack.c.b16 %v875, %v874
        %v879 = vpack.c.b16 %v877, %v876
        %vm882 = vcmask 261120
        %v884 = vsel %vm882, %v862, 0
        %886 = vmatprep.subr.bf16.mxu0 0
        %887 = vmatpush1.bf16.msra.mxu0 %v878
        %888 = vmatprep.subr.bf16.mxu0 0
        %889 = vmatpush1.bf16.msra.mxu0 %v879
        %890 = vmatprep.subr.bf16.mxu0 0
        %891 = vmatpush1.bf16.msra.mxu0 0
        %892 = vmatprep.subr.bf16.mxu0 0
        %893 = vmatpush1.bf16.msra.mxu0 0
        %894 = vmatprep.subr.bf16.mxu0 0
        %895 = vmatpush1.bf16.msra.mxu0 0
        %896 = vmatprep.subr.bf16.mxu0 0
        %897 = vmatpush1.bf16.msra.mxu0 0
        %898 = vmatprep.subr.bf16.mxu0 0
        %899 = vmatpush1.bf16.msra.mxu0 0
        %900 = vmatprep.subr.bf16.mxu0 0
        %901 = vmatpush1.bf16.msra.mxu0 0
        %902 = vmatprep.subr.bf16.mxu0 0
        %903 = vmatpush1.bf16.msra.mxu0 0
        %904 = vmatprep.subr.bf16.mxu0 0
        %905 = vmatpush1.bf16.msra.mxu0 0
        %906 = vmatprep.subr.bf16.mxu0 0
        %907 = vmatpush1.bf16.msra.mxu0 0
        %908 = vmatprep.subr.bf16.mxu0 0
        %909 = vmatpush1.bf16.msra.mxu0 0
        %910 = vmatprep.subr.bf16.mxu0 0
        %911 = vmatpush1.bf16.msra.mxu0 0
        %912 = vmatprep.subr.bf16.mxu0 0
        %913 = vmatpush1.bf16.msra.mxu0 0
        %914 = vmatprep.subr.bf16.mxu0 0
        %915 = vmatpush1.bf16.msra.mxu0 0
        %916 = vmatprep.subr.bf16.mxu0 0
        %917 = vmatpush1.bf16.msra.mxu0 0
        %918 = vmatprep.mubr.bf16.mxu0 0
        %919 = vmatmul.mubr.bf16.gmra.mrb[0].mxu0 %v884
        %v920 = vpop.f32.mrb[0].mxu0
        %v921 = vadd.f32 %v868, %v920
        %v922 = vpop.f32.mrb[0].mxu0
        %v923 = vpop.f32.mrb[0].mxu0
        %v924 = vpop.f32.mrb[0].mxu0
        %925 = vdwg.mxu0
        %v926 = vld [vmem:[#allocation2] sm:$0xff]
        %928 = vrot.lane.b32.xlu0 %v921, 120
        %v929 = vpop.permute.xlu0 %928
        %931 = vrot.lane.b32.xlu0 %v921, 112
        %v932 = vpop.permute.xlu0 %931
        %934 = vrot.lane.b32.xlu0 %v921, 104
        %v935 = vpop.permute.xlu0 %934
        %v937 = vcombine.low %v921, %v932
        %v938 = vcombine.high %v921, %v932
        %v940 = vunpack.c.l.s4 1983009808
        %v941 = vunpack.c.0.s8 %v940
        %v942 = vlaneseq
        %v943 = vshrl.u32 %v942, 7
        %v944 = vsub.s32 %v941, %v943
        %v945 = vrot.slane %v937, %v944
        %v947 = vunpack.c.l.s4 1983009808
        %v948 = vunpack.c.0.s8 %v947
        %v949 = vlaneseq
        %v950 = vshrl.u32 %v949, 7
        %v951 = vsub.s32 %v948, %v950
        %v952 = vrot.slane %v938, %v951
        %v953 = vcombine.low %v929, %v935
        %v954 = vcombine.high %v929, %v935
        %v956 = vunpack.c.l.s4 1983009808
        %v957 = vunpack.c.0.s8 %v956
        %v958 = vlaneseq
        %v959 = vshrl.u32 %v958, 7
        %v960 = vsub.s32 %v957, %v959
        %v961 = vrot.slane %v953, %v960
        %v963 = vunpack.c.l.s4 1983009808
        %v964 = vunpack.c.0.s8 %v963
        %v965 = vlaneseq
        %v966 = vshrl.u32 %v965, 7
        %v967 = vsub.s32 %v964, %v966
        %v968 = vrot.slane %v954, %v967
        %v969 = vcombine.low %v945, %v961
        %v970 = vcombine.high %v945, %v961
        %v972 = vunpack.c.l.s4 1934713408
        %v973 = vunpack.c.0.s8 %v972
        %v974 = vlaneseq
        %v975 = vshrl.u32 %v974, 7
        %v976 = vsub.s32 %v973, %v975
        %v977 = vrot.slane %v969, %v976
        %v979 = vunpack.c.l.s4 1934713408
        %v980 = vunpack.c.0.s8 %v979
        %v981 = vlaneseq
        %v982 = vshrl.u32 %v981, 7
        %v983 = vsub.s32 %v980, %v982
        %v984 = vrot.slane %v970, %v983
        %v985 = vcombine.low %v952, %v968
        %v986 = vcombine.high %v952, %v968
        %v988 = vunpack.c.l.s4 1934713408
        %v989 = vunpack.c.0.s8 %v988
        %v990 = vlaneseq
        %v991 = vshrl.u32 %v990, 7
        %v992 = vsub.s32 %v989, %v991
        %v993 = vrot.slane %v985, %v992
        %v995 = vunpack.c.l.s4 1934713408
        %v996 = vunpack.c.0.s8 %v995
        %v997 = vlaneseq
        %v998 = vshrl.u32 %v997, 7
        %v999 = vsub.s32 %v996, %v998
        %v1000 = vrot.slane %v986, %v999
        %v1001 = vcombine.high %v977, 0.0
        %v1002 = vcombine.high %v984, 0.0
        %v1003 = vcombine.high %v993, 0.0
        %v1004 = vcombine.high %v1000, 0.0
        %v1005 = vcombine.low %v977, %v984
        %v1007 = vunpack.c.l.s4 1983009808
        %v1008 = vunpack.c.0.s8 %v1007
        %v1009 = vlaneseq
        %v1010 = vshrl.u32 %v1009, 7
        %v1011 = vsub.s32 %v1008, %v1010
        %v1012 = vrot.slane %v1005, %v1011
        %v1013 = vcombine.low %v1001, %v1002
        %v1015 = vunpack.c.l.s4 1983009808
        %v1016 = vunpack.c.0.s8 %v1015
        %v1017 = vlaneseq
        %v1018 = vshrl.u32 %v1017, 7
        %v1019 = vsub.s32 %v1016, %v1018
        %v1020 = vrot.slane %v1013, %v1019
        %v1021 = vcombine.low %v993, %v1000
        %v1023 = vunpack.c.l.s4 1983009808
        %v1024 = vunpack.c.0.s8 %v1023
        %v1025 = vlaneseq
        %v1026 = vshrl.u32 %v1025, 7
        %v1027 = vsub.s32 %v1024, %v1026
        %v1028 = vrot.slane %v1021, %v1027
        %v1029 = vcombine.low %v1003, %v1004
        %v1031 = vunpack.c.l.s4 1983009808
        %v1032 = vunpack.c.0.s8 %v1031
        %v1033 = vlaneseq
        %v1034 = vshrl.u32 %v1033, 7
        %v1035 = vsub.s32 %v1032, %v1034
        %v1036 = vrot.slane %v1029, %v1035
        %v1037 = vcombine.low %v1012, %v1020
        %v1038 = vcombine.high %v1012, %v1020
        %v1040 = vunpack.c.l.s4 1934713408
        %v1041 = vunpack.c.0.s8 %v1040
        %v1042 = vlaneseq
        %v1043 = vshrl.u32 %v1042, 7
        %v1044 = vsub.s32 %v1041, %v1043
        %v1045 = vrot.slane %v1037, %v1044
        %v1047 = vunpack.c.l.s4 1934713408
        %v1048 = vunpack.c.0.s8 %v1047
        %v1049 = vlaneseq
        %v1050 = vshrl.u32 %v1049, 7
        %v1051 = vsub.s32 %v1048, %v1050
        %v1052 = vrot.slane %v1038, %v1051
        %v1053 = vcombine.low %v1028, %v1036
        %v1054 = vcombine.high %v1028, %v1036
        %v1056 = vunpack.c.l.s4 1934713408
        %v1057 = vunpack.c.0.s8 %v1056
        %v1058 = vlaneseq
        %v1059 = vshrl.u32 %v1058, 7
        %v1060 = vsub.s32 %v1057, %v1059
        %v1061 = vrot.slane %v1053, %v1060
        %v1063 = vunpack.c.l.s4 1934713408
        %v1064 = vunpack.c.0.s8 %v1063
        %v1065 = vlaneseq
        %v1066 = vshrl.u32 %v1065, 7
        %v1067 = vsub.s32 %v1064, %v1066
        %v1068 = vrot.slane %v1054, %v1067
        %v1069 = vcombine.low %v1045, %v1061
        %v1070 = vcombine.high %v1045, %v1061
        %v1071 = vcombine.low %v1052, %v1068
        %v1072 = vcombine.high %v1052, %v1068
        %1073 = vrot.lane.b32.xlu0 %v921, 96
        %v1074 = vpop.permute.xlu0 %1073
        %1075 = vrot.lane.b32.xlu0 %v929, 96
        %v1076 = vpop.permute.xlu0 %1075
        %1077 = vrot.lane.b32.xlu0 %v932, 96
        %v1078 = vpop.permute.xlu0 %1077
        %1079 = vrot.lane.b32.xlu0 %v935, 96
        %v1080 = vpop.permute.xlu0 %1079
        %v1085 = vcombine.low %v1074, %v1078
        %v1086 = vcombine.high %v1074, %v1078
        %v1088 = vunpack.c.l.s4 1983009808
        %v1089 = vunpack.c.0.s8 %v1088
        %v1090 = vlaneseq
        %v1091 = vshrl.u32 %v1090, 7
        %v1092 = vsub.s32 %v1089, %v1091
        %v1093 = vrot.slane %v1085, %v1092
        %v1095 = vunpack.c.l.s4 1983009808
        %v1096 = vunpack.c.0.s8 %v1095
        %v1097 = vlaneseq
        %v1098 = vshrl.u32 %v1097, 7
        %v1099 = vsub.s32 %v1096, %v1098
        %v1100 = vrot.slane %v1086, %v1099
        %v1101 = vcombine.low %v1076, %v1080
        %v1102 = vcombine.high %v1076, %v1080
        %v1104 = vunpack.c.l.s4 1983009808
        %v1105 = vunpack.c.0.s8 %v1104
        %v1106 = vlaneseq
        %v1107 = vshrl.u32 %v1106, 7
        %v1108 = vsub.s32 %v1105, %v1107
        %v1109 = vrot.slane %v1101, %v1108
        %v1111 = vunpack.c.l.s4 1983009808
        %v1112 = vunpack.c.0.s8 %v1111
        %v1113 = vlaneseq
        %v1114 = vshrl.u32 %v1113, 7
        %v1115 = vsub.s32 %v1112, %v1114
        %v1116 = vrot.slane %v1102, %v1115
        %v1117 = vcombine.low %v1093, %v1109
        %v1118 = vcombine.high %v1093, %v1109
        %v1120 = vunpack.c.l.s4 1934713408
        %v1121 = vunpack.c.0.s8 %v1120
        %v1122 = vlaneseq
        %v1123 = vshrl.u32 %v1122, 7
        %v1124 = vsub.s32 %v1121, %v1123
        %v1125 = vrot.slane %v1117, %v1124
        %v1127 = vunpack.c.l.s4 1934713408
        %v1128 = vunpack.c.0.s8 %v1127
        %v1129 = vlaneseq
        %v1130 = vshrl.u32 %v1129, 7
        %v1131 = vsub.s32 %v1128, %v1130
        %v1132 = vrot.slane %v1118, %v1131
        %v1133 = vcombine.low %v1100, %v1116
        %v1134 = vcombine.high %v1100, %v1116
        %v1136 = vunpack.c.l.s4 1934713408
        %v1137 = vunpack.c.0.s8 %v1136
        %v1138 = vlaneseq
        %v1139 = vshrl.u32 %v1138, 7
        %v1140 = vsub.s32 %v1137, %v1139
        %v1141 = vrot.slane %v1133, %v1140
        %v1143 = vunpack.c.l.s4 1934713408
        %v1144 = vunpack.c.0.s8 %v1143
        %v1145 = vlaneseq
        %v1146 = vshrl.u32 %v1145, 7
        %v1147 = vsub.s32 %v1144, %v1146
        %v1148 = vrot.slane %v1134, %v1147
        %v1149 = vcombine.high %v1125, 0.0
        %v1150 = vcombine.high %v1132, 0.0
        %v1151 = vcombine.high %v1141, 0.0
        %v1152 = vcombine.high %v1148, 0.0
        %v1153 = vcombine.low %v1125, %v1132
        %v1155 = vunpack.c.l.s4 1983009808
        %v1156 = vunpack.c.0.s8 %v1155
        %v1157 = vlaneseq
        %v1158 = vshrl.u32 %v1157, 7
        %v1159 = vsub.s32 %v1156, %v1158
        %v1160 = vrot.slane %v1153, %v1159
        %v1161 = vcombine.low %v1149, %v1150
        %v1163 = vunpack.c.l.s4 1983009808
        %v1164 = vunpack.c.0.s8 %v1163
        %v1165 = vlaneseq
        %v1166 = vshrl.u32 %v1165, 7
        %v1167 = vsub.s32 %v1164, %v1166
        %v1168 = vrot.slane %v1161, %v1167
        %v1169 = vcombine.low %v1141, %v1148
        %v1171 = vunpack.c.l.s4 1983009808
        %v1172 = vunpack.c.0.s8 %v1171
        %v1173 = vlaneseq
        %v1174 = vshrl.u32 %v1173, 7
        %v1175 = vsub.s32 %v1172, %v1174
        %v1176 = vrot.slane %v1169, %v1175
        %v1177 = vcombine.low %v1151, %v1152
        %v1179 = vunpack.c.l.s4 1983009808
        %v1180 = vunpack.c.0.s8 %v1179
        %v1181 = vlaneseq
        %v1182 = vshrl.u32 %v1181, 7
        %v1183 = vsub.s32 %v1180, %v1182
        %v1184 = vrot.slane %v1177, %v1183
        %v1185 = vcombine.low %v1160, %v1168
        %v1186 = vcombine.high %v1160, %v1168
        %v1188 = vunpack.c.l.s4 1934713408
        %v1189 = vunpack.c.0.s8 %v1188
        %v1190 = vlaneseq
        %v1191 = vshrl.u32 %v1190, 7
        %v1192 = vsub.s32 %v1189, %v1191
        %v1193 = vrot.slane %v1185, %v1192
        %v1195 = vunpack.c.l.s4 1934713408
        %v1196 = vunpack.c.0.s8 %v1195
        %v1197 = vlaneseq
        %v1198 = vshrl.u32 %v1197, 7
        %v1199 = vsub.s32 %v1196, %v1198
        %v1200 = vrot.slane %v1186, %v1199
        %v1201 = vcombine.low %v1176, %v1184
        %v1202 = vcombine.high %v1176, %v1184
        %v1204 = vunpack.c.l.s4 1934713408
        %v1205 = vunpack.c.0.s8 %v1204
        %v1206 = vlaneseq
        %v1207 = vshrl.u32 %v1206, 7
        %v1208 = vsub.s32 %v1205, %v1207
        %v1209 = vrot.slane %v1201, %v1208
        %v1211 = vunpack.c.l.s4 1934713408
        %v1212 = vunpack.c.0.s8 %v1211
        %v1213 = vlaneseq
        %v1214 = vshrl.u32 %v1213, 7
        %v1215 = vsub.s32 %v1212, %v1214
        %v1216 = vrot.slane %v1202, %v1215
        %v1217 = vcombine.low %v1193, %v1209
        %v1218 = vcombine.high %v1193, %v1209
        %v1219 = vcombine.low %v1200, %v1216
        %v1220 = vcombine.high %v1200, %v1216
        %1221 = vrot.lane.b32.xlu0 %v921, 64
        %v1222 = vpop.permute.xlu0 %1221
        %1223 = vrot.lane.b32.xlu0 %v929, 64
        %v1224 = vpop.permute.xlu0 %1223
        %1225 = vrot.lane.b32.xlu0 %v932, 64
        %v1226 = vpop.permute.xlu0 %1225
        %1227 = vrot.lane.b32.xlu0 %v935, 64
        %v1228 = vpop.permute.xlu0 %1227
        %v1233 = vcombine.low %v1222, %v1226
        %v1234 = vcombine.high %v1222, %v1226
        %v1236 = vunpack.c.l.s4 1983009808
        %v1237 = vunpack.c.0.s8 %v1236
        %v1238 = vlaneseq
        %v1239 = vshrl.u32 %v1238, 7
        %v1240 = vsub.s32 %v1237, %v1239
        %v1241 = vrot.slane %v1233, %v1240
        %v1243 = vunpack.c.l.s4 1983009808
        %v1244 = vunpack.c.0.s8 %v1243
        %v1245 = vlaneseq
        %v1246 = vshrl.u32 %v1245, 7
        %v1247 = vsub.s32 %v1244, %v1246
        %v1248 = vrot.slane %v1234, %v1247
        %v1249 = vcombine.low %v1224, %v1228
        %v1250 = vcombine.high %v1224, %v1228
        %v1252 = vunpack.c.l.s4 1983009808
        %v1253 = vunpack.c.0.s8 %v1252
        %v1254 = vlaneseq
        %v1255 = vshrl.u32 %v1254, 7
        %v1256 = vsub.s32 %v1253, %v1255
        %v1257 = vrot.slane %v1249, %v1256
        %v1259 = vunpack.c.l.s4 1983009808
        %v1260 = vunpack.c.0.s8 %v1259
        %v1261 = vlaneseq
        %v1262 = vshrl.u32 %v1261, 7
        %v1263 = vsub.s32 %v1260, %v1262
        %v1264 = vrot.slane %v1250, %v1263
        %v1265 = vcombine.low %v1241, %v1257
        %v1266 = vcombine.high %v1241, %v1257
        %v1268 = vunpack.c.l.s4 1934713408
        %v1269 = vunpack.c.0.s8 %v1268
        %v1270 = vlaneseq
        %v1271 = vshrl.u32 %v1270, 7
        %v1272 = vsub.s32 %v1269, %v1271
        %v1273 = vrot.slane %v1265, %v1272
        %v1275 = vunpack.c.l.s4 1934713408
        %v1276 = vunpack.c.0.s8 %v1275
        %v1277 = vlaneseq
        %v1278 = vshrl.u32 %v1277, 7
        %v1279 = vsub.s32 %v1276, %v1278
        %v1280 = vrot.slane %v1266, %v1279
        %v1281 = vcombine.low %v1248, %v1264
        %v1282 = vcombine.high %v1248, %v1264
        %v1284 = vunpack.c.l.s4 1934713408
        %v1285 = vunpack.c.0.s8 %v1284
        %v1286 = vlaneseq
        %v1287 = vshrl.u32 %v1286, 7
        %v1288 = vsub.s32 %v1285, %v1287
        %v1289 = vrot.slane %v1281, %v1288
        %v1291 = vunpack.c.l.s4 1934713408
        %v1292 = vunpack.c.0.s8 %v1291
        %v1293 = vlaneseq
        %v1294 = vshrl.u32 %v1293, 7
        %v1295 = vsub.s32 %v1292, %v1294
        %v1296 = vrot.slane %v1282, %v1295
        %v1297 = vcombine.high %v1273, 0.0
        %v1298 = vcombine.high %v1280, 0.0
        %v1299 = vcombine.high %v1289, 0.0
        %v1300 = vcombine.high %v1296, 0.0
        %v1301 = vcombine.low %v1273, %v1280
        %v1303 = vunpack.c.l.s4 1983009808
        %v1304 = vunpack.c.0.s8 %v1303
        %v1305 = vlaneseq
        %v1306 = vshrl.u32 %v1305, 7
        %v1307 = vsub.s32 %v1304, %v1306
        %v1308 = vrot.slane %v1301, %v1307
        %v1309 = vcombine.low %v1297, %v1298
        %v1311 = vunpack.c.l.s4 1983009808
        %v1312 = vunpack.c.0.s8 %v1311
        %v1313 = vlaneseq
        %v1314 = vshrl.u32 %v1313, 7
        %v1315 = vsub.s32 %v1312, %v1314
        %v1316 = vrot.slane %v1309, %v1315
        %v1317 = vcombine.low %v1289, %v1296
        %v1319 = vunpack.c.l.s4 1983009808
        %v1320 = vunpack.c.0.s8 %v1319
        %v1321 = vlaneseq
        %v1322 = vshrl.u32 %v1321, 7
        %v1323 = vsub.s32 %v1320, %v1322
        %v1324 = vrot.slane %v1317, %v1323
        %v1325 = vcombine.low %v1299, %v1300
        %v1327 = vunpack.c.l.s4 1983009808
        %v1328 = vunpack.c.0.s8 %v1327
        %v1329 = vlaneseq
        %v1330 = vshrl.u32 %v1329, 7
        %v1331 = vsub.s32 %v1328, %v1330
        %v1332 = vrot.slane %v1325, %v1331
        %v1333 = vcombine.low %v1308, %v1316
        %v1334 = vcombine.high %v1308, %v1316
        %v1336 = vunpack.c.l.s4 1934713408
        %v1337 = vunpack.c.0.s8 %v1336
        %v1338 = vlaneseq
        %v1339 = vshrl.u32 %v1338, 7
        %v1340 = vsub.s32 %v1337, %v1339
        %v1341 = vrot.slane %v1333, %v1340
        %v1343 = vunpack.c.l.s4 1934713408
        %v1344 = vunpack.c.0.s8 %v1343
        %v1345 = vlaneseq
        %v1346 = vshrl.u32 %v1345, 7
        %v1347 = vsub.s32 %v1344, %v1346
        %v1348 = vrot.slane %v1334, %v1347
        %v1349 = vcombine.low %v1324, %v1332
        %v1350 = vcombine.high %v1324, %v1332
        %v1352 = vunpack.c.l.s4 1934713408
        %v1353 = vunpack.c.0.s8 %v1352
        %v1354 = vlaneseq
        %v1355 = vshrl.u32 %v1354, 7
        %v1356 = vsub.s32 %v1353, %v1355
        %v1357 = vrot.slane %v1349, %v1356
        %v1359 = vunpack.c.l.s4 1934713408
        %v1360 = vunpack.c.0.s8 %v1359
        %v1361 = vlaneseq
        %v1362 = vshrl.u32 %v1361, 7
        %v1363 = vsub.s32 %v1360, %v1362
        %v1364 = vrot.slane %v1350, %v1363
        %v1365 = vcombine.low %v1341, %v1357
        %v1366 = vcombine.high %v1341, %v1357
        %v1367 = vcombine.low %v1348, %v1364
        %v1368 = vcombine.high %v1348, %v1364
        %v1369 = vpack.c.bf16 %v1069, %v1069
        %v1370 = vpack.c.bf16 %v1070, %v1070
        %v1371 = vpack.c.bf16 %v1071, %v1071
        %v1372 = vpack.c.bf16 %v1072, %v1072
        %v1373 = vpack.c.bf16 %v1217, %v1217
        %v1374 = vpack.c.bf16 %v1218, %v1218
        %v1375 = vpack.c.bf16 %v1219, %v1219
        %v1376 = vpack.c.bf16 %v1220, %v1220
        %vm1377 = vcmask 64512
        %v1379 = vsel %vm1377, %v1369, 0
        %v1382 = vsel %vm1377, %v1373, 0
        %1384 = vmatprep.subr.bf16.mxu0 0
        %1385 = vmatpush1.bf16.xpose.msra.mxu0 %v1382
        %1386 = vmatprep.subr.bf16.mxu0 0
        %1387 = vmatpush1.bf16.xpose.msra.mxu0 0
        %1388 = vmatprep.subr.bf16.mxu0 0
        %1389 = vmatpush1.bf16.xpose.msra.mxu0 0
        %1390 = vmatprep.subr.bf16.mxu0 0
        %1391 = vmatpush1.bf16.xpose.msra.mxu0 0
        %1392 = vmatprep.subr.bf16.mxu0 0
        %1393 = vmatpush1.bf16.xpose.msra.mxu0 0
        %1394 = vmatprep.subr.bf16.mxu0 0
        %1395 = vmatpush1.bf16.xpose.msra.mxu0 0
        %1396 = vmatprep.subr.bf16.mxu0 0
        %1397 = vmatpush1.bf16.xpose.msra.mxu0 0
        %1398 = vmatprep.subr.bf16.mxu0 0
        %1399 = vmatpush1.bf16.xpose.msra.mxu0 0
        %1400 = vmatprep.subr.bf16.mxu0 0
        %1401 = vmatpush1.bf16.xpose.msra.mxu0 0
        %1402 = vmatprep.subr.bf16.mxu0 0
        %1403 = vmatpush1.bf16.xpose.msra.mxu0 0
        %1404 = vmatprep.subr.bf16.mxu0 0
        %1405 = vmatpush1.bf16.xpose.msra.mxu0 0
        %1406 = vmatprep.subr.bf16.mxu0 0
        %1407 = vmatpush1.bf16.xpose.msra.mxu0 0
        %1408 = vmatprep.subr.bf16.mxu0 0
        %1409 = vmatpush1.bf16.xpose.msra.mxu0 0
        %1410 = vmatprep.subr.bf16.mxu0 0
        %1411 = vmatpush1.bf16.xpose.msra.mxu0 0
        %1412 = vmatprep.subr.bf16.mxu0 0
        %1413 = vmatpush1.bf16.xpose.msra.mxu0 0
        %1414 = vmatprep.subr.bf16.mxu0 0
        %1415 = vmatpush1.bf16.xpose.msra.mxu0 0
        %1416 = vmatprep.mubr.bf16.mxu0 0
        %1417 = vmatmul.mubr.bf16.gmra.mrb[0].mxu0 %v1379
        %v1418 = vpop.f32.mrb[0].mxu0
        %v1419 = vadd.f32 0.0, %v1418
        %v1420 = vpop.f32.mrb[0].mxu0
        %v1421 = vpop.f32.mrb[0].mxu0
        %v1422 = vpop.f32.mrb[0].mxu0
        %1423 = vdwg.mxu0
        %v1425 = vsel %vm1377, %v1370, 0
        %v1428 = vsel %vm1377, %v1374, 0
        %1430 = vmatprep.subr.bf16.mxu0 0
        %1431 = vmatpush1.bf16.xpose.msra.mxu0 %v1428
        %1432 = vmatprep.subr.bf16.mxu0 0
        %1433 = vmatpush1.bf16.xpose.msra.mxu0 0
        %1434 = vmatprep.subr.bf16.mxu0 0
        %1435 = vmatpush1.bf16.xpose.msra.mxu0 0
        %1436 = vmatprep.subr.bf16.mxu0 0
        %1437 = vmatpush1.bf16.xpose.msra.mxu0 0
        %1438 = vmatprep.subr.bf16.mxu0 0
        %1439 = vmatpush1.bf16.xpose.msra.mxu0 0
        %1440 = vmatprep.subr.bf16.mxu0 0
        %1441 = vmatpush1.bf16.xpose.msra.mxu0 0
        %1442 = vmatprep.subr.bf16.mxu0 0
        %1443 = vmatpush1.bf16.xpose.msra.mxu0 0
        %1444 = vmatprep.subr.bf16.mxu0 0
        %1445 = vmatpush1.bf16.xpose.msra.mxu0 0
        %1446 = vmatprep.subr.bf16.mxu0 0
        %1447 = vmatpush1.bf16.xpose.msra.mxu0 0
        %1448 = vmatprep.subr.bf16.mxu0 0
        %1449 = vmatpush1.bf16.xpose.msra.mxu0 0
        %1450 = vmatprep.subr.bf16.mxu0 0
        %1451 = vmatpush1.bf16.xpose.msra.mxu0 0
        %1452 = vmatprep.subr.bf16.mxu0 0
        %1453 = vmatpush1.bf16.xpose.msra.mxu0 0
        %1454 = vmatprep.subr.bf16.mxu0 0
        %1455 = vmatpush1.bf16.xpose.msra.mxu0 0
        %1456 = vmatprep.subr.bf16.mxu0 0
        %1457 = vmatpush1.bf16.xpose.msra.mxu0 0
        %1458 = vmatprep.subr.bf16.mxu0 0
        %1459 = vmatpush1.bf16.xpose.msra.mxu0 0
        %1460 = vmatprep.subr.bf16.mxu0 0
        %1461 = vmatpush1.bf16.xpose.msra.mxu0 0
        %1462 = vmatprep.mubr.bf16.mxu0 0
        %1463 = vmatmul.mubr.bf16.gmra.mrb[0].mxu0 %v1425
        %v1464 = vpop.f32.mrb[0].mxu0
        %v1465 = vadd.f32 0.0, %v1464
        %v1466 = vpop.f32.mrb[0].mxu0
        %v1467 = vpop.f32.mrb[0].mxu0
        %v1468 = vpop.f32.mrb[0].mxu0
        %1469 = vdwg.mxu0
        %v1471 = vsel %vm1377, %v1371, 0
        %v1474 = vsel %vm1377, %v1375, 0
        %1476 = vmatprep.subr.bf16.mxu0 0
        %1477 = vmatpush1.bf16.xpose.msra.mxu0 %v1474
        %1478 = vmatprep.subr.bf16.mxu0 0
        %1479 = vmatpush1.bf16.xpose.msra.mxu0 0
        %1480 = vmatprep.subr.bf16.mxu0 0
        %1481 = vmatpush1.bf16.xpose.msra.mxu0 0
        %1482 = vmatprep.subr.bf16.mxu0 0
        %1483 = vmatpush1.bf16.xpose.msra.mxu0 0
        %1484 = vmatprep.subr.bf16.mxu0 0
        %1485 = vmatpush1.bf16.xpose.msra.mxu0 0
        %1486 = vmatprep.subr.bf16.mxu0 0
        %1487 = vmatpush1.bf16.xpose.msra.mxu0 0
        %1488 = vmatprep.subr.bf16.mxu0 0
        %1489 = vmatpush1.bf16.xpose.msra.mxu0 0
        %1490 = vmatprep.subr.bf16.mxu0 0
        %1491 = vmatpush1.bf16.xpose.msra.mxu0 0
        %1492 = vmatprep.subr.bf16.mxu0 0
        %1493 = vmatpush1.bf16.xpose.msra.mxu0 0
        %1494 = vmatprep.subr.bf16.mxu0 0
        %1495 = vmatpush1.bf16.xpose.msra.mxu0 0
        %1496 = vmatprep.subr.bf16.mxu0 0
        %1497 = vmatpush1.bf16.xpose.msra.mxu0 0
        %1498 = vmatprep.subr.bf16.mxu0 0
        %1499 = vmatpush1.bf16.xpose.msra.mxu0 0
        %1500 = vmatprep.subr.bf16.mxu0 0
        %1501 = vmatpush1.bf16.xpose.msra.mxu0 0
        %1502 = vmatprep.subr.bf16.mxu0 0
        %1503 = vmatpush1.bf16.xpose.msra.mxu0 0
        %1504 = vmatprep.subr.bf16.mxu0 0
        %1505 = vmatpush1.bf16.xpose.msra.mxu0 0
        %1506 = vmatprep.subr.bf16.mxu0 0
        %1507 = vmatpush1.bf16.xpose.msra.mxu0 0
        %1508 = vmatprep.mubr.bf16.mxu0 0
        %1509 = vmatmul.mubr.bf16.gmra.mrb[0].mxu0 %v1471
        %v1510 = vpop.f32.mrb[0].mxu0
        %v1511 = vadd.f32 0.0, %v1510
        %v1512 = vpop.f32.mrb[0].mxu0
        %v1513 = vpop.f32.mrb[0].mxu0
        %v1514 = vpop.f32.mrb[0].mxu0
        %1515 = vdwg.mxu0
        %v1517 = vsel %vm1377, %v1372, 0
        %v1520 = vsel %vm1377, %v1376, 0
        %1522 = vmatprep.subr.bf16.mxu0 0
        %1523 = vmatpush1.bf16.xpose.msra.mxu0 %v1520
        %1524 = vmatprep.subr.bf16.mxu0 0
        %1525 = vmatpush1.bf16.xpose.msra.mxu0 0
        %1526 = vmatprep.subr.bf16.mxu0 0
        %1527 = vmatpush1.bf16.xpose.msra.mxu0 0
        %1528 = vmatprep.subr.bf16.mxu0 0
        %1529 = vmatpush1.bf16.xpose.msra.mxu0 0
        %1530 = vmatprep.subr.bf16.mxu0 0
        %1531 = vmatpush1.bf16.xpose.msra.mxu0 0
        %1532 = vmatprep.subr.bf16.mxu0 0
        %1533 = vmatpush1.bf16.xpose.msra.mxu0 0
        %1534 = vmatprep.subr.bf16.mxu0 0
        %1535 = vmatpush1.bf16.xpose.msra.mxu0 0
        %1536 = vmatprep.subr.bf16.mxu0 0
        %1537 = vmatpush1.bf16.xpose.msra.mxu0 0
        %1538 = vmatprep.subr.bf16.mxu0 0
        %1539 = vmatpush1.bf16.xpose.msra.mxu0 0
        %1540 = vmatprep.subr.bf16.mxu0 0
        %1541 = vmatpush1.bf16.xpose.msra.mxu0 0
        %1542 = vmatprep.subr.bf16.mxu0 0
        %1543 = vmatpush1.bf16.xpose.msra.mxu0 0
        %1544 = vmatprep.subr.bf16.mxu0 0
        %1545 = vmatpush1.bf16.xpose.msra.mxu0 0
        %1546 = vmatprep.subr.bf16.mxu0 0
        %1547 = vmatpush1.bf16.xpose.msra.mxu0 0
        %1548 = vmatprep.subr.bf16.mxu0 0
        %1549 = vmatpush1.bf16.xpose.msra.mxu0 0
        %1550 = vmatprep.subr.bf16.mxu0 0
        %1551 = vmatpush1.bf16.xpose.msra.mxu0 0
        %1552 = vmatprep.subr.bf16.mxu0 0
        %1553 = vmatpush1.bf16.xpose.msra.mxu0 0
        %1554 = vmatprep.mubr.bf16.mxu0 0
        %1555 = vmatmul.mubr.bf16.gmra.mrb[0].mxu0 %v1517
        %v1556 = vpop.f32.mrb[0].mxu0
        %v1557 = vadd.f32 0.0, %v1556
        %v1558 = vpop.f32.mrb[0].mxu0
        %v1559 = vpop.f32.mrb[0].mxu0
        %v1560 = vpop.f32.mrb[0].mxu0
        %1561 = vdwg.mxu0
        %v1562 = vmul.f32 %v1419, 0.35355338
        %v1563 = vmul.f32 %v1465, 0.35355338
        %v1564 = vmul.f32 %v1511, 0.35355338
        %v1565 = vmul.f32 %v1557, 0.35355338
        %v1566 = vadd.f32 %v1562, %v926
        %v1567 = vadd.f32 %v1563, %v926
        %v1568 = vadd.f32 %v1564, %v926
        %v1569 = vadd.f32 %v1565, %v926
        %v1570 = vsel %vm1377, %v1566, -inf
        %1571 = vmax.xlane.f32.xlu0 %v1570
        %v1572 = vpop.xlane.xlu0 %1571
        %v1573 = vsel %vm1377, %v1567, -inf
        %1574 = vmax.xlane.f32.xlu0 %v1573
        %v1575 = vpop.xlane.xlu0 %1574
        %v1576 = vsel %vm1377, %v1568, -inf
        %1577 = vmax.xlane.f32.xlu0 %v1576
        %v1578 = vpop.xlane.xlu0 %1577
        %v1579 = vsel %vm1377, %v1569, -inf
        %1580 = vmax.xlane.f32.xlu0 %v1579
        %v1581 = vpop.xlane.xlu0 %1580
        %v1582 = vsub.f32 %v1566, %v1572
        %v1583 = vsub.f32 %v1567, %v1575
        %v1584 = vsub.f32 %v1568, %v1578
        %v1585 = vsub.f32 %v1569, %v1581
        %v1586 = vmul.f32 %v1582, 1.442695
        %v1587 = vpow.pop %v1586
        %v1588 = vmul.f32 %v1583, 1.442695
        %v1589 = vpow.pop %v1588
        %v1590 = vmul.f32 %v1584, 1.442695
        %v1591 = vpow.pop %v1590
        %v1592 = vmul.f32 %v1585, 1.442695
        %v1593 = vpow.pop %v1592
        %v1594 = vsel %vm1377, %v1587, 0.0
        %1595 = vadd.xlane.f32.xlu0 %v1594
        %v1596 = vpop.xlane.xlu0 %1595
        %v1597 = vsel %vm1377, %v1589, 0.0
        %1598 = vadd.xlane.f32.xlu0 %v1597
        %v1599 = vpop.xlane.xlu0 %1598
        %v1600 = vsel %vm1377, %v1591, 0.0
        %1601 = vadd.xlane.f32.xlu0 %v1600
        %v1602 = vpop.xlane.xlu0 %1601
        %v1603 = vsel %vm1377, %v1593, 0.0
        %1604 = vadd.xlane.f32.xlu0 %v1603
        %v1605 = vpop.xlane.xlu0 %1604
        %v1606 = vrcp.pop %v1596
        %v1607 = vmul.f32 %v1587, %v1606
        %v1608 = vrcp.pop %v1599
        %v1609 = vmul.f32 %v1589, %v1608
        %v1610 = vrcp.pop %v1602
        %v1611 = vmul.f32 %v1591, %v1610
        %v1612 = vrcp.pop %v1605
        %v1613 = vmul.f32 %v1593, %v1612
        %v1614 = vpack.c.bf16 %v1607, %v1607
        %v1615 = vpack.c.bf16 %v1609, %v1609
        %v1616 = vpack.c.bf16 %v1611, %v1611
        %v1617 = vpack.c.bf16 %v1613, %v1613
        %v1618 = vpack.c.bf16 %v1365, %v1365
        %v1619 = vpack.c.bf16 %v1366, %v1366
        %v1620 = vpack.c.bf16 %v1367, %v1367
        %v1621 = vpack.c.bf16 %v1368, %v1368
        %v1623 = vsel %vm1377, %v1614, 0
        %vm1625 = vcmask 1043456
        %v1627 = vsel %vm1625, %v1618, 0
        %1629 = vmatprep.subr.bf16.mxu0 0
        %1630 = vmatpush1.bf16.msra.mxu0 %v1627
        %1631 = vmatprep.subr.bf16.mxu0 0
        %1632 = vmatpush1.bf16.msra.mxu0 0
        %1633 = vmatprep.subr.bf16.mxu0 0
        %1634 = vmatpush1.bf16.msra.mxu0 0
        %1635 = vmatprep.subr.bf16.mxu0 0
        %1636 = vmatpush1.bf16.msra.mxu0 0
        %1637 = vmatprep.subr.bf16.mxu0 0
        %1638 = vmatpush1.bf16.msra.mxu0 0
        %1639 = vmatprep.subr.bf16.mxu0 0
        %1640 = vmatpush1.bf16.msra.mxu0 0
        %1641 = vmatprep.subr.bf16.mxu0 0
        %1642 = vmatpush1.bf16.msra.mxu0 0
        %1643 = vmatprep.subr.bf16.mxu0 0
        %1644 = vmatpush1.bf16.msra.mxu0 0
        %1645 = vmatprep.subr.bf16.mxu0 0
        %1646 = vmatpush1.bf16.msra.mxu0 0
        %1647 = vmatprep.subr.bf16.mxu0 0
        %1648 = vmatpush1.bf16.msra.mxu0 0
        %1649 = vmatprep.subr.bf16.mxu0 0
        %1650 = vmatpush1.bf16.msra.mxu0 0
        %1651 = vmatprep.subr.bf16.mxu0 0
        %1652 = vmatpush1.bf16.msra.mxu0 0
        %1653 = vmatprep.subr.bf16.mxu0 0
        %1654 = vmatpush1.bf16.msra.mxu0 0
        %1655 = vmatprep.subr.bf16.mxu0 0
        %1656 = vmatpush1.bf16.msra.mxu0 0
        %1657 = vmatprep.subr.bf16.mxu0 0
        %1658 = vmatpush1.bf16.msra.mxu0 0
        %1659 = vmatprep.subr.bf16.mxu0 0
        %1660 = vmatpush1.bf16.msra.mxu0 0
        %1661 = vmatprep.mubr.bf16.mxu0 0
        %1662 = vmatmul.mubr.bf16.gmra.mrb[0].mxu0 %v1623
        %v1663 = vpop.f32.mrb[0].mxu0
        %v1664 = vadd.f32 0.0, %v1663
        %v1665 = vpop.f32.mrb[0].mxu0
        %v1666 = vpop.f32.mrb[0].mxu0
        %v1667 = vpop.f32.mrb[0].mxu0
        %1668 = vdwg.mxu0
        %v1670 = vsel %vm1377, %v1615, 0
        %v1673 = vsel %vm1625, %v1619, 0
        %1675 = vmatprep.subr.bf16.mxu0 0
        %1676 = vmatpush1.bf16.msra.mxu0 %v1673
        %1677 = vmatprep.subr.bf16.mxu0 0
        %1678 = vmatpush1.bf16.msra.mxu0 0
        %1679 = vmatprep.subr.bf16.mxu0 0
        %1680 = vmatpush1.bf16.msra.mxu0 0
        %1681 = vmatprep.subr.bf16.mxu0 0
        %1682 = vmatpush1.bf16.msra.mxu0 0
        %1683 = vmatprep.subr.bf16.mxu0 0
        %1684 = vmatpush1.bf16.msra.mxu0 0
        %1685 = vmatprep.subr.bf16.mxu0 0
        %1686 = vmatpush1.bf16.msra.mxu0 0
        %1687 = vmatprep.subr.bf16.mxu0 0
        %1688 = vmatpush1.bf16.msra.mxu0 0
        %1689 = vmatprep.subr.bf16.mxu0 0
        %1690 = vmatpush1.bf16.msra.mxu0 0
        %1691 = vmatprep.subr.bf16.mxu0 0
        %1692 = vmatpush1.bf16.msra.mxu0 0
        %1693 = vmatprep.subr.bf16.mxu0 0
        %1694 = vmatpush1.bf16.msra.mxu0 0
        %1695 = vmatprep.subr.bf16.mxu0 0
        %1696 = vmatpush1.bf16.msra.mxu0 0
        %1697 = vmatprep.subr.bf16.mxu0 0
        %1698 = vmatpush1.bf16.msra.mxu0 0
        %1699 = vmatprep.subr.bf16.mxu0 0
        %1700 = vmatpush1.bf16.msra.mxu0 0
        %1701 = vmatprep.subr.bf16.mxu0 0
        %1702 = vmatpush1.bf16.msra.mxu0 0
        %1703 = vmatprep.subr.bf16.mxu0 0
        %1704 = vmatpush1.bf16.msra.mxu0 0
        %1705 = vmatprep.subr.bf16.mxu0 0
        %1706 = vmatpush1.bf16.msra.mxu0 0
        %1707 = vmatprep.mubr.bf16.mxu0 0
        %1708 = vmatmul.mubr.bf16.gmra.mrb[0].mxu0 %v1670
        %v1709 = vpop.f32.mrb[0].mxu0
        %v1710 = vadd.f32 0.0, %v1709
        %v1711 = vpop.f32.mrb[0].mxu0
        %v1712 = vpop.f32.mrb[0].mxu0
        %v1713 = vpop.f32.mrb[0].mxu0
        %1714 = vdwg.mxu0
        %v1716 = vsel %vm1377, %v1616, 0
        %v1719 = vsel %vm1625, %v1620, 0
        %1721 = vmatprep.subr.bf16.mxu0 0
        %1722 = vmatpush1.bf16.msra.mxu0 %v1719
        %1723 = vmatprep.subr.bf16.mxu0 0
        %1724 = vmatpush1.bf16.msra.mxu0 0
        %1725 = vmatprep.subr.bf16.mxu0 0
        %1726 = vmatpush1.bf16.msra.mxu0 0
        %1727 = vmatprep.subr.bf16.mxu0 0
        %1728 = vmatpush1.bf16.msra.mxu0 0
        %1729 = vmatprep.subr.bf16.mxu0 0
        %1730 = vmatpush1.bf16.msra.mxu0 0
        %1731 = vmatprep.subr.bf16.mxu0 0
        %1732 = vmatpush1.bf16.msra.mxu0 0
        %1733 = vmatprep.subr.bf16.mxu0 0
        %1734 = vmatpush1.bf16.msra.mxu0 0
        %1735 = vmatprep.subr.bf16.mxu0 0
        %1736 = vmatpush1.bf16.msra.mxu0 0
        %1737 = vmatprep.subr.bf16.mxu0 0
        %1738 = vmatpush1.bf16.msra.mxu0 0
        %1739 = vmatprep.subr.bf16.mxu0 0
        %1740 = vmatpush1.bf16.msra.mxu0 0
        %1741 = vmatprep.subr.bf16.mxu0 0
        %1742 = vmatpush1.bf16.msra.mxu0 0
        %1743 = vmatprep.subr.bf16.mxu0 0
        %1744 = vmatpush1.bf16.msra.mxu0 0
        %1745 = vmatprep.subr.bf16.mxu0 0
        %1746 = vmatpush1.bf16.msra.mxu0 0
        %1747 = vmatprep.subr.bf16.mxu0 0
        %1748 = vmatpush1.bf16.msra.mxu0 0
        %1749 = vmatprep.subr.bf16.mxu0 0
        %1750 = vmatpush1.bf16.msra.mxu0 0
        %1751 = vmatprep.subr.bf16.mxu0 0
        %1752 = vmatpush1.bf16.msra.mxu0 0
        %1753 = vmatprep.mubr.bf16.mxu0 0
        %1754 = vmatmul.mubr.bf16.gmra.mrb[0].mxu0 %v1716
        %v1755 = vpop.f32.mrb[0].mxu0
        %v1756 = vadd.f32 0.0, %v1755
        %v1757 = vpop.f32.mrb[0].mxu0
        %v1758 = vpop.f32.mrb[0].mxu0
        %v1759 = vpop.f32.mrb[0].mxu0
        %1760 = vdwg.mxu0
        %v1762 = vsel %vm1377, %v1617, 0
        %v1765 = vsel %vm1625, %v1621, 0
        %1767 = vmatprep.subr.bf16.mxu0 0
        %1768 = vmatpush1.bf16.msra.mxu0 %v1765
        %1769 = vmatprep.subr.bf16.mxu0 0
        %1770 = vmatpush1.bf16.msra.mxu0 0
        %1771 = vmatprep.subr.bf16.mxu0 0
        %1772 = vmatpush1.bf16.msra.mxu0 0
        %1773 = vmatprep.subr.bf16.mxu0 0
        %1774 = vmatpush1.bf16.msra.mxu0 0
        %1775 = vmatprep.subr.bf16.mxu0 0
        %1776 = vmatpush1.bf16.msra.mxu0 0
        %1777 = vmatprep.subr.bf16.mxu0 0
        %1778 = vmatpush1.bf16.msra.mxu0 0
        %1779 = vmatprep.subr.bf16.mxu0 0
        %1780 = vmatpush1.bf16.msra.mxu0 0
        %1781 = vmatprep.subr.bf16.mxu0 0
        %1782 = vmatpush1.bf16.msra.mxu0 0
        %1783 = vmatprep.subr.bf16.mxu0 0
        %1784 = vmatpush1.bf16.msra.mxu0 0
        %1785 = vmatprep.subr.bf16.mxu0 0
        %1786 = vmatpush1.bf16.msra.mxu0 0
        %1787 = vmatprep.subr.bf16.mxu0 0
        %1788 = vmatpush1.bf16.msra.mxu0 0
        %1789 = vmatprep.subr.bf16.mxu0 0
        %1790 = vmatpush1.bf16.msra.mxu0 0
        %1791 = vmatprep.subr.bf16.mxu0 0
        %1792 = vmatpush1.bf16.msra.mxu0 0
        %1793 = vmatprep.subr.bf16.mxu0 0
        %1794 = vmatpush1.bf16.msra.mxu0 0
        %1795 = vmatprep.subr.bf16.mxu0 0
        %1796 = vmatpush1.bf16.msra.mxu0 0
        %1797 = vmatprep.subr.bf16.mxu0 0
        %1798 = vmatpush1.bf16.msra.mxu0 0
        %1799 = vmatprep.mubr.bf16.mxu0 0
        %1800 = vmatmul.mubr.bf16.gmra.mrb[0].mxu0 %v1762
        %v1801 = vpop.f32.mrb[0].mxu0
        %v1802 = vadd.f32 0.0, %v1801
        %v1803 = vpop.f32.mrb[0].mxu0
        %v1804 = vpop.f32.mrb[0].mxu0
        %v1805 = vpop.f32.mrb[0].mxu0
        %1806 = vdwg.mxu0
        %v1807 = vcombine.low %v1664, %v1756
        %v1808 = vcombine.high %v1664, %v1756
        %v1810 = vunpack.c.l.s4 1983009808
        %v1811 = vunpack.c.0.s8 %v1810
        %v1812 = vlaneseq
        %v1813 = vshrl.u32 %v1812, 7
        %v1814 = vsub.s32 %v1811, %v1813
        %v1815 = vrot.slane %v1807, %v1814
        %v1817 = vunpack.c.l.s4 1983009808
        %v1818 = vunpack.c.0.s8 %v1817
        %v1819 = vlaneseq
        %v1820 = vshrl.u32 %v1819, 7
        %v1821 = vsub.s32 %v1818, %v1820
        %v1822 = vrot.slane %v1808, %v1821
        %v1823 = vcombine.low %v1710, %v1802
        %v1824 = vcombine.high %v1710, %v1802
        %v1826 = vunpack.c.l.s4 1983009808
        %v1827 = vunpack.c.0.s8 %v1826
        %v1828 = vlaneseq
        %v1829 = vshrl.u32 %v1828, 7
        %v1830 = vsub.s32 %v1827, %v1829
        %v1831 = vrot.slane %v1823, %v1830
        %v1833 = vunpack.c.l.s4 1983009808
        %v1834 = vunpack.c.0.s8 %v1833
        %v1835 = vlaneseq
        %v1836 = vshrl.u32 %v1835, 7
        %v1837 = vsub.s32 %v1834, %v1836
        %v1838 = vrot.slane %v1824, %v1837
        %v1839 = vcombine.low %v1815, %v1831
        %v1840 = vcombine.high %v1815, %v1831
        %v1842 = vunpack.c.l.s4 1934713408
        %v1843 = vunpack.c.0.s8 %v1842
        %v1844 = vlaneseq
        %v1845 = vshrl.u32 %v1844, 7
        %v1846 = vsub.s32 %v1843, %v1845
        %v1847 = vrot.slane %v1839, %v1846
        %v1849 = vunpack.c.l.s4 1934713408
        %v1850 = vunpack.c.0.s8 %v1849
        %v1851 = vlaneseq
        %v1852 = vshrl.u32 %v1851, 7
        %v1853 = vsub.s32 %v1850, %v1852
        %v1854 = vrot.slane %v1840, %v1853
        %v1855 = vcombine.low %v1822, %v1838
        %v1856 = vcombine.high %v1822, %v1838
        %v1858 = vunpack.c.l.s4 1934713408
        %v1859 = vunpack.c.0.s8 %v1858
        %v1860 = vlaneseq
        %v1861 = vshrl.u32 %v1860, 7
        %v1862 = vsub.s32 %v1859, %v1861
        %v1863 = vrot.slane %v1855, %v1862
        %v1865 = vunpack.c.l.s4 1934713408
        %v1866 = vunpack.c.0.s8 %v1865
        %v1867 = vlaneseq
        %v1868 = vshrl.u32 %v1867, 7
        %v1869 = vsub.s32 %v1866, %v1868
        %v1870 = vrot.slane %v1856, %v1869
        %v1871 = vcombine.high %v1847, 0.0
        %v1872 = vcombine.high %v1854, 0.0
        %v1873 = vcombine.high %v1863, 0.0
        %v1874 = vcombine.high %v1870, 0.0
        %v1875 = vcombine.low %v1847, %v1854
        %v1877 = vunpack.c.l.s4 1983009808
        %v1878 = vunpack.c.0.s8 %v1877
        %v1879 = vlaneseq
        %v1880 = vshrl.u32 %v1879, 7
        %v1881 = vsub.s32 %v1878, %v1880
        %v1882 = vrot.slane %v1875, %v1881
        %v1883 = vcombine.low %v1871, %v1872
        %v1885 = vunpack.c.l.s4 1983009808
        %v1886 = vunpack.c.0.s8 %v1885
        %v1887 = vlaneseq
        %v1888 = vshrl.u32 %v1887, 7
        %v1889 = vsub.s32 %v1886, %v1888
        %v1890 = vrot.slane %v1883, %v1889
        %v1891 = vcombine.low %v1863, %v1870
        %v1893 = vunpack.c.l.s4 1983009808
        %v1894 = vunpack.c.0.s8 %v1893
        %v1895 = vlaneseq
        %v1896 = vshrl.u32 %v1895, 7
        %v1897 = vsub.s32 %v1894, %v1896
        %v1898 = vrot.slane %v1891, %v1897
        %v1899 = vcombine.low %v1873, %v1874
        %v1901 = vunpack.c.l.s4 1983009808
        %v1902 = vunpack.c.0.s8 %v1901
        %v1903 = vlaneseq
        %v1904 = vshrl.u32 %v1903, 7
        %v1905 = vsub.s32 %v1902, %v1904
        %v1906 = vrot.slane %v1899, %v1905
        %v1907 = vcombine.low %v1882, %v1890
        %v1908 = vcombine.high %v1882, %v1890
        %v1910 = vunpack.c.l.s4 1934713408
        %v1911 = vunpack.c.0.s8 %v1910
        %v1912 = vlaneseq
        %v1913 = vshrl.u32 %v1912, 7
        %v1914 = vsub.s32 %v1911, %v1913
        %v1915 = vrot.slane %v1907, %v1914
        %v1917 = vunpack.c.l.s4 1934713408
        %v1918 = vunpack.c.0.s8 %v1917
        %v1919 = vlaneseq
        %v1920 = vshrl.u32 %v1919, 7
        %v1921 = vsub.s32 %v1918, %v1920
        %v1922 = vrot.slane %v1908, %v1921
        %v1923 = vcombine.low %v1898, %v1906
        %v1924 = vcombine.high %v1898, %v1906
        %v1926 = vunpack.c.l.s4 1934713408
        %v1927 = vunpack.c.0.s8 %v1926
        %v1928 = vlaneseq
        %v1929 = vshrl.u32 %v1928, 7
        %v1930 = vsub.s32 %v1927, %v1929
        %v1931 = vrot.slane %v1923, %v1930
        %v1933 = vunpack.c.l.s4 1934713408
        %v1934 = vunpack.c.0.s8 %v1933
        %v1935 = vlaneseq
        %v1936 = vshrl.u32 %v1935, 7
        %v1937 = vsub.s32 %v1934, %v1936
        %v1938 = vrot.slane %v1924, %v1937
        %v1939 = vcombine.low %v1915, %v1931
        %v1940 = vcombine.high %v1915, %v1931
        %v1941 = vcombine.low %v1922, %v1938
        %v1942 = vcombine.high %v1922, %v1938
        %1944 = vrot.lane.b32.xlu0 %v1940, 8
        %v1945 = vpop.permute.xlu0 %1944
        %1948 = vrot.lane.b32.xlu0 %v1941, 16
        %v1949 = vpop.permute.xlu0 %1948
        %1952 = vrot.lane.b32.xlu0 %v1942, 24
        %v1953 = vpop.permute.xlu0 %1952
        %v1955 = vsel %vm1377, %v1939, %v1945
        %vm1956 = vcmask 130048
        %v1957 = vsel %vm1956, %v1955, %v1949
        %vm1958 = vcmask 195584
        %v1959 = vsel %vm1958, %v1957, %v1953
        %v1960 = vld [vmem:[%s6] sm:$0xf]
        %v1961 = vld [vmem:[%s6 + $0x4] sm:$0xf]
        %v1962 = vld [vmem:[%s6 + $0x8] sm:$0xf]
        %v1963 = vld [vmem:[%s6 + $0xc] sm:$0xf]
        %v1964 = vpack.c.bf16 %v1959, %v1959
        %v1965 = vld [vmem:[#allocation7] sm:$0x1]
        %v1967 = vlaneseq
        %v1968 = vshrl.u32 %v1967, 7
        %v1969 = vsub.s32 0, %v1968
        %v1970 = vrot.slane %v1965, %v1969
        %v1976 = vunpack.c.l.b16 %v1960
        %v1977 = vunpack.c.l.b16 %v1961
        %v1978 = vunpack.c.l.b16 %v1962
        %v1979 = vunpack.c.l.b16 %v1963
        %v1980 = vpack.c.b16 %v1977, %v1976
        %v1981 = vpack.c.b16 %v1979, %v1978
        %v1985 = vsel %vm882, %v1964, 0
        %1987 = vmatprep.subr.bf16.mxu0 0
        %1988 = vmatpush1.bf16.msra.mxu0 %v1980
        %1989 = vmatprep.subr.bf16.mxu0 0
        %1990 = vmatpush1.bf16.msra.mxu0 %v1981
        %1991 = vmatprep.subr.bf16.mxu0 0
        %1992 = vmatpush1.bf16.msra.mxu0 0
        %1993 = vmatprep.subr.bf16.mxu0 0
        %1994 = vmatpush1.bf16.msra.mxu0 0
        %1995 = vmatprep.subr.bf16.mxu0 0
        %1996 = vmatpush1.bf16.msra.mxu0 0
        %1997 = vmatprep.subr.bf16.mxu0 0
        %1998 = vmatpush1.bf16.msra.mxu0 0
        %1999 = vmatprep.subr.bf16.mxu0 0
        %2000 = vmatpush1.bf16.msra.mxu0 0
        %2001 = vmatprep.subr.bf16.mxu0 0
        %2002 = vmatpush1.bf16.msra.mxu0 0
        %2003 = vmatprep.subr.bf16.mxu0 0
        %2004 = vmatpush1.bf16.msra.mxu0 0
        %2005 = vmatprep.subr.bf16.mxu0 0
        %2006 = vmatpush1.bf16.msra.mxu0 0
        %2007 = vmatprep.subr.bf16.mxu0 0
        %2008 = vmatpush1.bf16.msra.mxu0 0
        %2009 = vmatprep.subr.bf16.mxu0 0
        %2010 = vmatpush1.bf16.msra.mxu0 0
        %2011 = vmatprep.subr.bf16.mxu0 0
        %2012 = vmatpush1.bf16.msra.mxu0 0
        %2013 = vmatprep.subr.bf16.mxu0 0
        %2014 = vmatpush1.bf16.msra.mxu0 0
        %2015 = vmatprep.subr.bf16.mxu0 0
        %2016 = vmatpush1.bf16.msra.mxu0 0
        %2017 = vmatprep.subr.bf16.mxu0 0
        %2018 = vmatpush1.bf16.msra.mxu0 0
        %2019 = vmatprep.mubr.bf16.mxu0 0
        %2020 = vmatmul.mubr.bf16.gmra.mrb[0].mxu0 %v1985
        %v2021 = vpop.f32.mrb[0].mxu0
        %v2022 = vadd.f32 %v1970, %v2021
        %v2023 = vpop.f32.mrb[0].mxu0
        %v2024 = vpop.f32.mrb[0].mxu0
        %v2025 = vpop.f32.mrb[0].mxu0
        %2026 = vdwg.mxu0
        %v2027 = vadd.f32 %v857, %v2022
        %v2028 = vld [vmem:[#allocation8] sm:$0x1]
        %v2029 = vld [vmem:[%s9] sm:$0x1]
        %v2030 = vsel %vm882, %v2027, 0.0
        %2031 = vadd.xlane.f32.xlu0 %v2030
        %v2032 = vpop.xlane.xlu0 %2031
        %v2033 = vrcp.pop 32.0
        %v2034 = vmul.f32 %v2032, %v2033
        %v2035 = vsub.f32 %v2027, %v2034
        %v2036 = vmul.f32 %v2035, %v2035
        %v2037 = vsel %vm882, %v2036, 0.0
        %2038 = vadd.xlane.f32.xlu0 %v2037
        %v2039 = vpop.xlane.xlu0 %2038
        %v2040 = vmul.f32 %v2039, %v2033
        %v2041 = vadd.f32 %v2040, 1e-05
        %v2042 = vrsqrt.pop %v2041
        %v2043 = vmul.f32 %v2035, %v2042
        %v2045 = vlaneseq
        %v2046 = vshrl.u32 %v2045, 7
        %v2047 = vsub.s32 0, %v2046
        %v2048 = vrot.slane %v2028, %v2047
        %v2050 = vmul.f32 %v2043, %v2048
        %v2052 = vlaneseq
        %v2053 = vshrl.u32 %v2052, 7
        %v2054 = vsub.s32 0, %v2053
        %v2055 = vrot.slane %v2029, %v2054
        %v2057 = vadd.f32 %v2050, %v2055
        %v2058 = vld [vmem:[%s10] sm:$0xf]
        %v2059 = vld [vmem:[%s10 + $0x4] sm:$0xf]
        %v2060 = vld [vmem:[%s10 + $0x8] sm:$0xf]
        %v2061 = vld [vmem:[%s10 + $0xc] sm:$0xf]
        %v2062 = vpack.c.bf16 %v2057, %v2057
        %v2063 = vld [vmem:[%s11] sm:$0x1]
        %v2065 = vlaneseq
        %v2066 = vshrl.u32 %v2065, 7
        %v2067 = vsub.s32 0, %v2066
        %v2068 = vrot.slane %v2063, %v2067
        %v2074 = vunpack.c.l.b16 %v2058
        %v2075 = vunpack.c.l.b16 %v2059
        %v2076 = vunpack.c.l.b16 %v2060
        %v2077 = vunpack.c.l.b16 %v2061
        %v2078 = vpack.c.b16 %v2075, %v2074
        %v2079 = vpack.c.b16 %v2077, %v2076
        %v2083 = vsel %vm882, %v2062, 0
        %2085 = vmatprep.subr.bf16.mxu0 0
        %2086 = vmatpush1.bf16.msra.mxu0 %v2078
        %2087 = vmatprep.subr.bf16.mxu0 0
        %2088 = vmatpush1.bf16.msra.mxu0 %v2079
        %2089 = vmatprep.subr.bf16.mxu0 0
        %2090 = vmatpush1.bf16.msra.mxu0 0
        %2091 = vmatprep.subr.bf16.mxu0 0
        %2092 = vmatpush1.bf16.msra.mxu0 0
        %2093 = vmatprep.subr.bf16.mxu0 0
        %2094 = vmatpush1.bf16.msra.mxu0 0
        %2095 = vmatprep.subr.bf16.mxu0 0
        %2096 = vmatpush1.bf16.msra.mxu0 0
        %2097 = vmatprep.subr.bf16.mxu0 0
        %2098 = vmatpush1.bf16.msra.mxu0 0
        %2099 = vmatprep.subr.bf16.mxu0 0
        %2100 = vmatpush1.bf16.msra.mxu0 0
        %2101 = vmatprep.subr.bf16.mxu0 0
        %2102 = vmatpush1.bf16.msra.mxu0 0
        %2103 = vmatprep.subr.bf16.mxu0 0
        %2104 = vmatpush1.bf16.msra.mxu0 0
        %2105 = vmatprep.subr.bf16.mxu0 0
        %2106 = vmatpush1.bf16.msra.mxu0 0
        %2107 = vmatprep.subr.bf16.mxu0 0
        %2108 = vmatpush1.bf16.msra.mxu0 0
        %2109 = vmatprep.subr.bf16.mxu0 0
        %2110 = vmatpush1.bf16.msra.mxu0 0
        %2111 = vmatprep.subr.bf16.mxu0 0
        %2112 = vmatpush1.bf16.msra.mxu0 0
        %2113 = vmatprep.subr.bf16.mxu0 0
        %2114 = vmatpush1.bf16.msra.mxu0 0
        %2115 = vmatprep.subr.bf16.mxu0 0
        %2116 = vmatpush1.bf16.msra.mxu0 0
        %2117 = vmatprep.mubr.bf16.mxu0 0
        %2118 = vmatmul.mubr.bf16.gmra.mrb[0].mxu0 %v2083
        %v2119 = vpop.f32.mrb[0].mxu0
        %v2120 = vadd.f32 %v2068, %v2119
        %v2121 = vpop.f32.mrb[0].mxu0
        %v2122 = vpop.f32.mrb[0].mxu0
        %v2123 = vpop.f32.mrb[0].mxu0
        %2124 = vdwg.mxu0
        %v2125 = vld [vmem:[%s852] sm:$0xff]
        %v2126 = vld [vmem:[%s852 + $0x8] sm:$0x3]
        %v2127 = vld [vmem:[%s12] sm:$0xf]
        %v2128 = vld [vmem:[%s12 + $0x4] sm:$0xf]
        %v2129 = vld [vmem:[%s12 + $0x8] sm:$0xf]
        %v2130 = vld [vmem:[%s12 + $0xc] sm:$0xf]
        %v2131 = vpack.c.bf16 %v2126, %v2125
        %v2132 = vld [vmem:[%s13] sm:$0x1]
        %v2134 = vlaneseq
        %v2135 = vshrl.u32 %v2134, 7
        %v2136 = vsub.s32 0, %v2135
        %v2137 = vrot.slane %v2132, %v2136
        %v2143 = vunpack.c.l.b16 %v2127
        %v2144 = vunpack.c.l.b16 %v2128
        %v2145 = vunpack.c.l.b16 %v2129
        %v2146 = vunpack.c.l.b16 %v2130
        %v2147 = vpack.c.b16 %v2144, %v2143
        %v2148 = vpack.c.b16 %v2146, %v2145
        %v2152 = vsel %vm882, %v2131, 0
        %2154 = vmatprep.subr.bf16.mxu0 0
        %2155 = vmatpush1.bf16.msra.mxu0 %v2147
        %2156 = vmatprep.subr.bf16.mxu0 0
        %2157 = vmatpush1.bf16.msra.mxu0 %v2148
        %2158 = vmatprep.subr.bf16.mxu0 0
        %2159 = vmatpush1.bf16.msra.mxu0 0
        %2160 = vmatprep.subr.bf16.mxu0 0
        %2161 = vmatpush1.bf16.msra.mxu0 0
        %2162 = vmatprep.subr.bf16.mxu0 0
        %2163 = vmatpush1.bf16.msra.mxu0 0
        %2164 = vmatprep.subr.bf16.mxu0 0
        %2165 = vmatpush1.bf16.msra.mxu0 0
        %2166 = vmatprep.subr.bf16.mxu0 0
        %2167 = vmatpush1.bf16.msra.mxu0 0
        %2168 = vmatprep.subr.bf16.mxu0 0
        %2169 = vmatpush1.bf16.msra.mxu0 0
        %2170 = vmatprep.subr.bf16.mxu0 0
        %2171 = vmatpush1.bf16.msra.mxu0 0
        %2172 = vmatprep.subr.bf16.mxu0 0
        %2173 = vmatpush1.bf16.msra.mxu0 0
        %2174 = vmatprep.subr.bf16.mxu0 0
        %2175 = vmatpush1.bf16.msra.mxu0 0
        %2176 = vmatprep.subr.bf16.mxu0 0
        %2177 = vmatpush1.bf16.msra.mxu0 0
        %2178 = vmatprep.subr.bf16.mxu0 0
        %2179 = vmatpush1.bf16.msra.mxu0 0
        %2180 = vmatprep.subr.bf16.mxu0 0
        %2181 = vmatpush1.bf16.msra.mxu0 0
        %2182 = vmatprep.subr.bf16.mxu0 0
        %2183 = vmatpush1.bf16.msra.mxu0 0
        %2184 = vmatprep.subr.bf16.mxu0 0
        %2185 = vmatpush1.bf16.msra.mxu0 0
        %2186 = vmatprep.mubr.bf16.mxu0 0
        %2187 = vmatmul.mubr.bf16.gmra.mrb[0].mxu0 %v2152
        %v2188 = vpop.f32.mrb[0].mxu0
        %v2189 = vadd.f32 %v2137, %v2188
        %v2190 = vpop.f32.mrb[0].mxu0
        %v2191 = vpop.f32.mrb[0].mxu0
        %v2192 = vadd.f32 %v2137, %v2191
        %v2193 = vpop.f32.mrb[0].mxu0
        %2194 = vdwg.mxu0
        %v2195 = vld [vmem:[%s855] sm:$0x1]
        %2197 = vrot.lane.b32.xlu0 %v2120, 120
        %v2198 = vpop.permute.xlu0 %2197
        %2200 = vrot.lane.b32.xlu0 %v2120, 112
        %v2201 = vpop.permute.xlu0 %2200
        %2203 = vrot.lane.b32.xlu0 %v2120, 104
        %v2204 = vpop.permute.xlu0 %2203
        %v2206 = vcombine.low %v2120, %v2201
        %v2207 = vcombine.high %v2120, %v2201
        %v2209 = vunpack.c.l.s4 1983009808
        %v2210 = vunpack.c.0.s8 %v2209
        %v2211 = vlaneseq
        %v2212 = vshrl.u32 %v2211, 7
        %v2213 = vsub.s32 %v2210, %v2212
        %v2214 = vrot.slane %v2206, %v2213
        %v2216 = vunpack.c.l.s4 1983009808
        %v2217 = vunpack.c.0.s8 %v2216
        %v2218 = vlaneseq
        %v2219 = vshrl.u32 %v2218, 7
        %v2220 = vsub.s32 %v2217, %v2219
        %v2221 = vrot.slane %v2207, %v2220
        %v2222 = vcombine.low %v2198, %v2204
        %v2223 = vcombine.high %v2198, %v2204
        %v2225 = vunpack.c.l.s4 1983009808
        %v2226 = vunpack.c.0.s8 %v2225
        %v2227 = vlaneseq
        %v2228 = vshrl.u32 %v2227, 7
        %v2229 = vsub.s32 %v2226, %v2228
        %v2230 = vrot.slane %v2222, %v2229
        %v2232 = vunpack.c.l.s4 1983009808
        %v2233 = vunpack.c.0.s8 %v2232
        %v2234 = vlaneseq
        %v2235 = vshrl.u32 %v2234, 7
        %v2236 = vsub.s32 %v2233, %v2235
        %v2237 = vrot.slane %v2223, %v2236
        %v2238 = vcombine.low %v2214, %v2230
        %v2239 = vcombine.high %v2214, %v2230
        %v2241 = vunpack.c.l.s4 1934713408
        %v2242 = vunpack.c.0.s8 %v2241
        %v2243 = vlaneseq
        %v2244 = vshrl.u32 %v2243, 7
        %v2245 = vsub.s32 %v2242, %v2244
        %v2246 = vrot.slane %v2238, %v2245
        %v2248 = vunpack.c.l.s4 1934713408
        %v2249 = vunpack.c.0.s8 %v2248
        %v2250 = vlaneseq
        %v2251 = vshrl.u32 %v2250, 7
        %v2252 = vsub.s32 %v2249, %v2251
        %v2253 = vrot.slane %v2239, %v2252
        %v2254 = vcombine.low %v2221, %v2237
        %v2255 = vcombine.high %v2221, %v2237
        %v2257 = vunpack.c.l.s4 1934713408
        %v2258 = vunpack.c.0.s8 %v2257
        %v2259 = vlaneseq
        %v2260 = vshrl.u32 %v2259, 7
        %v2261 = vsub.s32 %v2258, %v2260
        %v2262 = vrot.slane %v2254, %v2261
        %v2264 = vunpack.c.l.s4 1934713408
        %v2265 = vunpack.c.0.s8 %v2264
        %v2266 = vlaneseq
        %v2267 = vshrl.u32 %v2266, 7
        %v2268 = vsub.s32 %v2265, %v2267
        %v2269 = vrot.slane %v2255, %v2268
        %v2270 = vcombine.high %v2246, 0.0
        %v2271 = vcombine.high %v2253, 0.0
        %v2272 = vcombine.high %v2262, 0.0
        %v2273 = vcombine.high %v2269, 0.0
        %v2274 = vcombine.low %v2246, %v2253
        %v2276 = vunpack.c.l.s4 1983009808
        %v2277 = vunpack.c.0.s8 %v2276
        %v2278 = vlaneseq
        %v2279 = vshrl.u32 %v2278, 7
        %v2280 = vsub.s32 %v2277, %v2279
        %v2281 = vrot.slane %v2274, %v2280
        %v2282 = vcombine.low %v2270, %v2271
        %v2284 = vunpack.c.l.s4 1983009808
        %v2285 = vunpack.c.0.s8 %v2284
        %v2286 = vlaneseq
        %v2287 = vshrl.u32 %v2286, 7
        %v2288 = vsub.s32 %v2285, %v2287
        %v2289 = vrot.slane %v2282, %v2288
        %v2290 = vcombine.low %v2262, %v2269
        %v2292 = vunpack.c.l.s4 1983009808
        %v2293 = vunpack.c.0.s8 %v2292
        %v2294 = vlaneseq
        %v2295 = vshrl.u32 %v2294, 7
        %v2296 = vsub.s32 %v2293, %v2295
        %v2297 = vrot.slane %v2290, %v2296
        %v2298 = vcombine.low %v2272, %v2273
        %v2300 = vunpack.c.l.s4 1983009808
        %v2301 = vunpack.c.0.s8 %v2300
        %v2302 = vlaneseq
        %v2303 = vshrl.u32 %v2302, 7
        %v2304 = vsub.s32 %v2301, %v2303
        %v2305 = vrot.slane %v2298, %v2304
        %v2306 = vcombine.low %v2281, %v2289
        %v2307 = vcombine.high %v2281, %v2289
        %v2309 = vunpack.c.l.s4 1934713408
        %v2310 = vunpack.c.0.s8 %v2309
        %v2311 = vlaneseq
        %v2312 = vshrl.u32 %v2311, 7
        %v2313 = vsub.s32 %v2310, %v2312
        %v2314 = vrot.slane %v2306, %v2313
        %v2316 = vunpack.c.l.s4 1934713408
        %v2317 = vunpack.c.0.s8 %v2316
        %v2318 = vlaneseq
        %v2319 = vshrl.u32 %v2318, 7
        %v2320 = vsub.s32 %v2317, %v2319
        %v2321 = vrot.slane %v2307, %v2320
        %v2322 = vcombine.low %v2297, %v2305
        %v2323 = vcombine.high %v2297, %v2305
        %v2325 = vunpack.c.l.s4 1934713408
        %v2326 = vunpack.c.0.s8 %v2325
        %v2327 = vlaneseq
        %v2328 = vshrl.u32 %v2327, 7
        %v2329 = vsub.s32 %v2326, %v2328
        %v2330 = vrot.slane %v2322, %v2329
        %v2332 = vunpack.c.l.s4 1934713408
        %v2333 = vunpack.c.0.s8 %v2332
        %v2334 = vlaneseq
        %v2335 = vshrl.u32 %v2334, 7
        %v2336 = vsub.s32 %v2333, %v2335
        %v2337 = vrot.slane %v2323, %v2336
        %v2338 = vcombine.low %v2314, %v2330
        %v2339 = vcombine.high %v2314, %v2330
        %v2340 = vcombine.low %v2321, %v2337
        %v2341 = vcombine.high %v2321, %v2337
        %2344 = vrot.lane.b32.xlu0 %v2189, 120
        %v2345 = vpop.permute.xlu0 %2344
        %2346 = vrot.lane.b32.xlu0 %v2192, 120
        %v2347 = vpop.permute.xlu0 %2346
        %2350 = vrot.lane.b32.xlu0 %v2189, 112
        %v2351 = vpop.permute.xlu0 %2350
        %2352 = vrot.lane.b32.xlu0 %v2192, 112
        %v2353 = vpop.permute.xlu0 %2352
        %2356 = vrot.lane.b32.xlu0 %v2189, 104
        %v2357 = vpop.permute.xlu0 %2356
        %2358 = vrot.lane.b32.xlu0 %v2192, 104
        %v2359 = vpop.permute.xlu0 %2358
        %v2362 = vcombine.low %v2189, %v2351
        %v2363 = vcombine.high %v2189, %v2351
        %v2365 = vunpack.c.l.s4 1983009808
        %v2366 = vunpack.c.0.s8 %v2365
        %v2367 = vlaneseq
        %v2368 = vshrl.u32 %v2367, 7
        %v2369 = vsub.s32 %v2366, %v2368
        %v2370 = vrot.slane %v2362, %v2369
        %v2372 = vunpack.c.l.s4 1983009808
        %v2373 = vunpack.c.0.s8 %v2372
        %v2374 = vlaneseq
        %v2375 = vshrl.u32 %v2374, 7
        %v2376 = vsub.s32 %v2373, %v2375
        %v2377 = vrot.slane %v2363, %v2376
        %v2378 = vcombine.low %v2345, %v2357
        %v2379 = vcombine.high %v2345, %v2357
        %v2381 = vunpack.c.l.s4 1983009808
        %v2382 = vunpack.c.0.s8 %v2381
        %v2383 = vlaneseq
        %v2384 = vshrl.u32 %v2383, 7
        %v2385 = vsub.s32 %v2382, %v2384
        %v2386 = vrot.slane %v2378, %v2385
        %v2388 = vunpack.c.l.s4 1983009808
        %v2389 = vunpack.c.0.s8 %v2388
        %v2390 = vlaneseq
        %v2391 = vshrl.u32 %v2390, 7
        %v2392 = vsub.s32 %v2389, %v2391
        %v2393 = vrot.slane %v2379, %v2392
        %v2394 = vcombine.low %v2370, %v2386
        %v2395 = vcombine.high %v2370, %v2386
        %v2397 = vunpack.c.l.s4 1934713408
        %v2398 = vunpack.c.0.s8 %v2397
        %v2399 = vlaneseq
        %v2400 = vshrl.u32 %v2399, 7
        %v2401 = vsub.s32 %v2398, %v2400
        %v2402 = vrot.slane %v2394, %v2401
        %v2404 = vunpack.c.l.s4 1934713408
        %v2405 = vunpack.c.0.s8 %v2404
        %v2406 = vlaneseq
        %v2407 = vshrl.u32 %v2406, 7
        %v2408 = vsub.s32 %v2405, %v2407
        %v2409 = vrot.slane %v2395, %v2408
        %v2410 = vcombine.low %v2377, %v2393
        %v2411 = vcombine.high %v2377, %v2393
        %v2413 = vunpack.c.l.s4 1934713408
        %v2414 = vunpack.c.0.s8 %v2413
        %v2415 = vlaneseq
        %v2416 = vshrl.u32 %v2415, 7
        %v2417 = vsub.s32 %v2414, %v2416
        %v2418 = vrot.slane %v2410, %v2417
        %v2420 = vunpack.c.l.s4 1934713408
        %v2421 = vunpack.c.0.s8 %v2420
        %v2422 = vlaneseq
        %v2423 = vshrl.u32 %v2422, 7
        %v2424 = vsub.s32 %v2421, %v2423
        %v2425 = vrot.slane %v2411, %v2424
        %v2426 = vcombine.high %v2402, 0.0
        %v2427 = vcombine.high %v2409, 0.0
        %v2428 = vcombine.high %v2418, 0.0
        %v2429 = vcombine.high %v2425, 0.0
        %v2430 = vcombine.low %v2192, %v2353
        %v2432 = vunpack.c.l.s4 1983009808
        %v2433 = vunpack.c.0.s8 %v2432
        %v2434 = vlaneseq
        %v2435 = vshrl.u32 %v2434, 7
        %v2436 = vsub.s32 %v2433, %v2435
        %v2437 = vrot.slane %v2430, %v2436
        %v2438 = vcombine.low %v2347, %v2359
        %v2440 = vunpack.c.l.s4 1983009808
        %v2441 = vunpack.c.0.s8 %v2440
        %v2442 = vlaneseq
        %v2443 = vshrl.u32 %v2442, 7
        %v2444 = vsub.s32 %v2441, %v2443
        %v2445 = vrot.slane %v2438, %v2444
        %v2446 = vcombine.low %v2437, %v2445
        %v2448 = vunpack.c.l.s4 1934713408
        %v2449 = vunpack.c.0.s8 %v2448
        %v2450 = vlaneseq
        %v2451 = vshrl.u32 %v2450, 7
        %v2452 = vsub.s32 %v2449, %v2451
        %v2453 = vrot.slane %v2446, %v2452
        %v2454 = vcombine.low %v2402, %v2409
        %v2456 = vunpack.c.l.s4 1983009808
        %v2457 = vunpack.c.0.s8 %v2456
        %v2458 = vlaneseq
        %v2459 = vshrl.u32 %v2458, 7
        %v2460 = vsub.s32 %v2457, %v2459
        %v2461 = vrot.slane %v2454, %v2460
        %v2462 = vcombine.low %v2426, %v2427
        %v2464 = vunpack.c.l.s4 1983009808
        %v2465 = vunpack.c.0.s8 %v2464
        %v2466 = vlaneseq
        %v2467 = vshrl.u32 %v2466, 7
        %v2468 = vsub.s32 %v2465, %v2467
        %v2469 = vrot.slane %v2462, %v2468
        %v2470 = vcombine.low %v2418, %v2425
        %v2472 = vunpack.c.l.s4 1983009808
        %v2473 = vunpack.c.0.s8 %v2472
        %v2474 = vlaneseq
        %v2475 = vshrl.u32 %v2474, 7
        %v2476 = vsub.s32 %v2473, %v2475
        %v2477 = vrot.slane %v2470, %v2476
        %v2478 = vcombine.low %v2428, %v2429
        %v2480 = vunpack.c.l.s4 1983009808
        %v2481 = vunpack.c.0.s8 %v2480
        %v2482 = vlaneseq
        %v2483 = vshrl.u32 %v2482, 7
        %v2484 = vsub.s32 %v2481, %v2483
        %v2485 = vrot.slane %v2478, %v2484
        %v2486 = vcombine.low %v2461, %v2469
        %v2487 = vcombine.high %v2461, %v2469
        %v2489 = vunpack.c.l.s4 1934713408
        %v2490 = vunpack.c.0.s8 %v2489
        %v2491 = vlaneseq
        %v2492 = vshrl.u32 %v2491, 7
        %v2493 = vsub.s32 %v2490, %v2492
        %v2494 = vrot.slane %v2486, %v2493
        %v2496 = vunpack.c.l.s4 1934713408
        %v2497 = vunpack.c.0.s8 %v2496
        %v2498 = vlaneseq
        %v2499 = vshrl.u32 %v2498, 7
        %v2500 = vsub.s32 %v2497, %v2499
        %v2501 = vrot.slane %v2487, %v2500
        %v2502 = vcombine.low %v2477, %v2485
        %v2503 = vcombine.high %v2477, %v2485
        %v2505 = vunpack.c.l.s4 1934713408
        %v2506 = vunpack.c.0.s8 %v2505
        %v2507 = vlaneseq
        %v2508 = vshrl.u32 %v2507, 7
        %v2509 = vsub.s32 %v2506, %v2508
        %v2510 = vrot.slane %v2502, %v2509
        %v2512 = vunpack.c.l.s4 1934713408
        %v2513 = vunpack.c.0.s8 %v2512
        %v2514 = vlaneseq
        %v2515 = vshrl.u32 %v2514, 7
        %v2516 = vsub.s32 %v2513, %v2515
        %v2517 = vrot.slane %v2503, %v2516
        %v2518 = vcombine.low %v2494, %v2510
        %v2519 = vcombine.high %v2494, %v2510
        %v2520 = vcombine.low %v2501, %v2517
        %v2521 = vcombine.high %v2501, %v2517
        %v2523 = vunpack.c.l.s4 1983009808
        %v2524 = vunpack.c.0.s8 %v2523
        %v2525 = vlaneseq
        %v2526 = vshrl.u32 %v2525, 7
        %v2527 = vsub.s32 %v2524, %v2526
        %v2528 = vrot.slane %v2453, %v2527
        %v2529 = vcombine.high %v2453, 0.0
        %v2531 = vunpack.c.l.s4 1983009808
        %v2532 = vunpack.c.0.s8 %v2531
        %v2533 = vlaneseq
        %v2534 = vshrl.u32 %v2533, 7
        %v2535 = vsub.s32 %v2532, %v2534
        %v2536 = vrot.slane %v2529, %v2535
        %v2537 = vcombine.low %v2528, %v2536
        %v2538 = vcombine.high %v2528, %v2536
        %v2540 = vunpack.c.l.s4 1934713408
        %v2541 = vunpack.c.0.s8 %v2540
        %v2542 = vlaneseq
        %v2543 = vshrl.u32 %v2542, 7
        %v2544 = vsub.s32 %v2541, %v2543
        %v2545 = vrot.slane %v2537, %v2544
        %v2547 = vunpack.c.l.s4 1934713408
        %v2548 = vunpack.c.0.s8 %v2547
        %v2549 = vlaneseq
        %v2550 = vshrl.u32 %v2549, 7
        %v2551 = vsub.s32 %v2548, %v2550
        %v2552 = vrot.slane %v2538, %v2551
        %v2553 = vcombine.high %v2545, 0.0
        %v2554 = vcombine.high %v2552, 0.0
        %2555 = vrot.lane.b32.xlu0 %v2189, 96
        %v2556 = vpop.permute.xlu0 %2555
        %2557 = vrot.lane.b32.xlu0 %v2192, 96
        %v2558 = vpop.permute.xlu0 %2557
        %2559 = vrot.lane.b32.xlu0 %v2345, 96
        %v2560 = vpop.permute.xlu0 %2559
        %2561 = vrot.lane.b32.xlu0 %v2347, 96
        %v2562 = vpop.permute.xlu0 %2561
        %2563 = vrot.lane.b32.xlu0 %v2351, 96
        %v2564 = vpop.permute.xlu0 %2563
        %2565 = vrot.lane.b32.xlu0 %v2353, 96
        %v2566 = vpop.permute.xlu0 %2565
        %2567 = vrot.lane.b32.xlu0 %v2357, 96
        %v2568 = vpop.permute.xlu0 %2567
        %2569 = vrot.lane.b32.xlu0 %v2359, 96
        %v2570 = vpop.permute.xlu0 %2569
        %v2579 = vcombine.low %v2556, %v2564
        %v2580 = vcombine.high %v2556, %v2564
        %v2582 = vunpack.c.l.s4 1983009808
        %v2583 = vunpack.c.0.s8 %v2582
        %v2584 = vlaneseq
        %v2585 = vshrl.u32 %v2584, 7
        %v2586 = vsub.s32 %v2583, %v2585
        %v2587 = vrot.slane %v2579, %v2586
        %v2589 = vunpack.c.l.s4 1983009808
        %v2590 = vunpack.c.0.s8 %v2589
        %v2591 = vlaneseq
        %v2592 = vshrl.u32 %v2591, 7
        %v2593 = vsub.s32 %v2590, %v2592
        %v2594 = vrot.slane %v2580, %v2593
        %v2595 = vcombine.low %v2560, %v2568
        %v2596 = vcombine.high %v2560, %v2568
        %v2598 = vunpack.c.l.s4 1983009808
        %v2599 = vunpack.c.0.s8 %v2598
        %v2600 = vlaneseq
        %v2601 = vshrl.u32 %v2600, 7
        %v2602 = vsub.s32 %v2599, %v2601
        %v2603 = vrot.slane %v2595, %v2602
        %v2605 = vunpack.c.l.s4 1983009808
        %v2606 = vunpack.c.0.s8 %v2605
        %v2607 = vlaneseq
        %v2608 = vshrl.u32 %v2607, 7
        %v2609 = vsub.s32 %v2606, %v2608
        %v2610 = vrot.slane %v2596, %v2609
        %v2611 = vcombine.low %v2587, %v2603
        %v2612 = vcombine.high %v2587, %v2603
        %v2614 = vunpack.c.l.s4 1934713408
        %v2615 = vunpack.c.0.s8 %v2614
        %v2616 = vlaneseq
        %v2617 = vshrl.u32 %v2616, 7
        %v2618 = vsub.s32 %v2615, %v2617
        %v2619 = vrot.slane %v2611, %v2618
        %v2621 = vunpack.c.l.s4 1934713408
        %v2622 = vunpack.c.0.s8 %v2621
        %v2623 = vlaneseq
        %v2624 = vshrl.u32 %v2623, 7
        %v2625 = vsub.s32 %v2622, %v2624
        %v2626 = vrot.slane %v2612, %v2625
        %v2627 = vcombine.low %v2594, %v2610
        %v2628 = vcombine.high %v2594, %v2610
        %v2630 = vunpack.c.l.s4 1934713408
        %v2631 = vunpack.c.0.s8 %v2630
        %v2632 = vlaneseq
        %v2633 = vshrl.u32 %v2632, 7
        %v2634 = vsub.s32 %v2631, %v2633
        %v2635 = vrot.slane %v2627, %v2634
        %v2637 = vunpack.c.l.s4 1934713408
        %v2638 = vunpack.c.0.s8 %v2637
        %v2639 = vlaneseq
        %v2640 = vshrl.u32 %v2639, 7
        %v2641 = vsub.s32 %v2638, %v2640
        %v2642 = vrot.slane %v2628, %v2641
        %v2643 = vcombine.high %v2619, 0.0
        %v2644 = vcombine.high %v2626, 0.0
        %v2645 = vcombine.high %v2635, 0.0
        %v2646 = vcombine.high %v2642, 0.0
        %v2647 = vcombine.low %v2558, %v2566
        %v2649 = vunpack.c.l.s4 1983009808
        %v2650 = vunpack.c.0.s8 %v2649
        %v2651 = vlaneseq
        %v2652 = vshrl.u32 %v2651, 7
        %v2653 = vsub.s32 %v2650, %v2652
        %v2654 = vrot.slane %v2647, %v2653
        %v2655 = vcombine.low %v2562, %v2570
        %v2657 = vunpack.c.l.s4 1983009808
        %v2658 = vunpack.c.0.s8 %v2657
        %v2659 = vlaneseq
        %v2660 = vshrl.u32 %v2659, 7
        %v2661 = vsub.s32 %v2658, %v2660
        %v2662 = vrot.slane %v2655, %v2661
        %v2663 = vcombine.low %v2654, %v2662
        %v2665 = vunpack.c.l.s4 1934713408
        %v2666 = vunpack.c.0.s8 %v2665
        %v2667 = vlaneseq
        %v2668 = vshrl.u32 %v2667, 7
        %v2669 = vsub.s32 %v2666, %v2668
        %v2670 = vrot.slane %v2663, %v2669
        %v2671 = vcombine.low %v2619, %v2626
        %v2673 = vunpack.c.l.s4 1983009808
        %v2674 = vunpack.c.0.s8 %v2673
        %v2675 = vlaneseq
        %v2676 = vshrl.u32 %v2675, 7
        %v2677 = vsub.s32 %v2674, %v2676
        %v2678 = vrot.slane %v2671, %v2677
        %v2679 = vcombine.low %v2643, %v2644
        %v2681 = vunpack.c.l.s4 1983009808
        %v2682 = vunpack.c.0.s8 %v2681
        %v2683 = vlaneseq
        %v2684 = vshrl.u32 %v2683, 7
        %v2685 = vsub.s32 %v2682, %v2684
        %v2686 = vrot.slane %v2679, %v2685
        %v2687 = vcombine.low %v2635, %v2642
        %v2689 = vunpack.c.l.s4 1983009808
        %v2690 = vunpack.c.0.s8 %v2689
        %v2691 = vlaneseq
        %v2692 = vshrl.u32 %v2691, 7
        %v2693 = vsub.s32 %v2690, %v2692
        %v2694 = vrot.slane %v2687, %v2693
        %v2695 = vcombine.low %v2645, %v2646
        %v2697 = vunpack.c.l.s4 1983009808
        %v2698 = vunpack.c.0.s8 %v2697
        %v2699 = vlaneseq
        %v2700 = vshrl.u32 %v2699, 7
        %v2701 = vsub.s32 %v2698, %v2700
        %v2702 = vrot.slane %v2695, %v2701
        %v2703 = vcombine.low %v2678, %v2686
        %v2704 = vcombine.high %v2678, %v2686
        %v2706 = vunpack.c.l.s4 1934713408
        %v2707 = vunpack.c.0.s8 %v2706
        %v2708 = vlaneseq
        %v2709 = vshrl.u32 %v2708, 7
        %v2710 = vsub.s32 %v2707, %v2709
        %v2711 = vrot.slane %v2703, %v2710
        %v2713 = vunpack.c.l.s4 1934713408
        %v2714 = vunpack.c.0.s8 %v2713
        %v2715 = vlaneseq
        %v2716 = vshrl.u32 %v2715, 7
        %v2717 = vsub.s32 %v2714, %v2716
        %v2718 = vrot.slane %v2704, %v2717
        %v2719 = vcombine.low %v2694, %v2702
        %v2720 = vcombine.high %v2694, %v2702
        %v2722 = vunpack.c.l.s4 1934713408
        %v2723 = vunpack.c.0.s8 %v2722
        %v2724 = vlaneseq
        %v2725 = vshrl.u32 %v2724, 7
        %v2726 = vsub.s32 %v2723, %v2725
        %v2727 = vrot.slane %v2719, %v2726
        %v2729 = vunpack.c.l.s4 1934713408
        %v2730 = vunpack.c.0.s8 %v2729
        %v2731 = vlaneseq
        %v2732 = vshrl.u32 %v2731, 7
        %v2733 = vsub.s32 %v2730, %v2732
        %v2734 = vrot.slane %v2720, %v2733
        %v2735 = vcombine.low %v2711, %v2727
        %v2736 = vcombine.high %v2711, %v2727
        %v2737 = vcombine.low %v2718, %v2734
        %v2738 = vcombine.high %v2718, %v2734
        %v2740 = vunpack.c.l.s4 1983009808
        %v2741 = vunpack.c.0.s8 %v2740
        %v2742 = vlaneseq
        %v2743 = vshrl.u32 %v2742, 7
        %v2744 = vsub.s32 %v2741, %v2743
        %v2745 = vrot.slane %v2670, %v2744
        %v2746 = vcombine.high %v2670, 0.0
        %v2748 = vunpack.c.l.s4 1983009808
        %v2749 = vunpack.c.0.s8 %v2748
        %v2750 = vlaneseq
        %v2751 = vshrl.u32 %v2750, 7
        %v2752 = vsub.s32 %v2749, %v2751
        %v2753 = vrot.slane %v2746, %v2752
        %v2754 = vcombine.low %v2745, %v2753
        %v2755 = vcombine.high %v2745, %v2753
        %v2757 = vunpack.c.l.s4 1934713408
        %v2758 = vunpack.c.0.s8 %v2757
        %v2759 = vlaneseq
        %v2760 = vshrl.u32 %v2759, 7
        %v2761 = vsub.s32 %v2758, %v2760
        %v2762 = vrot.slane %v2754, %v2761
        %v2764 = vunpack.c.l.s4 1934713408
        %v2765 = vunpack.c.0.s8 %v2764
        %v2766 = vlaneseq
        %v2767 = vshrl.u32 %v2766, 7
        %v2768 = vsub.s32 %v2765, %v2767
        %v2769 = vrot.slane %v2755, %v2768
        %v2770 = vcombine.high %v2762, 0.0
        %v2771 = vcombine.high %v2769, 0.0
        %v2772 = vpack.c.bf16 %v2338, %v2338
        %v2773 = vpack.c.bf16 %v2339, %v2339
        %v2774 = vpack.c.bf16 %v2340, %v2340
        %v2775 = vpack.c.bf16 %v2341, %v2341
        %v2776 = vpack.c.bf16 %v2545, %v2518
        %v2777 = vpack.c.bf16 %v2553, %v2519
        %v2778 = vpack.c.bf16 %v2552, %v2520
        %v2779 = vpack.c.bf16 %v2554, %v2521
        %v2781 = vsel %vm1377, %v2772, 0
        %v2784 = vsel %vm1377, %v2776, 0
        %2786 = vmatprep.subr.bf16.mxu0 0
        %2787 = vmatpush1.bf16.xpose.msra.mxu0 %v2784
        %2788 = vmatprep.subr.bf16.mxu0 0
        %2789 = vmatpush1.bf16.xpose.msra.mxu0 0
        %2790 = vmatprep.subr.bf16.mxu0 0
        %2791 = vmatpush1.bf16.xpose.msra.mxu0 0
        %2792 = vmatprep.subr.bf16.mxu0 0
        %2793 = vmatpush1.bf16.xpose.msra.mxu0 0
        %2794 = vmatprep.subr.bf16.mxu0 0
        %2795 = vmatpush1.bf16.xpose.msra.mxu0 0
        %2796 = vmatprep.subr.bf16.mxu0 0
        %2797 = vmatpush1.bf16.xpose.msra.mxu0 0
        %2798 = vmatprep.subr.bf16.mxu0 0
        %2799 = vmatpush1.bf16.xpose.msra.mxu0 0
        %2800 = vmatprep.subr.bf16.mxu0 0
        %2801 = vmatpush1.bf16.xpose.msra.mxu0 0
        %2802 = vmatprep.subr.bf16.mxu0 0
        %2803 = vmatpush1.bf16.xpose.msra.mxu0 0
        %2804 = vmatprep.subr.bf16.mxu0 0
        %2805 = vmatpush1.bf16.xpose.msra.mxu0 0
        %2806 = vmatprep.subr.bf16.mxu0 0
        %2807 = vmatpush1.bf16.xpose.msra.mxu0 0
        %2808 = vmatprep.subr.bf16.mxu0 0
        %2809 = vmatpush1.bf16.xpose.msra.mxu0 0
        %2810 = vmatprep.subr.bf16.mxu0 0
        %2811 = vmatpush1.bf16.xpose.msra.mxu0 0
        %2812 = vmatprep.subr.bf16.mxu0 0
        %2813 = vmatpush1.bf16.xpose.msra.mxu0 0
        %2814 = vmatprep.subr.bf16.mxu0 0
        %2815 = vmatpush1.bf16.xpose.msra.mxu0 0
        %2816 = vmatprep.subr.bf16.mxu0 0
        %2817 = vmatpush1.bf16.xpose.msra.mxu0 0
        %2818 = vmatprep.mubr.bf16.mxu0 0
        %2819 = vmatmul.mubr.bf16.gmra.mrb[0].mxu0 %v2781
        %v2820 = vpop.f32.mrb[0].mxu0
        %v2821 = vadd.f32 0.0, %v2820
        %v2822 = vpop.f32.mrb[0].mxu0
        %v2823 = vpop.f32.mrb[0].mxu0
        %v2824 = vpop.f32.mrb[0].mxu0
        %2825 = vdwg.mxu0
        %v2827 = vsel %vm1377, %v2773, 0
        %v2830 = vsel %vm1377, %v2777, 0
        %2832 = vmatprep.subr.bf16.mxu0 0
        %2833 = vmatpush1.bf16.xpose.msra.mxu0 %v2830
        %2834 = vmatprep.subr.bf16.mxu0 0
        %2835 = vmatpush1.bf16.xpose.msra.mxu0 0
        %2836 = vmatprep.subr.bf16.mxu0 0
        %2837 = vmatpush1.bf16.xpose.msra.mxu0 0
        %2838 = vmatprep.subr.bf16.mxu0 0
        %2839 = vmatpush1.bf16.xpose.msra.mxu0 0
        %2840 = vmatprep.subr.bf16.mxu0 0
        %2841 = vmatpush1.bf16.xpose.msra.mxu0 0
        %2842 = vmatprep.subr.bf16.mxu0 0
        %2843 = vmatpush1.bf16.xpose.msra.mxu0 0
        %2844 = vmatprep.subr.bf16.mxu0 0
        %2845 = vmatpush1.bf16.xpose.msra.mxu0 0
        %2846 = vmatprep.subr.bf16.mxu0 0
        %2847 = vmatpush1.bf16.xpose.msra.mxu0 0
        %2848 = vmatprep.subr.bf16.mxu0 0
        %2849 = vmatpush1.bf16.xpose.msra.mxu0 0
        %2850 = vmatprep.subr.bf16.mxu0 0
        %2851 = vmatpush1.bf16.xpose.msra.mxu0 0
        %2852 = vmatprep.subr.bf16.mxu0 0
        %2853 = vmatpush1.bf16.xpose.msra.mxu0 0
        %2854 = vmatprep.subr.bf16.mxu0 0
        %2855 = vmatpush1.bf16.xpose.msra.mxu0 0
        %2856 = vmatprep.subr.bf16.mxu0 0
        %2857 = vmatpush1.bf16.xpose.msra.mxu0 0
        %2858 = vmatprep.subr.bf16.mxu0 0
        %2859 = vmatpush1.bf16.xpose.msra.mxu0 0
        %2860 = vmatprep.subr.bf16.mxu0 0
        %2861 = vmatpush1.bf16.xpose.msra.mxu0 0
        %2862 = vmatprep.subr.bf16.mxu0 0
        %2863 = vmatpush1.bf16.xpose.msra.mxu0 0
        %2864 = vmatprep.mubr.bf16.mxu0 0
        %2865 = vmatmul.mubr.bf16.gmra.mrb[0].mxu0 %v2827
        %v2866 = vpop.f32.mrb[0].mxu0
        %v2867 = vadd.f32 0.0, %v2866
        %v2868 = vpop.f32.mrb[0].mxu0
        %v2869 = vpop.f32.mrb[0].mxu0
        %v2870 = vpop.f32.mrb[0].mxu0
        %2871 = vdwg.mxu0
        %v2873 = vsel %vm1377, %v2774, 0
        %v2876 = vsel %vm1377, %v2778, 0
        %2878 = vmatprep.subr.bf16.mxu0 0
        %2879 = vmatpush1.bf16.xpose.msra.mxu0 %v2876
        %2880 = vmatprep.subr.bf16.mxu0 0
        %2881 = vmatpush1.bf16.xpose.msra.mxu0 0
        %2882 = vmatprep.subr.bf16.mxu0 0
        %2883 = vmatpush1.bf16.xpose.msra.mxu0 0
        %2884 = vmatprep.subr.bf16.mxu0 0
        %2885 = vmatpush1.bf16.xpose.msra.mxu0 0
        %2886 = vmatprep.subr.bf16.mxu0 0
        %2887 = vmatpush1.bf16.xpose.msra.mxu0 0
        %2888 = vmatprep.subr.bf16.mxu0 0
        %2889 = vmatpush1.bf16.xpose.msra.mxu0 0
        %2890 = vmatprep.subr.bf16.mxu0 0
        %2891 = vmatpush1.bf16.xpose.msra.mxu0 0
        %2892 = vmatprep.subr.bf16.mxu0 0
        %2893 = vmatpush1.bf16.xpose.msra.mxu0 0
        %2894 = vmatprep.subr.bf16.mxu0 0
        %2895 = vmatpush1.bf16.xpose.msra.mxu0 0
        %2896 = vmatprep.subr.bf16.mxu0 0
        %2897 = vmatpush1.bf16.xpose.msra.mxu0 0
        %2898 = vmatprep.subr.bf16.mxu0 0
        %2899 = vmatpush1.bf16.xpose.msra.mxu0 0
        %2900 = vmatprep.subr.bf16.mxu0 0
        %2901 = vmatpush1.bf16.xpose.msra.mxu0 0
        %2902 = vmatprep.subr.bf16.mxu0 0
        %2903 = vmatpush1.bf16.xpose.msra.mxu0 0
        %2904 = vmatprep.subr.bf16.mxu0 0
        %2905 = vmatpush1.bf16.xpose.msra.mxu0 0
        %2906 = vmatprep.subr.bf16.mxu0 0
        %2907 = vmatpush1.bf16.xpose.msra.mxu0 0
        %2908 = vmatprep.subr.bf16.mxu0 0
        %2909 = vmatpush1.bf16.xpose.msra.mxu0 0
        %2910 = vmatprep.mubr.bf16.mxu0 0
        %2911 = vmatmul.mubr.bf16.gmra.mrb[0].mxu0 %v2873
        %v2912 = vpop.f32.mrb[0].mxu0
        %v2913 = vadd.f32 0.0, %v2912
        %v2914 = vpop.f32.mrb[0].mxu0
        %v2915 = vpop.f32.mrb[0].mxu0
        %v2916 = vpop.f32.mrb[0].mxu0
        %2917 = vdwg.mxu0
        %v2919 = vsel %vm1377, %v2775, 0
        %v2922 = vsel %vm1377, %v2779, 0
        %2924 = vmatprep.subr.bf16.mxu0 0
        %2925 = vmatpush1.bf16.xpose.msra.mxu0 %v2922
        %2926 = vmatprep.subr.bf16.mxu0 0
        %2927 = vmatpush1.bf16.xpose.msra.mxu0 0
        %2928 = vmatprep.subr.bf16.mxu0 0
        %2929 = vmatpush1.bf16.xpose.msra.mxu0 0
        %2930 = vmatprep.subr.bf16.mxu0 0
        %2931 = vmatpush1.bf16.xpose.msra.mxu0 0
        %2932 = vmatprep.subr.bf16.mxu0 0
        %2933 = vmatpush1.bf16.xpose.msra.mxu0 0
        %2934 = vmatprep.subr.bf16.mxu0 0
        %2935 = vmatpush1.bf16.xpose.msra.mxu0 0
        %2936 = vmatprep.subr.bf16.mxu0 0
        %2937 = vmatpush1.bf16.xpose.msra.mxu0 0
        %2938 = vmatprep.subr.bf16.mxu0 0
        %2939 = vmatpush1.bf16.xpose.msra.mxu0 0
        %2940 = vmatprep.subr.bf16.mxu0 0
        %2941 = vmatpush1.bf16.xpose.msra.mxu0 0
        %2942 = vmatprep.subr.bf16.mxu0 0
        %2943 = vmatpush1.bf16.xpose.msra.mxu0 0
        %2944 = vmatprep.subr.bf16.mxu0 0
        %2945 = vmatpush1.bf16.xpose.msra.mxu0 0
        %2946 = vmatprep.subr.bf16.mxu0 0
        %2947 = vmatpush1.bf16.xpose.msra.mxu0 0
        %2948 = vmatprep.subr.bf16.mxu0 0
        %2949 = vmatpush1.bf16.xpose.msra.mxu0 0
        %2950 = vmatprep.subr.bf16.mxu0 0
        %2951 = vmatpush1.bf16.xpose.msra.mxu0 0
        %2952 = vmatprep.subr.bf16.mxu0 0
        %2953 = vmatpush1.bf16.xpose.msra.mxu0 0
        %2954 = vmatprep.subr.bf16.mxu0 0
        %2955 = vmatpush1.bf16.xpose.msra.mxu0 0
        %2956 = vmatprep.mubr.bf16.mxu0 0
        %2957 = vmatmul.mubr.bf16.gmra.mrb[0].mxu0 %v2919
        %v2958 = vpop.f32.mrb[0].mxu0
        %v2959 = vadd.f32 0.0, %v2958
        %v2960 = vpop.f32.mrb[0].mxu0
        %v2961 = vpop.f32.mrb[0].mxu0
        %v2962 = vpop.f32.mrb[0].mxu0
        %2963 = vdwg.mxu0
        %v2964 = vmul.f32 %v2821, 0.35355338
        %v2965 = vmul.f32 %v2867, 0.35355338
        %v2966 = vmul.f32 %v2913, 0.35355338
        %v2967 = vmul.f32 %v2959, 0.35355338
        %v2969 = vlaneseq
        %v2970 = vshrl.u32 %v2969, 7
        %v2971 = vsub.s32 0, %v2970
        %v2972 = vrot.slane %v2195, %v2971
        %v2974 = vadd.f32 %v2964, %v2972
        %v2975 = vadd.f32 %v2965, %v2972
        %v2976 = vadd.f32 %v2966, %v2972
        %v2977 = vadd.f32 %v2967, %v2972
        %vm2978 = vcmask 80896
        %v2979 = vsel %vm2978, %v2974, -inf
        %2980 = vmax.xlane.f32.xlu0 %v2979
        %v2981 = vpop.xlane.xlu0 %2980
        %v2982 = vsel %vm2978, %v2975, -inf
        %2983 = vmax.xlane.f32.xlu0 %v2982
        %v2984 = vpop.xlane.xlu0 %2983
        %v2985 = vsel %vm2978, %v2976, -inf
        %2986 = vmax.xlane.f32.xlu0 %v2985
        %v2987 = vpop.xlane.xlu0 %2986
        %v2988 = vsel %vm2978, %v2977, -inf
        %2989 = vmax.xlane.f32.xlu0 %v2988
        %v2990 = vpop.xlane.xlu0 %2989
        %v2991 = vsub.f32 %v2974, %v2981
        %v2992 = vsub.f32 %v2975, %v2984
        %v2993 = vsub.f32 %v2976, %v2987
        %v2994 = vsub.f32 %v2977, %v2990
        %v2995 = vmul.f32 %v2991, 1.442695
        %v2996 = vpow.pop %v2995
        %v2997 = vmul.f32 %v2992, 1.442695
        %v2998 = vpow.pop %v2997
        %v2999 = vmul.f32 %v2993, 1.442695
        %v3000 = vpow.pop %v2999
        %v3001 = vmul.f32 %v2994, 1.442695
        %v3002 = vpow.pop %v3001
        %v3003 = vsel %vm2978, %v2996, 0.0
        %3004 = vadd.xlane.f32.xlu0 %v3003
        %v3005 = vpop.xlane.xlu0 %3004
        %v3006 = vsel %vm2978, %v2998, 0.0
        %3007 = vadd.xlane.f32.xlu0 %v3006
        %v3008 = vpop.xlane.xlu0 %3007
        %v3009 = vsel %vm2978, %v3000, 0.0
        %3010 = vadd.xlane.f32.xlu0 %v3009
        %v3011 = vpop.xlane.xlu0 %3010
        %v3012 = vsel %vm2978, %v3002, 0.0
        %3013 = vadd.xlane.f32.xlu0 %v3012
        %v3014 = vpop.xlane.xlu0 %3013
        %v3015 = vrcp.pop %v3005
        %v3016 = vmul.f32 %v2996, %v3015
        %v3017 = vrcp.pop %v3008
        %v3018 = vmul.f32 %v2998, %v3017
        %v3019 = vrcp.pop %v3011
        %v3020 = vmul.f32 %v3000, %v3019
        %v3021 = vrcp.pop %v3014
        %v3022 = vmul.f32 %v3002, %v3021
        %v3023 = vpack.c.bf16 %v3016, %v3016
        %v3024 = vpack.c.bf16 %v3018, %v3018
        %v3025 = vpack.c.bf16 %v3020, %v3020
        %v3026 = vpack.c.bf16 %v3022, %v3022
        %v3027 = vpack.c.bf16 %v2762, %v2735
        %v3028 = vpack.c.bf16 %v2770, %v2736
        %v3029 = vpack.c.bf16 %v2769, %v2737
        %v3030 = vpack.c.bf16 %v2771, %v2738
        %v3032 = vsel %vm2978, %v3023, 0
        %vm3034 = vcmask 1044480
        %v3036 = vsel %vm3034, %v3027, 0
        %3038 = vmatprep.subr.bf16.mxu0 0
        %3039 = vmatpush1.bf16.msra.mxu0 %v3036
        %3040 = vmatprep.subr.bf16.mxu0 0
        %3041 = vmatpush1.bf16.msra.mxu0 0
        %3042 = vmatprep.subr.bf16.mxu0 0
        %3043 = vmatpush1.bf16.msra.mxu0 0
        %3044 = vmatprep.subr.bf16.mxu0 0
        %3045 = vmatpush1.bf16.msra.mxu0 0
        %3046 = vmatprep.subr.bf16.mxu0 0
        %3047 = vmatpush1.bf16.msra.mxu0 0
        %3048 = vmatprep.subr.bf16.mxu0 0
        %3049 = vmatpush1.bf16.msra.mxu0 0
        %3050 = vmatprep.subr.bf16.mxu0 0
        %3051 = vmatpush1.bf16.msra.mxu0 0
        %3052 = vmatprep.subr.bf16.mxu0 0
        %3053 = vmatpush1.bf16.msra.mxu0 0
        %3054 = vmatprep.subr.bf16.mxu0 0
        %3055 = vmatpush1.bf16.msra.mxu0 0
        %3056 = vmatprep.subr.bf16.mxu0 0
        %3057 = vmatpush1.bf16.msra.mxu0 0
        %3058 = vmatprep.subr.bf16.mxu0 0
        %3059 = vmatpush1.bf16.msra.mxu0 0
        %3060 = vmatprep.subr.bf16.mxu0 0
        %3061 = vmatpush1.bf16.msra.mxu0 0
        %3062 = vmatprep.subr.bf16.mxu0 0
        %3063 = vmatpush1.bf16.msra.mxu0 0
        %3064 = vmatprep.subr.bf16.mxu0 0
        %3065 = vmatpush1.bf16.msra.mxu0 0
        %3066 = vmatprep.subr.bf16.mxu0 0
        %3067 = vmatpush1.bf16.msra.mxu0 0
        %3068 = vmatprep.subr.bf16.mxu0 0
        %3069 = vmatpush1.bf16.msra.mxu0 0
        %3070 = vmatprep.mubr.bf16.mxu0 0
        %3071 = vmatmul.mubr.bf16.gmra.mrb[0].mxu0 %v3032
        %v3072 = vpop.f32.mrb[0].mxu0
        %v3073 = vadd.f32 0.0, %v3072
        %v3074 = vpop.f32.mrb[0].mxu0
        %v3075 = vpop.f32.mrb[0].mxu0
        %v3076 = vpop.f32.mrb[0].mxu0
        %3077 = vdwg.mxu0
        %v3079 = vsel %vm2978, %v3024, 0
        %v3082 = vsel %vm3034, %v3028, 0
        %3084 = vmatprep.subr.bf16.mxu0 0
        %3085 = vmatpush1.bf16.msra.mxu0 %v3082
        %3086 = vmatprep.subr.bf16.mxu0 0
        %3087 = vmatpush1.bf16.msra.mxu0 0
        %3088 = vmatprep.subr.bf16.mxu0 0
        %3089 = vmatpush1.bf16.msra.mxu0 0
        %3090 = vmatprep.subr.bf16.mxu0 0
        %3091 = vmatpush1.bf16.msra.mxu0 0
        %3092 = vmatprep.subr.bf16.mxu0 0
        %3093 = vmatpush1.bf16.msra.mxu0 0
        %3094 = vmatprep.subr.bf16.mxu0 0
        %3095 = vmatpush1.bf16.msra.mxu0 0
        %3096 = vmatprep.subr.bf16.mxu0 0
        %3097 = vmatpush1.bf16.msra.mxu0 0
        %3098 = vmatprep.subr.bf16.mxu0 0
        %3099 = vmatpush1.bf16.msra.mxu0 0
        %3100 = vmatprep.subr.bf16.mxu0 0
        %3101 = vmatpush1.bf16.msra.mxu0 0
        %3102 = vmatprep.subr.bf16.mxu0 0
        %3103 = vmatpush1.bf16.msra.mxu0 0
        %3104 = vmatprep.subr.bf16.mxu0 0
        %3105 = vmatpush1.bf16.msra.mxu0 0
        %3106 = vmatprep.subr.bf16.mxu0 0
        %3107 = vmatpush1.bf16.msra.mxu0 0
        %3108 = vmatprep.subr.bf16.mxu0 0
        %3109 = vmatpush1.bf16.msra.mxu0 0
        %3110 = vmatprep.subr.bf16.mxu0 0
        %3111 = vmatpush1.bf16.msra.mxu0 0
        %3112 = vmatprep.subr.bf16.mxu0 0
        %3113 = vmatpush1.bf16.msra.mxu0 0
        %3114 = vmatprep.subr.bf16.mxu0 0
        %3115 = vmatpush1.bf16.msra.mxu0 0
        %3116 = vmatprep.mubr.bf16.mxu0 0
        %3117 = vmatmul.mubr.bf16.gmra.mrb[0].mxu0 %v3079
        %v3118 = vpop.f32.mrb[0].mxu0
        %v3119 = vadd.f32 0.0, %v3118
        %v3120 = vpop.f32.mrb[0].mxu0
        %v3121 = vpop.f32.mrb[0].mxu0
        %v3122 = vpop.f32.mrb[0].mxu0
        %3123 = vdwg.mxu0
        %v3125 = vsel %vm2978, %v3025, 0
        %v3128 = vsel %vm3034, %v3029, 0
        %3130 = vmatprep.subr.bf16.mxu0 0
        %3131 = vmatpush1.bf16.msra.mxu0 %v3128
        %3132 = vmatprep.subr.bf16.mxu0 0
        %3133 = vmatpush1.bf16.msra.mxu0 0
        %3134 = vmatprep.subr.bf16.mxu0 0
        %3135 = vmatpush1.bf16.msra.mxu0 0
        %3136 = vmatprep.subr.bf16.mxu0 0
        %3137 = vmatpush1.bf16.msra.mxu0 0
        %3138 = vmatprep.subr.bf16.mxu0 0
        %3139 = vmatpush1.bf16.msra.mxu0 0
        %3140 = vmatprep.subr.bf16.mxu0 0
        %3141 = vmatpush1.bf16.msra.mxu0 0
        %3142 = vmatprep.subr.bf16.mxu0 0
        %3143 = vmatpush1.bf16.msra.mxu0 0
        %3144 = vmatprep.subr.bf16.mxu0 0
        %3145 = vmatpush1.bf16.msra.mxu0 0
        %3146 = vmatprep.subr.bf16.mxu0 0
        %3147 = vmatpush1.bf16.msra.mxu0 0
        %3148 = vmatprep.subr.bf16.mxu0 0
        %3149 = vmatpush1.bf16.msra.mxu0 0
        %3150 = vmatprep.subr.bf16.mxu0 0
        %3151 = vmatpush1.bf16.msra.mxu0 0
        %3152 = vmatprep.subr.bf16.mxu0 0
        %3153 = vmatpush1.bf16.msra.mxu0 0
        %3154 = vmatprep.subr.bf16.mxu0 0
        %3155 = vmatpush1.bf16.msra.mxu0 0
        %3156 = vmatprep.subr.bf16.mxu0 0
        %3157 = vmatpush1.bf16.msra.mxu0 0
        %3158 = vmatprep.subr.bf16.mxu0 0
        %3159 = vmatpush1.bf16.msra.mxu0 0
        %3160 = vmatprep.subr.bf16.mxu0 0
        %3161 = vmatpush1.bf16.msra.mxu0 0
        %3162 = vmatprep.mubr.bf16.mxu0 0
        %3163 = vmatmul.mubr.bf16.gmra.mrb[0].mxu0 %v3125
        %v3164 = vpop.f32.mrb[0].mxu0
        %v3165 = vadd.f32 0.0, %v3164
        %v3166 = vpop.f32.mrb[0].mxu0
        %v3167 = vpop.f32.mrb[0].mxu0
        %v3168 = vpop.f32.mrb[0].mxu0
        %3169 = vdwg.mxu0
        %v3171 = vsel %vm2978, %v3026, 0
        %v3174 = vsel %vm3034, %v3030, 0
        %3176 = vmatprep.subr.bf16.mxu0 0
        %3177 = vmatpush1.bf16.msra.mxu0 %v3174
        %3178 = vmatprep.subr.bf16.mxu0 0
        %3179 = vmatpush1.bf16.msra.mxu0 0
        %3180 = vmatprep.subr.bf16.mxu0 0
        %3181 = vmatpush1.bf16.msra.mxu0 0
        %3182 = vmatprep.subr.bf16.mxu0 0
        %3183 = vmatpush1.bf16.msra.mxu0 0
        %3184 = vmatprep.subr.bf16.mxu0 0
        %3185 = vmatpush1.bf16.msra.mxu0 0
        %3186 = vmatprep.subr.bf16.mxu0 0
        %3187 = vmatpush1.bf16.msra.mxu0 0
        %3188 = vmatprep.subr.bf16.mxu0 0
        %3189 = vmatpush1.bf16.msra.mxu0 0
        %3190 = vmatprep.subr.bf16.mxu0 0
        %3191 = vmatpush1.bf16.msra.mxu0 0
        %3192 = vmatprep.subr.bf16.mxu0 0
        %3193 = vmatpush1.bf16.msra.mxu0 0
        %3194 = vmatprep.subr.bf16.mxu0 0
        %3195 = vmatpush1.bf16.msra.mxu0 0
        %3196 = vmatprep.subr.bf16.mxu0 0
        %3197 = vmatpush1.bf16.msra.mxu0 0
        %3198 = vmatprep.subr.bf16.mxu0 0
        %3199 = vmatpush1.bf16.msra.mxu0 0
        %3200 = vmatprep.subr.bf16.mxu0 0
        %3201 = vmatpush1.bf16.msra.mxu0 0
        %3202 = vmatprep.subr.bf16.mxu0 0
        %3203 = vmatpush1.bf16.msra.mxu0 0
        %3204 = vmatprep.subr.bf16.mxu0 0
        %3205 = vmatpush1.bf16.msra.mxu0 0
        %3206 = vmatprep.subr.bf16.mxu0 0
        %3207 = vmatpush1.bf16.msra.mxu0 0
        %3208 = vmatprep.mubr.bf16.mxu0 0
        %3209 = vmatmul.mubr.bf16.gmra.mrb[0].mxu0 %v3171
        %v3210 = vpop.f32.mrb[0].mxu0
        %v3211 = vadd.f32 0.0, %v3210
        %v3212 = vpop.f32.mrb[0].mxu0
        %v3213 = vpop.f32.mrb[0].mxu0
        %v3214 = vpop.f32.mrb[0].mxu0
        %3215 = vdwg.mxu0
        %v3216 = vcombine.low %v3073, %v3165
        %v3217 = vcombine.high %v3073, %v3165
        %v3219 = vunpack.c.l.s4 1983009808
        %v3220 = vunpack.c.0.s8 %v3219
        %v3221 = vlaneseq
        %v3222 = vshrl.u32 %v3221, 7
        %v3223 = vsub.s32 %v3220, %v3222
        %v3224 = vrot.slane %v3216, %v3223
        %v3226 = vunpack.c.l.s4 1983009808
        %v3227 = vunpack.c.0.s8 %v3226
        %v3228 = vlaneseq
        %v3229 = vshrl.u32 %v3228, 7
        %v3230 = vsub.s32 %v3227, %v3229
        %v3231 = vrot.slane %v3217, %v3230
        %v3232 = vcombine.low %v3119, %v3211
        %v3233 = vcombine.high %v3119, %v3211
        %v3235 = vunpack.c.l.s4 1983009808
        %v3236 = vunpack.c.0.s8 %v3235
        %v3237 = vlaneseq
        %v3238 = vshrl.u32 %v3237, 7
        %v3239 = vsub.s32 %v3236, %v3238
        %v3240 = vrot.slane %v3232, %v3239
        %v3242 = vunpack.c.l.s4 1983009808
        %v3243 = vunpack.c.0.s8 %v3242
        %v3244 = vlaneseq
        %v3245 = vshrl.u32 %v3244, 7
        %v3246 = vsub.s32 %v3243, %v3245
        %v3247 = vrot.slane %v3233, %v3246
        %v3248 = vcombine.low %v3224, %v3240
        %v3249 = vcombine.high %v3224, %v3240
        %v3251 = vunpack.c.l.s4 1934713408
        %v3252 = vunpack.c.0.s8 %v3251
        %v3253 = vlaneseq
        %v3254 = vshrl.u32 %v3253, 7
        %v3255 = vsub.s32 %v3252, %v3254
        %v3256 = vrot.slane %v3248, %v3255
        %v3258 = vunpack.c.l.s4 1934713408
        %v3259 = vunpack.c.0.s8 %v3258
        %v3260 = vlaneseq
        %v3261 = vshrl.u32 %v3260, 7
        %v3262 = vsub.s32 %v3259, %v3261
        %v3263 = vrot.slane %v3249, %v3262
        %v3264 = vcombine.low %v3231, %v3247
        %v3265 = vcombine.high %v3231, %v3247
        %v3267 = vunpack.c.l.s4 1934713408
        %v3268 = vunpack.c.0.s8 %v3267
        %v3269 = vlaneseq
        %v3270 = vshrl.u32 %v3269, 7
        %v3271 = vsub.s32 %v3268, %v3270
        %v3272 = vrot.slane %v3264, %v3271
        %v3274 = vunpack.c.l.s4 1934713408
        %v3275 = vunpack.c.0.s8 %v3274
        %v3276 = vlaneseq
        %v3277 = vshrl.u32 %v3276, 7
        %v3278 = vsub.s32 %v3275, %v3277
        %v3279 = vrot.slane %v3265, %v3278
        %v3280 = vcombine.high %v3256, 0.0
        %v3281 = vcombine.high %v3263, 0.0
        %v3282 = vcombine.high %v3272, 0.0
        %v3283 = vcombine.high %v3279, 0.0
        %v3284 = vcombine.low %v3256, %v3263
        %v3286 = vunpack.c.l.s4 1983009808
        %v3287 = vunpack.c.0.s8 %v3286
        %v3288 = vlaneseq
        %v3289 = vshrl.u32 %v3288, 7
        %v3290 = vsub.s32 %v3287, %v3289
        %v3291 = vrot.slane %v3284, %v3290
        %v3292 = vcombine.low %v3280, %v3281
        %v3294 = vunpack.c.l.s4 1983009808
        %v3295 = vunpack.c.0.s8 %v3294
        %v3296 = vlaneseq
        %v3297 = vshrl.u32 %v3296, 7
        %v3298 = vsub.s32 %v3295, %v3297
        %v3299 = vrot.slane %v3292, %v3298
        %v3300 = vcombine.low %v3272, %v3279
        %v3302 = vunpack.c.l.s4 1983009808
        %v3303 = vunpack.c.0.s8 %v3302
        %v3304 = vlaneseq
        %v3305 = vshrl.u32 %v3304, 7
        %v3306 = vsub.s32 %v3303, %v3305
        %v3307 = vrot.slane %v3300, %v3306
        %v3308 = vcombine.low %v3282, %v3283
        %v3310 = vunpack.c.l.s4 1983009808
        %v3311 = vunpack.c.0.s8 %v3310
        %v3312 = vlaneseq
        %v3313 = vshrl.u32 %v3312, 7
        %v3314 = vsub.s32 %v3311, %v3313
        %v3315 = vrot.slane %v3308, %v3314
        %v3316 = vcombine.low %v3291, %v3299
        %v3317 = vcombine.high %v3291, %v3299
        %v3319 = vunpack.c.l.s4 1934713408
        %v3320 = vunpack.c.0.s8 %v3319
        %v3321 = vlaneseq
        %v3322 = vshrl.u32 %v3321, 7
        %v3323 = vsub.s32 %v3320, %v3322
        %v3324 = vrot.slane %v3316, %v3323
        %v3326 = vunpack.c.l.s4 1934713408
        %v3327 = vunpack.c.0.s8 %v3326
        %v3328 = vlaneseq
        %v3329 = vshrl.u32 %v3328, 7
        %v3330 = vsub.s32 %v3327, %v3329
        %v3331 = vrot.slane %v3317, %v3330
        %v3332 = vcombine.low %v3307, %v3315
        %v3333 = vcombine.high %v3307, %v3315
        %v3335 = vunpack.c.l.s4 1934713408
        %v3336 = vunpack.c.0.s8 %v3335
        %v3337 = vlaneseq
        %v3338 = vshrl.u32 %v3337, 7
        %v3339 = vsub.s32 %v3336, %v3338
        %v3340 = vrot.slane %v3332, %v3339
        %v3342 = vunpack.c.l.s4 1934713408
        %v3343 = vunpack.c.0.s8 %v3342
        %v3344 = vlaneseq
        %v3345 = vshrl.u32 %v3344, 7
        %v3346 = vsub.s32 %v3343, %v3345
        %v3347 = vrot.slane %v3333, %v3346
        %v3348 = vcombine.low %v3324, %v3340
        %v3349 = vcombine.high %v3324, %v3340
        %v3350 = vcombine.low %v3331, %v3347
        %v3351 = vcombine.high %v3331, %v3347
        %3353 = vrot.lane.b32.xlu0 %v3349, 8
        %v3354 = vpop.permute.xlu0 %3353
        %3357 = vrot.lane.b32.xlu0 %v3350, 16
        %v3358 = vpop.permute.xlu0 %3357
        %3361 = vrot.lane.b32.xlu0 %v3351, 24
        %v3362 = vpop.permute.xlu0 %3361
        %v3364 = vsel %vm1377, %v3348, %v3354
        %v3365 = vsel %vm1956, %v3364, %v3358
        %v3366 = vsel %vm1958, %v3365, %v3362
        %3367 = vst.msk [vmem:[%s843] sm:$0xff] %vm2978, %v3016
        %3368 = vst.msk [vmem:[%s843 + $0x8] sm:$0xff] %vm2978, %v3018
        %3369 = vst.msk [vmem:[%s843 + $0x10] sm:$0xff] %vm2978, %v3020
        %3370 = vst.msk [vmem:[%s843 + $0x18] sm:$0xff] %vm2978, %v3022
        %v3371 = vld [vmem:[%s14] sm:$0xf]
        %v3372 = vld [vmem:[%s14 + $0x4] sm:$0xf]
        %v3373 = vld [vmem:[%s14 + $0x8] sm:$0xf]
        %v3374 = vld [vmem:[%s14 + $0xc] sm:$0xf]
        %v3375 = vpack.c.bf16 %v3366, %v3366
        %v3376 = vld [vmem:[%s15] sm:$0x1]
        %v3378 = vlaneseq
        %v3379 = vshrl.u32 %v3378, 7
        %v3380 = vsub.s32 0, %v3379
        %v3381 = vrot.slane %v3376, %v3380
        %v3387 = vunpack.c.l.b16 %v3371
        %v3388 = vunpack.c.l.b16 %v3372
        %v3389 = vunpack.c.l.b16 %v3373
        %v3390 = vunpack.c.l.b16 %v3374
        %v3391 = vpack.c.b16 %v3388, %v3387
        %v3392 = vpack.c.b16 %v3390, %v3389
        %v3396 = vsel %vm882, %v3375, 0
        %3398 = vmatprep.subr.bf16.mxu0 0
        %3399 = vmatpush1.bf16.msra.mxu0 %v3391
        %3400 = vmatprep.subr.bf16.mxu0 0
        %3401 = vmatpush1.bf16.msra.mxu0 %v3392
        %3402 = vmatprep.subr.bf16.mxu0 0
        %3403 = vmatpush1.bf16.msra.mxu0 0
        %3404 = vmatprep.subr.bf16.mxu0 0
        %3405 = vmatpush1.bf16.msra.mxu0 0
        %3406 = vmatprep.subr.bf16.mxu0 0
        %3407 = vmatpush1.bf16.msra.mxu0 0
        %3408 = vmatprep.subr.bf16.mxu0 0
        %3409 = vmatpush1.bf16.msra.mxu0 0
        %3410 = vmatprep.subr.bf16.mxu0 0
        %3411 = vmatpush1.bf16.msra.mxu0 0
        %3412 = vmatprep.subr.bf16.mxu0 0
        %3413 = vmatpush1.bf16.msra.mxu0 0
        %3414 = vmatprep.subr.bf16.mxu0 0
        %3415 = vmatpush1.bf16.msra.mxu0 0
        %3416 = vmatprep.subr.bf16.mxu0 0
        %3417 = vmatpush1.bf16.msra.mxu0 0
        %3418 = vmatprep.subr.bf16.mxu0 0
        %3419 = vmatpush1.bf16.msra.mxu0 0
        %3420 = vmatprep.subr.bf16.mxu0 0
        %3421 = vmatpush1.bf16.msra.mxu0 0
        %3422 = vmatprep.subr.bf16.mxu0 0
        %3423 = vmatpush1.bf16.msra.mxu0 0
        %3424 = vmatprep.subr.bf16.mxu0 0
        %3425 = vmatpush1.bf16.msra.mxu0 0
        %3426 = vmatprep.subr.bf16.mxu0 0
        %3427 = vmatpush1.bf16.msra.mxu0 0
        %3428 = vmatprep.subr.bf16.mxu0 0
        %3429 = vmatpush1.bf16.msra.mxu0 0
        %3430 = vmatprep.mubr.bf16.mxu0 0
        %3431 = vmatmul.mubr.bf16.gmra.mrb[0].mxu0 %v3396
        %v3432 = vpop.f32.mrb[0].mxu0
        %v3433 = vadd.f32 %v3381, %v3432
        %v3434 = vpop.f32.mrb[0].mxu0
        %v3435 = vpop.f32.mrb[0].mxu0
        %v3436 = vpop.f32.mrb[0].mxu0
        %3437 = vdwg.mxu0
        %v3438 = vadd.f32 %v2057, %v3433
        %v3439 = vld [vmem:[%s16] sm:$0x1]
        %v3440 = vld [vmem:[%s17] sm:$0x1]
        %v3441 = vsel %vm882, %v3438, 0.0
        %3442 = vadd.xlane.f32.xlu0 %v3441
        %v3443 = vpop.xlane.xlu0 %3442
        %v3444 = vmul.f32 %v3443, %v2033
        %v3445 = vsub.f32 %v3438, %v3444
        %v3446 = vmul.f32 %v3445, %v3445
        %v3447 = vsel %vm882, %v3446, 0.0
        %3448 = vadd.xlane.f32.xlu0 %v3447
        %v3449 = vpop.xlane.xlu0 %3448
        %v3450 = vmul.f32 %v3449, %v2033
        %v3451 = vadd.f32 %v3450, 1e-05
        %v3452 = vrsqrt.pop %v3451
        %v3453 = vmul.f32 %v3445, %v3452
        %v3455 = vlaneseq
        %v3456 = vshrl.u32 %v3455, 7
        %v3457 = vsub.s32 0, %v3456
        %v3458 = vrot.slane %v3439, %v3457
        %v3460 = vmul.f32 %v3453, %v3458
        %v3462 = vlaneseq
        %v3463 = vshrl.u32 %v3462, 7
        %v3464 = vsub.s32 0, %v3463
        %v3465 = vrot.slane %v3440, %v3464
        %v3467 = vadd.f32 %v3460, %v3465
        %v3468 = vld [vmem:[%s18] sm:$0xf]
        %v3469 = vld [vmem:[%s18 + $0x4] sm:$0xf]
        %v3470 = vld [vmem:[%s18 + $0x8] sm:$0xf]
        %v3471 = vld [vmem:[%s18 + $0xc] sm:$0xf]
        %v3472 = vpack.c.bf16 %v3467, %v3467
        %v3473 = vld [vmem:[%s19] sm:$0x1]
        %v3475 = vlaneseq
        %v3476 = vshrl.u32 %v3475, 7
        %v3477 = vsub.s32 0, %v3476
        %v3478 = vrot.slane %v3473, %v3477
        %v3484 = vunpack.c.l.b16 %v3468
        %v3485 = vunpack.c.l.b16 %v3469
        %v3486 = vunpack.c.l.b16 %v3470
        %v3487 = vunpack.c.l.b16 %v3471
        %v3488 = vpack.c.b16 %v3485, %v3484
        %v3489 = vpack.c.b16 %v3487, %v3486
        %v3493 = vsel %vm882, %v3472, 0
        %3495 = vmatprep.subr.bf16.mxu0 0
        %3496 = vmatpush1.bf16.msra.mxu0 %v3488
        %3497 = vmatprep.subr.bf16.mxu0 0
        %3498 = vmatpush1.bf16.msra.mxu0 %v3489
        %3499 = vmatprep.subr.bf16.mxu0 0
        %3500 = vmatpush1.bf16.msra.mxu0 0
        %3501 = vmatprep.subr.bf16.mxu0 0
        %3502 = vmatpush1.bf16.msra.mxu0 0
        %3503 = vmatprep.subr.bf16.mxu0 0
        %3504 = vmatpush1.bf16.msra.mxu0 0
        %3505 = vmatprep.subr.bf16.mxu0 0
        %3506 = vmatpush1.bf16.msra.mxu0 0
        %3507 = vmatprep.subr.bf16.mxu0 0
        %3508 = vmatpush1.bf16.msra.mxu0 0
        %3509 = vmatprep.subr.bf16.mxu0 0
        %3510 = vmatpush1.bf16.msra.mxu0 0
        %3511 = vmatprep.subr.bf16.mxu0 0
        %3512 = vmatpush1.bf16.msra.mxu0 0
        %3513 = vmatprep.subr.bf16.mxu0 0
        %3514 = vmatpush1.bf16.msra.mxu0 0
        %3515 = vmatprep.subr.bf16.mxu0 0
        %3516 = vmatpush1.bf16.msra.mxu0 0
        %3517 = vmatprep.subr.bf16.mxu0 0
        %3518 = vmatpush1.bf16.msra.mxu0 0
        %3519 = vmatprep.subr.bf16.mxu0 0
        %3520 = vmatpush1.bf16.msra.mxu0 0
        %3521 = vmatprep.subr.bf16.mxu0 0
        %3522 = vmatpush1.bf16.msra.mxu0 0
        %3523 = vmatprep.subr.bf16.mxu0 0
        %3524 = vmatpush1.bf16.msra.mxu0 0
        %3525 = vmatprep.subr.bf16.mxu0 0
        %3526 = vmatpush1.bf16.msra.mxu0 0
        %3527 = vmatprep.mubr.bf16.mxu0 0
        %3528 = vmatmul.mubr.bf16.gmra.mrb[0].mxu0 %v3493
        %v3529 = vpop.f32.mrb[0].mxu0
        %v3530 = vadd.f32 %v3478, %v3529
        %v3531 = vpop.f32.mrb[0].mxu0
        %v3532 = vpop.f32.mrb[0].mxu0
        %v3533 = vpop.f32.mrb[0].mxu0
        %3534 = vdwg.mxu0
        %v3535 = vmax.f32 %v3530, 0.0
        %v3536 = vld [vmem:[%s20] sm:$0xf]
        %v3537 = vld [vmem:[%s20 + $0x4] sm:$0xf]
        %v3538 = vld [vmem:[%s20 + $0x8] sm:$0xf]
        %v3539 = vld [vmem:[%s20 + $0xc] sm:$0xf]
        %v3540 = vld [vmem:[%s20 + $0x10] sm:$0xf]
        %v3541 = vld [vmem:[%s20 + $0x14] sm:$0xf]
        %v3542 = vld [vmem:[%s20 + $0x18] sm:$0xf]
        %v3543 = vld [vmem:[%s20 + $0x1c] sm:$0xf]
        %v3544 = vpack.c.bf16 %v3535, %v3535
        %v3545 = vld [vmem:[%s21] sm:$0x1]
        %v3547 = vlaneseq
        %v3548 = vshrl.u32 %v3547, 7
        %v3549 = vsub.s32 0, %v3548
        %v3550 = vrot.slane %v3545, %v3549
        %v3560 = vunpack.c.l.b16 %v3536
        %v3561 = vunpack.c.l.b16 %v3537
        %v3562 = vunpack.c.l.b16 %v3538
        %v3563 = vunpack.c.l.b16 %v3539
        %v3564 = vunpack.c.l.b16 %v3540
        %v3565 = vunpack.c.l.b16 %v3541
        %v3566 = vunpack.c.l.b16 %v3542
        %v3567 = vunpack.c.l.b16 %v3543
        %v3568 = vpack.c.b16 %v3561, %v3560
        %v3569 = vpack.c.b16 %v3563, %v3562
        %v3570 = vpack.c.b16 %v3565, %v3564
        %v3571 = vpack.c.b16 %v3567, %v3566
        %vm3576 = vcmask 523264
        %v3578 = vsel %vm3576, %v3544, 0
        %3580 = vmatprep.subr.bf16.mxu0 0
        %3581 = vmatpush1.bf16.msra.mxu0 %v3568
        %3582 = vmatprep.subr.bf16.mxu0 0
        %3583 = vmatpush1.bf16.msra.mxu0 %v3569
        %3584 = vmatprep.subr.bf16.mxu0 0
        %3585 = vmatpush1.bf16.msra.mxu0 %v3570
        %3586 = vmatprep.subr.bf16.mxu0 0
        %3587 = vmatpush1.bf16.msra.mxu0 %v3571
        %3588 = vmatprep.subr.bf16.mxu0 0
        %3589 = vmatpush1.bf16.msra.mxu0 0
        %3590 = vmatprep.subr.bf16.mxu0 0
        %3591 = vmatpush1.bf16.msra.mxu0 0
        %3592 = vmatprep.subr.bf16.mxu0 0
        %3593 = vmatpush1.bf16.msra.mxu0 0
        %3594 = vmatprep.subr.bf16.mxu0 0
        %3595 = vmatpush1.bf16.msra.mxu0 0
        %3596 = vmatprep.subr.bf16.mxu0 0
        %3597 = vmatpush1.bf16.msra.mxu0 0
        %3598 = vmatprep.subr.bf16.mxu0 0
        %3599 = vmatpush1.bf16.msra.mxu0 0
        %3600 = vmatprep.subr.bf16.mxu0 0
        %3601 = vmatpush1.bf16.msra.mxu0 0
        %3602 = vmatprep.subr.bf16.mxu0 0
        %3603 = vmatpush1.bf16.msra.mxu0 0
        %3604 = vmatprep.subr.bf16.mxu0 0
        %3605 = vmatpush1.bf16.msra.mxu0 0
        %3606 = vmatprep.subr.bf16.mxu0 0
        %3607 = vmatpush1.bf16.msra.mxu0 0
        %3608 = vmatprep.subr.bf16.mxu0 0
        %3609 = vmatpush1.bf16.msra.mxu0 0
        %3610 = vmatprep.subr.bf16.mxu0 0
        %3611 = vmatpush1.bf16.msra.mxu0 0
        %3612 = vmatprep.mubr.bf16.mxu0 0
        %3613 = vmatmul.mubr.bf16.gmra.mrb[0].mxu0 %v3578
        %v3614 = vpop.f32.mrb[0].mxu0
        %v3615 = vadd.f32 %v3550, %v3614
        %v3616 = vpop.f32.mrb[0].mxu0
        %v3617 = vpop.f32.mrb[0].mxu0
        %v3618 = vpop.f32.mrb[0].mxu0
        %3619 = vdwg.mxu0
        %v3620 = vadd.f32 %v3467, %v3615
        %v3621 = vld [vmem:[%s22] sm:$0x1]
        %v3622 = vld [vmem:[%s23] sm:$0x1]
        %v3623 = vsel %vm882, %v3620, 0.0
        %3624 = vadd.xlane.f32.xlu0 %v3623
        %v3625 = vpop.xlane.xlu0 %3624
        %v3626 = vmul.f32 %v3625, %v2033
        %v3627 = vsub.f32 %v3620, %v3626
        %v3628 = vmul.f32 %v3627, %v3627
        %v3629 = vsel %vm882, %v3628, 0.0
        %3630 = vadd.xlane.f32.xlu0 %v3629
        %v3631 = vpop.xlane.xlu0 %3630
        %v3632 = vmul.f32 %v3631, %v2033
        %v3633 = vadd.f32 %v3632, 1e-05
        %v3634 = vrsqrt.pop %v3633
        %v3635 = vmul.f32 %v3627, %v3634
        %v3637 = vlaneseq
        %v3638 = vshrl.u32 %v3637, 7
        %v3639 = vsub.s32 0, %v3638
        %v3640 = vrot.slane %v3621, %v3639
        %v3642 = vmul.f32 %v3635, %v3640
        %v3644 = vlaneseq
        %v3645 = vshrl.u32 %v3644, 7
        %v3646 = vsub.s32 0, %v3645
        %v3647 = vrot.slane %v3622, %v3646
        %v3649 = vadd.f32 %v3642, %v3647
        %3650 = vst.msk [vmem:[%s836] sm:$0xff] %vm882, %v3649
        %s3651 = sand.u32 %s573, 1
        %s3652 = scalar_lea.sflag [#allocation4], %s3651
        %s3653 = sand.u32 %s573, 1
        %s3654 = smul.addr %s3653, 8
        %s3655 = scalar_lea.vmem [#allocation10], %s3654
        %s3656 = sand.u32 %s599, 1
        %s3657 = scalar_lea.sflag [#allocation12], %s3656
        %s3658 = sand.u32 %s599, 1
        %s3659 = smul.addr %s3658, 32
        %s3660 = scalar_lea.vmem [#allocation11], %s3659
        // Predicated region
        $region133: #{tpu_custom_call.1} parent=115 // pred_check
          %p3661 = pneg %p583
        $region134: #{tpu_custom_call.1} parent=115 // pred_check_branch
          %3663 = sbr.rel (%p3661) target = $region136
        $region135: #{tpu_custom_call.1} parent=115 // pred_region
          %s3665 = ssub.s32 128, 128
          %3666 = vsyncadd %s3652, %s3665
          %s3667 = smul.addr %s46, 128
          %s3668 = scalar_lea.hbm %s24, %s3667
          %s3670 = sshll.u32 %s3655, 4
          %s3671 = int_to_ptr.vmem [resolvable:$true] %s3670
          %3673 = dma.vmem_to_hbm [thread:$0]  %s3671, 128, %s3668, %s3652
        $region136: #{tpu_custom_call.1} parent=115 // pred_fallthru
          _
        // Predicated region
        $region137: #{tpu_custom_call.1} parent=115 // pred_check
          %p3674 = pneg %p609
        $region138: #{tpu_custom_call.1} parent=115 // pred_check_branch
          %3676 = sbr.rel (%p3674) target = $region140
        $region139: #{tpu_custom_call.1} parent=115 // pred_region
          %s3678 = ssub.s32 512, 512
          %3679 = vsyncadd %s3657, %s3678
          %s3680 = smul.addr %s46, 4
          %s3681 = smul.addr %s3680, 128
          %s3682 = scalar_lea.hbm %s25, %s3681
          %s3683 = sshll.u32 %s3660, 4
          %s3684 = int_to_ptr.vmem [resolvable:$true] %s3683
          %3689 = dma.vmem_to_hbm [thread:$0]  %s3684, 512, %s3682, %s3657, 128, 128, 8
        $region140: #{tpu_custom_call.1} parent=115 // pred_fallthru
          _
      $region116: #{tpu_custom_call.1} parent=5 // pred_fallthru
        _
      %p3690 = scmp.le.s32.totalorder 2, %s41
      // Predicated region
      $region141: #{tpu_custom_call.1} parent=5 // pred_check
        %p3691 = pneg %p3690
      $region142: #{tpu_custom_call.1} parent=5 // pred_check_branch
        %3693 = sbr.rel (%p3691) target = $region144
      $region143: #{tpu_custom_call.1} parent=5 // pred_region
        %s3694 = ssub.s32 %s41, 2
        // Predicated region
        $region145: #{tpu_custom_call.1} parent=143 // pred_check
          %p3695 = pneg %p589
        $region146: #{tpu_custom_call.1} parent=143 // pred_check_branch
          %3697 = sbr.rel (%p3695) target = $region148
        $region147: #{tpu_custom_call.1} parent=143 // pred_region
          %s3698 = sand.u32 %s574, 1
          %s3699 = scalar_lea.sflag [#allocation4], %s3698
          %s3700 = sand.u32 %s574, 1
          %s3701 = smul.addr %s3700, 8
          %s3702 = scalar_lea.vmem [#allocation10], %s3701
          %3703 = dma.done %s3699, 128
        $region148: #{tpu_custom_call.1} parent=143 // pred_fallthru
          _
        // Predicated region
        $region149: #{tpu_custom_call.1} parent=143 // pred_check
          %p3704 = pneg %p615
        $region150: #{tpu_custom_call.1} parent=143 // pred_check_branch
          %3706 = sbr.rel (%p3704) target = $region152
        $region151: #{tpu_custom_call.1} parent=143 // pred_region
          %s3707 = sand.u32 %s600, 1
          %s3708 = scalar_lea.sflag [#allocation12], %s3707
          %s3709 = sand.u32 %s600, 1
          %s3710 = smul.addr %s3709, 32
          %s3711 = scalar_lea.vmem [#allocation11], %s3710
          %3712 = dma.done %s3708, 512
        $region152: #{tpu_custom_call.1} parent=143 // pred_fallthru
          _
      $region144: #{tpu_custom_call.1} parent=5 // pred_fallthru
        _
    $region6: #{tpu_custom_call.1} parent=1 // loop_footer
      %s45 = sadd.s32 1, %s41
    $region7: #{tpu_custom_call.1} parent=1 // loop_footer_branch
      %40 = sbr.rel target = $region3
    $region8: #{tpu_custom_call.1} parent=1 // loop_exit
      _
    %3713 = vsyncpa [#allocation3], 1
    %s3714 = scalar_lea.sflag [#allocation3], 1
    %3715 = vsyncpa %s3714, 1
    %3716 = vsyncpa [#allocation6], 1
    %3717 = vsyncpa [#allocation9], 1
    %3718 = vsyncpa [#allocation4], 1
    %s3719 = scalar_lea.sflag [#allocation4], 1
    %3720 = vsyncpa %s3719, 1
    %3721 = vsyncpa [#allocation12], 1
    %s3722 = scalar_lea.sflag [#allocation12], 1
    %3723 = vsyncpa %s3722, 1

</llo_original>
